<compile_context>
chip_gen: v7x
topology: tpu7x:2x2x1
jax: 0.10.0
libtpu: 0.0.40
codegen_flags: <defaults>
</compile_context>

<pallas_src>
import jax
import jax.numpy as jnp
from jax import lax
from jax.experimental import pallas as pl
from jax.experimental.pallas import tpu as pltpu


# ------------------------------ ELU (shared) -------------------------------- #
def _elu(v):
    """F.elu(alpha=1) with a cancellation-free expm1.

    Built only from exp/where/mul/add (Mosaic-safe on every generation); the
    3-term Taylor branch below |v| < 1e-2 avoids exp(v)-1 cancellation.
    """
    small = jnp.abs(v) < 1e-2
    expm1 = jnp.where(small, v * (1.0 + v * (0.5 + v * (1.0 / 6.0))),
                      jnp.exp(v) - 1.0)
    return jnp.where(v > 0.0, v, expm1)


# ------------------------------ Pallas kernel ------------------------------- #
def _mednet_fused_kernel(x_ref, w1_ref, w2_ref, w3_ref, w4_ref, w5_ref,
                         aux_ref, o_ref):
    """Entire MedNet forward for one batch tile: 5 x (matmul + scale + bias [+ ELU])."""

    def dense(h, w_ref, layer, apply_elu):
        w = w_ref[...]
        if w.dtype == jnp.int8:
            # int8 -> f32 -> bf16 is exact for int8 values; per-column
            # dequant scale is folded into the post-accumulation multiply.
            w = w.astype(jnp.float32).astype(jnp.bfloat16)
        n = w.shape[1]
        y = jnp.dot(h, w, preferred_element_type=jnp.float32)
        y = y * aux_ref[5 + layer:6 + layer, :n] + aux_ref[layer:layer + 1, :n]
        return _elu(y).astype(jnp.bfloat16) if apply_elu else y

    h = x_ref[...]                          # (TB, 576) bf16
    h = dense(h, w1_ref, 0, True)           # conv1 Toeplitz -> (TB, 1664)
    h = dense(h, w2_ref, 1, True)           # conv2 Toeplitz -> (TB, 1536), torch flatten order
    h = dense(h, w3_ref, 2, True)           # ful1           -> (TB, 512)
    h = dense(h, w4_ref, 3, True)           # ful2           -> (TB, 128)
    o_ref[...] = dense(h, w5_ref, 4, False).astype(o_ref.dtype)   # ful3 -> (TB, 128)


def mednet_forward(prep, x, *, num_c):
    """Jitted forward: reshape/pad + one fused pallas_call over a batch grid."""
    B = x.shape[0]
    x2d = x.reshape(B, -1).astype(jnp.bfloat16)      # NCHW flatten (Cin=1), bf16 once
    n_in = x2d.shape[1]

    # Batch tile: multiple of 16 (bf16 sublane-safe), capped at 128 rows so the
    # per-tile activation footprint stays small on every generation.
    tb = 128 if B > 128 else ((B + 15) // 16) * 16
    b_pad = ((B + tb - 1) // tb) * tb
    if b_pad != B:
        x2d = jnp.pad(x2d, ((0, b_pad - B), (0, 0)))

    w1, w2, w3 = prep["w1"], prep["w2"], prep["w3"]
    w4, w5, aux = prep["w4"], prep["w5"], prep["aux"]
    n_out_pad = w5.shape[1]

    # Weights + aux: full-array blocks with a constant index_map -> fetched once,
    # VMEM-resident for the whole grid.
    weight_specs = [pl.BlockSpec(w.shape, lambda i: (0, 0))
                    for w in (w1, w2, w3, w4, w5, aux)]

    weight_bytes = sum(int(w.size) * w.dtype.itemsize
                       for w in (w1, w2, w3, w4, w5, aux))
    flops = 2 * b_pad * sum(int(w.shape[0]) * int(w.shape[1])
                            for w in (w1, w2, w3, w4, w5))
    transcendentals = b_pad * sum(int(w.shape[1]) for w in (w1, w2, w3, w4))
    bytes_accessed = weight_bytes + b_pad * (n_in * 2 + n_out_pad * 4)

    out = pl.pallas_call(
        _mednet_fused_kernel,
        out_shape=jax.ShapeDtypeStruct((b_pad, n_out_pad), jnp.float32),
        grid=(b_pad // tb,),
        in_specs=[pl.BlockSpec((tb, n_in), lambda i: (i, 0))] + weight_specs,
        out_specs=pl.BlockSpec((tb, n_out_pad), lambda i: (i, 0)),
        compiler_params=pltpu.CompilerParams(
            dimension_semantics=("parallel",),
            vmem_limit_bytes=48 * 1024 * 1024),
        cost_estimate=pl.CostEstimate(
            flops=int(flops),
            transcendentals=int(transcendentals),
            bytes_accessed=int(bytes_accessed)),
    )(x2d, w1, w2, w3, w4, w5, aux)
    return out[:B, :num_c]


# ----------------------- one-time parameter repacking ----------------------- #
def _conv_matrix(w_oihw, cin, h, w):
    """Exact Toeplitz matrix of a VALID Conv2d: (cin*h*w, cout*ho*wo).

    Built by pushing an identity batch through lax.conv, so row/column order
    matches torch NCHW flattening exactly.
    """
    n_in = cin * h * w
    eye = jnp.eye(n_in, dtype=jnp.float32).reshape(n_in, cin, h, w)
    out = lax.conv_general_dilated(
        eye, w_oihw, (1, 1), "VALID",
        dimension_numbers=("NCHW", "OIHW", "NCHW"),
        precision=lax.Precision.HIGHEST)
    return out.reshape(n_in, -1)           # columns in torch (co, i, j) order


def _quantize_int8(w):
    """Per-output-column symmetric int8 weight quantization."""
    amax = jnp.max(jnp.abs(w), axis=0)
    scale = jnp.where(amax > 0.0, amax / 127.0, 1.0).astype(jnp.float32)
    q = jnp.clip(jnp.round(w / scale), -127.0, 127.0).astype(jnp.int8)
    return q, scale


def prepare_params(params, x_dim, y_dim):
    """One-time (outside jit) repack of torch-layout params for the fused kernel."""
    c1, _, k1, _ = params["w_cnv1"].shape           # (5, 1, 7, 7)
    c2, _, k2, _ = params["w_cnv2"].shape           # (10, 5, 7, 7)
    h1, w1d = x_dim - k1 + 1, y_dim - k1 + 1        # 18, 18
    h2, w2d = h1 - k2 + 1, w1d - k2 + 1             # 12, 12
    n1, n2 = c1 * h1 * w1d, c2 * h2 * w2d           # 1620, 1440
    fc1 = params["w_ful1"].shape[0]                 # 400
    fc2 = params["w_ful2"].shape[0]                 # 80
    num_c = params["w_ful3"].shape[0]

    pad128 = lambda n: ((n + 127) // 128) * 128
    n1p, n2p = pad128(n1), pad128(n2)               # 1664, 1536
    fc1p, fc2p, ncp = pad128(fc1), pad128(fc2), pad128(num_c)   # 512, 128, 128

    W1 = _conv_matrix(params["w_cnv1"], 1, x_dim, y_dim)        # (576, 1620)
    W2 = _conv_matrix(params["w_cnv2"], c1, h1, w1d)            # (1620, 1440)
    W1 = jnp.pad(W1, ((0, 0), (0, n1p - n1)))                   # (576, 1664)
    W2 = jnp.pad(W2, ((0, n1p - n1), (0, n2p - n2)))            # (1664, 1536)
    W3 = jnp.pad(params["w_ful1"].T, ((0, n2p - n2), (0, fc1p - fc1)))   # (1536, 512)
    W4 = jnp.pad(params["w_ful2"].T, ((0, fc1p - fc1), (0, fc2p - fc2))) # (512, 128)
    W5 = jnp.pad(params["w_ful3"].T, ((0, fc2p - fc2), (0, ncp - num_c)))# (128, 128)

    W1q, s1 = _quantize_int8(W1)
    W2q, s2 = _quantize_int8(W2)
    W3q, s3 = _quantize_int8(W3)

    # Rows 0..4: biases (zero in padded lanes).  Rows 5..9: dequant scales
    # (1.0 for the unquantized bf16 layers).  One small VMEM constant, one DMA.
    aux = jnp.zeros((10, n1p), jnp.float32)
    aux = aux.at[0, :n1].set(jnp.repeat(params["b_cnv1"], h1 * w1d))
    aux = aux.at[1, :n2].set(jnp.repeat(params["b_cnv2"], h2 * w2d))
    aux = aux.at[2, :fc1].set(params["b_ful1"])
    aux = aux.at[3, :fc2].set(params["b_ful2"])
    aux = aux.at[4, :num_c].set(params["b_ful3"])
    aux = aux.at[5, :n1p].set(s1)
    aux = aux.at[6, :n2p].set(s2)
    aux = aux.at[7, :fc1p].set(s3)
    aux = aux.at[8, :fc2p].set(1.0)
    aux = aux.at[9, :ncp].set(1.0)

    return {
        "w1": W1q, "w2": W2q, "w3": W3q,            # int8, per-column scales in aux
        "w4": W4.astype(jnp.bfloat16),
        "w5": W5.astype(jnp.bfloat16),
        "aux": aux,
    }


# ------------------------- deterministic parameters ------------------------- #
def init_params(key, x_dim, y_dim, num_c):
    num_convs1, conv_size1 = 5, 7
    num_convs2, conv_size2 = 10, 7
    num_nodes_to_fc = num_convs2 * (x_dim - (conv_size1 - 1) - (conv_size2 - 1)) \
                                 * (y_dim - (conv_size1 - 1) - (conv_size2 - 1))
    fc1, fc2 = 400, 80
    ks = jax.random.split(key, 10)
    s = 0.02
    return {
        "w_cnv1": s * jax.random.normal(ks[0], (num_convs1, 1, conv_size1, conv_size1), jnp.float32),
        "b_cnv1": s * jax.random.normal(ks[1], (num_convs1,), jnp.float32),
        "w_cnv2": s * jax.random.normal(ks[2], (num_convs2, num_convs1, conv_size2, conv_size2), jnp.float32),
        "b_cnv2": s * jax.random.normal(ks[3], (num_convs2,), jnp.float32),
        "w_ful1": s * jax.random.normal(ks[4], (fc1, num_nodes_to_fc), jnp.float32),
        "b_ful1": s * jax.random.normal(ks[5], (fc1,), jnp.float32),
        "w_ful2": s * jax.random.normal(ks[6], (fc2, fc1), jnp.float32),
        "b_ful2": s * jax.random.normal(ks[7], (fc2,), jnp.float32),
        "w_ful3": s * jax.random.normal(ks[8], (num_c, fc2), jnp.float32),
        "b_ful3": s * jax.random.normal(ks[9], (num_c,), jnp.float32),
    }


# ---------------------------- pure-JAX reference ---------------------------- #
def reference_forward(params, x):
    def conv(v, w, b):
        y = lax.conv_general_dilated(
            v, w, (1, 1), "VALID",
            dimension_numbers=("NCHW", "OIHW", "NCHW"),
            precision=lax.Precision.HIGHEST)
        return y + b[None, :, None, None]

    y = _elu(conv(x, params["w_cnv1"], params["b_cnv1"]))
    y = _elu(conv(y, params["w_cnv2"], params["b_cnv2"]))
    y = y.reshape(y.shape[0], -1)
    y = _elu(jnp.dot(y, params["w_ful1"].T, precision=lax.Precision.HIGHEST) + params["b_ful1"])
    y = _elu(jnp.dot(y, params["w_ful2"].T, precision=lax.Precision.HIGHEST) + params["b_ful2"])
    y = jnp.dot(y, params["w_ful3"].T, precision=lax.Precision.HIGHEST) + params["b_ful3"]
    return y


# ----------------------------------- main ----------------------------------- #
if __name__ == "__main__":
    X_DIM = Y_DIM = 24     # conv1: 18x18, conv2: 12x12, flat = 10*12*12 = 1440
    NUM_C = 6
    BATCH = 2

    key = jax.random.PRNGKey(0)
    k_param, k_x = jax.random.split(key)
    params = init_params(k_param, X_DIM, Y_DIM, NUM_C)
    x = jax.random.normal(k_x, (BATCH, 1, X_DIM, Y_DIM), jnp.float32)   # NCHW like torch

    prep = prepare_params(params, X_DIM, Y_DIM)      # once, outside jit

    fwd = jax.jit(mednet_forward, static_argnames=("num_c",))
    out = jax.block_until_ready(fwd(prep, x, num_c=NUM_C))
    assert out.shape == (BATCH, NUM_C)

    ref = jax.block_until_ready(reference_forward(params, x))
    err = float(jnp.max(jnp.abs(out - ref)))
    # int8 weights (per-column scales) + bf16 activations, f32 accumulation:
    # small bounded quantization error vs the f32 reference.
    assert jnp.allclose(out, ref, rtol=3e-2, atol=1e-3), \
        f"mismatch vs reference: max abs err {err}"

    print("KERNEL_OK")
</pallas_src>

<mosaic_0001>
module attributes {stable_mosaic.version = 11 : i64} {
  func.func @_mednet_fused_kernel(%arg0: i32, %arg1: memref<16x576xbf16, #tpu.memory_space<vmem>>, %arg2: memref<576x1664xi8, #tpu.memory_space<vmem>>, %arg3: memref<1664x1536xi8, #tpu.memory_space<vmem>>, %arg4: memref<1536x512xi8, #tpu.memory_space<vmem>>, %arg5: memref<512x128xbf16, #tpu.memory_space<vmem>>, %arg6: memref<128x128xbf16, #tpu.memory_space<vmem>>, %arg7: memref<10x1664xf32, #tpu.memory_space<vmem>>, %arg8: memref<16x128xf32, #tpu.memory_space<vmem>>) attributes {dimension_semantics = [#tpu.dimension_semantics<parallel>], iteration_bounds = array<i64: 1>, scalar_prefetch = 0 : i64, scratch_operands = 0 : i64, tpu.core_type = #tpu.core_type<tc>, window_params = [{transform_indices = @transform_0, window_bounds = array<i64: 16, 576>}, {pipeline_mode = #tpu.pipeline_mode<synchronous>, transform_indices = @transform_1, window_bounds = array<i64: 576, 1664>}, {pipeline_mode = #tpu.pipeline_mode<synchronous>, transform_indices = @transform_2, window_bounds = array<i64: 1664, 1536>}, {pipeline_mode = #tpu.pipeline_mode<synchronous>, transform_indices = @transform_3, window_bounds = array<i64: 1536, 512>}, {pipeline_mode = #tpu.pipeline_mode<synchronous>, transform_indices = @transform_4, window_bounds = array<i64: 512, 128>}, {pipeline_mode = #tpu.pipeline_mode<synchronous>, transform_indices = @transform_5, window_bounds = array<i64: 128, 128>}, {pipeline_mode = #tpu.pipeline_mode<synchronous>, transform_indices = @transform_6, window_bounds = array<i64: 10, 1664>}, {transform_indices = @transform_7, window_bounds = array<i64: 16, 128>}]} {
    %c0 = arith.constant 0 : index
    %c0_0 = arith.constant 0 : index
    %0 = vector.load %arg1[%c0, %c0_0] : memref<16x576xbf16, #tpu.memory_space<vmem>>, vector<16x576xbf16>
    %c0_1 = arith.constant 0 : index
    %c0_2 = arith.constant 0 : index
    %1 = vector.load %arg2[%c0_1, %c0_2] : memref<576x1664xi8, #tpu.memory_space<vmem>>, vector<576x1664xi8>
    %2 = arith.sitofp %1 : vector<576x1664xi8> to vector<576x1664xf32>
    %3 = arith.truncf %2 : vector<576x1664xf32> to vector<576x1664xbf16>
    %cst = arith.constant dense<0.000000e+00> : vector<16x1664xf32>
    %4 = tpu.matmul %0, %3, %cst {dimension_numbers = #tpu.dot_dimension_numbers<[1], [0], [0], [1], [0, 0, 1, 1], [], []>} : vector<16x576xbf16>, vector<576x1664xbf16>, vector<16x1664xf32> -> vector<16x1664xf32>
    %c5 = arith.constant 5 : index
    %c0_3 = arith.constant 0 : index
    %5 = vector.load %arg7[%c5, %c0_3] : memref<10x1664xf32, #tpu.memory_space<vmem>>, vector<1x1664xf32>
    %6 = vector.broadcast %5 : vector<1x1664xf32> to vector<16x1664xf32>
    %7 = arith.mulf %4, %6 : vector<16x1664xf32>
    %c0_4 = arith.constant 0 : index
    %c0_5 = arith.constant 0 : index
    %8 = vector.load %arg7[%c0_4, %c0_5] : memref<10x1664xf32, #tpu.memory_space<vmem>>, vector<1x1664xf32>
    %9 = vector.broadcast %8 : vector<1x1664xf32> to vector<16x1664xf32>
    %10 = arith.addf %7, %9 : vector<16x1664xf32>
    %11 = math.absf %10 : vector<16x1664xf32>
    %cst_6 = arith.constant 0.00999999977 : f32
    %12 = vector.broadcast %cst_6 : f32 to vector<16x1664xf32>
    %13 = arith.cmpf olt, %11, %12 : vector<16x1664xf32>
    %cst_7 = arith.constant 0.166666672 : f32
    %14 = vector.broadcast %cst_7 : f32 to vector<16x1664xf32>
    %15 = arith.mulf %10, %14 : vector<16x1664xf32>
    %cst_8 = arith.constant 5.000000e-01 : f32
    %16 = vector.broadcast %cst_8 : f32 to vector<16x1664xf32>
    %17 = arith.addf %16, %15 : vector<16x1664xf32>
    %18 = arith.mulf %10, %17 : vector<16x1664xf32>
    %cst_9 = arith.constant 1.000000e+00 : f32
    %19 = vector.broadcast %cst_9 : f32 to vector<16x1664xf32>
    %20 = arith.addf %19, %18 : vector<16x1664xf32>
    %21 = arith.mulf %10, %20 : vector<16x1664xf32>
    %22 = math.exp %10 : vector<16x1664xf32>
    %cst_10 = arith.constant 1.000000e+00 : f32
    %23 = vector.broadcast %cst_10 : f32 to vector<16x1664xf32>
    %24 = arith.subf %22, %23 : vector<16x1664xf32>
    %25 = arith.select %13, %21, %24 : vector<16x1664xi1>, vector<16x1664xf32>
    %cst_11 = arith.constant 0.000000e+00 : f32
    %26 = vector.broadcast %cst_11 : f32 to vector<16x1664xf32>
    %27 = arith.cmpf ogt, %10, %26 : vector<16x1664xf32>
    %28 = arith.select %27, %10, %25 : vector<16x1664xi1>, vector<16x1664xf32>
    %29 = arith.truncf %28 : vector<16x1664xf32> to vector<16x1664xbf16>
    %c0_12 = arith.constant 0 : index
    %c0_13 = arith.constant 0 : index
    %30 = vector.load %arg3[%c0_12, %c0_13] : memref<1664x1536xi8, #tpu.memory_space<vmem>>, vector<1664x1536xi8>
    %31 = arith.sitofp %30 : vector<1664x1536xi8> to vector<1664x1536xf32>
    %32 = arith.truncf %31 : vector<1664x1536xf32> to vector<1664x1536xbf16>
    %cst_14 = arith.constant dense<0.000000e+00> : vector<16x1536xf32>
    %33 = tpu.matmul %29, %32, %cst_14 {dimension_numbers = #tpu.dot_dimension_numbers<[1], [0], [0], [1], [0, 0, 1, 1], [], []>} : vector<16x1664xbf16>, vector<1664x1536xbf16>, vector<16x1536xf32> -> vector<16x1536xf32>
    %c6 = arith.constant 6 : index
    %c0_15 = arith.constant 0 : index
    %34 = vector.load %arg7[%c6, %c0_15] : memref<10x1664xf32, #tpu.memory_space<vmem>>, vector<1x1536xf32>
    %35 = vector.broadcast %34 : vector<1x1536xf32> to vector<16x1536xf32>
    %36 = arith.mulf %33, %35 : vector<16x1536xf32>
    %c1 = arith.constant 1 : index
    %c0_16 = arith.constant 0 : index
    %37 = vector.load %arg7[%c1, %c0_16] : memref<10x1664xf32, #tpu.memory_space<vmem>>, vector<1x1536xf32>
    %38 = vector.broadcast %37 : vector<1x1536xf32> to vector<16x1536xf32>
    %39 = arith.addf %36, %38 : vector<16x1536xf32>
    %40 = math.absf %39 : vector<16x1536xf32>
    %cst_17 = arith.constant 0.00999999977 : f32
    %41 = vector.broadcast %cst_17 : f32 to vector<16x1536xf32>
    %42 = arith.cmpf olt, %40, %41 : vector<16x1536xf32>
    %cst_18 = arith.constant 0.166666672 : f32
    %43 = vector.broadcast %cst_18 : f32 to vector<16x1536xf32>
    %44 = arith.mulf %39, %43 : vector<16x1536xf32>
    %cst_19 = arith.constant 5.000000e-01 : f32
    %45 = vector.broadcast %cst_19 : f32 to vector<16x1536xf32>
    %46 = arith.addf %45, %44 : vector<16x1536xf32>
    %47 = arith.mulf %39, %46 : vector<16x1536xf32>
    %cst_20 = arith.constant 1.000000e+00 : f32
    %48 = vector.broadcast %cst_20 : f32 to vector<16x1536xf32>
    %49 = arith.addf %48, %47 : vector<16x1536xf32>
    %50 = arith.mulf %39, %49 : vector<16x1536xf32>
    %51 = math.exp %39 : vector<16x1536xf32>
    %cst_21 = arith.constant 1.000000e+00 : f32
    %52 = vector.broadcast %cst_21 : f32 to vector<16x1536xf32>
    %53 = arith.subf %51, %52 : vector<16x1536xf32>
    %54 = arith.select %42, %50, %53 : vector<16x1536xi1>, vector<16x1536xf32>
    %cst_22 = arith.constant 0.000000e+00 : f32
    %55 = vector.broadcast %cst_22 : f32 to vector<16x1536xf32>
    %56 = arith.cmpf ogt, %39, %55 : vector<16x1536xf32>
    %57 = arith.select %56, %39, %54 : vector<16x1536xi1>, vector<16x1536xf32>
    %58 = arith.truncf %57 : vector<16x1536xf32> to vector<16x1536xbf16>
    %c0_23 = arith.constant 0 : index
    %c0_24 = arith.constant 0 : index
    %59 = vector.load %arg4[%c0_23, %c0_24] : memref<1536x512xi8, #tpu.memory_space<vmem>>, vector<1536x512xi8>
    %60 = arith.sitofp %59 : vector<1536x512xi8> to vector<1536x512xf32>
    %61 = arith.truncf %60 : vector<1536x512xf32> to vector<1536x512xbf16>
    %cst_25 = arith.constant dense<0.000000e+00> : vector<16x512xf32>
    %62 = tpu.matmul %58, %61, %cst_25 {dimension_numbers = #tpu.dot_dimension_numbers<[1], [0], [0], [1], [0, 0, 1, 1], [], []>} : vector<16x1536xbf16>, vector<1536x512xbf16>, vector<16x512xf32> -> vector<16x512xf32>
    %c7 = arith.constant 7 : index
    %c0_26 = arith.constant 0 : index
    %63 = vector.load %arg7[%c7, %c0_26] : memref<10x1664xf32, #tpu.memory_space<vmem>>, vector<1x512xf32>
    %64 = vector.broadcast %63 : vector<1x512xf32> to vector<16x512xf32>
    %65 = arith.mulf %62, %64 : vector<16x512xf32>
    %c2 = arith.constant 2 : index
    %c0_27 = arith.constant 0 : index
    %66 = vector.load %arg7[%c2, %c0_27] : memref<10x1664xf32, #tpu.memory_space<vmem>>, vector<1x512xf32>
    %67 = vector.broadcast %66 : vector<1x512xf32> to vector<16x512xf32>
    %68 = arith.addf %65, %67 : vector<16x512xf32>
    %69 = math.absf %68 : vector<16x512xf32>
    %cst_28 = arith.constant 0.00999999977 : f32
    %70 = vector.broadcast %cst_28 : f32 to vector<16x512xf32>
    %71 = arith.cmpf olt, %69, %70 : vector<16x512xf32>
    %cst_29 = arith.constant 0.166666672 : f32
    %72 = vector.broadcast %cst_29 : f32 to vector<16x512xf32>
    %73 = arith.mulf %68, %72 : vector<16x512xf32>
    %cst_30 = arith.constant 5.000000e-01 : f32
    %74 = vector.broadcast %cst_30 : f32 to vector<16x512xf32>
    %75 = arith.addf %74, %73 : vector<16x512xf32>
    %76 = arith.mulf %68, %75 : vector<16x512xf32>
    %cst_31 = arith.constant 1.000000e+00 : f32
    %77 = vector.broadcast %cst_31 : f32 to vector<16x512xf32>
    %78 = arith.addf %77, %76 : vector<16x512xf32>
    %79 = arith.mulf %68, %78 : vector<16x512xf32>
    %80 = math.exp %68 : vector<16x512xf32>
    %cst_32 = arith.constant 1.000000e+00 : f32
    %81 = vector.broadcast %cst_32 : f32 to vector<16x512xf32>
    %82 = arith.subf %80, %81 : vector<16x512xf32>
    %83 = arith.select %71, %79, %82 : vector<16x512xi1>, vector<16x512xf32>
    %cst_33 = arith.constant 0.000000e+00 : f32
    %84 = vector.broadcast %cst_33 : f32 to vector<16x512xf32>
    %85 = arith.cmpf ogt, %68, %84 : vector<16x512xf32>
    %86 = arith.select %85, %68, %83 : vector<16x512xi1>, vector<16x512xf32>
    %87 = arith.truncf %86 : vector<16x512xf32> to vector<16x512xbf16>
    %c0_34 = arith.constant 0 : index
    %c0_35 = arith.constant 0 : index
    %88 = vector.load %arg5[%c0_34, %c0_35] : memref<512x128xbf16, #tpu.memory_space<vmem>>, vector<512x128xbf16>
    %cst_36 = arith.constant dense<0.000000e+00> : vector<16x128xf32>
    %89 = tpu.matmul %87, %88, %cst_36 {dimension_numbers = #tpu.dot_dimension_numbers<[1], [0], [0], [1], [0, 0, 1, 1], [], []>} : vector<16x512xbf16>, vector<512x128xbf16>, vector<16x128xf32> -> vector<16x128xf32>
    %c8 = arith.constant 8 : index
    %c0_37 = arith.constant 0 : index
    %90 = vector.load %arg7[%c8, %c0_37] : memref<10x1664xf32, #tpu.memory_space<vmem>>, vector<1x128xf32>
    %91 = vector.broadcast %90 : vector<1x128xf32> to vector<16x128xf32>
    %92 = arith.mulf %89, %91 : vector<16x128xf32>
    %c3 = arith.constant 3 : index
    %c0_38 = arith.constant 0 : index
    %93 = vector.load %arg7[%c3, %c0_38] : memref<10x1664xf32, #tpu.memory_space<vmem>>, vector<1x128xf32>
    %94 = vector.broadcast %93 : vector<1x128xf32> to vector<16x128xf32>
    %95 = arith.addf %92, %94 : vector<16x128xf32>
    %96 = math.absf %95 : vector<16x128xf32>
    %cst_39 = arith.constant 0.00999999977 : f32
    %97 = vector.broadcast %cst_39 : f32 to vector<16x128xf32>
    %98 = arith.cmpf olt, %96, %97 : vector<16x128xf32>
    %cst_40 = arith.constant 0.166666672 : f32
    %99 = vector.broadcast %cst_40 : f32 to vector<16x128xf32>
    %100 = arith.mulf %95, %99 : vector<16x128xf32>
    %cst_41 = arith.constant 5.000000e-01 : f32
    %101 = vector.broadcast %cst_41 : f32 to vector<16x128xf32>
    %102 = arith.addf %101, %100 : vector<16x128xf32>
    %103 = arith.mulf %95, %102 : vector<16x128xf32>
    %cst_42 = arith.constant 1.000000e+00 : f32
    %104 = vector.broadcast %cst_42 : f32 to vector<16x128xf32>
    %105 = arith.addf %104, %103 : vector<16x128xf32>
    %106 = arith.mulf %95, %105 : vector<16x128xf32>
    %107 = math.exp %95 : vector<16x128xf32>
    %cst_43 = arith.constant 1.000000e+00 : f32
    %108 = vector.broadcast %cst_43 : f32 to vector<16x128xf32>
    %109 = arith.subf %107, %108 : vector<16x128xf32>
    %110 = arith.select %98, %106, %109 : vector<16x128xi1>, vector<16x128xf32>
    %cst_44 = arith.constant 0.000000e+00 : f32
    %111 = vector.broadcast %cst_44 : f32 to vector<16x128xf32>
    %112 = arith.cmpf ogt, %95, %111 : vector<16x128xf32>
    %113 = arith.select %112, %95, %110 : vector<16x128xi1>, vector<16x128xf32>
    %114 = arith.truncf %113 : vector<16x128xf32> to vector<16x128xbf16>
    %c0_45 = arith.constant 0 : index
    %c0_46 = arith.constant 0 : index
    %115 = vector.load %arg6[%c0_45, %c0_46] : memref<128x128xbf16, #tpu.memory_space<vmem>>, vector<128x128xbf16>
    %cst_47 = arith.constant dense<0.000000e+00> : vector<16x128xf32>
    %116 = tpu.matmul %114, %115, %cst_47 {dimension_numbers = #tpu.dot_dimension_numbers<[1], [0], [0], [1], [0, 0, 1, 1], [], []>} : vector<16x128xbf16>, vector<128x128xbf16>, vector<16x128xf32> -> vector<16x128xf32>
    %c9 = arith.constant 9 : index
    %c0_48 = arith.constant 0 : index
    %117 = vector.load %arg7[%c9, %c0_48] : memref<10x1664xf32, #tpu.memory_space<vmem>>, vector<1x128xf32>
    %118 = vector.broadcast %117 : vector<1x128xf32> to vector<16x128xf32>
    %119 = arith.mulf %116, %118 : vector<16x128xf32>
    %c4 = arith.constant 4 : index
    %c0_49 = arith.constant 0 : index
    %120 = vector.load %arg7[%c4, %c0_49] : memref<10x1664xf32, #tpu.memory_space<vmem>>, vector<1x128xf32>
    %121 = vector.broadcast %120 : vector<1x128xf32> to vector<16x128xf32>
    %122 = arith.addf %119, %121 : vector<16x128xf32>
    %c0_50 = arith.constant 0 : index
    %c0_51 = arith.constant 0 : index
    %123 = vector.load %arg8[%c0_50, %c0_51] : memref<16x128xf32, #tpu.memory_space<vmem>>, vector<16x128xf32>
    tpu.vector_store %arg8[%c0_50, %c0_51], %122 {strides = array<i32>} : memref<16x128xf32, #tpu.memory_space<vmem>>, vector<16x128xf32>,
    return
  }
  func.func @transform_0(%arg0: i32) -> (i32, i32) {
    %c0_i32 = arith.constant 0 : i32
    %c0_i32_0 = arith.constant 0 : i32
    return %arg0, %c0_i32 : i32, i32
  }
  func.func @transform_1(%arg0: i32) -> (i32, i32) {
    %c0_i32 = arith.constant 0 : i32
    %c0_i32_0 = arith.constant 0 : i32
    %c0_i32_1 = arith.constant 0 : i32
    return %c0_i32, %c0_i32_0 : i32, i32
  }
  func.func @transform_2(%arg0: i32) -> (i32, i32) {
    %c0_i32 = arith.constant 0 : i32
    %c0_i32_0 = arith.constant 0 : i32
    %c0_i32_1 = arith.constant 0 : i32
    return %c0_i32, %c0_i32_0 : i32, i32
  }
  func.func @transform_3(%arg0: i32) -> (i32, i32) {
    %c0_i32 = arith.constant 0 : i32
    %c0_i32_0 = arith.constant 0 : i32
    %c0_i32_1 = arith.constant 0 : i32
    return %c0_i32, %c0_i32_0 : i32, i32
  }
  func.func @transform_4(%arg0: i32) -> (i32, i32) {
    %c0_i32 = arith.constant 0 : i32
    %c0_i32_0 = arith.constant 0 : i32
    %c0_i32_1 = arith.constant 0 : i32
    return %c0_i32, %c0_i32_0 : i32, i32
  }
  func.func @transform_5(%arg0: i32) -> (i32, i32) {
    %c0_i32 = arith.constant 0 : i32
    %c0_i32_0 = arith.constant 0 : i32
    %c0_i32_1 = arith.constant 0 : i32
    return %c0_i32, %c0_i32_0 : i32, i32
  }
  func.func @transform_6(%arg0: i32) -> (i32, i32) {
    %c0_i32 = arith.constant 0 : i32
    %c0_i32_0 = arith.constant 0 : i32
    %c0_i32_1 = arith.constant 0 : i32
    return %c0_i32, %c0_i32_0 : i32, i32
  }
  func.func @transform_7(%arg0: i32) -> (i32, i32) {
    %c0_i32 = arith.constant 0 : i32
    %c0_i32_0 = arith.constant 0 : i32
    return %arg0, %c0_i32 : i32, i32
  }
}

</mosaic_0001>

<llo_original>
// kernel: mednet_forward.1
$region0: #{mednet_forward.1}
  #allocation0 [shape = 'u32[]', space=smem, size = 0x4, offset = 0x4, fixed_abs, tag = 'smem constant byte address 0x4 - core index']
  #allocation1 [shape = 'u32[144,128]{1,0:T(1,128)}', space=vmem, size = 0x12000, scoped, tag = 'internal scratch']
  %s0 = inlined_call_operand.vmem [shape: bf16[16,576], index: 0, kind: input, shape index: {}]
  %s1 = inlined_call_operand.hbm [shape: s8[576,1664], index: 1, kind: input, shape index: {}]
  %s2 = inlined_call_operand.hbm [shape: s8[1664,1536], index: 2, kind: input, shape index: {}]
  %s3 = inlined_call_operand.hbm [shape: s8[1536,512], index: 3, kind: input, shape index: {}]
  %s4 = inlined_call_operand.hbm [shape: bf16[512,128], index: 4, kind: input, shape index: {}]
  %s5 = inlined_call_operand.hbm [shape: bf16[128,128], index: 5, kind: input, shape index: {}]
  %s6 = inlined_call_operand.hbm [shape: f32[10,1664], index: 6, kind: input, shape index: {}]
  %s7 = inlined_call_operand.vmem [shape: f32[16,128], index: 7, kind: output, shape index: {}]
  %s8 = sld [smem:[#allocation0]]
  $region62: #{mednet_forward.1} parent=0
    _
  %s10 = ssub.s32 1, %s8
  %s11 = scalar_select 0, %s10, %s8
  $region1: #{mednet_forward.1} parent=0
    #allocation2 [shape = 'u8[958464]{0}', space=vmem, size = 0xea000, scoped, tag = 'input window, operand 1, single buffered']
    #allocation3 [shape = 's32[1]{0}', space=sflag, size = 0x4, scoped, tag = 'scoped memory for mednet_forward.1']
    #allocation4 [shape = 'u8[2555904]{0}', space=vmem, size = 0x270000, scoped, tag = 'input window, operand 2, single buffered']
    #allocation5 [shape = 's32[1]{0}', space=sflag, size = 0x4, scoped, tag = 'scoped memory for mednet_forward.1']
    #allocation6 [shape = 'u8[786432]{0}', space=vmem, size = 0xc0000, scoped, tag = 'input window, operand 3, single buffered']
    #allocation7 [shape = 'u8[131072]{0}', space=vmem, size = 0x20000, scoped, tag = 'input window, operand 4, single buffered']
    #allocation8 [shape = 's32[1]{0}', space=sflag, size = 0x4, scoped, tag = 'scoped memory for mednet_forward.1']
    #allocation9 [shape = 'u8[32768]{0}', space=vmem, size = 0x8000, scoped, tag = 'input window, operand 5, single buffered']
    #allocation10 [shape = 'u8[106496]{0}', space=vmem, size = 0x1a000, scoped, tag = 'input window, operand 6, single buffered']
    #allocation11 [shape = 's32[1]{0}', space=sflag, size = 0x4, scoped, tag = 'scoped memory for mednet_forward.1']
    %12 = vsyncpa [#allocation3], 0
    %13 = vsyncpa [#allocation5], 0
    %14 = vsyncpa [#allocation8], 0
    %15 = vsyncpa [#allocation11], 0
    // Predicated region
    $region2: #{mednet_forward.1} parent=1 // pred_check
      _
    $region3: #{mednet_forward.1} parent=1 // pred_check_branch
      %17 = sbr.rel (0) target = $region5
    $region4: #{mednet_forward.1} parent=1 // pred_region
      _
    $region5: #{mednet_forward.1} parent=1 // pred_fallthru
      _
    // Predicated region
    $region6: #{mednet_forward.1} parent=1 // pred_check
      _
    $region7: #{mednet_forward.1} parent=1 // pred_check_branch
      %19 = sbr.rel (0) target = $region9
    $region8: #{mednet_forward.1} parent=1 // pred_region
      %s21 = ssub.s32 29952, 29952
      %22 = vsyncadd [#allocation3], %s21
      %s23 = sshll.u32 [#allocation2], 4
      %s24 = int_to_ptr.vmem [resolvable:$true] %s23
      %29 = dma.hbm_to_vmem [thread:$0]  %s1, 29952, %s24, [#allocation3], 1664, 1664, 104
    $region9: #{mednet_forward.1} parent=1 // pred_fallthru
      _
    // Predicated region
    $region10: #{mednet_forward.1} parent=1 // pred_check
      _
    $region11: #{mednet_forward.1} parent=1 // pred_check_branch
      %31 = sbr.rel (0) target = $region13
    $region12: #{mednet_forward.1} parent=1 // pred_region
      %s33 = ssub.s32 79872, 79872
      %34 = vsyncadd [#allocation5], %s33
      %s35 = sshll.u32 [#allocation4], 4
      %s36 = int_to_ptr.vmem [resolvable:$true] %s35
      %41 = dma.hbm_to_vmem [thread:$0]  %s2, 79872, %s36, [#allocation5], 1536, 1536, 96
    $region13: #{mednet_forward.1} parent=1 // pred_fallthru
      _
    // Predicated region
    $region14: #{mednet_forward.1} parent=1 // pred_check
      _
    $region15: #{mednet_forward.1} parent=1 // pred_check_branch
      %43 = sbr.rel (0) target = $region17
    $region16: #{mednet_forward.1} parent=1 // pred_region
      %s45 = ssub.s32 24576, 24576
      %46 = vsyncadd [#allocation5], %s45
      %s47 = sshll.u32 [#allocation6], 4
      %s48 = int_to_ptr.vmem [resolvable:$true] %s47
      %53 = dma.hbm_to_vmem [thread:$0]  %s3, 24576, %s48, [#allocation5], 512, 512, 32
    $region17: #{mednet_forward.1} parent=1 // pred_fallthru
      _
    // Predicated region
    $region18: #{mednet_forward.1} parent=1 // pred_check
      _
    $region19: #{mednet_forward.1} parent=1 // pred_check_branch
      %55 = sbr.rel (0) target = $region21
    $region20: #{mednet_forward.1} parent=1 // pred_region
      %s57 = ssub.s32 4096, 4096
      %58 = vsyncadd [#allocation8], %s57
      %s59 = sshll.u32 [#allocation7], 4
      %s60 = int_to_ptr.vmem [resolvable:$true] %s59
      %65 = dma.hbm_to_vmem [thread:$0]  %s4, 4096, %s60, [#allocation8], 64, 64, 4
    $region21: #{mednet_forward.1} parent=1 // pred_fallthru
      _
    // Predicated region
    $region22: #{mednet_forward.1} parent=1 // pred_check
      _
    $region23: #{mednet_forward.1} parent=1 // pred_check_branch
      %67 = sbr.rel (0) target = $region25
    $region24: #{mednet_forward.1} parent=1 // pred_region
      %s69 = ssub.s32 1024, 1024
      %70 = vsyncadd [#allocation8], %s69
      %s71 = sshll.u32 [#allocation9], 4
      %s72 = int_to_ptr.vmem [resolvable:$true] %s71
      %77 = dma.hbm_to_vmem [thread:$0]  %s5, 1024, %s72, [#allocation8], 64, 64, 4
    $region25: #{mednet_forward.1} parent=1 // pred_fallthru
      _
    // Predicated region
    $region26: #{mednet_forward.1} parent=1 // pred_check
      _
    $region27: #{mednet_forward.1} parent=1 // pred_check_branch
      %79 = sbr.rel (0) target = $region29
    $region28: #{mednet_forward.1} parent=1 // pred_region
      %s81 = ssub.s32 3328, 3328
      %82 = vsyncadd [#allocation11], %s81
      %s83 = sshll.u32 [#allocation10], 4
      %s84 = int_to_ptr.vmem [resolvable:$true] %s83
      %89 = dma.hbm_to_vmem [thread:$0]  %s6, 3328, %s84, [#allocation11], 1664, 1664, 104
    $region29: #{mednet_forward.1} parent=1 // pred_fallthru
      _
    // Predicated region
    $region30: #{mednet_forward.1} parent=1 // pred_check
      _
    $region31: #{mednet_forward.1} parent=1 // pred_check_branch
      %91 = sbr.rel (0) target = $region33
    $region32: #{mednet_forward.1} parent=1 // pred_region
      %92 = dma.done [#allocation3], 29952
    $region33: #{mednet_forward.1} parent=1 // pred_fallthru
      _
    // Predicated region
    $region34: #{mednet_forward.1} parent=1 // pred_check
      _
    $region35: #{mednet_forward.1} parent=1 // pred_check_branch
      %94 = sbr.rel (0) target = $region37
    $region36: #{mednet_forward.1} parent=1 // pred_region
      %95 = dma.done [#allocation5], 79872
    $region37: #{mednet_forward.1} parent=1 // pred_fallthru
      _
    // Predicated region
    $region38: #{mednet_forward.1} parent=1 // pred_check
      _
    $region39: #{mednet_forward.1} parent=1 // pred_check_branch
      %97 = sbr.rel (0) target = $region41
    $region40: #{mednet_forward.1} parent=1 // pred_region
      %98 = dma.done [#allocation5], 24576
    $region41: #{mednet_forward.1} parent=1 // pred_fallthru
      _
    // Predicated region
    $region42: #{mednet_forward.1} parent=1 // pred_check
      _
    $region43: #{mednet_forward.1} parent=1 // pred_check_branch
      %100 = sbr.rel (0) target = $region45
    $region44: #{mednet_forward.1} parent=1 // pred_region
      %101 = dma.done [#allocation8], 4096
    $region45: #{mednet_forward.1} parent=1 // pred_fallthru
      _
    // Predicated region
    $region46: #{mednet_forward.1} parent=1 // pred_check
      _
    $region47: #{mednet_forward.1} parent=1 // pred_check_branch
      %103 = sbr.rel (0) target = $region49
    $region48: #{mednet_forward.1} parent=1 // pred_region
      %104 = dma.done [#allocation8], 1024
    $region49: #{mednet_forward.1} parent=1 // pred_fallthru
      _
    // Predicated region
    $region50: #{mednet_forward.1} parent=1 // pred_check
      _
    $region51: #{mednet_forward.1} parent=1 // pred_check_branch
      %106 = sbr.rel (0) target = $region53
    $region52: #{mednet_forward.1} parent=1 // pred_region
      %107 = dma.done [#allocation11], 3328
    $region53: #{mednet_forward.1} parent=1 // pred_fallthru
      _
    %v109 = vld [vmem:[%s0] sm:$0xff]
    %v110 = vld [vmem:[%s0 + $0x8] sm:$0xff]
    %v111 = vld [vmem:[%s0 + $0x10] sm:$0xf]
    %v112 = vld [vmem:[%s0 + $0x14] sm:$0xff]
    %v113 = vld [vmem:[%s0 + $0x1c] sm:$0xff]
    %v114 = vld [vmem:[%s0 + $0x24] sm:$0xf]
    %v115 = vld [vmem:[#allocation2] sm:$0xff]
    %v116 = vld [vmem:[#allocation2 + $0x8] sm:$0xff]
    %v117 = vld [vmem:[#allocation2 + $0x10] sm:$0xff]
    %v118 = vld [vmem:[#allocation2 + $0x18] sm:$0xff]
    %v119 = vld [vmem:[#allocation2 + $0x20] sm:$0xff]
    %v120 = vld [vmem:[#allocation2 + $0x28] sm:$0xff]
    %v121 = vld [vmem:[#allocation2 + $0x30] sm:$0xff]
    %v122 = vld [vmem:[#allocation2 + $0x38] sm:$0xff]
    %v123 = vld [vmem:[#allocation2 + $0x40] sm:$0xff]
    %v124 = vld [vmem:[#allocation2 + $0x48] sm:$0xff]
    %v125 = vld [vmem:[#allocation2 + $0x50] sm:$0xff]
    %v126 = vld [vmem:[#allocation2 + $0x58] sm:$0xff]
    %v127 = vld [vmem:[#allocation2 + $0x60] sm:$0xff]
    %v128 = vld [vmem:[#allocation2 + $0x68] sm:$0xff]
    %v129 = vld [vmem:[#allocation2 + $0x70] sm:$0xff]
    %v130 = vld [vmem:[#allocation2 + $0x78] sm:$0xff]
    %v131 = vld [vmem:[#allocation2 + $0x80] sm:$0xff]
    %v132 = vld [vmem:[#allocation2 + $0x88] sm:$0xff]
    %v133 = vld [vmem:[#allocation2 + $0x90] sm:$0xff]
    %v134 = vld [vmem:[#allocation2 + $0x98] sm:$0xff]
    %v135 = vld [vmem:[#allocation2 + $0xa0] sm:$0xff]
    %v136 = vld [vmem:[#allocation2 + $0xa8] sm:$0xff]
    %v137 = vld [vmem:[#allocation2 + $0xb0] sm:$0xff]
    %v138 = vld [vmem:[#allocation2 + $0xb8] sm:$0xff]
    %v139 = vld [vmem:[#allocation2 + $0xc0] sm:$0xff]
    %v140 = vld [vmem:[#allocation2 + $0xc8] sm:$0xff]
    %v141 = vld [vmem:[#allocation2 + $0xd0] sm:$0xff]
    %v142 = vld [vmem:[#allocation2 + $0xd8] sm:$0xff]
    %v143 = vld [vmem:[#allocation2 + $0xe0] sm:$0xff]
    %v144 = vld [vmem:[#allocation2 + $0xe8] sm:$0xff]
    %v145 = vld [vmem:[#allocation2 + $0xf0] sm:$0xff]
    %v146 = vld [vmem:[#allocation2 + $0xf8] sm:$0xff]
    %v147 = vld [vmem:[#allocation2 + $0x100] sm:$0xff]
    %v148 = vld [vmem:[#allocation2 + $0x108] sm:$0xff]
    %v149 = vld [vmem:[#allocation2 + $0x110] sm:$0xff]
    %v150 = vld [vmem:[#allocation2 + $0x118] sm:$0xff]
    %v151 = vld [vmem:[#allocation2 + $0x120] sm:$0xff]
    %v152 = vld [vmem:[#allocation2 + $0x128] sm:$0xff]
    %v153 = vld [vmem:[#allocation2 + $0x130] sm:$0xff]
    %v154 = vld [vmem:[#allocation2 + $0x138] sm:$0xff]
    %v155 = vld [vmem:[#allocation2 + $0x140] sm:$0xff]
    %v156 = vld [vmem:[#allocation2 + $0x148] sm:$0xff]
    %v157 = vld [vmem:[#allocation2 + $0x150] sm:$0xff]
    %v158 = vld [vmem:[#allocation2 + $0x158] sm:$0xff]
    %v159 = vld [vmem:[#allocation2 + $0x160] sm:$0xff]
    %v160 = vld [vmem:[#allocation2 + $0x168] sm:$0xff]
    %v161 = vld [vmem:[#allocation2 + $0x170] sm:$0xff]
    %v162 = vld [vmem:[#allocation2 + $0x178] sm:$0xff]
    %v163 = vld [vmem:[#allocation2 + $0x180] sm:$0xff]
    %v164 = vld [vmem:[#allocation2 + $0x188] sm:$0xff]
    %v165 = vld [vmem:[#allocation2 + $0x190] sm:$0xff]
    %v166 = vld [vmem:[#allocation2 + $0x198] sm:$0xff]
    %v167 = vld [vmem:[#allocation2 + $0x1a0] sm:$0xff]
    %v168 = vld [vmem:[#allocation2 + $0x1a8] sm:$0xff]
    %v169 = vld [vmem:[#allocation2 + $0x1b0] sm:$0xff]
    %v170 = vld [vmem:[#allocation2 + $0x1b8] sm:$0xff]
    %v171 = vld [vmem:[#allocation2 + $0x1c0] sm:$0xff]
    %v172 = vld [vmem:[#allocation2 + $0x1c8] sm:$0xff]
    %v173 = vld [vmem:[#allocation2 + $0x1d0] sm:$0xff]
    %v174 = vld [vmem:[#allocation2 + $0x1d8] sm:$0xff]
    %v175 = vld [vmem:[#allocation2 + $0x1e0] sm:$0xff]
    %v176 = vld [vmem:[#allocation2 + $0x1e8] sm:$0xff]
    %v177 = vld [vmem:[#allocation2 + $0x1f0] sm:$0xff]
    %v178 = vld [vmem:[#allocation2 + $0x1f8] sm:$0xff]
    %v179 = vld [vmem:[#allocation2 + $0x200] sm:$0xff]
    %v180 = vld [vmem:[#allocation2 + $0x208] sm:$0xff]
    %v181 = vld [vmem:[#allocation2 + $0x210] sm:$0xff]
    %v182 = vld [vmem:[#allocation2 + $0x218] sm:$0xff]
    %v183 = vld [vmem:[#allocation2 + $0x220] sm:$0xff]
    %v184 = vld [vmem:[#allocation2 + $0x228] sm:$0xff]
    %v185 = vld [vmem:[#allocation2 + $0x230] sm:$0xff]
    %v186 = vld [vmem:[#allocation2 + $0x238] sm:$0xff]
    %v187 = vld [vmem:[#allocation2 + $0x240] sm:$0xff]
    %v188 = vld [vmem:[#allocation2 + $0x248] sm:$0xff]
    %v189 = vld [vmem:[#allocation2 + $0x250] sm:$0xff]
    %v190 = vld [vmem:[#allocation2 + $0x258] sm:$0xff]
    %v191 = vld [vmem:[#allocation2 + $0x260] sm:$0xff]
    %v192 = vld [vmem:[#allocation2 + $0x268] sm:$0xff]
    %v193 = vld [vmem:[#allocation2 + $0x270] sm:$0xff]
    %v194 = vld [vmem:[#allocation2 + $0x278] sm:$0xff]
    %v195 = vld [vmem:[#allocation2 + $0x280] sm:$0xff]
    %v196 = vld [vmem:[#allocation2 + $0x288] sm:$0xff]
    %v197 = vld [vmem:[#allocation2 + $0x290] sm:$0xff]
    %v198 = vld [vmem:[#allocation2 + $0x298] sm:$0xff]
    %v199 = vld [vmem:[#allocation2 + $0x2a0] sm:$0xff]
    %v200 = vld [vmem:[#allocation2 + $0x2a8] sm:$0xff]
    %v201 = vld [vmem:[#allocation2 + $0x2b0] sm:$0xff]
    %v202 = vld [vmem:[#allocation2 + $0x2b8] sm:$0xff]
    %v203 = vld [vmem:[#allocation2 + $0x2c0] sm:$0xff]
    %v204 = vld [vmem:[#allocation2 + $0x2c8] sm:$0xff]
    %v205 = vld [vmem:[#allocation2 + $0x2d0] sm:$0xff]
    %v206 = vld [vmem:[#allocation2 + $0x2d8] sm:$0xff]
    %v207 = vld [vmem:[#allocation2 + $0x2e0] sm:$0xff]
    %v208 = vld [vmem:[#allocation2 + $0x2e8] sm:$0xff]
    %v209 = vld [vmem:[#allocation2 + $0x2f0] sm:$0xff]
    %v210 = vld [vmem:[#allocation2 + $0x2f8] sm:$0xff]
    %v211 = vld [vmem:[#allocation2 + $0x300] sm:$0xff]
    %v212 = vld [vmem:[#allocation2 + $0x308] sm:$0xff]
    %v213 = vld [vmem:[#allocation2 + $0x310] sm:$0xff]
    %v214 = vld [vmem:[#allocation2 + $0x318] sm:$0xff]
    %v215 = vld [vmem:[#allocation2 + $0x320] sm:$0xff]
    %v216 = vld [vmem:[#allocation2 + $0x328] sm:$0xff]
    %v217 = vld [vmem:[#allocation2 + $0x330] sm:$0xff]
    %v218 = vld [vmem:[#allocation2 + $0x338] sm:$0xff]
    %v219 = vld [vmem:[#allocation2 + $0x340] sm:$0xff]
    %v220 = vld [vmem:[#allocation2 + $0x348] sm:$0xff]
    %v221 = vld [vmem:[#allocation2 + $0x350] sm:$0xff]
    %v222 = vld [vmem:[#allocation2 + $0x358] sm:$0xff]
    %v223 = vld [vmem:[#allocation2 + $0x360] sm:$0xff]
    %v224 = vld [vmem:[#allocation2 + $0x368] sm:$0xff]
    %v225 = vld [vmem:[#allocation2 + $0x370] sm:$0xff]
    %v226 = vld [vmem:[#allocation2 + $0x378] sm:$0xff]
    %v227 = vld [vmem:[#allocation2 + $0x380] sm:$0xff]
    %v228 = vld [vmem:[#allocation2 + $0x388] sm:$0xff]
    %v229 = vld [vmem:[#allocation2 + $0x390] sm:$0xff]
    %v230 = vld [vmem:[#allocation2 + $0x398] sm:$0xff]
    %v231 = vld [vmem:[#allocation2 + $0x3a0] sm:$0xff]
    %v232 = vld [vmem:[#allocation2 + $0x3a8] sm:$0xff]
    %v233 = vld [vmem:[#allocation2 + $0x3b0] sm:$0xff]
    %v234 = vld [vmem:[#allocation2 + $0x3b8] sm:$0xff]
    %v235 = vld [vmem:[#allocation2 + $0x3c0] sm:$0xff]
    %v236 = vld [vmem:[#allocation2 + $0x3c8] sm:$0xff]
    %v237 = vld [vmem:[#allocation2 + $0x3d0] sm:$0xff]
    %v238 = vld [vmem:[#allocation2 + $0x3d8] sm:$0xff]
    %v239 = vld [vmem:[#allocation2 + $0x3e0] sm:$0xff]
    %v240 = vld [vmem:[#allocation2 + $0x3e8] sm:$0xff]
    %v241 = vld [vmem:[#allocation2 + $0x3f0] sm:$0xff]
    %v242 = vld [vmem:[#allocation2 + $0x3f8] sm:$0xff]
    %v243 = vld [vmem:[#allocation2 + $0x400] sm:$0xff]
    %v244 = vld [vmem:[#allocation2 + $0x408] sm:$0xff]
    %v245 = vld [vmem:[#allocation2 + $0x410] sm:$0xff]
    %v246 = vld [vmem:[#allocation2 + $0x418] sm:$0xff]
    %v247 = vld [vmem:[#allocation2 + $0x420] sm:$0xff]
    %v248 = vld [vmem:[#allocation2 + $0x428] sm:$0xff]
    %v249 = vld [vmem:[#allocation2 + $0x430] sm:$0xff]
    %v250 = vld [vmem:[#allocation2 + $0x438] sm:$0xff]
    %v251 = vld [vmem:[#allocation2 + $0x440] sm:$0xff]
    %v252 = vld [vmem:[#allocation2 + $0x448] sm:$0xff]
    %v253 = vld [vmem:[#allocation2 + $0x450] sm:$0xff]
    %v254 = vld [vmem:[#allocation2 + $0x458] sm:$0xff]
    %v255 = vld [vmem:[#allocation2 + $0x460] sm:$0xff]
    %v256 = vld [vmem:[#allocation2 + $0x468] sm:$0xff]
    %v257 = vld [vmem:[#allocation2 + $0x470] sm:$0xff]
    %v258 = vld [vmem:[#allocation2 + $0x478] sm:$0xff]
    %v259 = vld [vmem:[#allocation2 + $0x480] sm:$0xff]
    %v260 = vld [vmem:[#allocation2 + $0x488] sm:$0xff]
    %v261 = vld [vmem:[#allocation2 + $0x490] sm:$0xff]
    %v262 = vld [vmem:[#allocation2 + $0x498] sm:$0xff]
    %v263 = vld [vmem:[#allocation2 + $0x4a0] sm:$0xff]
    %v264 = vld [vmem:[#allocation2 + $0x4a8] sm:$0xff]
    %v265 = vld [vmem:[#allocation2 + $0x4b0] sm:$0xff]
    %v266 = vld [vmem:[#allocation2 + $0x4b8] sm:$0xff]
    %v267 = vld [vmem:[#allocation2 + $0x4c0] sm:$0xff]
    %v268 = vld [vmem:[#allocation2 + $0x4c8] sm:$0xff]
    %v269 = vld [vmem:[#allocation2 + $0x4d0] sm:$0xff]
    %v270 = vld [vmem:[#allocation2 + $0x4d8] sm:$0xff]
    %v271 = vld [vmem:[#allocation2 + $0x4e0] sm:$0xff]
    %v272 = vld [vmem:[#allocation2 + $0x4e8] sm:$0xff]
    %v273 = vld [vmem:[#allocation2 + $0x4f0] sm:$0xff]
    %v274 = vld [vmem:[#allocation2 + $0x4f8] sm:$0xff]
    %v275 = vld [vmem:[#allocation2 + $0x500] sm:$0xff]
    %v276 = vld [vmem:[#allocation2 + $0x508] sm:$0xff]
    %v277 = vld [vmem:[#allocation2 + $0x510] sm:$0xff]
    %v278 = vld [vmem:[#allocation2 + $0x518] sm:$0xff]
    %v279 = vld [vmem:[#allocation2 + $0x520] sm:$0xff]
    %v280 = vld [vmem:[#allocation2 + $0x528] sm:$0xff]
    %v281 = vld [vmem:[#allocation2 + $0x530] sm:$0xff]
    %v282 = vld [vmem:[#allocation2 + $0x538] sm:$0xff]
    %v283 = vld [vmem:[#allocation2 + $0x540] sm:$0xff]
    %v284 = vld [vmem:[#allocation2 + $0x548] sm:$0xff]
    %v285 = vld [vmem:[#allocation2 + $0x550] sm:$0xff]
    %v286 = vld [vmem:[#allocation2 + $0x558] sm:$0xff]
    %v287 = vld [vmem:[#allocation2 + $0x560] sm:$0xff]
    %v288 = vld [vmem:[#allocation2 + $0x568] sm:$0xff]
    %v289 = vld [vmem:[#allocation2 + $0x570] sm:$0xff]
    %v290 = vld [vmem:[#allocation2 + $0x578] sm:$0xff]
    %v291 = vld [vmem:[#allocation2 + $0x580] sm:$0xff]
    %v292 = vld [vmem:[#allocation2 + $0x588] sm:$0xff]
    %v293 = vld [vmem:[#allocation2 + $0x590] sm:$0xff]
    %v294 = vld [vmem:[#allocation2 + $0x598] sm:$0xff]
    %v295 = vld [vmem:[#allocation2 + $0x5a0] sm:$0xff]
    %v296 = vld [vmem:[#allocation2 + $0x5a8] sm:$0xff]
    %v297 = vld [vmem:[#allocation2 + $0x5b0] sm:$0xff]
    %v298 = vld [vmem:[#allocation2 + $0x5b8] sm:$0xff]
    %v299 = vld [vmem:[#allocation2 + $0x5c0] sm:$0xff]
    %v300 = vld [vmem:[#allocation2 + $0x5c8] sm:$0xff]
    %v301 = vld [vmem:[#allocation2 + $0x5d0] sm:$0xff]
    %v302 = vld [vmem:[#allocation2 + $0x5d8] sm:$0xff]
    %v303 = vld [vmem:[#allocation2 + $0x5e0] sm:$0xff]
    %v304 = vld [vmem:[#allocation2 + $0x5e8] sm:$0xff]
    %v305 = vld [vmem:[#allocation2 + $0x5f0] sm:$0xff]
    %v306 = vld [vmem:[#allocation2 + $0x5f8] sm:$0xff]
    %v307 = vld [vmem:[#allocation2 + $0x600] sm:$0xff]
    %v308 = vld [vmem:[#allocation2 + $0x608] sm:$0xff]
    %v309 = vld [vmem:[#allocation2 + $0x610] sm:$0xff]
    %v310 = vld [vmem:[#allocation2 + $0x618] sm:$0xff]
    %v311 = vld [vmem:[#allocation2 + $0x620] sm:$0xff]
    %v312 = vld [vmem:[#allocation2 + $0x628] sm:$0xff]
    %v313 = vld [vmem:[#allocation2 + $0x630] sm:$0xff]
    %v314 = vld [vmem:[#allocation2 + $0x638] sm:$0xff]
    %v315 = vld [vmem:[#allocation2 + $0x640] sm:$0xff]
    %v316 = vld [vmem:[#allocation2 + $0x648] sm:$0xff]
    %v317 = vld [vmem:[#allocation2 + $0x650] sm:$0xff]
    %v318 = vld [vmem:[#allocation2 + $0x658] sm:$0xff]
    %v319 = vld [vmem:[#allocation2 + $0x660] sm:$0xff]
    %v320 = vld [vmem:[#allocation2 + $0x668] sm:$0xff]
    %v321 = vld [vmem:[#allocation2 + $0x670] sm:$0xff]
    %v322 = vld [vmem:[#allocation2 + $0x678] sm:$0xff]
    %v323 = vld [vmem:[#allocation2 + $0x680] sm:$0xff]
    %v324 = vld [vmem:[#allocation2 + $0x688] sm:$0xff]
    %v325 = vld [vmem:[#allocation2 + $0x690] sm:$0xff]
    %v326 = vld [vmem:[#allocation2 + $0x698] sm:$0xff]
    %v327 = vld [vmem:[#allocation2 + $0x6a0] sm:$0xff]
    %v328 = vld [vmem:[#allocation2 + $0x6a8] sm:$0xff]
    %v329 = vld [vmem:[#allocation2 + $0x6b0] sm:$0xff]
    %v330 = vld [vmem:[#allocation2 + $0x6b8] sm:$0xff]
    %v331 = vld [vmem:[#allocation2 + $0x6c0] sm:$0xff]
    %v332 = vld [vmem:[#allocation2 + $0x6c8] sm:$0xff]
    %v333 = vld [vmem:[#allocation2 + $0x6d0] sm:$0xff]
    %v334 = vld [vmem:[#allocation2 + $0x6d8] sm:$0xff]
    %v335 = vld [vmem:[#allocation2 + $0x6e0] sm:$0xff]
    %v336 = vld [vmem:[#allocation2 + $0x6e8] sm:$0xff]
    %v337 = vld [vmem:[#allocation2 + $0x6f0] sm:$0xff]
    %v338 = vld [vmem:[#allocation2 + $0x6f8] sm:$0xff]
    %v339 = vld [vmem:[#allocation2 + $0x700] sm:$0xff]
    %v340 = vld [vmem:[#allocation2 + $0x708] sm:$0xff]
    %v341 = vld [vmem:[#allocation2 + $0x710] sm:$0xff]
    %v342 = vld [vmem:[#allocation2 + $0x718] sm:$0xff]
    %v343 = vld [vmem:[#allocation2 + $0x720] sm:$0xff]
    %v344 = vld [vmem:[#allocation2 + $0x728] sm:$0xff]
    %v345 = vld [vmem:[#allocation2 + $0x730] sm:$0xff]
    %v346 = vld [vmem:[#allocation2 + $0x738] sm:$0xff]
    %v347 = vld [vmem:[#allocation2 + $0x740] sm:$0xff]
    %v348 = vld [vmem:[#allocation2 + $0x748] sm:$0xff]
    %v349 = vunpack.c.l.s8.bf16 %v115
    %v350 = vunpack.c.l.s8.bf16 %v116
    %v351 = vunpack.c.l.s8.bf16 %v117
    %v352 = vunpack.c.l.s8.bf16 %v118
    %v353 = vunpack.c.l.s8.bf16 %v119
    %v354 = vunpack.c.l.s8.bf16 %v120
    %v355 = vunpack.c.l.s8.bf16 %v121
    %v356 = vunpack.c.l.s8.bf16 %v122
    %v357 = vunpack.c.l.s8.bf16 %v123
    %v358 = vunpack.c.l.s8.bf16 %v124
    %v359 = vunpack.c.l.s8.bf16 %v125
    %v360 = vunpack.c.l.s8.bf16 %v126
    %v361 = vunpack.c.l.s8.bf16 %v127
    %v362 = vunpack.c.h.s8.bf16 %v115
    %v363 = vunpack.c.h.s8.bf16 %v116
    %v364 = vunpack.c.h.s8.bf16 %v117
    %v365 = vunpack.c.h.s8.bf16 %v118
    %v366 = vunpack.c.h.s8.bf16 %v119
    %v367 = vunpack.c.h.s8.bf16 %v120
    %v368 = vunpack.c.h.s8.bf16 %v121
    %v369 = vunpack.c.h.s8.bf16 %v122
    %v370 = vunpack.c.h.s8.bf16 %v123
    %v371 = vunpack.c.h.s8.bf16 %v124
    %v372 = vunpack.c.h.s8.bf16 %v125
    %v373 = vunpack.c.h.s8.bf16 %v126
    %v374 = vunpack.c.h.s8.bf16 %v127
    %v375 = vunpack.c.l.s8.bf16 %v128
    %v376 = vunpack.c.l.s8.bf16 %v129
    %v377 = vunpack.c.l.s8.bf16 %v130
    %v378 = vunpack.c.l.s8.bf16 %v131
    %v379 = vunpack.c.l.s8.bf16 %v132
    %v380 = vunpack.c.l.s8.bf16 %v133
    %v381 = vunpack.c.l.s8.bf16 %v134
    %v382 = vunpack.c.l.s8.bf16 %v135
    %v383 = vunpack.c.l.s8.bf16 %v136
    %v384 = vunpack.c.l.s8.bf16 %v137
    %v385 = vunpack.c.l.s8.bf16 %v138
    %v386 = vunpack.c.l.s8.bf16 %v139
    %v387 = vunpack.c.l.s8.bf16 %v140
    %v388 = vunpack.c.h.s8.bf16 %v128
    %v389 = vunpack.c.h.s8.bf16 %v129
    %v390 = vunpack.c.h.s8.bf16 %v130
    %v391 = vunpack.c.h.s8.bf16 %v131
    %v392 = vunpack.c.h.s8.bf16 %v132
    %v393 = vunpack.c.h.s8.bf16 %v133
    %v394 = vunpack.c.h.s8.bf16 %v134
    %v395 = vunpack.c.h.s8.bf16 %v135
    %v396 = vunpack.c.h.s8.bf16 %v136
    %v397 = vunpack.c.h.s8.bf16 %v137
    %v398 = vunpack.c.h.s8.bf16 %v138
    %v399 = vunpack.c.h.s8.bf16 %v139
    %v400 = vunpack.c.h.s8.bf16 %v140
    %v401 = vunpack.c.l.s8.bf16 %v141
    %v402 = vunpack.c.l.s8.bf16 %v142
    %v403 = vunpack.c.l.s8.bf16 %v143
    %v404 = vunpack.c.l.s8.bf16 %v144
    %v405 = vunpack.c.l.s8.bf16 %v145
    %v406 = vunpack.c.l.s8.bf16 %v146
    %v407 = vunpack.c.l.s8.bf16 %v147
    %v408 = vunpack.c.l.s8.bf16 %v148
    %v409 = vunpack.c.l.s8.bf16 %v149
    %v410 = vunpack.c.l.s8.bf16 %v150
    %v411 = vunpack.c.l.s8.bf16 %v151
    %v412 = vunpack.c.l.s8.bf16 %v152
    %v413 = vunpack.c.l.s8.bf16 %v153
    %v414 = vunpack.c.h.s8.bf16 %v141
    %v415 = vunpack.c.h.s8.bf16 %v142
    %v416 = vunpack.c.h.s8.bf16 %v143
    %v417 = vunpack.c.h.s8.bf16 %v144
    %v418 = vunpack.c.h.s8.bf16 %v145
    %v419 = vunpack.c.h.s8.bf16 %v146
    %v420 = vunpack.c.h.s8.bf16 %v147
    %v421 = vunpack.c.h.s8.bf16 %v148
    %v422 = vunpack.c.h.s8.bf16 %v149
    %v423 = vunpack.c.h.s8.bf16 %v150
    %v424 = vunpack.c.h.s8.bf16 %v151
    %v425 = vunpack.c.h.s8.bf16 %v152
    %v426 = vunpack.c.h.s8.bf16 %v153
    %v427 = vunpack.c.l.s8.bf16 %v154
    %v428 = vunpack.c.l.s8.bf16 %v155
    %v429 = vunpack.c.l.s8.bf16 %v156
    %v430 = vunpack.c.l.s8.bf16 %v157
    %v431 = vunpack.c.l.s8.bf16 %v158
    %v432 = vunpack.c.l.s8.bf16 %v159
    %v433 = vunpack.c.l.s8.bf16 %v160
    %v434 = vunpack.c.l.s8.bf16 %v161
    %v435 = vunpack.c.l.s8.bf16 %v162
    %v436 = vunpack.c.l.s8.bf16 %v163
    %v437 = vunpack.c.l.s8.bf16 %v164
    %v438 = vunpack.c.l.s8.bf16 %v165
    %v439 = vunpack.c.l.s8.bf16 %v166
    %v440 = vunpack.c.h.s8.bf16 %v154
    %v441 = vunpack.c.h.s8.bf16 %v155
    %v442 = vunpack.c.h.s8.bf16 %v156
    %v443 = vunpack.c.h.s8.bf16 %v157
    %v444 = vunpack.c.h.s8.bf16 %v158
    %v445 = vunpack.c.h.s8.bf16 %v159
    %v446 = vunpack.c.h.s8.bf16 %v160
    %v447 = vunpack.c.h.s8.bf16 %v161
    %v448 = vunpack.c.h.s8.bf16 %v162
    %v449 = vunpack.c.h.s8.bf16 %v163
    %v450 = vunpack.c.h.s8.bf16 %v164
    %v451 = vunpack.c.h.s8.bf16 %v165
    %v452 = vunpack.c.h.s8.bf16 %v166
    %v453 = vunpack.c.l.s8.bf16 %v167
    %v454 = vunpack.c.l.s8.bf16 %v168
    %v455 = vunpack.c.l.s8.bf16 %v169
    %v456 = vunpack.c.l.s8.bf16 %v170
    %v457 = vunpack.c.l.s8.bf16 %v171
    %v458 = vunpack.c.l.s8.bf16 %v172
    %v459 = vunpack.c.l.s8.bf16 %v173
    %v460 = vunpack.c.l.s8.bf16 %v174
    %v461 = vunpack.c.l.s8.bf16 %v175
    %v462 = vunpack.c.l.s8.bf16 %v176
    %v463 = vunpack.c.l.s8.bf16 %v177
    %v464 = vunpack.c.l.s8.bf16 %v178
    %v465 = vunpack.c.l.s8.bf16 %v179
    %v466 = vunpack.c.h.s8.bf16 %v167
    %v467 = vunpack.c.h.s8.bf16 %v168
    %v468 = vunpack.c.h.s8.bf16 %v169
    %v469 = vunpack.c.h.s8.bf16 %v170
    %v470 = vunpack.c.h.s8.bf16 %v171
    %v471 = vunpack.c.h.s8.bf16 %v172
    %v472 = vunpack.c.h.s8.bf16 %v173
    %v473 = vunpack.c.h.s8.bf16 %v174
    %v474 = vunpack.c.h.s8.bf16 %v175
    %v475 = vunpack.c.h.s8.bf16 %v176
    %v476 = vunpack.c.h.s8.bf16 %v177
    %v477 = vunpack.c.h.s8.bf16 %v178
    %v478 = vunpack.c.h.s8.bf16 %v179
    %v479 = vunpack.c.l.s8.bf16 %v180
    %v480 = vunpack.c.l.s8.bf16 %v181
    %v481 = vunpack.c.l.s8.bf16 %v182
    %v482 = vunpack.c.l.s8.bf16 %v183
    %v483 = vunpack.c.l.s8.bf16 %v184
    %v484 = vunpack.c.l.s8.bf16 %v185
    %v485 = vunpack.c.l.s8.bf16 %v186
    %v486 = vunpack.c.l.s8.bf16 %v187
    %v487 = vunpack.c.l.s8.bf16 %v188
    %v488 = vunpack.c.l.s8.bf16 %v189
    %v489 = vunpack.c.l.s8.bf16 %v190
    %v490 = vunpack.c.l.s8.bf16 %v191
    %v491 = vunpack.c.l.s8.bf16 %v192
    %v492 = vunpack.c.h.s8.bf16 %v180
    %v493 = vunpack.c.h.s8.bf16 %v181
    %v494 = vunpack.c.h.s8.bf16 %v182
    %v495 = vunpack.c.h.s8.bf16 %v183
    %v496 = vunpack.c.h.s8.bf16 %v184
    %v497 = vunpack.c.h.s8.bf16 %v185
    %v498 = vunpack.c.h.s8.bf16 %v186
    %v499 = vunpack.c.h.s8.bf16 %v187
    %v500 = vunpack.c.h.s8.bf16 %v188
    %v501 = vunpack.c.h.s8.bf16 %v189
    %v502 = vunpack.c.h.s8.bf16 %v190
    %v503 = vunpack.c.h.s8.bf16 %v191
    %v504 = vunpack.c.h.s8.bf16 %v192
    %v505 = vunpack.c.l.s8.bf16 %v193
    %v506 = vunpack.c.l.s8.bf16 %v194
    %v507 = vunpack.c.l.s8.bf16 %v195
    %v508 = vunpack.c.l.s8.bf16 %v196
    %v509 = vunpack.c.l.s8.bf16 %v197
    %v510 = vunpack.c.l.s8.bf16 %v198
    %v511 = vunpack.c.l.s8.bf16 %v199
    %v512 = vunpack.c.l.s8.bf16 %v200
    %v513 = vunpack.c.l.s8.bf16 %v201
    %v514 = vunpack.c.l.s8.bf16 %v202
    %v515 = vunpack.c.l.s8.bf16 %v203
    %v516 = vunpack.c.l.s8.bf16 %v204
    %v517 = vunpack.c.l.s8.bf16 %v205
    %v518 = vunpack.c.h.s8.bf16 %v193
    %v519 = vunpack.c.h.s8.bf16 %v194
    %v520 = vunpack.c.h.s8.bf16 %v195
    %v521 = vunpack.c.h.s8.bf16 %v196
    %v522 = vunpack.c.h.s8.bf16 %v197
    %v523 = vunpack.c.h.s8.bf16 %v198
    %v524 = vunpack.c.h.s8.bf16 %v199
    %v525 = vunpack.c.h.s8.bf16 %v200
    %v526 = vunpack.c.h.s8.bf16 %v201
    %v527 = vunpack.c.h.s8.bf16 %v202
    %v528 = vunpack.c.h.s8.bf16 %v203
    %v529 = vunpack.c.h.s8.bf16 %v204
    %v530 = vunpack.c.h.s8.bf16 %v205
    %v531 = vunpack.c.l.s8.bf16 %v206
    %v532 = vunpack.c.l.s8.bf16 %v207
    %v533 = vunpack.c.l.s8.bf16 %v208
    %v534 = vunpack.c.l.s8.bf16 %v209
    %v535 = vunpack.c.l.s8.bf16 %v210
    %v536 = vunpack.c.l.s8.bf16 %v211
    %v537 = vunpack.c.l.s8.bf16 %v212
    %v538 = vunpack.c.l.s8.bf16 %v213
    %v539 = vunpack.c.l.s8.bf16 %v214
    %v540 = vunpack.c.l.s8.bf16 %v215
    %v541 = vunpack.c.l.s8.bf16 %v216
    %v542 = vunpack.c.l.s8.bf16 %v217
    %v543 = vunpack.c.l.s8.bf16 %v218
    %v544 = vunpack.c.h.s8.bf16 %v206
    %v545 = vunpack.c.h.s8.bf16 %v207
    %v546 = vunpack.c.h.s8.bf16 %v208
    %v547 = vunpack.c.h.s8.bf16 %v209
    %v548 = vunpack.c.h.s8.bf16 %v210
    %v549 = vunpack.c.h.s8.bf16 %v211
    %v550 = vunpack.c.h.s8.bf16 %v212
    %v551 = vunpack.c.h.s8.bf16 %v213
    %v552 = vunpack.c.h.s8.bf16 %v214
    %v553 = vunpack.c.h.s8.bf16 %v215
    %v554 = vunpack.c.h.s8.bf16 %v216
    %v555 = vunpack.c.h.s8.bf16 %v217
    %v556 = vunpack.c.h.s8.bf16 %v218
    %v557 = vunpack.c.l.s8.bf16 %v219
    %v558 = vunpack.c.l.s8.bf16 %v220
    %v559 = vunpack.c.l.s8.bf16 %v221
    %v560 = vunpack.c.l.s8.bf16 %v222
    %v561 = vunpack.c.l.s8.bf16 %v223
    %v562 = vunpack.c.l.s8.bf16 %v224
    %v563 = vunpack.c.l.s8.bf16 %v225
    %v564 = vunpack.c.l.s8.bf16 %v226
    %v565 = vunpack.c.l.s8.bf16 %v227
    %v566 = vunpack.c.l.s8.bf16 %v228
    %v567 = vunpack.c.l.s8.bf16 %v229
    %v568 = vunpack.c.l.s8.bf16 %v230
    %v569 = vunpack.c.l.s8.bf16 %v231
    %v570 = vunpack.c.h.s8.bf16 %v219
    %v571 = vunpack.c.h.s8.bf16 %v220
    %v572 = vunpack.c.h.s8.bf16 %v221
    %v573 = vunpack.c.h.s8.bf16 %v222
    %v574 = vunpack.c.h.s8.bf16 %v223
    %v575 = vunpack.c.h.s8.bf16 %v224
    %v576 = vunpack.c.h.s8.bf16 %v225
    %v577 = vunpack.c.h.s8.bf16 %v226
    %v578 = vunpack.c.h.s8.bf16 %v227
    %v579 = vunpack.c.h.s8.bf16 %v228
    %v580 = vunpack.c.h.s8.bf16 %v229
    %v581 = vunpack.c.h.s8.bf16 %v230
    %v582 = vunpack.c.h.s8.bf16 %v231
    %v583 = vunpack.c.l.s8.bf16 %v232
    %v584 = vunpack.c.l.s8.bf16 %v233
    %v585 = vunpack.c.l.s8.bf16 %v234
    %v586 = vunpack.c.l.s8.bf16 %v235
    %v587 = vunpack.c.l.s8.bf16 %v236
    %v588 = vunpack.c.l.s8.bf16 %v237
    %v589 = vunpack.c.l.s8.bf16 %v238
    %v590 = vunpack.c.l.s8.bf16 %v239
    %v591 = vunpack.c.l.s8.bf16 %v240
    %v592 = vunpack.c.l.s8.bf16 %v241
    %v593 = vunpack.c.l.s8.bf16 %v242
    %v594 = vunpack.c.l.s8.bf16 %v243
    %v595 = vunpack.c.l.s8.bf16 %v244
    %v596 = vunpack.c.h.s8.bf16 %v232
    %v597 = vunpack.c.h.s8.bf16 %v233
    %v598 = vunpack.c.h.s8.bf16 %v234
    %v599 = vunpack.c.h.s8.bf16 %v235
    %v600 = vunpack.c.h.s8.bf16 %v236
    %v601 = vunpack.c.h.s8.bf16 %v237
    %v602 = vunpack.c.h.s8.bf16 %v238
    %v603 = vunpack.c.h.s8.bf16 %v239
    %v604 = vunpack.c.h.s8.bf16 %v240
    %v605 = vunpack.c.h.s8.bf16 %v241
    %v606 = vunpack.c.h.s8.bf16 %v242
    %v607 = vunpack.c.h.s8.bf16 %v243
    %v608 = vunpack.c.h.s8.bf16 %v244
    %v609 = vunpack.c.l.s8.bf16 %v245
    %v610 = vunpack.c.l.s8.bf16 %v246
    %v611 = vunpack.c.l.s8.bf16 %v247
    %v612 = vunpack.c.l.s8.bf16 %v248
    %v613 = vunpack.c.l.s8.bf16 %v249
    %v614 = vunpack.c.l.s8.bf16 %v250
    %v615 = vunpack.c.l.s8.bf16 %v251
    %v616 = vunpack.c.l.s8.bf16 %v252
    %v617 = vunpack.c.l.s8.bf16 %v253
    %v618 = vunpack.c.l.s8.bf16 %v254
    %v619 = vunpack.c.l.s8.bf16 %v255
    %v620 = vunpack.c.l.s8.bf16 %v256
    %v621 = vunpack.c.l.s8.bf16 %v257
    %v622 = vunpack.c.h.s8.bf16 %v245
    %v623 = vunpack.c.h.s8.bf16 %v246
    %v624 = vunpack.c.h.s8.bf16 %v247
    %v625 = vunpack.c.h.s8.bf16 %v248
    %v626 = vunpack.c.h.s8.bf16 %v249
    %v627 = vunpack.c.h.s8.bf16 %v250
    %v628 = vunpack.c.h.s8.bf16 %v251
    %v629 = vunpack.c.h.s8.bf16 %v252
    %v630 = vunpack.c.h.s8.bf16 %v253
    %v631 = vunpack.c.h.s8.bf16 %v254
    %v632 = vunpack.c.h.s8.bf16 %v255
    %v633 = vunpack.c.h.s8.bf16 %v256
    %v634 = vunpack.c.h.s8.bf16 %v257
    %v635 = vunpack.c.l.s8.bf16 %v258
    %v636 = vunpack.c.l.s8.bf16 %v259
    %v637 = vunpack.c.l.s8.bf16 %v260
    %v638 = vunpack.c.l.s8.bf16 %v261
    %v639 = vunpack.c.l.s8.bf16 %v262
    %v640 = vunpack.c.l.s8.bf16 %v263
    %v641 = vunpack.c.l.s8.bf16 %v264
    %v642 = vunpack.c.l.s8.bf16 %v265
    %v643 = vunpack.c.l.s8.bf16 %v266
    %v644 = vunpack.c.l.s8.bf16 %v267
    %v645 = vunpack.c.l.s8.bf16 %v268
    %v646 = vunpack.c.l.s8.bf16 %v269
    %v647 = vunpack.c.l.s8.bf16 %v270
    %v648 = vunpack.c.h.s8.bf16 %v258
    %v649 = vunpack.c.h.s8.bf16 %v259
    %v650 = vunpack.c.h.s8.bf16 %v260
    %v651 = vunpack.c.h.s8.bf16 %v261
    %v652 = vunpack.c.h.s8.bf16 %v262
    %v653 = vunpack.c.h.s8.bf16 %v263
    %v654 = vunpack.c.h.s8.bf16 %v264
    %v655 = vunpack.c.h.s8.bf16 %v265
    %v656 = vunpack.c.h.s8.bf16 %v266
    %v657 = vunpack.c.h.s8.bf16 %v267
    %v658 = vunpack.c.h.s8.bf16 %v268
    %v659 = vunpack.c.h.s8.bf16 %v269
    %v660 = vunpack.c.h.s8.bf16 %v270
    %v661 = vunpack.c.l.s8.bf16 %v271
    %v662 = vunpack.c.l.s8.bf16 %v272
    %v663 = vunpack.c.l.s8.bf16 %v273
    %v664 = vunpack.c.l.s8.bf16 %v274
    %v665 = vunpack.c.l.s8.bf16 %v275
    %v666 = vunpack.c.l.s8.bf16 %v276
    %v667 = vunpack.c.l.s8.bf16 %v277
    %v668 = vunpack.c.l.s8.bf16 %v278
    %v669 = vunpack.c.l.s8.bf16 %v279
    %v670 = vunpack.c.l.s8.bf16 %v280
    %v671 = vunpack.c.l.s8.bf16 %v281
    %v672 = vunpack.c.l.s8.bf16 %v282
    %v673 = vunpack.c.l.s8.bf16 %v283
    %v674 = vunpack.c.h.s8.bf16 %v271
    %v675 = vunpack.c.h.s8.bf16 %v272
    %v676 = vunpack.c.h.s8.bf16 %v273
    %v677 = vunpack.c.h.s8.bf16 %v274
    %v678 = vunpack.c.h.s8.bf16 %v275
    %v679 = vunpack.c.h.s8.bf16 %v276
    %v680 = vunpack.c.h.s8.bf16 %v277
    %v681 = vunpack.c.h.s8.bf16 %v278
    %v682 = vunpack.c.h.s8.bf16 %v279
    %v683 = vunpack.c.h.s8.bf16 %v280
    %v684 = vunpack.c.h.s8.bf16 %v281
    %v685 = vunpack.c.h.s8.bf16 %v282
    %v686 = vunpack.c.h.s8.bf16 %v283
    %v687 = vunpack.c.l.s8.bf16 %v284
    %v688 = vunpack.c.l.s8.bf16 %v285
    %v689 = vunpack.c.l.s8.bf16 %v286
    %v690 = vunpack.c.l.s8.bf16 %v287
    %v691 = vunpack.c.l.s8.bf16 %v288
    %v692 = vunpack.c.l.s8.bf16 %v289
    %v693 = vunpack.c.l.s8.bf16 %v290
    %v694 = vunpack.c.l.s8.bf16 %v291
    %v695 = vunpack.c.l.s8.bf16 %v292
    %v696 = vunpack.c.l.s8.bf16 %v293
    %v697 = vunpack.c.l.s8.bf16 %v294
    %v698 = vunpack.c.l.s8.bf16 %v295
    %v699 = vunpack.c.l.s8.bf16 %v296
    %v700 = vunpack.c.h.s8.bf16 %v284
    %v701 = vunpack.c.h.s8.bf16 %v285
    %v702 = vunpack.c.h.s8.bf16 %v286
    %v703 = vunpack.c.h.s8.bf16 %v287
    %v704 = vunpack.c.h.s8.bf16 %v288
    %v705 = vunpack.c.h.s8.bf16 %v289
    %v706 = vunpack.c.h.s8.bf16 %v290
    %v707 = vunpack.c.h.s8.bf16 %v291
    %v708 = vunpack.c.h.s8.bf16 %v292
    %v709 = vunpack.c.h.s8.bf16 %v293
    %v710 = vunpack.c.h.s8.bf16 %v294
    %v711 = vunpack.c.h.s8.bf16 %v295
    %v712 = vunpack.c.h.s8.bf16 %v296
    %v713 = vunpack.c.l.s8.bf16 %v297
    %v714 = vunpack.c.l.s8.bf16 %v298
    %v715 = vunpack.c.l.s8.bf16 %v299
    %v716 = vunpack.c.l.s8.bf16 %v300
    %v717 = vunpack.c.l.s8.bf16 %v301
    %v718 = vunpack.c.l.s8.bf16 %v302
    %v719 = vunpack.c.l.s8.bf16 %v303
    %v720 = vunpack.c.l.s8.bf16 %v304
    %v721 = vunpack.c.l.s8.bf16 %v305
    %v722 = vunpack.c.l.s8.bf16 %v306
    %v723 = vunpack.c.l.s8.bf16 %v307
    %v724 = vunpack.c.l.s8.bf16 %v308
    %v725 = vunpack.c.l.s8.bf16 %v309
    %v726 = vunpack.c.h.s8.bf16 %v297
    %v727 = vunpack.c.h.s8.bf16 %v298
    %v728 = vunpack.c.h.s8.bf16 %v299
    %v729 = vunpack.c.h.s8.bf16 %v300
    %v730 = vunpack.c.h.s8.bf16 %v301
    %v731 = vunpack.c.h.s8.bf16 %v302
    %v732 = vunpack.c.h.s8.bf16 %v303
    %v733 = vunpack.c.h.s8.bf16 %v304
    %v734 = vunpack.c.h.s8.bf16 %v305
    %v735 = vunpack.c.h.s8.bf16 %v306
    %v736 = vunpack.c.h.s8.bf16 %v307
    %v737 = vunpack.c.h.s8.bf16 %v308
    %v738 = vunpack.c.h.s8.bf16 %v309
    %v739 = vunpack.c.l.s8.bf16 %v310
    %v740 = vunpack.c.l.s8.bf16 %v311
    %v741 = vunpack.c.l.s8.bf16 %v312
    %v742 = vunpack.c.l.s8.bf16 %v313
    %v743 = vunpack.c.l.s8.bf16 %v314
    %v744 = vunpack.c.l.s8.bf16 %v315
    %v745 = vunpack.c.l.s8.bf16 %v316
    %v746 = vunpack.c.l.s8.bf16 %v317
    %v747 = vunpack.c.l.s8.bf16 %v318
    %v748 = vunpack.c.l.s8.bf16 %v319
    %v749 = vunpack.c.l.s8.bf16 %v320
    %v750 = vunpack.c.l.s8.bf16 %v321
    %v751 = vunpack.c.l.s8.bf16 %v322
    %v752 = vunpack.c.h.s8.bf16 %v310
    %v753 = vunpack.c.h.s8.bf16 %v311
    %v754 = vunpack.c.h.s8.bf16 %v312
    %v755 = vunpack.c.h.s8.bf16 %v313
    %v756 = vunpack.c.h.s8.bf16 %v314
    %v757 = vunpack.c.h.s8.bf16 %v315
    %v758 = vunpack.c.h.s8.bf16 %v316
    %v759 = vunpack.c.h.s8.bf16 %v317
    %v760 = vunpack.c.h.s8.bf16 %v318
    %v761 = vunpack.c.h.s8.bf16 %v319
    %v762 = vunpack.c.h.s8.bf16 %v320
    %v763 = vunpack.c.h.s8.bf16 %v321
    %v764 = vunpack.c.h.s8.bf16 %v322
    %v765 = vunpack.c.l.s8.bf16 %v323
    %v766 = vunpack.c.l.s8.bf16 %v324
    %v767 = vunpack.c.l.s8.bf16 %v325
    %v768 = vunpack.c.l.s8.bf16 %v326
    %v769 = vunpack.c.l.s8.bf16 %v327
    %v770 = vunpack.c.l.s8.bf16 %v328
    %v771 = vunpack.c.l.s8.bf16 %v329
    %v772 = vunpack.c.l.s8.bf16 %v330
    %v773 = vunpack.c.l.s8.bf16 %v331
    %v774 = vunpack.c.l.s8.bf16 %v332
    %v775 = vunpack.c.l.s8.bf16 %v333
    %v776 = vunpack.c.l.s8.bf16 %v334
    %v777 = vunpack.c.l.s8.bf16 %v335
    %v778 = vunpack.c.h.s8.bf16 %v323
    %v779 = vunpack.c.h.s8.bf16 %v324
    %v780 = vunpack.c.h.s8.bf16 %v325
    %v781 = vunpack.c.h.s8.bf16 %v326
    %v782 = vunpack.c.h.s8.bf16 %v327
    %v783 = vunpack.c.h.s8.bf16 %v328
    %v784 = vunpack.c.h.s8.bf16 %v329
    %v785 = vunpack.c.h.s8.bf16 %v330
    %v786 = vunpack.c.h.s8.bf16 %v331
    %v787 = vunpack.c.h.s8.bf16 %v332
    %v788 = vunpack.c.h.s8.bf16 %v333
    %v789 = vunpack.c.h.s8.bf16 %v334
    %v790 = vunpack.c.h.s8.bf16 %v335
    %v791 = vunpack.c.l.s8.bf16 %v336
    %v792 = vunpack.c.l.s8.bf16 %v337
    %v793 = vunpack.c.l.s8.bf16 %v338
    %v794 = vunpack.c.l.s8.bf16 %v339
    %v795 = vunpack.c.l.s8.bf16 %v340
    %v796 = vunpack.c.l.s8.bf16 %v341
    %v797 = vunpack.c.l.s8.bf16 %v342
    %v798 = vunpack.c.l.s8.bf16 %v343
    %v799 = vunpack.c.l.s8.bf16 %v344
    %v800 = vunpack.c.l.s8.bf16 %v345
    %v801 = vunpack.c.l.s8.bf16 %v346
    %v802 = vunpack.c.l.s8.bf16 %v347
    %v803 = vunpack.c.l.s8.bf16 %v348
    %v804 = vunpack.c.h.s8.bf16 %v336
    %v805 = vunpack.c.h.s8.bf16 %v337
    %v806 = vunpack.c.h.s8.bf16 %v338
    %v807 = vunpack.c.h.s8.bf16 %v339
    %v808 = vunpack.c.h.s8.bf16 %v340
    %v809 = vunpack.c.h.s8.bf16 %v341
    %v810 = vunpack.c.h.s8.bf16 %v342
    %v811 = vunpack.c.h.s8.bf16 %v343
    %v812 = vunpack.c.h.s8.bf16 %v344
    %v813 = vunpack.c.h.s8.bf16 %v345
    %v814 = vunpack.c.h.s8.bf16 %v346
    %v815 = vunpack.c.h.s8.bf16 %v347
    %v816 = vunpack.c.h.s8.bf16 %v348
    %v823 = vunpack.c.l.b16 %v109
    %v824 = vunpack.c.h.b16 %v109
    %v825 = vunpack.c.l.b16 %v110
    %v826 = vunpack.c.h.b16 %v110
    %v827 = vunpack.c.l.b16 %v111
    %v828 = vunpack.c.l.b16 %v112
    %v829 = vunpack.c.h.b16 %v112
    %v830 = vunpack.c.l.b16 %v113
    %v831 = vunpack.c.h.b16 %v113
    %v832 = vunpack.c.l.b16 %v114
    %v833 = vpack.c.b16 %v828, %v823
    %v834 = vpack.c.b16 %v829, %v824
    %v835 = vpack.c.b16 %v830, %v825
    %v836 = vpack.c.b16 %v831, %v826
    %v837 = vpack.c.b16 %v832, %v827
    %vm842 = vcmask 523264
    %v844 = vsel %vm842, %v837, 0
    %846 = vmatprep.subr.bf16.mxu0 %v350
    %847 = vmatpush1.bf16.msra.mxu0 %v349
    %848 = vmatprep.subr.bf16.mxu0 %v363
    %849 = vmatpush1.bf16.msra.mxu0 %v362
    %850 = vmatprep.subr.bf16.mxu0 %v376
    %851 = vmatpush1.bf16.msra.mxu0 %v375
    %852 = vmatprep.subr.bf16.mxu0 %v389
    %853 = vmatpush1.bf16.msra.mxu0 %v388
    %854 = vmatprep.subr.bf16.mxu0 %v402
    %855 = vmatpush1.bf16.msra.mxu0 %v401
    %856 = vmatprep.subr.bf16.mxu0 %v415
    %857 = vmatpush1.bf16.msra.mxu0 %v414
    %858 = vmatprep.subr.bf16.mxu0 %v428
    %859 = vmatpush1.bf16.msra.mxu0 %v427
    %860 = vmatprep.subr.bf16.mxu0 %v441
    %861 = vmatpush1.bf16.msra.mxu0 %v440
    %862 = vmatprep.subr.bf16.mxu0 %v454
    %863 = vmatpush1.bf16.msra.mxu0 %v453
    %864 = vmatprep.subr.bf16.mxu0 %v467
    %865 = vmatpush1.bf16.msra.mxu0 %v466
    %866 = vmatprep.subr.bf16.mxu0 %v480
    %867 = vmatpush1.bf16.msra.mxu0 %v479
    %868 = vmatprep.subr.bf16.mxu0 %v493
    %869 = vmatpush1.bf16.msra.mxu0 %v492
    %870 = vmatprep.subr.bf16.mxu0 %v506
    %871 = vmatpush1.bf16.msra.mxu0 %v505
    %872 = vmatprep.subr.bf16.mxu0 %v519
    %873 = vmatpush1.bf16.msra.mxu0 %v518
    %874 = vmatprep.subr.bf16.mxu0 %v532
    %875 = vmatpush1.bf16.msra.mxu0 %v531
    %876 = vmatprep.subr.bf16.mxu0 %v545
    %877 = vmatpush1.bf16.msra.mxu0 %v544
    %878 = vmatprep.mubr.bf16.mxu0 %v834
    %879 = vmatmul.mubr.bf16.gmra.mrb[0].mxu0 %v833
    %v880 = vpop.f32.mrb[0].mxu0
    %v881 = vadd.f32 0.0, %v880
    %v882 = vpop.f32.mrb[0].mxu0
    %v883 = vadd.f32 0.0, %v882
    %v884 = vpop.f32.mrb[0].mxu0
    %v885 = vadd.f32 0.0, %v884
    %v886 = vpop.f32.mrb[0].mxu0
    %v887 = vadd.f32 0.0, %v886
    %888 = vdwg.mxu0
    %889 = vmatprep.subr.bf16.mxu0 %v558
    %890 = vmatpush1.bf16.msra.mxu0 %v557
    %891 = vmatprep.subr.bf16.mxu0 %v571
    %892 = vmatpush1.bf16.msra.mxu0 %v570
    %893 = vmatprep.subr.bf16.mxu0 %v584
    %894 = vmatpush1.bf16.msra.mxu0 %v583
    %895 = vmatprep.subr.bf16.mxu0 %v597
    %896 = vmatpush1.bf16.msra.mxu0 %v596
    %897 = vmatprep.subr.bf16.mxu0 %v610
    %898 = vmatpush1.bf16.msra.mxu0 %v609
    %899 = vmatprep.subr.bf16.mxu0 %v623
    %900 = vmatpush1.bf16.msra.mxu0 %v622
    %901 = vmatprep.subr.bf16.mxu0 %v636
    %902 = vmatpush1.bf16.msra.mxu0 %v635
    %903 = vmatprep.subr.bf16.mxu0 %v649
    %904 = vmatpush1.bf16.msra.mxu0 %v648
    %905 = vmatprep.subr.bf16.mxu0 %v662
    %906 = vmatpush1.bf16.msra.mxu0 %v661
    %907 = vmatprep.subr.bf16.mxu0 %v675
    %908 = vmatpush1.bf16.msra.mxu0 %v674
    %909 = vmatprep.subr.bf16.mxu0 %v688
    %910 = vmatpush1.bf16.msra.mxu0 %v687
    %911 = vmatprep.subr.bf16.mxu0 %v701
    %912 = vmatpush1.bf16.msra.mxu0 %v700
    %913 = vmatprep.subr.bf16.mxu0 %v714
    %914 = vmatpush1.bf16.msra.mxu0 %v713
    %915 = vmatprep.subr.bf16.mxu0 %v727
    %916 = vmatpush1.bf16.msra.mxu0 %v726
    %917 = vmatprep.subr.bf16.mxu0 %v740
    %918 = vmatpush1.bf16.msra.mxu0 %v739
    %919 = vmatprep.subr.bf16.mxu0 %v753
    %920 = vmatpush1.bf16.msra.mxu0 %v752
    %921 = vmatprep.mubr.bf16.mxu0 %v836
    %922 = vmatmul.mubr.bf16.gmra.mrb[0].mxu0 %v835
    %v923 = vpop.f32.mrb[0].mxu0
    %v924 = vadd.f32 %v881, %v923
    %v925 = vpop.f32.mrb[0].mxu0
    %v926 = vadd.f32 %v883, %v925
    %v927 = vpop.f32.mrb[0].mxu0
    %v928 = vadd.f32 %v885, %v927
    %v929 = vpop.f32.mrb[0].mxu0
    %v930 = vadd.f32 %v887, %v929
    %931 = vdwg.mxu0
    %932 = vmatprep.subr.bf16.mxu0 %v766
    %933 = vmatpush1.bf16.msra.mxu0 %v765
    %934 = vmatprep.subr.bf16.mxu0 %v779
    %935 = vmatpush1.bf16.msra.mxu0 %v778
    %936 = vmatprep.subr.bf16.mxu0 %v792
    %937 = vmatpush1.bf16.msra.mxu0 %v791
    %938 = vmatprep.subr.bf16.mxu0 %v805
    %939 = vmatpush1.bf16.msra.mxu0 %v804
    %940 = vmatprep.subr.bf16.mxu0 0
    %941 = vmatpush1.bf16.msra.mxu0 0
    %942 = vmatprep.subr.bf16.mxu0 0
    %943 = vmatpush1.bf16.msra.mxu0 0
    %944 = vmatprep.subr.bf16.mxu0 0
    %945 = vmatpush1.bf16.msra.mxu0 0
    %946 = vmatprep.subr.bf16.mxu0 0
    %947 = vmatpush1.bf16.msra.mxu0 0
    %948 = vmatprep.subr.bf16.mxu0 0
    %949 = vmatpush1.bf16.msra.mxu0 0
    %950 = vmatprep.subr.bf16.mxu0 0
    %951 = vmatpush1.bf16.msra.mxu0 0
    %952 = vmatprep.subr.bf16.mxu0 0
    %953 = vmatpush1.bf16.msra.mxu0 0
    %954 = vmatprep.subr.bf16.mxu0 0
    %955 = vmatpush1.bf16.msra.mxu0 0
    %956 = vmatprep.subr.bf16.mxu0 0
    %957 = vmatpush1.bf16.msra.mxu0 0
    %958 = vmatprep.subr.bf16.mxu0 0
    %959 = vmatpush1.bf16.msra.mxu0 0
    %960 = vmatprep.subr.bf16.mxu0 0
    %961 = vmatpush1.bf16.msra.mxu0 0
    %962 = vmatprep.subr.bf16.mxu0 0
    %963 = vmatpush1.bf16.msra.mxu0 0
    %964 = vmatprep.mubr.bf16.mxu0 0
    %965 = vmatmul.mubr.bf16.gmra.mrb[0].mxu0 %v844
    %v966 = vpop.f32.mrb[0].mxu0
    %v967 = vadd.f32 %v924, %v966
    %v968 = vpop.f32.mrb[0].mxu0
    %v969 = vadd.f32 %v926, %v968
    %v970 = vpop.f32.mrb[0].mxu0
    %v971 = vadd.f32 %v928, %v970
    %v972 = vpop.f32.mrb[0].mxu0
    %v973 = vadd.f32 %v930, %v972
    %974 = vdwg.mxu0
    %975 = vmatprep.subr.bf16.mxu0 %v352
    %976 = vmatpush1.bf16.msra.mxu0 %v351
    %977 = vmatprep.subr.bf16.mxu0 %v365
    %978 = vmatpush1.bf16.msra.mxu0 %v364
    %979 = vmatprep.subr.bf16.mxu0 %v378
    %980 = vmatpush1.bf16.msra.mxu0 %v377
    %981 = vmatprep.subr.bf16.mxu0 %v391
    %982 = vmatpush1.bf16.msra.mxu0 %v390
    %983 = vmatprep.subr.bf16.mxu0 %v404
    %984 = vmatpush1.bf16.msra.mxu0 %v403
    %985 = vmatprep.subr.bf16.mxu0 %v417
    %986 = vmatpush1.bf16.msra.mxu0 %v416
    %987 = vmatprep.subr.bf16.mxu0 %v430
    %988 = vmatpush1.bf16.msra.mxu0 %v429
    %989 = vmatprep.subr.bf16.mxu0 %v443
    %990 = vmatpush1.bf16.msra.mxu0 %v442
    %991 = vmatprep.subr.bf16.mxu0 %v456
    %992 = vmatpush1.bf16.msra.mxu0 %v455
    %993 = vmatprep.subr.bf16.mxu0 %v469
    %994 = vmatpush1.bf16.msra.mxu0 %v468
    %995 = vmatprep.subr.bf16.mxu0 %v482
    %996 = vmatpush1.bf16.msra.mxu0 %v481
    %997 = vmatprep.subr.bf16.mxu0 %v495
    %998 = vmatpush1.bf16.msra.mxu0 %v494
    %999 = vmatprep.subr.bf16.mxu0 %v508
    %1000 = vmatpush1.bf16.msra.mxu0 %v507
    %1001 = vmatprep.subr.bf16.mxu0 %v521
    %1002 = vmatpush1.bf16.msra.mxu0 %v520
    %1003 = vmatprep.subr.bf16.mxu0 %v534
    %1004 = vmatpush1.bf16.msra.mxu0 %v533
    %1005 = vmatprep.subr.bf16.mxu0 %v547
    %1006 = vmatpush1.bf16.msra.mxu0 %v546
    %1007 = vmatprep.mubr.bf16.mxu0 %v834
    %1008 = vmatmul.mubr.bf16.gmra.mrb[0].mxu0 %v833
    %v1009 = vpop.f32.mrb[0].mxu0
    %v1010 = vadd.f32 0.0, %v1009
    %v1011 = vpop.f32.mrb[0].mxu0
    %v1012 = vadd.f32 0.0, %v1011
    %v1013 = vpop.f32.mrb[0].mxu0
    %v1014 = vadd.f32 0.0, %v1013
    %v1015 = vpop.f32.mrb[0].mxu0
    %v1016 = vadd.f32 0.0, %v1015
    %1017 = vdwg.mxu0
    %1018 = vmatprep.subr.bf16.mxu0 %v560
    %1019 = vmatpush1.bf16.msra.mxu0 %v559
    %1020 = vmatprep.subr.bf16.mxu0 %v573
    %1021 = vmatpush1.bf16.msra.mxu0 %v572
    %1022 = vmatprep.subr.bf16.mxu0 %v586
    %1023 = vmatpush1.bf16.msra.mxu0 %v585
    %1024 = vmatprep.subr.bf16.mxu0 %v599
    %1025 = vmatpush1.bf16.msra.mxu0 %v598
    %1026 = vmatprep.subr.bf16.mxu0 %v612
    %1027 = vmatpush1.bf16.msra.mxu0 %v611
    %1028 = vmatprep.subr.bf16.mxu0 %v625
    %1029 = vmatpush1.bf16.msra.mxu0 %v624
    %1030 = vmatprep.subr.bf16.mxu0 %v638
    %1031 = vmatpush1.bf16.msra.mxu0 %v637
    %1032 = vmatprep.subr.bf16.mxu0 %v651
    %1033 = vmatpush1.bf16.msra.mxu0 %v650
    %1034 = vmatprep.subr.bf16.mxu0 %v664
    %1035 = vmatpush1.bf16.msra.mxu0 %v663
    %1036 = vmatprep.subr.bf16.mxu0 %v677
    %1037 = vmatpush1.bf16.msra.mxu0 %v676
    %1038 = vmatprep.subr.bf16.mxu0 %v690
    %1039 = vmatpush1.bf16.msra.mxu0 %v689
    %1040 = vmatprep.subr.bf16.mxu0 %v703
    %1041 = vmatpush1.bf16.msra.mxu0 %v702
    %1042 = vmatprep.subr.bf16.mxu0 %v716
    %1043 = vmatpush1.bf16.msra.mxu0 %v715
    %1044 = vmatprep.subr.bf16.mxu0 %v729
    %1045 = vmatpush1.bf16.msra.mxu0 %v728
    %1046 = vmatprep.subr.bf16.mxu0 %v742
    %1047 = vmatpush1.bf16.msra.mxu0 %v741
    %1048 = vmatprep.subr.bf16.mxu0 %v755
    %1049 = vmatpush1.bf16.msra.mxu0 %v754
    %1050 = vmatprep.mubr.bf16.mxu0 %v836
    %1051 = vmatmul.mubr.bf16.gmra.mrb[0].mxu0 %v835
    %v1052 = vpop.f32.mrb[0].mxu0
    %v1053 = vadd.f32 %v1010, %v1052
    %v1054 = vpop.f32.mrb[0].mxu0
    %v1055 = vadd.f32 %v1012, %v1054
    %v1056 = vpop.f32.mrb[0].mxu0
    %v1057 = vadd.f32 %v1014, %v1056
    %v1058 = vpop.f32.mrb[0].mxu0
    %v1059 = vadd.f32 %v1016, %v1058
    %1060 = vdwg.mxu0
    %1061 = vmatprep.subr.bf16.mxu0 %v768
    %1062 = vmatpush1.bf16.msra.mxu0 %v767
    %1063 = vmatprep.subr.bf16.mxu0 %v781
    %1064 = vmatpush1.bf16.msra.mxu0 %v780
    %1065 = vmatprep.subr.bf16.mxu0 %v794
    %1066 = vmatpush1.bf16.msra.mxu0 %v793
    %1067 = vmatprep.subr.bf16.mxu0 %v807
    %1068 = vmatpush1.bf16.msra.mxu0 %v806
    %1069 = vmatprep.subr.bf16.mxu0 0
    %1070 = vmatpush1.bf16.msra.mxu0 0
    %1071 = vmatprep.subr.bf16.mxu0 0
    %1072 = vmatpush1.bf16.msra.mxu0 0
    %1073 = vmatprep.subr.bf16.mxu0 0
    %1074 = vmatpush1.bf16.msra.mxu0 0
    %1075 = vmatprep.subr.bf16.mxu0 0
    %1076 = vmatpush1.bf16.msra.mxu0 0
    %1077 = vmatprep.subr.bf16.mxu0 0
    %1078 = vmatpush1.bf16.msra.mxu0 0
    %1079 = vmatprep.subr.bf16.mxu0 0
    %1080 = vmatpush1.bf16.msra.mxu0 0
    %1081 = vmatprep.subr.bf16.mxu0 0
    %1082 = vmatpush1.bf16.msra.mxu0 0
    %1083 = vmatprep.subr.bf16.mxu0 0
    %1084 = vmatpush1.bf16.msra.mxu0 0
    %1085 = vmatprep.subr.bf16.mxu0 0
    %1086 = vmatpush1.bf16.msra.mxu0 0
    %1087 = vmatprep.subr.bf16.mxu0 0
    %1088 = vmatpush1.bf16.msra.mxu0 0
    %1089 = vmatprep.subr.bf16.mxu0 0
    %1090 = vmatpush1.bf16.msra.mxu0 0
    %1091 = vmatprep.subr.bf16.mxu0 0
    %1092 = vmatpush1.bf16.msra.mxu0 0
    %1093 = vmatprep.mubr.bf16.mxu0 0
    %1094 = vmatmul.mubr.bf16.gmra.mrb[0].mxu0 %v844
    %v1095 = vpop.f32.mrb[0].mxu0
    %v1096 = vadd.f32 %v1053, %v1095
    %v1097 = vpop.f32.mrb[0].mxu0
    %v1098 = vadd.f32 %v1055, %v1097
    %v1099 = vpop.f32.mrb[0].mxu0
    %v1100 = vadd.f32 %v1057, %v1099
    %v1101 = vpop.f32.mrb[0].mxu0
    %v1102 = vadd.f32 %v1059, %v1101
    %1103 = vdwg.mxu0
    %1104 = vmatprep.subr.bf16.mxu0 %v354
    %1105 = vmatpush1.bf16.msra.mxu0 %v353
    %1106 = vmatprep.subr.bf16.mxu0 %v367
    %1107 = vmatpush1.bf16.msra.mxu0 %v366
    %1108 = vmatprep.subr.bf16.mxu0 %v380
    %1109 = vmatpush1.bf16.msra.mxu0 %v379
    %1110 = vmatprep.subr.bf16.mxu0 %v393
    %1111 = vmatpush1.bf16.msra.mxu0 %v392
    %1112 = vmatprep.subr.bf16.mxu0 %v406
    %1113 = vmatpush1.bf16.msra.mxu0 %v405
    %1114 = vmatprep.subr.bf16.mxu0 %v419
    %1115 = vmatpush1.bf16.msra.mxu0 %v418
    %1116 = vmatprep.subr.bf16.mxu0 %v432
    %1117 = vmatpush1.bf16.msra.mxu0 %v431
    %1118 = vmatprep.subr.bf16.mxu0 %v445
    %1119 = vmatpush1.bf16.msra.mxu0 %v444
    %1120 = vmatprep.subr.bf16.mxu0 %v458
    %1121 = vmatpush1.bf16.msra.mxu0 %v457
    %1122 = vmatprep.subr.bf16.mxu0 %v471
    %1123 = vmatpush1.bf16.msra.mxu0 %v470
    %1124 = vmatprep.subr.bf16.mxu0 %v484
    %1125 = vmatpush1.bf16.msra.mxu0 %v483
    %1126 = vmatprep.subr.bf16.mxu0 %v497
    %1127 = vmatpush1.bf16.msra.mxu0 %v496
    %1128 = vmatprep.subr.bf16.mxu0 %v510
    %1129 = vmatpush1.bf16.msra.mxu0 %v509
    %1130 = vmatprep.subr.bf16.mxu0 %v523
    %1131 = vmatpush1.bf16.msra.mxu0 %v522
    %1132 = vmatprep.subr.bf16.mxu0 %v536
    %1133 = vmatpush1.bf16.msra.mxu0 %v535
    %1134 = vmatprep.subr.bf16.mxu0 %v549
    %1135 = vmatpush1.bf16.msra.mxu0 %v548
    %1136 = vmatprep.mubr.bf16.mxu0 %v834
    %1137 = vmatmul.mubr.bf16.gmra.mrb[0].mxu0 %v833
    %v1138 = vpop.f32.mrb[0].mxu0
    %v1139 = vadd.f32 0.0, %v1138
    %v1140 = vpop.f32.mrb[0].mxu0
    %v1141 = vadd.f32 0.0, %v1140
    %v1142 = vpop.f32.mrb[0].mxu0
    %v1143 = vadd.f32 0.0, %v1142
    %v1144 = vpop.f32.mrb[0].mxu0
    %v1145 = vadd.f32 0.0, %v1144
    %1146 = vdwg.mxu0
    %1147 = vmatprep.subr.bf16.mxu0 %v562
    %1148 = vmatpush1.bf16.msra.mxu0 %v561
    %1149 = vmatprep.subr.bf16.mxu0 %v575
    %1150 = vmatpush1.bf16.msra.mxu0 %v574
    %1151 = vmatprep.subr.bf16.mxu0 %v588
    %1152 = vmatpush1.bf16.msra.mxu0 %v587
    %1153 = vmatprep.subr.bf16.mxu0 %v601
    %1154 = vmatpush1.bf16.msra.mxu0 %v600
    %1155 = vmatprep.subr.bf16.mxu0 %v614
    %1156 = vmatpush1.bf16.msra.mxu0 %v613
    %1157 = vmatprep.subr.bf16.mxu0 %v627
    %1158 = vmatpush1.bf16.msra.mxu0 %v626
    %1159 = vmatprep.subr.bf16.mxu0 %v640
    %1160 = vmatpush1.bf16.msra.mxu0 %v639
    %1161 = vmatprep.subr.bf16.mxu0 %v653
    %1162 = vmatpush1.bf16.msra.mxu0 %v652
    %1163 = vmatprep.subr.bf16.mxu0 %v666
    %1164 = vmatpush1.bf16.msra.mxu0 %v665
    %1165 = vmatprep.subr.bf16.mxu0 %v679
    %1166 = vmatpush1.bf16.msra.mxu0 %v678
    %1167 = vmatprep.subr.bf16.mxu0 %v692
    %1168 = vmatpush1.bf16.msra.mxu0 %v691
    %1169 = vmatprep.subr.bf16.mxu0 %v705
    %1170 = vmatpush1.bf16.msra.mxu0 %v704
    %1171 = vmatprep.subr.bf16.mxu0 %v718
    %1172 = vmatpush1.bf16.msra.mxu0 %v717
    %1173 = vmatprep.subr.bf16.mxu0 %v731
    %1174 = vmatpush1.bf16.msra.mxu0 %v730
    %1175 = vmatprep.subr.bf16.mxu0 %v744
    %1176 = vmatpush1.bf16.msra.mxu0 %v743
    %1177 = vmatprep.subr.bf16.mxu0 %v757
    %1178 = vmatpush1.bf16.msra.mxu0 %v756
    %1179 = vmatprep.mubr.bf16.mxu0 %v836
    %1180 = vmatmul.mubr.bf16.gmra.mrb[0].mxu0 %v835
    %v1181 = vpop.f32.mrb[0].mxu0
    %v1182 = vadd.f32 %v1139, %v1181
    %v1183 = vpop.f32.mrb[0].mxu0
    %v1184 = vadd.f32 %v1141, %v1183
    %v1185 = vpop.f32.mrb[0].mxu0
    %v1186 = vadd.f32 %v1143, %v1185
    %v1187 = vpop.f32.mrb[0].mxu0
    %v1188 = vadd.f32 %v1145, %v1187
    %1189 = vdwg.mxu0
    %1190 = vmatprep.subr.bf16.mxu0 %v770
    %1191 = vmatpush1.bf16.msra.mxu0 %v769
    %1192 = vmatprep.subr.bf16.mxu0 %v783
    %1193 = vmatpush1.bf16.msra.mxu0 %v782
    %1194 = vmatprep.subr.bf16.mxu0 %v796
    %1195 = vmatpush1.bf16.msra.mxu0 %v795
    %1196 = vmatprep.subr.bf16.mxu0 %v809
    %1197 = vmatpush1.bf16.msra.mxu0 %v808
    %1198 = vmatprep.subr.bf16.mxu0 0
    %1199 = vmatpush1.bf16.msra.mxu0 0
    %1200 = vmatprep.subr.bf16.mxu0 0
    %1201 = vmatpush1.bf16.msra.mxu0 0
    %1202 = vmatprep.subr.bf16.mxu0 0
    %1203 = vmatpush1.bf16.msra.mxu0 0
    %1204 = vmatprep.subr.bf16.mxu0 0
    %1205 = vmatpush1.bf16.msra.mxu0 0
    %1206 = vmatprep.subr.bf16.mxu0 0
    %1207 = vmatpush1.bf16.msra.mxu0 0
    %1208 = vmatprep.subr.bf16.mxu0 0
    %1209 = vmatpush1.bf16.msra.mxu0 0
    %1210 = vmatprep.subr.bf16.mxu0 0
    %1211 = vmatpush1.bf16.msra.mxu0 0
    %1212 = vmatprep.subr.bf16.mxu0 0
    %1213 = vmatpush1.bf16.msra.mxu0 0
    %1214 = vmatprep.subr.bf16.mxu0 0
    %1215 = vmatpush1.bf16.msra.mxu0 0
    %1216 = vmatprep.subr.bf16.mxu0 0
    %1217 = vmatpush1.bf16.msra.mxu0 0
    %1218 = vmatprep.subr.bf16.mxu0 0
    %1219 = vmatpush1.bf16.msra.mxu0 0
    %1220 = vmatprep.subr.bf16.mxu0 0
    %1221 = vmatpush1.bf16.msra.mxu0 0
    %1222 = vmatprep.mubr.bf16.mxu0 0
    %1223 = vmatmul.mubr.bf16.gmra.mrb[0].mxu0 %v844
    %v1224 = vpop.f32.mrb[0].mxu0
    %v1225 = vadd.f32 %v1182, %v1224
    %v1226 = vpop.f32.mrb[0].mxu0
    %v1227 = vadd.f32 %v1184, %v1226
    %v1228 = vpop.f32.mrb[0].mxu0
    %v1229 = vadd.f32 %v1186, %v1228
    %v1230 = vpop.f32.mrb[0].mxu0
    %v1231 = vadd.f32 %v1188, %v1230
    %1232 = vdwg.mxu0
    %1233 = vmatprep.subr.bf16.mxu0 %v356
    %1234 = vmatpush1.bf16.msra.mxu0 %v355
    %1235 = vmatprep.subr.bf16.mxu0 %v369
    %1236 = vmatpush1.bf16.msra.mxu0 %v368
    %1237 = vmatprep.subr.bf16.mxu0 %v382
    %1238 = vmatpush1.bf16.msra.mxu0 %v381
    %1239 = vmatprep.subr.bf16.mxu0 %v395
    %1240 = vmatpush1.bf16.msra.mxu0 %v394
    %1241 = vmatprep.subr.bf16.mxu0 %v408
    %1242 = vmatpush1.bf16.msra.mxu0 %v407
    %1243 = vmatprep.subr.bf16.mxu0 %v421
    %1244 = vmatpush1.bf16.msra.mxu0 %v420
    %1245 = vmatprep.subr.bf16.mxu0 %v434
    %1246 = vmatpush1.bf16.msra.mxu0 %v433
    %1247 = vmatprep.subr.bf16.mxu0 %v447
    %1248 = vmatpush1.bf16.msra.mxu0 %v446
    %1249 = vmatprep.subr.bf16.mxu0 %v460
    %1250 = vmatpush1.bf16.msra.mxu0 %v459
    %1251 = vmatprep.subr.bf16.mxu0 %v473
    %1252 = vmatpush1.bf16.msra.mxu0 %v472
    %1253 = vmatprep.subr.bf16.mxu0 %v486
    %1254 = vmatpush1.bf16.msra.mxu0 %v485
    %1255 = vmatprep.subr.bf16.mxu0 %v499
    %1256 = vmatpush1.bf16.msra.mxu0 %v498
    %1257 = vmatprep.subr.bf16.mxu0 %v512
    %1258 = vmatpush1.bf16.msra.mxu0 %v511
    %1259 = vmatprep.subr.bf16.mxu0 %v525
    %1260 = vmatpush1.bf16.msra.mxu0 %v524
    %1261 = vmatprep.subr.bf16.mxu0 %v538
    %1262 = vmatpush1.bf16.msra.mxu0 %v537
    %1263 = vmatprep.subr.bf16.mxu0 %v551
    %1264 = vmatpush1.bf16.msra.mxu0 %v550
    %1265 = vmatprep.mubr.bf16.mxu0 %v834
    %1266 = vmatmul.mubr.bf16.gmra.mrb[0].mxu0 %v833
    %v1267 = vpop.f32.mrb[0].mxu0
    %v1268 = vadd.f32 0.0, %v1267
    %v1269 = vpop.f32.mrb[0].mxu0
    %v1270 = vadd.f32 0.0, %v1269
    %v1271 = vpop.f32.mrb[0].mxu0
    %v1272 = vadd.f32 0.0, %v1271
    %v1273 = vpop.f32.mrb[0].mxu0
    %v1274 = vadd.f32 0.0, %v1273
    %1275 = vdwg.mxu0
    %1276 = vmatprep.subr.bf16.mxu0 %v564
    %1277 = vmatpush1.bf16.msra.mxu0 %v563
    %1278 = vmatprep.subr.bf16.mxu0 %v577
    %1279 = vmatpush1.bf16.msra.mxu0 %v576
    %1280 = vmatprep.subr.bf16.mxu0 %v590
    %1281 = vmatpush1.bf16.msra.mxu0 %v589
    %1282 = vmatprep.subr.bf16.mxu0 %v603
    %1283 = vmatpush1.bf16.msra.mxu0 %v602
    %1284 = vmatprep.subr.bf16.mxu0 %v616
    %1285 = vmatpush1.bf16.msra.mxu0 %v615
    %1286 = vmatprep.subr.bf16.mxu0 %v629
    %1287 = vmatpush1.bf16.msra.mxu0 %v628
    %1288 = vmatprep.subr.bf16.mxu0 %v642
    %1289 = vmatpush1.bf16.msra.mxu0 %v641
    %1290 = vmatprep.subr.bf16.mxu0 %v655
    %1291 = vmatpush1.bf16.msra.mxu0 %v654
    %1292 = vmatprep.subr.bf16.mxu0 %v668
    %1293 = vmatpush1.bf16.msra.mxu0 %v667
    %1294 = vmatprep.subr.bf16.mxu0 %v681
    %1295 = vmatpush1.bf16.msra.mxu0 %v680
    %1296 = vmatprep.subr.bf16.mxu0 %v694
    %1297 = vmatpush1.bf16.msra.mxu0 %v693
    %1298 = vmatprep.subr.bf16.mxu0 %v707
    %1299 = vmatpush1.bf16.msra.mxu0 %v706
    %1300 = vmatprep.subr.bf16.mxu0 %v720
    %1301 = vmatpush1.bf16.msra.mxu0 %v719
    %1302 = vmatprep.subr.bf16.mxu0 %v733
    %1303 = vmatpush1.bf16.msra.mxu0 %v732
    %1304 = vmatprep.subr.bf16.mxu0 %v746
    %1305 = vmatpush1.bf16.msra.mxu0 %v745
    %1306 = vmatprep.subr.bf16.mxu0 %v759
    %1307 = vmatpush1.bf16.msra.mxu0 %v758
    %1308 = vmatprep.mubr.bf16.mxu0 %v836
    %1309 = vmatmul.mubr.bf16.gmra.mrb[0].mxu0 %v835
    %v1310 = vpop.f32.mrb[0].mxu0
    %v1311 = vadd.f32 %v1268, %v1310
    %v1312 = vpop.f32.mrb[0].mxu0
    %v1313 = vadd.f32 %v1270, %v1312
    %v1314 = vpop.f32.mrb[0].mxu0
    %v1315 = vadd.f32 %v1272, %v1314
    %v1316 = vpop.f32.mrb[0].mxu0
    %v1317 = vadd.f32 %v1274, %v1316
    %1318 = vdwg.mxu0
    %1319 = vmatprep.subr.bf16.mxu0 %v772
    %1320 = vmatpush1.bf16.msra.mxu0 %v771
    %1321 = vmatprep.subr.bf16.mxu0 %v785
    %1322 = vmatpush1.bf16.msra.mxu0 %v784
    %1323 = vmatprep.subr.bf16.mxu0 %v798
    %1324 = vmatpush1.bf16.msra.mxu0 %v797
    %1325 = vmatprep.subr.bf16.mxu0 %v811
    %1326 = vmatpush1.bf16.msra.mxu0 %v810
    %1327 = vmatprep.subr.bf16.mxu0 0
    %1328 = vmatpush1.bf16.msra.mxu0 0
    %1329 = vmatprep.subr.bf16.mxu0 0
    %1330 = vmatpush1.bf16.msra.mxu0 0
    %1331 = vmatprep.subr.bf16.mxu0 0
    %1332 = vmatpush1.bf16.msra.mxu0 0
    %1333 = vmatprep.subr.bf16.mxu0 0
    %1334 = vmatpush1.bf16.msra.mxu0 0
    %1335 = vmatprep.subr.bf16.mxu0 0
    %1336 = vmatpush1.bf16.msra.mxu0 0
    %1337 = vmatprep.subr.bf16.mxu0 0
    %1338 = vmatpush1.bf16.msra.mxu0 0
    %1339 = vmatprep.subr.bf16.mxu0 0
    %1340 = vmatpush1.bf16.msra.mxu0 0
    %1341 = vmatprep.subr.bf16.mxu0 0
    %1342 = vmatpush1.bf16.msra.mxu0 0
    %1343 = vmatprep.subr.bf16.mxu0 0
    %1344 = vmatpush1.bf16.msra.mxu0 0
    %1345 = vmatprep.subr.bf16.mxu0 0
    %1346 = vmatpush1.bf16.msra.mxu0 0
    %1347 = vmatprep.subr.bf16.mxu0 0
    %1348 = vmatpush1.bf16.msra.mxu0 0
    %1349 = vmatprep.subr.bf16.mxu0 0
    %1350 = vmatpush1.bf16.msra.mxu0 0
    %1351 = vmatprep.mubr.bf16.mxu0 0
    %1352 = vmatmul.mubr.bf16.gmra.mrb[0].mxu0 %v844
    %v1353 = vpop.f32.mrb[0].mxu0
    %v1354 = vadd.f32 %v1311, %v1353
    %v1355 = vpop.f32.mrb[0].mxu0
    %v1356 = vadd.f32 %v1313, %v1355
    %v1357 = vpop.f32.mrb[0].mxu0
    %v1358 = vadd.f32 %v1315, %v1357
    %v1359 = vpop.f32.mrb[0].mxu0
    %v1360 = vadd.f32 %v1317, %v1359
    %1361 = vdwg.mxu0
    %1362 = vmatprep.subr.bf16.mxu0 %v358
    %1363 = vmatpush1.bf16.msra.mxu0 %v357
    %1364 = vmatprep.subr.bf16.mxu0 %v371
    %1365 = vmatpush1.bf16.msra.mxu0 %v370
    %1366 = vmatprep.subr.bf16.mxu0 %v384
    %1367 = vmatpush1.bf16.msra.mxu0 %v383
    %1368 = vmatprep.subr.bf16.mxu0 %v397
    %1369 = vmatpush1.bf16.msra.mxu0 %v396
    %1370 = vmatprep.subr.bf16.mxu0 %v410
    %1371 = vmatpush1.bf16.msra.mxu0 %v409
    %1372 = vmatprep.subr.bf16.mxu0 %v423
    %1373 = vmatpush1.bf16.msra.mxu0 %v422
    %1374 = vmatprep.subr.bf16.mxu0 %v436
    %1375 = vmatpush1.bf16.msra.mxu0 %v435
    %1376 = vmatprep.subr.bf16.mxu0 %v449
    %1377 = vmatpush1.bf16.msra.mxu0 %v448
    %1378 = vmatprep.subr.bf16.mxu0 %v462
    %1379 = vmatpush1.bf16.msra.mxu0 %v461
    %1380 = vmatprep.subr.bf16.mxu0 %v475
    %1381 = vmatpush1.bf16.msra.mxu0 %v474
    %1382 = vmatprep.subr.bf16.mxu0 %v488
    %1383 = vmatpush1.bf16.msra.mxu0 %v487
    %1384 = vmatprep.subr.bf16.mxu0 %v501
    %1385 = vmatpush1.bf16.msra.mxu0 %v500
    %1386 = vmatprep.subr.bf16.mxu0 %v514
    %1387 = vmatpush1.bf16.msra.mxu0 %v513
    %1388 = vmatprep.subr.bf16.mxu0 %v527
    %1389 = vmatpush1.bf16.msra.mxu0 %v526
    %1390 = vmatprep.subr.bf16.mxu0 %v540
    %1391 = vmatpush1.bf16.msra.mxu0 %v539
    %1392 = vmatprep.subr.bf16.mxu0 %v553
    %1393 = vmatpush1.bf16.msra.mxu0 %v552
    %1394 = vmatprep.mubr.bf16.mxu0 %v834
    %1395 = vmatmul.mubr.bf16.gmra.mrb[0].mxu0 %v833
    %v1396 = vpop.f32.mrb[0].mxu0
    %v1397 = vadd.f32 0.0, %v1396
    %v1398 = vpop.f32.mrb[0].mxu0
    %v1399 = vadd.f32 0.0, %v1398
    %v1400 = vpop.f32.mrb[0].mxu0
    %v1401 = vadd.f32 0.0, %v1400
    %v1402 = vpop.f32.mrb[0].mxu0
    %v1403 = vadd.f32 0.0, %v1402
    %1404 = vdwg.mxu0
    %1405 = vmatprep.subr.bf16.mxu0 %v566
    %1406 = vmatpush1.bf16.msra.mxu0 %v565
    %1407 = vmatprep.subr.bf16.mxu0 %v579
    %1408 = vmatpush1.bf16.msra.mxu0 %v578
    %1409 = vmatprep.subr.bf16.mxu0 %v592
    %1410 = vmatpush1.bf16.msra.mxu0 %v591
    %1411 = vmatprep.subr.bf16.mxu0 %v605
    %1412 = vmatpush1.bf16.msra.mxu0 %v604
    %1413 = vmatprep.subr.bf16.mxu0 %v618
    %1414 = vmatpush1.bf16.msra.mxu0 %v617
    %1415 = vmatprep.subr.bf16.mxu0 %v631
    %1416 = vmatpush1.bf16.msra.mxu0 %v630
    %1417 = vmatprep.subr.bf16.mxu0 %v644
    %1418 = vmatpush1.bf16.msra.mxu0 %v643
    %1419 = vmatprep.subr.bf16.mxu0 %v657
    %1420 = vmatpush1.bf16.msra.mxu0 %v656
    %1421 = vmatprep.subr.bf16.mxu0 %v670
    %1422 = vmatpush1.bf16.msra.mxu0 %v669
    %1423 = vmatprep.subr.bf16.mxu0 %v683
    %1424 = vmatpush1.bf16.msra.mxu0 %v682
    %1425 = vmatprep.subr.bf16.mxu0 %v696
    %1426 = vmatpush1.bf16.msra.mxu0 %v695
    %1427 = vmatprep.subr.bf16.mxu0 %v709
    %1428 = vmatpush1.bf16.msra.mxu0 %v708
    %1429 = vmatprep.subr.bf16.mxu0 %v722
    %1430 = vmatpush1.bf16.msra.mxu0 %v721
    %1431 = vmatprep.subr.bf16.mxu0 %v735
    %1432 = vmatpush1.bf16.msra.mxu0 %v734
    %1433 = vmatprep.subr.bf16.mxu0 %v748
    %1434 = vmatpush1.bf16.msra.mxu0 %v747
    %1435 = vmatprep.subr.bf16.mxu0 %v761
    %1436 = vmatpush1.bf16.msra.mxu0 %v760
    %1437 = vmatprep.mubr.bf16.mxu0 %v836
    %1438 = vmatmul.mubr.bf16.gmra.mrb[0].mxu0 %v835
    %v1439 = vpop.f32.mrb[0].mxu0
    %v1440 = vadd.f32 %v1397, %v1439
    %v1441 = vpop.f32.mrb[0].mxu0
    %v1442 = vadd.f32 %v1399, %v1441
    %v1443 = vpop.f32.mrb[0].mxu0
    %v1444 = vadd.f32 %v1401, %v1443
    %v1445 = vpop.f32.mrb[0].mxu0
    %v1446 = vadd.f32 %v1403, %v1445
    %1447 = vdwg.mxu0
    %1448 = vmatprep.subr.bf16.mxu0 %v774
    %1449 = vmatpush1.bf16.msra.mxu0 %v773
    %1450 = vmatprep.subr.bf16.mxu0 %v787
    %1451 = vmatpush1.bf16.msra.mxu0 %v786
    %1452 = vmatprep.subr.bf16.mxu0 %v800
    %1453 = vmatpush1.bf16.msra.mxu0 %v799
    %1454 = vmatprep.subr.bf16.mxu0 %v813
    %1455 = vmatpush1.bf16.msra.mxu0 %v812
    %1456 = vmatprep.subr.bf16.mxu0 0
    %1457 = vmatpush1.bf16.msra.mxu0 0
    %1458 = vmatprep.subr.bf16.mxu0 0
    %1459 = vmatpush1.bf16.msra.mxu0 0
    %1460 = vmatprep.subr.bf16.mxu0 0
    %1461 = vmatpush1.bf16.msra.mxu0 0
    %1462 = vmatprep.subr.bf16.mxu0 0
    %1463 = vmatpush1.bf16.msra.mxu0 0
    %1464 = vmatprep.subr.bf16.mxu0 0
    %1465 = vmatpush1.bf16.msra.mxu0 0
    %1466 = vmatprep.subr.bf16.mxu0 0
    %1467 = vmatpush1.bf16.msra.mxu0 0
    %1468 = vmatprep.subr.bf16.mxu0 0
    %1469 = vmatpush1.bf16.msra.mxu0 0
    %1470 = vmatprep.subr.bf16.mxu0 0
    %1471 = vmatpush1.bf16.msra.mxu0 0
    %1472 = vmatprep.subr.bf16.mxu0 0
    %1473 = vmatpush1.bf16.msra.mxu0 0
    %1474 = vmatprep.subr.bf16.mxu0 0
    %1475 = vmatpush1.bf16.msra.mxu0 0
    %1476 = vmatprep.subr.bf16.mxu0 0
    %1477 = vmatpush1.bf16.msra.mxu0 0
    %1478 = vmatprep.subr.bf16.mxu0 0
    %1479 = vmatpush1.bf16.msra.mxu0 0
    %1480 = vmatprep.mubr.bf16.mxu0 0
    %1481 = vmatmul.mubr.bf16.gmra.mrb[0].mxu0 %v844
    %v1482 = vpop.f32.mrb[0].mxu0
    %v1483 = vadd.f32 %v1440, %v1482
    %v1484 = vpop.f32.mrb[0].mxu0
    %v1485 = vadd.f32 %v1442, %v1484
    %v1486 = vpop.f32.mrb[0].mxu0
    %v1487 = vadd.f32 %v1444, %v1486
    %v1488 = vpop.f32.mrb[0].mxu0
    %v1489 = vadd.f32 %v1446, %v1488
    %1490 = vdwg.mxu0
    %1491 = vmatprep.subr.bf16.mxu0 %v360
    %1492 = vmatpush1.bf16.msra.mxu0 %v359
    %1493 = vmatprep.subr.bf16.mxu0 %v373
    %1494 = vmatpush1.bf16.msra.mxu0 %v372
    %1495 = vmatprep.subr.bf16.mxu0 %v386
    %1496 = vmatpush1.bf16.msra.mxu0 %v385
    %1497 = vmatprep.subr.bf16.mxu0 %v399
    %1498 = vmatpush1.bf16.msra.mxu0 %v398
    %1499 = vmatprep.subr.bf16.mxu0 %v412
    %1500 = vmatpush1.bf16.msra.mxu0 %v411
    %1501 = vmatprep.subr.bf16.mxu0 %v425
    %1502 = vmatpush1.bf16.msra.mxu0 %v424
    %1503 = vmatprep.subr.bf16.mxu0 %v438
    %1504 = vmatpush1.bf16.msra.mxu0 %v437
    %1505 = vmatprep.subr.bf16.mxu0 %v451
    %1506 = vmatpush1.bf16.msra.mxu0 %v450
    %1507 = vmatprep.subr.bf16.mxu0 %v464
    %1508 = vmatpush1.bf16.msra.mxu0 %v463
    %1509 = vmatprep.subr.bf16.mxu0 %v477
    %1510 = vmatpush1.bf16.msra.mxu0 %v476
    %1511 = vmatprep.subr.bf16.mxu0 %v490
    %1512 = vmatpush1.bf16.msra.mxu0 %v489
    %1513 = vmatprep.subr.bf16.mxu0 %v503
    %1514 = vmatpush1.bf16.msra.mxu0 %v502
    %1515 = vmatprep.subr.bf16.mxu0 %v516
    %1516 = vmatpush1.bf16.msra.mxu0 %v515
    %1517 = vmatprep.subr.bf16.mxu0 %v529
    %1518 = vmatpush1.bf16.msra.mxu0 %v528
    %1519 = vmatprep.subr.bf16.mxu0 %v542
    %1520 = vmatpush1.bf16.msra.mxu0 %v541
    %1521 = vmatprep.subr.bf16.mxu0 %v555
    %1522 = vmatpush1.bf16.msra.mxu0 %v554
    %1523 = vmatprep.mubr.bf16.mxu0 %v834
    %1524 = vmatmul.mubr.bf16.gmra.mrb[0].mxu0 %v833
    %v1525 = vpop.f32.mrb[0].mxu0
    %v1526 = vadd.f32 0.0, %v1525
    %v1527 = vpop.f32.mrb[0].mxu0
    %v1528 = vadd.f32 0.0, %v1527
    %v1529 = vpop.f32.mrb[0].mxu0
    %v1530 = vadd.f32 0.0, %v1529
    %v1531 = vpop.f32.mrb[0].mxu0
    %v1532 = vadd.f32 0.0, %v1531
    %1533 = vdwg.mxu0
    %1534 = vmatprep.subr.bf16.mxu0 %v568
    %1535 = vmatpush1.bf16.msra.mxu0 %v567
    %1536 = vmatprep.subr.bf16.mxu0 %v581
    %1537 = vmatpush1.bf16.msra.mxu0 %v580
    %1538 = vmatprep.subr.bf16.mxu0 %v594
    %1539 = vmatpush1.bf16.msra.mxu0 %v593
    %1540 = vmatprep.subr.bf16.mxu0 %v607
    %1541 = vmatpush1.bf16.msra.mxu0 %v606
    %1542 = vmatprep.subr.bf16.mxu0 %v620
    %1543 = vmatpush1.bf16.msra.mxu0 %v619
    %1544 = vmatprep.subr.bf16.mxu0 %v633
    %1545 = vmatpush1.bf16.msra.mxu0 %v632
    %1546 = vmatprep.subr.bf16.mxu0 %v646
    %1547 = vmatpush1.bf16.msra.mxu0 %v645
    %1548 = vmatprep.subr.bf16.mxu0 %v659
    %1549 = vmatpush1.bf16.msra.mxu0 %v658
    %1550 = vmatprep.subr.bf16.mxu0 %v672
    %1551 = vmatpush1.bf16.msra.mxu0 %v671
    %1552 = vmatprep.subr.bf16.mxu0 %v685
    %1553 = vmatpush1.bf16.msra.mxu0 %v684
    %1554 = vmatprep.subr.bf16.mxu0 %v698
    %1555 = vmatpush1.bf16.msra.mxu0 %v697
    %1556 = vmatprep.subr.bf16.mxu0 %v711
    %1557 = vmatpush1.bf16.msra.mxu0 %v710
    %1558 = vmatprep.subr.bf16.mxu0 %v724
    %1559 = vmatpush1.bf16.msra.mxu0 %v723
    %1560 = vmatprep.subr.bf16.mxu0 %v737
    %1561 = vmatpush1.bf16.msra.mxu0 %v736
    %1562 = vmatprep.subr.bf16.mxu0 %v750
    %1563 = vmatpush1.bf16.msra.mxu0 %v749
    %1564 = vmatprep.subr.bf16.mxu0 %v763
    %1565 = vmatpush1.bf16.msra.mxu0 %v762
    %1566 = vmatprep.mubr.bf16.mxu0 %v836
    %1567 = vmatmul.mubr.bf16.gmra.mrb[0].mxu0 %v835
    %v1568 = vpop.f32.mrb[0].mxu0
    %v1569 = vadd.f32 %v1526, %v1568
    %v1570 = vpop.f32.mrb[0].mxu0
    %v1571 = vadd.f32 %v1528, %v1570
    %v1572 = vpop.f32.mrb[0].mxu0
    %v1573 = vadd.f32 %v1530, %v1572
    %v1574 = vpop.f32.mrb[0].mxu0
    %v1575 = vadd.f32 %v1532, %v1574
    %1576 = vdwg.mxu0
    %1577 = vmatprep.subr.bf16.mxu0 %v776
    %1578 = vmatpush1.bf16.msra.mxu0 %v775
    %1579 = vmatprep.subr.bf16.mxu0 %v789
    %1580 = vmatpush1.bf16.msra.mxu0 %v788
    %1581 = vmatprep.subr.bf16.mxu0 %v802
    %1582 = vmatpush1.bf16.msra.mxu0 %v801
    %1583 = vmatprep.subr.bf16.mxu0 %v815
    %1584 = vmatpush1.bf16.msra.mxu0 %v814
    %1585 = vmatprep.subr.bf16.mxu0 0
    %1586 = vmatpush1.bf16.msra.mxu0 0
    %1587 = vmatprep.subr.bf16.mxu0 0
    %1588 = vmatpush1.bf16.msra.mxu0 0
    %1589 = vmatprep.subr.bf16.mxu0 0
    %1590 = vmatpush1.bf16.msra.mxu0 0
    %1591 = vmatprep.subr.bf16.mxu0 0
    %1592 = vmatpush1.bf16.msra.mxu0 0
    %1593 = vmatprep.subr.bf16.mxu0 0
    %1594 = vmatpush1.bf16.msra.mxu0 0
    %1595 = vmatprep.subr.bf16.mxu0 0
    %1596 = vmatpush1.bf16.msra.mxu0 0
    %1597 = vmatprep.subr.bf16.mxu0 0
    %1598 = vmatpush1.bf16.msra.mxu0 0
    %1599 = vmatprep.subr.bf16.mxu0 0
    %1600 = vmatpush1.bf16.msra.mxu0 0
    %1601 = vmatprep.subr.bf16.mxu0 0
    %1602 = vmatpush1.bf16.msra.mxu0 0
    %1603 = vmatprep.subr.bf16.mxu0 0
    %1604 = vmatpush1.bf16.msra.mxu0 0
    %1605 = vmatprep.subr.bf16.mxu0 0
    %1606 = vmatpush1.bf16.msra.mxu0 0
    %1607 = vmatprep.subr.bf16.mxu0 0
    %1608 = vmatpush1.bf16.msra.mxu0 0
    %1609 = vmatprep.mubr.bf16.mxu0 0
    %1610 = vmatmul.mubr.bf16.gmra.mrb[0].mxu0 %v844
    %v1611 = vpop.f32.mrb[0].mxu0
    %v1612 = vadd.f32 %v1569, %v1611
    %v1613 = vpop.f32.mrb[0].mxu0
    %v1614 = vadd.f32 %v1571, %v1613
    %v1615 = vpop.f32.mrb[0].mxu0
    %v1616 = vadd.f32 %v1573, %v1615
    %v1617 = vpop.f32.mrb[0].mxu0
    %v1618 = vadd.f32 %v1575, %v1617
    %1619 = vdwg.mxu0
    %1620 = vmatprep.subr.bf16.mxu0 0
    %1621 = vmatpush1.bf16.msra.mxu0 %v361
    %1622 = vmatprep.subr.bf16.mxu0 0
    %1623 = vmatpush1.bf16.msra.mxu0 %v374
    %1624 = vmatprep.subr.bf16.mxu0 0
    %1625 = vmatpush1.bf16.msra.mxu0 %v387
    %1626 = vmatprep.subr.bf16.mxu0 0
    %1627 = vmatpush1.bf16.msra.mxu0 %v400
    %1628 = vmatprep.subr.bf16.mxu0 0
    %1629 = vmatpush1.bf16.msra.mxu0 %v413
    %1630 = vmatprep.subr.bf16.mxu0 0
    %1631 = vmatpush1.bf16.msra.mxu0 %v426
    %1632 = vmatprep.subr.bf16.mxu0 0
    %1633 = vmatpush1.bf16.msra.mxu0 %v439
    %1634 = vmatprep.subr.bf16.mxu0 0
    %1635 = vmatpush1.bf16.msra.mxu0 %v452
    %1636 = vmatprep.subr.bf16.mxu0 0
    %1637 = vmatpush1.bf16.msra.mxu0 %v465
    %1638 = vmatprep.subr.bf16.mxu0 0
    %1639 = vmatpush1.bf16.msra.mxu0 %v478
    %1640 = vmatprep.subr.bf16.mxu0 0
    %1641 = vmatpush1.bf16.msra.mxu0 %v491
    %1642 = vmatprep.subr.bf16.mxu0 0
    %1643 = vmatpush1.bf16.msra.mxu0 %v504
    %1644 = vmatprep.subr.bf16.mxu0 0
    %1645 = vmatpush1.bf16.msra.mxu0 %v517
    %1646 = vmatprep.subr.bf16.mxu0 0
    %1647 = vmatpush1.bf16.msra.mxu0 %v530
    %1648 = vmatprep.subr.bf16.mxu0 0
    %1649 = vmatpush1.bf16.msra.mxu0 %v543
    %1650 = vmatprep.subr.bf16.mxu0 0
    %1651 = vmatpush1.bf16.msra.mxu0 %v556
    %1652 = vmatprep.mubr.bf16.mxu0 %v834
    %1653 = vmatmul.mubr.bf16.gmra.mrb[0].mxu0 %v833
    %v1654 = vpop.f32.mrb[0].mxu0
    %v1655 = vadd.f32 0.0, %v1654
    %v1656 = vpop.f32.mrb[0].mxu0
    %v1657 = vpop.f32.mrb[0].mxu0
    %v1658 = vadd.f32 0.0, %v1657
    %v1659 = vpop.f32.mrb[0].mxu0
    %1660 = vdwg.mxu0
    %1661 = vmatprep.subr.bf16.mxu0 0
    %1662 = vmatpush1.bf16.msra.mxu0 %v569
    %1663 = vmatprep.subr.bf16.mxu0 0
    %1664 = vmatpush1.bf16.msra.mxu0 %v582
    %1665 = vmatprep.subr.bf16.mxu0 0
    %1666 = vmatpush1.bf16.msra.mxu0 %v595
    %1667 = vmatprep.subr.bf16.mxu0 0
    %1668 = vmatpush1.bf16.msra.mxu0 %v608
    %1669 = vmatprep.subr.bf16.mxu0 0
    %1670 = vmatpush1.bf16.msra.mxu0 %v621
    %1671 = vmatprep.subr.bf16.mxu0 0
    %1672 = vmatpush1.bf16.msra.mxu0 %v634
    %1673 = vmatprep.subr.bf16.mxu0 0
    %1674 = vmatpush1.bf16.msra.mxu0 %v647
    %1675 = vmatprep.subr.bf16.mxu0 0
    %1676 = vmatpush1.bf16.msra.mxu0 %v660
    %1677 = vmatprep.subr.bf16.mxu0 0
    %1678 = vmatpush1.bf16.msra.mxu0 %v673
    %1679 = vmatprep.subr.bf16.mxu0 0
    %1680 = vmatpush1.bf16.msra.mxu0 %v686
    %1681 = vmatprep.subr.bf16.mxu0 0
    %1682 = vmatpush1.bf16.msra.mxu0 %v699
    %1683 = vmatprep.subr.bf16.mxu0 0
    %1684 = vmatpush1.bf16.msra.mxu0 %v712
    %1685 = vmatprep.subr.bf16.mxu0 0
    %1686 = vmatpush1.bf16.msra.mxu0 %v725
    %1687 = vmatprep.subr.bf16.mxu0 0
    %1688 = vmatpush1.bf16.msra.mxu0 %v738
    %1689 = vmatprep.subr.bf16.mxu0 0
    %1690 = vmatpush1.bf16.msra.mxu0 %v751
    %1691 = vmatprep.subr.bf16.mxu0 0
    %1692 = vmatpush1.bf16.msra.mxu0 %v764
    %1693 = vmatprep.mubr.bf16.mxu0 %v836
    %1694 = vmatmul.mubr.bf16.gmra.mrb[0].mxu0 %v835
    %v1695 = vpop.f32.mrb[0].mxu0
    %v1696 = vadd.f32 %v1655, %v1695
    %v1697 = vpop.f32.mrb[0].mxu0
    %v1698 = vpop.f32.mrb[0].mxu0
    %v1699 = vadd.f32 %v1658, %v1698
    %v1700 = vpop.f32.mrb[0].mxu0
    %1701 = vdwg.mxu0
    %1702 = vmatprep.subr.bf16.mxu0 0
    %1703 = vmatpush1.bf16.msra.mxu0 %v777
    %1704 = vmatprep.subr.bf16.mxu0 0
    %1705 = vmatpush1.bf16.msra.mxu0 %v790
    %1706 = vmatprep.subr.bf16.mxu0 0
    %1707 = vmatpush1.bf16.msra.mxu0 %v803
    %1708 = vmatprep.subr.bf16.mxu0 0
    %1709 = vmatpush1.bf16.msra.mxu0 %v816
    %1710 = vmatprep.subr.bf16.mxu0 0
    %1711 = vmatpush1.bf16.msra.mxu0 0
    %1712 = vmatprep.subr.bf16.mxu0 0
    %1713 = vmatpush1.bf16.msra.mxu0 0
    %1714 = vmatprep.subr.bf16.mxu0 0
    %1715 = vmatpush1.bf16.msra.mxu0 0
    %1716 = vmatprep.subr.bf16.mxu0 0
    %1717 = vmatpush1.bf16.msra.mxu0 0
    %1718 = vmatprep.subr.bf16.mxu0 0
    %1719 = vmatpush1.bf16.msra.mxu0 0
    %1720 = vmatprep.subr.bf16.mxu0 0
    %1721 = vmatpush1.bf16.msra.mxu0 0
    %1722 = vmatprep.subr.bf16.mxu0 0
    %1723 = vmatpush1.bf16.msra.mxu0 0
    %1724 = vmatprep.subr.bf16.mxu0 0
    %1725 = vmatpush1.bf16.msra.mxu0 0
    %1726 = vmatprep.subr.bf16.mxu0 0
    %1727 = vmatpush1.bf16.msra.mxu0 0
    %1728 = vmatprep.subr.bf16.mxu0 0
    %1729 = vmatpush1.bf16.msra.mxu0 0
    %1730 = vmatprep.subr.bf16.mxu0 0
    %1731 = vmatpush1.bf16.msra.mxu0 0
    %1732 = vmatprep.subr.bf16.mxu0 0
    %1733 = vmatpush1.bf16.msra.mxu0 0
    %1734 = vmatprep.mubr.bf16.mxu0 0
    %1735 = vmatmul.mubr.bf16.gmra.mrb[0].mxu0 %v844
    %v1736 = vpop.f32.mrb[0].mxu0
    %v1737 = vadd.f32 %v1696, %v1736
    %v1738 = vpop.f32.mrb[0].mxu0
    %v1739 = vpop.f32.mrb[0].mxu0
    %v1740 = vadd.f32 %v1699, %v1739
    %v1741 = vpop.f32.mrb[0].mxu0
    %1742 = vdwg.mxu0
    %s1743 = scalar_lea.vmem [#allocation10], 5
    %v1744 = vld [vmem:[%s1743] ss:$8 sm:$0xf]
    %v1745 = vld [vmem:[%s1743] ss:$8 sm:$0xf0]
    %v1746 = vor.u32 %v1744, %v1745
    %s1747 = scalar_lea.vmem [#allocation10], 69
    %v1748 = vld [vmem:[%s1747] ss:$8 sm:$0xf]
    %v1749 = vld [vmem:[%s1747] ss:$8 sm:$0x10]
    %v1750 = vor.u32 %v1748, %v1749
    %v1753 = vlaneseq
    %v1754 = vshrl.u32 %v1753, 7
    %v1755 = vsub.s32 0, %v1754
    %v1756 = vrot.slane %v1746, %v1755
    %v1757 = vlaneseq
    %v1758 = vshrl.u32 %v1757, 7
    %v1759 = vsub.s32 1, %v1758
    %v1760 = vrot.slane %v1746, %v1759
    %v1761 = vlaneseq
    %v1762 = vshrl.u32 %v1761, 7
    %v1763 = vsub.s32 2, %v1762
    %v1764 = vrot.slane %v1746, %v1763
    %v1765 = vlaneseq
    %v1766 = vshrl.u32 %v1765, 7
    %v1767 = vsub.s32 3, %v1766
    %v1768 = vrot.slane %v1746, %v1767
    %v1769 = vlaneseq
    %v1770 = vshrl.u32 %v1769, 7
    %v1771 = vsub.s32 4, %v1770
    %v1772 = vrot.slane %v1746, %v1771
    %v1773 = vlaneseq
    %v1774 = vshrl.u32 %v1773, 7
    %v1775 = vsub.s32 5, %v1774
    %v1776 = vrot.slane %v1746, %v1775
    %v1777 = vlaneseq
    %v1778 = vshrl.u32 %v1777, 7
    %v1779 = vsub.s32 6, %v1778
    %v1780 = vrot.slane %v1746, %v1779
    %v1781 = vlaneseq
    %v1782 = vshrl.u32 %v1781, 7
    %v1783 = vsub.s32 7, %v1782
    %v1784 = vrot.slane %v1746, %v1783
    %v1785 = vlaneseq
    %v1786 = vshrl.u32 %v1785, 7
    %v1787 = vsub.s32 0, %v1786
    %v1788 = vrot.slane %v1750, %v1787
    %v1789 = vlaneseq
    %v1790 = vshrl.u32 %v1789, 7
    %v1791 = vsub.s32 1, %v1790
    %v1792 = vrot.slane %v1750, %v1791
    %v1793 = vlaneseq
    %v1794 = vshrl.u32 %v1793, 7
    %v1795 = vsub.s32 2, %v1794
    %v1796 = vrot.slane %v1750, %v1795
    %v1797 = vlaneseq
    %v1798 = vshrl.u32 %v1797, 7
    %v1799 = vsub.s32 3, %v1798
    %v1800 = vrot.slane %v1750, %v1799
    %v1801 = vlaneseq
    %v1802 = vshrl.u32 %v1801, 7
    %v1803 = vsub.s32 4, %v1802
    %v1804 = vrot.slane %v1750, %v1803
    %v1818 = vmul.f32 %v967, %v1756
    %v1819 = vmul.f32 %v969, %v1760
    %v1820 = vmul.f32 %v1096, %v1764
    %v1821 = vmul.f32 %v1098, %v1768
    %v1822 = vmul.f32 %v1225, %v1772
    %v1823 = vmul.f32 %v1227, %v1776
    %v1824 = vmul.f32 %v1354, %v1780
    %v1825 = vmul.f32 %v1356, %v1784
    %v1826 = vmul.f32 %v1483, %v1788
    %v1827 = vmul.f32 %v1485, %v1792
    %v1828 = vmul.f32 %v1612, %v1796
    %v1829 = vmul.f32 %v1614, %v1800
    %v1830 = vmul.f32 %v1737, %v1804
    %v1831 = vmul.f32 %v971, %v1756
    %v1832 = vmul.f32 %v973, %v1760
    %v1833 = vmul.f32 %v1100, %v1764
    %v1834 = vmul.f32 %v1102, %v1768
    %v1835 = vmul.f32 %v1229, %v1772
    %v1836 = vmul.f32 %v1231, %v1776
    %v1837 = vmul.f32 %v1358, %v1780
    %v1838 = vmul.f32 %v1360, %v1784
    %v1839 = vmul.f32 %v1487, %v1788
    %v1840 = vmul.f32 %v1489, %v1792
    %v1841 = vmul.f32 %v1616, %v1796
    %v1842 = vmul.f32 %v1618, %v1800
    %v1843 = vmul.f32 %v1740, %v1804
    %v1844 = vld [vmem:[#allocation10] ss:$8 sm:$0xf]
    %v1845 = vld [vmem:[#allocation10] ss:$8 sm:$0xf0]
    %v1846 = vor.u32 %v1844, %v1845
    %s1847 = scalar_lea.vmem [#allocation10], 64
    %v1848 = vld [vmem:[%s1847] ss:$8 sm:$0xf]
    %v1849 = vld [vmem:[%s1847] ss:$8 sm:$0x10]
    %v1850 = vor.u32 %v1848, %v1849
    %v1853 = vlaneseq
    %v1854 = vshrl.u32 %v1853, 7
    %v1855 = vsub.s32 0, %v1854
    %v1856 = vrot.slane %v1846, %v1855
    %v1857 = vlaneseq
    %v1858 = vshrl.u32 %v1857, 7
    %v1859 = vsub.s32 1, %v1858
    %v1860 = vrot.slane %v1846, %v1859
    %v1861 = vlaneseq
    %v1862 = vshrl.u32 %v1861, 7
    %v1863 = vsub.s32 2, %v1862
    %v1864 = vrot.slane %v1846, %v1863
    %v1865 = vlaneseq
    %v1866 = vshrl.u32 %v1865, 7
    %v1867 = vsub.s32 3, %v1866
    %v1868 = vrot.slane %v1846, %v1867
    %v1869 = vlaneseq
    %v1870 = vshrl.u32 %v1869, 7
    %v1871 = vsub.s32 4, %v1870
    %v1872 = vrot.slane %v1846, %v1871
    %v1873 = vlaneseq
    %v1874 = vshrl.u32 %v1873, 7
    %v1875 = vsub.s32 5, %v1874
    %v1876 = vrot.slane %v1846, %v1875
    %v1877 = vlaneseq
    %v1878 = vshrl.u32 %v1877, 7
    %v1879 = vsub.s32 6, %v1878
    %v1880 = vrot.slane %v1846, %v1879
    %v1881 = vlaneseq
    %v1882 = vshrl.u32 %v1881, 7
    %v1883 = vsub.s32 7, %v1882
    %v1884 = vrot.slane %v1846, %v1883
    %v1885 = vlaneseq
    %v1886 = vshrl.u32 %v1885, 7
    %v1887 = vsub.s32 0, %v1886
    %v1888 = vrot.slane %v1850, %v1887
    %v1889 = vlaneseq
    %v1890 = vshrl.u32 %v1889, 7
    %v1891 = vsub.s32 1, %v1890
    %v1892 = vrot.slane %v1850, %v1891
    %v1893 = vlaneseq
    %v1894 = vshrl.u32 %v1893, 7
    %v1895 = vsub.s32 2, %v1894
    %v1896 = vrot.slane %v1850, %v1895
    %v1897 = vlaneseq
    %v1898 = vshrl.u32 %v1897, 7
    %v1899 = vsub.s32 3, %v1898
    %v1900 = vrot.slane %v1850, %v1899
    %v1901 = vlaneseq
    %v1902 = vshrl.u32 %v1901, 7
    %v1903 = vsub.s32 4, %v1902
    %v1904 = vrot.slane %v1850, %v1903
    %v1918 = vadd.f32 %v1818, %v1856
    %v1919 = vadd.f32 %v1819, %v1860
    %v1920 = vadd.f32 %v1820, %v1864
    %v1921 = vadd.f32 %v1821, %v1868
    %v1922 = vadd.f32 %v1822, %v1872
    %v1923 = vadd.f32 %v1823, %v1876
    %v1924 = vadd.f32 %v1824, %v1880
    %v1925 = vadd.f32 %v1825, %v1884
    %v1926 = vadd.f32 %v1826, %v1888
    %v1927 = vadd.f32 %v1827, %v1892
    %v1928 = vadd.f32 %v1828, %v1896
    %v1929 = vadd.f32 %v1829, %v1900
    %v1930 = vadd.f32 %v1830, %v1904
    %v1931 = vadd.f32 %v1831, %v1856
    %v1932 = vadd.f32 %v1832, %v1860
    %v1933 = vadd.f32 %v1833, %v1864
    %v1934 = vadd.f32 %v1834, %v1868
    %v1935 = vadd.f32 %v1835, %v1872
    %v1936 = vadd.f32 %v1836, %v1876
    %v1937 = vadd.f32 %v1837, %v1880
    %v1938 = vadd.f32 %v1838, %v1884
    %v1939 = vadd.f32 %v1839, %v1888
    %v1940 = vadd.f32 %v1840, %v1892
    %v1941 = vadd.f32 %v1841, %v1896
    %v1942 = vadd.f32 %v1842, %v1900
    %v1943 = vadd.f32 %v1843, %v1904
    %v1944 = vand.u32 2147483647, %v1918
    %v1945 = vand.u32 2147483647, %v1919
    %v1946 = vand.u32 2147483647, %v1920
    %v1947 = vand.u32 2147483647, %v1921
    %v1948 = vand.u32 2147483647, %v1922
    %v1949 = vand.u32 2147483647, %v1923
    %v1950 = vand.u32 2147483647, %v1924
    %v1951 = vand.u32 2147483647, %v1925
    %v1952 = vand.u32 2147483647, %v1926
    %v1953 = vand.u32 2147483647, %v1927
    %v1954 = vand.u32 2147483647, %v1928
    %v1955 = vand.u32 2147483647, %v1929
    %v1956 = vand.u32 2147483647, %v1930
    %v1957 = vand.u32 2147483647, %v1931
    %v1958 = vand.u32 2147483647, %v1932
    %v1959 = vand.u32 2147483647, %v1933
    %v1960 = vand.u32 2147483647, %v1934
    %v1961 = vand.u32 2147483647, %v1935
    %v1962 = vand.u32 2147483647, %v1936
    %v1963 = vand.u32 2147483647, %v1937
    %v1964 = vand.u32 2147483647, %v1938
    %v1965 = vand.u32 2147483647, %v1939
    %v1966 = vand.u32 2147483647, %v1940
    %v1967 = vand.u32 2147483647, %v1941
    %v1968 = vand.u32 2147483647, %v1942
    %v1969 = vand.u32 2147483647, %v1943
    %vm1970 = vcmp.lt.f32.partialorder %v1944, 0.01
    %vm1971 = vcmp.lt.f32.partialorder %v1945, 0.01
    %vm1972 = vcmp.lt.f32.partialorder %v1946, 0.01
    %vm1973 = vcmp.lt.f32.partialorder %v1947, 0.01
    %vm1974 = vcmp.lt.f32.partialorder %v1948, 0.01
    %vm1975 = vcmp.lt.f32.partialorder %v1949, 0.01
    %vm1976 = vcmp.lt.f32.partialorder %v1950, 0.01
    %vm1977 = vcmp.lt.f32.partialorder %v1951, 0.01
    %vm1978 = vcmp.lt.f32.partialorder %v1952, 0.01
    %vm1979 = vcmp.lt.f32.partialorder %v1953, 0.01
    %vm1980 = vcmp.lt.f32.partialorder %v1954, 0.01
    %vm1981 = vcmp.lt.f32.partialorder %v1955, 0.01
    %vm1982 = vcmp.lt.f32.partialorder %v1956, 0.01
    %vm1983 = vcmp.lt.f32.partialorder %v1957, 0.01
    %vm1984 = vcmp.lt.f32.partialorder %v1958, 0.01
    %vm1985 = vcmp.lt.f32.partialorder %v1959, 0.01
    %vm1986 = vcmp.lt.f32.partialorder %v1960, 0.01
    %vm1987 = vcmp.lt.f32.partialorder %v1961, 0.01
    %vm1988 = vcmp.lt.f32.partialorder %v1962, 0.01
    %vm1989 = vcmp.lt.f32.partialorder %v1963, 0.01
    %vm1990 = vcmp.lt.f32.partialorder %v1964, 0.01
    %vm1991 = vcmp.lt.f32.partialorder %v1965, 0.01
    %vm1992 = vcmp.lt.f32.partialorder %v1966, 0.01
    %vm1993 = vcmp.lt.f32.partialorder %v1967, 0.01
    %vm1994 = vcmp.lt.f32.partialorder %v1968, 0.01
    %vm1995 = vcmp.lt.f32.partialorder %v1969, 0.01
    %v1996 = vmul.f32 %v1918, 0.16666667
    %v1997 = vmul.f32 %v1919, 0.16666667
    %v1998 = vmul.f32 %v1920, 0.16666667
    %v1999 = vmul.f32 %v1921, 0.16666667
    %v2000 = vmul.f32 %v1922, 0.16666667
    %v2001 = vmul.f32 %v1923, 0.16666667
    %v2002 = vmul.f32 %v1924, 0.16666667
    %v2003 = vmul.f32 %v1925, 0.16666667
    %v2004 = vmul.f32 %v1926, 0.16666667
    %v2005 = vmul.f32 %v1927, 0.16666667
    %v2006 = vmul.f32 %v1928, 0.16666667
    %v2007 = vmul.f32 %v1929, 0.16666667
    %v2008 = vmul.f32 %v1930, 0.16666667
    %v2009 = vmul.f32 %v1931, 0.16666667
    %v2010 = vmul.f32 %v1932, 0.16666667
    %v2011 = vmul.f32 %v1933, 0.16666667
    %v2012 = vmul.f32 %v1934, 0.16666667
    %v2013 = vmul.f32 %v1935, 0.16666667
    %v2014 = vmul.f32 %v1936, 0.16666667
    %v2015 = vmul.f32 %v1937, 0.16666667
    %v2016 = vmul.f32 %v1938, 0.16666667
    %v2017 = vmul.f32 %v1939, 0.16666667
    %v2018 = vmul.f32 %v1940, 0.16666667
    %v2019 = vmul.f32 %v1941, 0.16666667
    %v2020 = vmul.f32 %v1942, 0.16666667
    %v2021 = vmul.f32 %v1943, 0.16666667
    %v2022 = vadd.f32 %v1996, 0.5
    %v2023 = vadd.f32 %v1997, 0.5
    %v2024 = vadd.f32 %v1998, 0.5
    %v2025 = vadd.f32 %v1999, 0.5
    %v2026 = vadd.f32 %v2000, 0.5
    %v2027 = vadd.f32 %v2001, 0.5
    %v2028 = vadd.f32 %v2002, 0.5
    %v2029 = vadd.f32 %v2003, 0.5
    %v2030 = vadd.f32 %v2004, 0.5
    %v2031 = vadd.f32 %v2005, 0.5
    %v2032 = vadd.f32 %v2006, 0.5
    %v2033 = vadd.f32 %v2007, 0.5
    %v2034 = vadd.f32 %v2008, 0.5
    %v2035 = vadd.f32 %v2009, 0.5
    %v2036 = vadd.f32 %v2010, 0.5
    %v2037 = vadd.f32 %v2011, 0.5
    %v2038 = vadd.f32 %v2012, 0.5
    %v2039 = vadd.f32 %v2013, 0.5
    %v2040 = vadd.f32 %v2014, 0.5
    %v2041 = vadd.f32 %v2015, 0.5
    %v2042 = vadd.f32 %v2016, 0.5
    %v2043 = vadd.f32 %v2017, 0.5
    %v2044 = vadd.f32 %v2018, 0.5
    %v2045 = vadd.f32 %v2019, 0.5
    %v2046 = vadd.f32 %v2020, 0.5
    %v2047 = vadd.f32 %v2021, 0.5
    %v2048 = vmul.f32 %v1918, %v2022
    %v2049 = vmul.f32 %v1919, %v2023
    %v2050 = vmul.f32 %v1920, %v2024
    %v2051 = vmul.f32 %v1921, %v2025
    %v2052 = vmul.f32 %v1922, %v2026
    %v2053 = vmul.f32 %v1923, %v2027
    %v2054 = vmul.f32 %v1924, %v2028
    %v2055 = vmul.f32 %v1925, %v2029
    %v2056 = vmul.f32 %v1926, %v2030
    %v2057 = vmul.f32 %v1927, %v2031
    %v2058 = vmul.f32 %v1928, %v2032
    %v2059 = vmul.f32 %v1929, %v2033
    %v2060 = vmul.f32 %v1930, %v2034
    %v2061 = vmul.f32 %v1931, %v2035
    %v2062 = vmul.f32 %v1932, %v2036
    %v2063 = vmul.f32 %v1933, %v2037
    %v2064 = vmul.f32 %v1934, %v2038
    %v2065 = vmul.f32 %v1935, %v2039
    %v2066 = vmul.f32 %v1936, %v2040
    %v2067 = vmul.f32 %v1937, %v2041
    %v2068 = vmul.f32 %v1938, %v2042
    %v2069 = vmul.f32 %v1939, %v2043
    %v2070 = vmul.f32 %v1940, %v2044
    %v2071 = vmul.f32 %v1941, %v2045
    %v2072 = vmul.f32 %v1942, %v2046
    %v2073 = vmul.f32 %v1943, %v2047
    %v2074 = vadd.f32 %v2048, 1.0
    %v2075 = vadd.f32 %v2049, 1.0
    %v2076 = vadd.f32 %v2050, 1.0
    %v2077 = vadd.f32 %v2051, 1.0
    %v2078 = vadd.f32 %v2052, 1.0
    %v2079 = vadd.f32 %v2053, 1.0
    %v2080 = vadd.f32 %v2054, 1.0
    %v2081 = vadd.f32 %v2055, 1.0
    %v2082 = vadd.f32 %v2056, 1.0
    %v2083 = vadd.f32 %v2057, 1.0
    %v2084 = vadd.f32 %v2058, 1.0
    %v2085 = vadd.f32 %v2059, 1.0
    %v2086 = vadd.f32 %v2060, 1.0
    %v2087 = vadd.f32 %v2061, 1.0
    %v2088 = vadd.f32 %v2062, 1.0
    %v2089 = vadd.f32 %v2063, 1.0
    %v2090 = vadd.f32 %v2064, 1.0
    %v2091 = vadd.f32 %v2065, 1.0
    %v2092 = vadd.f32 %v2066, 1.0
    %v2093 = vadd.f32 %v2067, 1.0
    %v2094 = vadd.f32 %v2068, 1.0
    %v2095 = vadd.f32 %v2069, 1.0
    %v2096 = vadd.f32 %v2070, 1.0
    %v2097 = vadd.f32 %v2071, 1.0
    %v2098 = vadd.f32 %v2072, 1.0
    %v2099 = vadd.f32 %v2073, 1.0
    %v2100 = vmul.f32 %v1918, %v2074
    %v2101 = vmul.f32 %v1919, %v2075
    %v2102 = vmul.f32 %v1920, %v2076
    %v2103 = vmul.f32 %v1921, %v2077
    %v2104 = vmul.f32 %v1922, %v2078
    %v2105 = vmul.f32 %v1923, %v2079
    %v2106 = vmul.f32 %v1924, %v2080
    %v2107 = vmul.f32 %v1925, %v2081
    %v2108 = vmul.f32 %v1926, %v2082
    %v2109 = vmul.f32 %v1927, %v2083
    %v2110 = vmul.f32 %v1928, %v2084
    %v2111 = vmul.f32 %v1929, %v2085
    %v2112 = vmul.f32 %v1930, %v2086
    %v2113 = vmul.f32 %v1931, %v2087
    %v2114 = vmul.f32 %v1932, %v2088
    %v2115 = vmul.f32 %v1933, %v2089
    %v2116 = vmul.f32 %v1934, %v2090
    %v2117 = vmul.f32 %v1935, %v2091
    %v2118 = vmul.f32 %v1936, %v2092
    %v2119 = vmul.f32 %v1937, %v2093
    %v2120 = vmul.f32 %v1938, %v2094
    %v2121 = vmul.f32 %v1939, %v2095
    %v2122 = vmul.f32 %v1940, %v2096
    %v2123 = vmul.f32 %v1941, %v2097
    %v2124 = vmul.f32 %v1942, %v2098
    %v2125 = vmul.f32 %v1943, %v2099
    %v2126 = vmul.f32 %v1918, 1.442695
    %v2127 = vpow.pop %v2126
    %v2128 = vmul.f32 %v1919, 1.442695
    %v2129 = vpow.pop %v2128
    %v2130 = vmul.f32 %v1920, 1.442695
    %v2131 = vpow.pop %v2130
    %v2132 = vmul.f32 %v1921, 1.442695
    %v2133 = vpow.pop %v2132
    %v2134 = vmul.f32 %v1922, 1.442695
    %v2135 = vpow.pop %v2134
    %v2136 = vmul.f32 %v1923, 1.442695
    %v2137 = vpow.pop %v2136
    %v2138 = vmul.f32 %v1924, 1.442695
    %v2139 = vpow.pop %v2138
    %v2140 = vmul.f32 %v1925, 1.442695
    %v2141 = vpow.pop %v2140
    %v2142 = vmul.f32 %v1926, 1.442695
    %v2143 = vpow.pop %v2142
    %v2144 = vmul.f32 %v1927, 1.442695
    %v2145 = vpow.pop %v2144
    %v2146 = vmul.f32 %v1928, 1.442695
    %v2147 = vpow.pop %v2146
    %v2148 = vmul.f32 %v1929, 1.442695
    %v2149 = vpow.pop %v2148
    %v2150 = vmul.f32 %v1930, 1.442695
    %v2151 = vpow.pop %v2150
    %v2152 = vmul.f32 %v1931, 1.442695
    %v2153 = vpow.pop %v2152
    %v2154 = vmul.f32 %v1932, 1.442695
    %v2155 = vpow.pop %v2154
    %v2156 = vmul.f32 %v1933, 1.442695
    %v2157 = vpow.pop %v2156
    %v2158 = vmul.f32 %v1934, 1.442695
    %v2159 = vpow.pop %v2158
    %v2160 = vmul.f32 %v1935, 1.442695
    %v2161 = vpow.pop %v2160
    %v2162 = vmul.f32 %v1936, 1.442695
    %v2163 = vpow.pop %v2162
    %v2164 = vmul.f32 %v1937, 1.442695
    %v2165 = vpow.pop %v2164
    %v2166 = vmul.f32 %v1938, 1.442695
    %v2167 = vpow.pop %v2166
    %v2168 = vmul.f32 %v1939, 1.442695
    %v2169 = vpow.pop %v2168
    %v2170 = vmul.f32 %v1940, 1.442695
    %v2171 = vpow.pop %v2170
    %v2172 = vmul.f32 %v1941, 1.442695
    %v2173 = vpow.pop %v2172
    %v2174 = vmul.f32 %v1942, 1.442695
    %v2175 = vpow.pop %v2174
    %v2176 = vmul.f32 %v1943, 1.442695
    %v2177 = vpow.pop %v2176
    %v2178 = vsub.f32 %v2127, 1.0
    %v2179 = vsub.f32 %v2129, 1.0
    %v2180 = vsub.f32 %v2131, 1.0
    %v2181 = vsub.f32 %v2133, 1.0
    %v2182 = vsub.f32 %v2135, 1.0
    %v2183 = vsub.f32 %v2137, 1.0
    %v2184 = vsub.f32 %v2139, 1.0
    %v2185 = vsub.f32 %v2141, 1.0
    %v2186 = vsub.f32 %v2143, 1.0
    %v2187 = vsub.f32 %v2145, 1.0
    %v2188 = vsub.f32 %v2147, 1.0
    %v2189 = vsub.f32 %v2149, 1.0
    %v2190 = vsub.f32 %v2151, 1.0
    %v2191 = vsub.f32 %v2153, 1.0
    %v2192 = vsub.f32 %v2155, 1.0
    %v2193 = vsub.f32 %v2157, 1.0
    %v2194 = vsub.f32 %v2159, 1.0
    %v2195 = vsub.f32 %v2161, 1.0
    %v2196 = vsub.f32 %v2163, 1.0
    %v2197 = vsub.f32 %v2165, 1.0
    %v2198 = vsub.f32 %v2167, 1.0
    %v2199 = vsub.f32 %v2169, 1.0
    %v2200 = vsub.f32 %v2171, 1.0
    %v2201 = vsub.f32 %v2173, 1.0
    %v2202 = vsub.f32 %v2175, 1.0
    %v2203 = vsub.f32 %v2177, 1.0
    %v2204 = vsel %vm1970, %v2100, %v2178
    %v2205 = vsel %vm1971, %v2101, %v2179
    %v2206 = vsel %vm1972, %v2102, %v2180
    %v2207 = vsel %vm1973, %v2103, %v2181
    %v2208 = vsel %vm1974, %v2104, %v2182
    %v2209 = vsel %vm1975, %v2105, %v2183
    %v2210 = vsel %vm1976, %v2106, %v2184
    %v2211 = vsel %vm1977, %v2107, %v2185
    %v2212 = vsel %vm1978, %v2108, %v2186
    %v2213 = vsel %vm1979, %v2109, %v2187
    %v2214 = vsel %vm1980, %v2110, %v2188
    %v2215 = vsel %vm1981, %v2111, %v2189
    %v2216 = vsel %vm1982, %v2112, %v2190
    %v2217 = vsel %vm1983, %v2113, %v2191
    %v2218 = vsel %vm1984, %v2114, %v2192
    %v2219 = vsel %vm1985, %v2115, %v2193
    %v2220 = vsel %vm1986, %v2116, %v2194
    %v2221 = vsel %vm1987, %v2117, %v2195
    %v2222 = vsel %vm1988, %v2118, %v2196
    %v2223 = vsel %vm1989, %v2119, %v2197
    %v2224 = vsel %vm1990, %v2120, %v2198
    %v2225 = vsel %vm1991, %v2121, %v2199
    %v2226 = vsel %vm1992, %v2122, %v2200
    %v2227 = vsel %vm1993, %v2123, %v2201
    %v2228 = vsel %vm1994, %v2124, %v2202
    %v2229 = vsel %vm1995, %v2125, %v2203
    %vm2230 = vcmp.gt.f32.partialorder %v1918, 0.0
    %vm2231 = vcmp.gt.f32.partialorder %v1919, 0.0
    %vm2232 = vcmp.gt.f32.partialorder %v1920, 0.0
    %vm2233 = vcmp.gt.f32.partialorder %v1921, 0.0
    %vm2234 = vcmp.gt.f32.partialorder %v1922, 0.0
    %vm2235 = vcmp.gt.f32.partialorder %v1923, 0.0
    %vm2236 = vcmp.gt.f32.partialorder %v1924, 0.0
    %vm2237 = vcmp.gt.f32.partialorder %v1925, 0.0
    %vm2238 = vcmp.gt.f32.partialorder %v1926, 0.0
    %vm2239 = vcmp.gt.f32.partialorder %v1927, 0.0
    %vm2240 = vcmp.gt.f32.partialorder %v1928, 0.0
    %vm2241 = vcmp.gt.f32.partialorder %v1929, 0.0
    %vm2242 = vcmp.gt.f32.partialorder %v1930, 0.0
    %vm2243 = vcmp.gt.f32.partialorder %v1931, 0.0
    %vm2244 = vcmp.gt.f32.partialorder %v1932, 0.0
    %vm2245 = vcmp.gt.f32.partialorder %v1933, 0.0
    %vm2246 = vcmp.gt.f32.partialorder %v1934, 0.0
    %vm2247 = vcmp.gt.f32.partialorder %v1935, 0.0
    %vm2248 = vcmp.gt.f32.partialorder %v1936, 0.0
    %vm2249 = vcmp.gt.f32.partialorder %v1937, 0.0
    %vm2250 = vcmp.gt.f32.partialorder %v1938, 0.0
    %vm2251 = vcmp.gt.f32.partialorder %v1939, 0.0
    %vm2252 = vcmp.gt.f32.partialorder %v1940, 0.0
    %vm2253 = vcmp.gt.f32.partialorder %v1941, 0.0
    %vm2254 = vcmp.gt.f32.partialorder %v1942, 0.0
    %vm2255 = vcmp.gt.f32.partialorder %v1943, 0.0
    %v2256 = vsel %vm2230, %v1918, %v2204
    %v2257 = vsel %vm2231, %v1919, %v2205
    %v2258 = vsel %vm2232, %v1920, %v2206
    %v2259 = vsel %vm2233, %v1921, %v2207
    %v2260 = vsel %vm2234, %v1922, %v2208
    %v2261 = vsel %vm2235, %v1923, %v2209
    %v2262 = vsel %vm2236, %v1924, %v2210
    %v2263 = vsel %vm2237, %v1925, %v2211
    %v2264 = vsel %vm2238, %v1926, %v2212
    %v2265 = vsel %vm2239, %v1927, %v2213
    %v2266 = vsel %vm2240, %v1928, %v2214
    %v2267 = vsel %vm2241, %v1929, %v2215
    %v2268 = vsel %vm2242, %v1930, %v2216
    %v2269 = vsel %vm2243, %v1931, %v2217
    %v2270 = vsel %vm2244, %v1932, %v2218
    %v2271 = vsel %vm2245, %v1933, %v2219
    %v2272 = vsel %vm2246, %v1934, %v2220
    %v2273 = vsel %vm2247, %v1935, %v2221
    %v2274 = vsel %vm2248, %v1936, %v2222
    %v2275 = vsel %vm2249, %v1937, %v2223
    %v2276 = vsel %vm2250, %v1938, %v2224
    %v2277 = vsel %vm2251, %v1939, %v2225
    %v2278 = vsel %vm2252, %v1940, %v2226
    %v2279 = vsel %vm2253, %v1941, %v2227
    %v2280 = vsel %vm2254, %v1942, %v2228
    %v2281 = vsel %vm2255, %v1943, %v2229
    %v2282 = vpack.c.bf16 %v2269, %v2256
    %v2283 = vpack.c.bf16 %v2270, %v2257
    %v2284 = vpack.c.bf16 %v2271, %v2258
    %v2285 = vpack.c.bf16 %v2272, %v2259
    %v2286 = vpack.c.bf16 %v2273, %v2260
    %v2287 = vpack.c.bf16 %v2274, %v2261
    %v2288 = vpack.c.bf16 %v2275, %v2262
    %v2289 = vpack.c.bf16 %v2276, %v2263
    %v2290 = vpack.c.bf16 %v2277, %v2264
    %v2291 = vpack.c.bf16 %v2278, %v2265
    %v2292 = vpack.c.bf16 %v2279, %v2266
    %v2293 = vpack.c.bf16 %v2280, %v2267
    %v2294 = vpack.c.bf16 %v2281, %v2268
    %v2295 = vld [vmem:[#allocation4] sm:$0xff]
    %v2296 = vld [vmem:[#allocation4 + $0x8] sm:$0xff]
    %v2297 = vld [vmem:[#allocation4 + $0x10] sm:$0xff]
    %v2298 = vld [vmem:[#allocation4 + $0x18] sm:$0xff]
    %v2299 = vld [vmem:[#allocation4 + $0x20] sm:$0xff]
    %v2300 = vld [vmem:[#allocation4 + $0x28] sm:$0xff]
    %v2301 = vld [vmem:[#allocation4 + $0x30] sm:$0xff]
    %v2302 = vld [vmem:[#allocation4 + $0x38] sm:$0xff]
    %v2303 = vld [vmem:[#allocation4 + $0x40] sm:$0xff]
    %v2304 = vld [vmem:[#allocation4 + $0x48] sm:$0xff]
    %v2305 = vld [vmem:[#allocation4 + $0x50] sm:$0xff]
    %v2306 = vld [vmem:[#allocation4 + $0x58] sm:$0xff]
    %v2307 = vld [vmem:[#allocation4 + $0x60] sm:$0xff]
    %v2308 = vld [vmem:[#allocation4 + $0x68] sm:$0xff]
    %v2309 = vld [vmem:[#allocation4 + $0x70] sm:$0xff]
    %v2310 = vld [vmem:[#allocation4 + $0x78] sm:$0xff]
    %v2311 = vld [vmem:[#allocation4 + $0x80] sm:$0xff]
    %v2312 = vld [vmem:[#allocation4 + $0x88] sm:$0xff]
    %v2313 = vld [vmem:[#allocation4 + $0x90] sm:$0xff]
    %v2314 = vld [vmem:[#allocation4 + $0x98] sm:$0xff]
    %v2315 = vld [vmem:[#allocation4 + $0xa0] sm:$0xff]
    %v2316 = vld [vmem:[#allocation4 + $0xa8] sm:$0xff]
    %v2317 = vld [vmem:[#allocation4 + $0xb0] sm:$0xff]
    %v2318 = vld [vmem:[#allocation4 + $0xb8] sm:$0xff]
    %v2319 = vld [vmem:[#allocation4 + $0xc0] sm:$0xff]
    %v2320 = vld [vmem:[#allocation4 + $0xc8] sm:$0xff]
    %v2321 = vld [vmem:[#allocation4 + $0xd0] sm:$0xff]
    %v2322 = vld [vmem:[#allocation4 + $0xd8] sm:$0xff]
    %v2323 = vld [vmem:[#allocation4 + $0xe0] sm:$0xff]
    %v2324 = vld [vmem:[#allocation4 + $0xe8] sm:$0xff]
    %v2325 = vld [vmem:[#allocation4 + $0xf0] sm:$0xff]
    %v2326 = vld [vmem:[#allocation4 + $0xf8] sm:$0xff]
    %v2327 = vld [vmem:[#allocation4 + $0x100] sm:$0xff]
    %v2328 = vld [vmem:[#allocation4 + $0x108] sm:$0xff]
    %v2329 = vld [vmem:[#allocation4 + $0x110] sm:$0xff]
    %v2330 = vld [vmem:[#allocation4 + $0x118] sm:$0xff]
    %v2331 = vld [vmem:[#allocation4 + $0x120] sm:$0xff]
    %v2332 = vld [vmem:[#allocation4 + $0x128] sm:$0xff]
    %v2333 = vld [vmem:[#allocation4 + $0x130] sm:$0xff]
    %v2334 = vld [vmem:[#allocation4 + $0x138] sm:$0xff]
    %v2335 = vld [vmem:[#allocation4 + $0x140] sm:$0xff]
    %v2336 = vld [vmem:[#allocation4 + $0x148] sm:$0xff]
    %v2337 = vld [vmem:[#allocation4 + $0x150] sm:$0xff]
    %v2338 = vld [vmem:[#allocation4 + $0x158] sm:$0xff]
    %v2339 = vld [vmem:[#allocation4 + $0x160] sm:$0xff]
    %v2340 = vld [vmem:[#allocation4 + $0x168] sm:$0xff]
    %v2341 = vld [vmem:[#allocation4 + $0x170] sm:$0xff]
    %v2342 = vld [vmem:[#allocation4 + $0x178] sm:$0xff]
    %v2343 = vld [vmem:[#allocation4 + $0x180] sm:$0xff]
    %v2344 = vld [vmem:[#allocation4 + $0x188] sm:$0xff]
    %v2345 = vld [vmem:[#allocation4 + $0x190] sm:$0xff]
    %v2346 = vld [vmem:[#allocation4 + $0x198] sm:$0xff]
    %v2347 = vld [vmem:[#allocation4 + $0x1a0] sm:$0xff]
    %v2348 = vld [vmem:[#allocation4 + $0x1a8] sm:$0xff]
    %v2349 = vld [vmem:[#allocation4 + $0x1b0] sm:$0xff]
    %v2350 = vld [vmem:[#allocation4 + $0x1b8] sm:$0xff]
    %v2351 = vld [vmem:[#allocation4 + $0x1c0] sm:$0xff]
    %v2352 = vld [vmem:[#allocation4 + $0x1c8] sm:$0xff]
    %v2353 = vld [vmem:[#allocation4 + $0x1d0] sm:$0xff]
    %v2354 = vld [vmem:[#allocation4 + $0x1d8] sm:$0xff]
    %v2355 = vld [vmem:[#allocation4 + $0x1e0] sm:$0xff]
    %v2356 = vld [vmem:[#allocation4 + $0x1e8] sm:$0xff]
    %v2357 = vld [vmem:[#allocation4 + $0x1f0] sm:$0xff]
    %v2358 = vld [vmem:[#allocation4 + $0x1f8] sm:$0xff]
    %v2359 = vld [vmem:[#allocation4 + $0x200] sm:$0xff]
    %v2360 = vld [vmem:[#allocation4 + $0x208] sm:$0xff]
    %v2361 = vld [vmem:[#allocation4 + $0x210] sm:$0xff]
    %v2362 = vld [vmem:[#allocation4 + $0x218] sm:$0xff]
    %v2363 = vld [vmem:[#allocation4 + $0x220] sm:$0xff]
    %v2364 = vld [vmem:[#allocation4 + $0x228] sm:$0xff]
    %v2365 = vld [vmem:[#allocation4 + $0x230] sm:$0xff]
    %v2366 = vld [vmem:[#allocation4 + $0x238] sm:$0xff]
    %v2367 = vld [vmem:[#allocation4 + $0x240] sm:$0xff]
    %v2368 = vld [vmem:[#allocation4 + $0x248] sm:$0xff]
    %v2369 = vld [vmem:[#allocation4 + $0x250] sm:$0xff]
    %v2370 = vld [vmem:[#allocation4 + $0x258] sm:$0xff]
    %v2371 = vld [vmem:[#allocation4 + $0x260] sm:$0xff]
    %v2372 = vld [vmem:[#allocation4 + $0x268] sm:$0xff]
    %v2373 = vld [vmem:[#allocation4 + $0x270] sm:$0xff]
    %v2374 = vld [vmem:[#allocation4 + $0x278] sm:$0xff]
    %v2375 = vld [vmem:[#allocation4 + $0x280] sm:$0xff]
    %v2376 = vld [vmem:[#allocation4 + $0x288] sm:$0xff]
    %v2377 = vld [vmem:[#allocation4 + $0x290] sm:$0xff]
    %v2378 = vld [vmem:[#allocation4 + $0x298] sm:$0xff]
    %v2379 = vld [vmem:[#allocation4 + $0x2a0] sm:$0xff]
    %v2380 = vld [vmem:[#allocation4 + $0x2a8] sm:$0xff]
    %v2381 = vld [vmem:[#allocation4 + $0x2b0] sm:$0xff]
    %v2382 = vld [vmem:[#allocation4 + $0x2b8] sm:$0xff]
    %v2383 = vld [vmem:[#allocation4 + $0x2c0] sm:$0xff]
    %v2384 = vld [vmem:[#allocation4 + $0x2c8] sm:$0xff]
    %v2385 = vld [vmem:[#allocation4 + $0x2d0] sm:$0xff]
    %v2386 = vld [vmem:[#allocation4 + $0x2d8] sm:$0xff]
    %v2387 = vld [vmem:[#allocation4 + $0x2e0] sm:$0xff]
    %v2388 = vld [vmem:[#allocation4 + $0x2e8] sm:$0xff]
    %v2389 = vld [vmem:[#allocation4 + $0x2f0] sm:$0xff]
    %v2390 = vld [vmem:[#allocation4 + $0x2f8] sm:$0xff]
    %v2391 = vld [vmem:[#allocation4 + $0x300] sm:$0xff]
    %v2392 = vld [vmem:[#allocation4 + $0x308] sm:$0xff]
    %v2393 = vld [vmem:[#allocation4 + $0x310] sm:$0xff]
    %v2394 = vld [vmem:[#allocation4 + $0x318] sm:$0xff]
    %v2395 = vld [vmem:[#allocation4 + $0x320] sm:$0xff]
    %v2396 = vld [vmem:[#allocation4 + $0x328] sm:$0xff]
    %v2397 = vld [vmem:[#allocation4 + $0x330] sm:$0xff]
    %v2398 = vld [vmem:[#allocation4 + $0x338] sm:$0xff]
    %v2399 = vld [vmem:[#allocation4 + $0x340] sm:$0xff]
    %v2400 = vld [vmem:[#allocation4 + $0x348] sm:$0xff]
    %v2401 = vld [vmem:[#allocation4 + $0x350] sm:$0xff]
    %v2402 = vld [vmem:[#allocation4 + $0x358] sm:$0xff]
    %v2403 = vld [vmem:[#allocation4 + $0x360] sm:$0xff]
    %v2404 = vld [vmem:[#allocation4 + $0x368] sm:$0xff]
    %v2405 = vld [vmem:[#allocation4 + $0x370] sm:$0xff]
    %v2406 = vld [vmem:[#allocation4 + $0x378] sm:$0xff]
    %v2407 = vld [vmem:[#allocation4 + $0x380] sm:$0xff]
    %v2408 = vld [vmem:[#allocation4 + $0x388] sm:$0xff]
    %v2409 = vld [vmem:[#allocation4 + $0x390] sm:$0xff]
    %v2410 = vld [vmem:[#allocation4 + $0x398] sm:$0xff]
    %v2411 = vld [vmem:[#allocation4 + $0x3a0] sm:$0xff]
    %v2412 = vld [vmem:[#allocation4 + $0x3a8] sm:$0xff]
    %v2413 = vld [vmem:[#allocation4 + $0x3b0] sm:$0xff]
    %v2414 = vld [vmem:[#allocation4 + $0x3b8] sm:$0xff]
    %v2415 = vld [vmem:[#allocation4 + $0x3c0] sm:$0xff]
    %v2416 = vld [vmem:[#allocation4 + $0x3c8] sm:$0xff]
    %v2417 = vld [vmem:[#allocation4 + $0x3d0] sm:$0xff]
    %v2418 = vld [vmem:[#allocation4 + $0x3d8] sm:$0xff]
    %v2419 = vld [vmem:[#allocation4 + $0x3e0] sm:$0xff]
    %v2420 = vld [vmem:[#allocation4 + $0x3e8] sm:$0xff]
    %v2421 = vld [vmem:[#allocation4 + $0x3f0] sm:$0xff]
    %v2422 = vld [vmem:[#allocation4 + $0x3f8] sm:$0xff]
    %v2423 = vld [vmem:[#allocation4 + $0x400] sm:$0xff]
    %v2424 = vld [vmem:[#allocation4 + $0x408] sm:$0xff]
    %v2425 = vld [vmem:[#allocation4 + $0x410] sm:$0xff]
    %v2426 = vld [vmem:[#allocation4 + $0x418] sm:$0xff]
    %v2427 = vld [vmem:[#allocation4 + $0x420] sm:$0xff]
    %v2428 = vld [vmem:[#allocation4 + $0x428] sm:$0xff]
    %v2429 = vld [vmem:[#allocation4 + $0x430] sm:$0xff]
    %v2430 = vld [vmem:[#allocation4 + $0x438] sm:$0xff]
    %v2431 = vld [vmem:[#allocation4 + $0x440] sm:$0xff]
    %v2432 = vld [vmem:[#allocation4 + $0x448] sm:$0xff]
    %v2433 = vld [vmem:[#allocation4 + $0x450] sm:$0xff]
    %v2434 = vld [vmem:[#allocation4 + $0x458] sm:$0xff]
    %v2435 = vld [vmem:[#allocation4 + $0x460] sm:$0xff]
    %v2436 = vld [vmem:[#allocation4 + $0x468] sm:$0xff]
    %v2437 = vld [vmem:[#allocation4 + $0x470] sm:$0xff]
    %v2438 = vld [vmem:[#allocation4 + $0x478] sm:$0xff]
    %v2439 = vld [vmem:[#allocation4 + $0x480] sm:$0xff]
    %v2440 = vld [vmem:[#allocation4 + $0x488] sm:$0xff]
    %v2441 = vld [vmem:[#allocation4 + $0x490] sm:$0xff]
    %v2442 = vld [vmem:[#allocation4 + $0x498] sm:$0xff]
    %v2443 = vld [vmem:[#allocation4 + $0x4a0] sm:$0xff]
    %v2444 = vld [vmem:[#allocation4 + $0x4a8] sm:$0xff]
    %v2445 = vld [vmem:[#allocation4 + $0x4b0] sm:$0xff]
    %v2446 = vld [vmem:[#allocation4 + $0x4b8] sm:$0xff]
    %v2447 = vld [vmem:[#allocation4 + $0x4c0] sm:$0xff]
    %v2448 = vld [vmem:[#allocation4 + $0x4c8] sm:$0xff]
    %v2449 = vld [vmem:[#allocation4 + $0x4d0] sm:$0xff]
    %v2450 = vld [vmem:[#allocation4 + $0x4d8] sm:$0xff]
    %v2451 = vld [vmem:[#allocation4 + $0x4e0] sm:$0xff]
    %v2452 = vld [vmem:[#allocation4 + $0x4e8] sm:$0xff]
    %v2453 = vld [vmem:[#allocation4 + $0x4f0] sm:$0xff]
    %v2454 = vld [vmem:[#allocation4 + $0x4f8] sm:$0xff]
    %v2455 = vld [vmem:[#allocation4 + $0x500] sm:$0xff]
    %v2456 = vld [vmem:[#allocation4 + $0x508] sm:$0xff]
    %v2457 = vld [vmem:[#allocation4 + $0x510] sm:$0xff]
    %v2458 = vld [vmem:[#allocation4 + $0x518] sm:$0xff]
    %v2459 = vld [vmem:[#allocation4 + $0x520] sm:$0xff]
    %v2460 = vld [vmem:[#allocation4 + $0x528] sm:$0xff]
    %v2461 = vld [vmem:[#allocation4 + $0x530] sm:$0xff]
    %v2462 = vld [vmem:[#allocation4 + $0x538] sm:$0xff]
    %v2463 = vld [vmem:[#allocation4 + $0x540] sm:$0xff]
    %v2464 = vld [vmem:[#allocation4 + $0x548] sm:$0xff]
    %v2465 = vld [vmem:[#allocation4 + $0x550] sm:$0xff]
    %v2466 = vld [vmem:[#allocation4 + $0x558] sm:$0xff]
    %v2467 = vld [vmem:[#allocation4 + $0x560] sm:$0xff]
    %v2468 = vld [vmem:[#allocation4 + $0x568] sm:$0xff]
    %v2469 = vld [vmem:[#allocation4 + $0x570] sm:$0xff]
    %v2470 = vld [vmem:[#allocation4 + $0x578] sm:$0xff]
    %v2471 = vld [vmem:[#allocation4 + $0x580] sm:$0xff]
    %v2472 = vld [vmem:[#allocation4 + $0x588] sm:$0xff]
    %v2473 = vld [vmem:[#allocation4 + $0x590] sm:$0xff]
    %v2474 = vld [vmem:[#allocation4 + $0x598] sm:$0xff]
    %v2475 = vld [vmem:[#allocation4 + $0x5a0] sm:$0xff]
    %v2476 = vld [vmem:[#allocation4 + $0x5a8] sm:$0xff]
    %v2477 = vld [vmem:[#allocation4 + $0x5b0] sm:$0xff]
    %v2478 = vld [vmem:[#allocation4 + $0x5b8] sm:$0xff]
    %v2479 = vld [vmem:[#allocation4 + $0x5c0] sm:$0xff]
    %v2480 = vld [vmem:[#allocation4 + $0x5c8] sm:$0xff]
    %v2481 = vld [vmem:[#allocation4 + $0x5d0] sm:$0xff]
    %v2482 = vld [vmem:[#allocation4 + $0x5d8] sm:$0xff]
    %v2483 = vld [vmem:[#allocation4 + $0x5e0] sm:$0xff]
    %v2484 = vld [vmem:[#allocation4 + $0x5e8] sm:$0xff]
    %v2485 = vld [vmem:[#allocation4 + $0x5f0] sm:$0xff]
    %v2486 = vld [vmem:[#allocation4 + $0x5f8] sm:$0xff]
    %v2487 = vld [vmem:[#allocation4 + $0x600] sm:$0xff]
    %v2488 = vld [vmem:[#allocation4 + $0x608] sm:$0xff]
    %v2489 = vld [vmem:[#allocation4 + $0x610] sm:$0xff]
    %v2490 = vld [vmem:[#allocation4 + $0x618] sm:$0xff]
    %v2491 = vld [vmem:[#allocation4 + $0x620] sm:$0xff]
    %v2492 = vld [vmem:[#allocation4 + $0x628] sm:$0xff]
    %v2493 = vld [vmem:[#allocation4 + $0x630] sm:$0xff]
    %v2494 = vld [vmem:[#allocation4 + $0x638] sm:$0xff]
    %v2495 = vld [vmem:[#allocation4 + $0x640] sm:$0xff]
    %v2496 = vld [vmem:[#allocation4 + $0x648] sm:$0xff]
    %v2497 = vld [vmem:[#allocation4 + $0x650] sm:$0xff]
    %v2498 = vld [vmem:[#allocation4 + $0x658] sm:$0xff]
    %v2499 = vld [vmem:[#allocation4 + $0x660] sm:$0xff]
    %v2500 = vld [vmem:[#allocation4 + $0x668] sm:$0xff]
    %v2501 = vld [vmem:[#allocation4 + $0x670] sm:$0xff]
    %v2502 = vld [vmem:[#allocation4 + $0x678] sm:$0xff]
    %v2503 = vld [vmem:[#allocation4 + $0x680] sm:$0xff]
    %v2504 = vld [vmem:[#allocation4 + $0x688] sm:$0xff]
    %v2505 = vld [vmem:[#allocation4 + $0x690] sm:$0xff]
    %v2506 = vld [vmem:[#allocation4 + $0x698] sm:$0xff]
    %v2507 = vld [vmem:[#allocation4 + $0x6a0] sm:$0xff]
    %v2508 = vld [vmem:[#allocation4 + $0x6a8] sm:$0xff]
    %v2509 = vld [vmem:[#allocation4 + $0x6b0] sm:$0xff]
    %v2510 = vld [vmem:[#allocation4 + $0x6b8] sm:$0xff]
    %v2511 = vld [vmem:[#allocation4 + $0x6c0] sm:$0xff]
    %v2512 = vld [vmem:[#allocation4 + $0x6c8] sm:$0xff]
    %v2513 = vld [vmem:[#allocation4 + $0x6d0] sm:$0xff]
    %v2514 = vld [vmem:[#allocation4 + $0x6d8] sm:$0xff]
    %v2515 = vld [vmem:[#allocation4 + $0x6e0] sm:$0xff]
    %v2516 = vld [vmem:[#allocation4 + $0x6e8] sm:$0xff]
    %v2517 = vld [vmem:[#allocation4 + $0x6f0] sm:$0xff]
    %v2518 = vld [vmem:[#allocation4 + $0x6f8] sm:$0xff]
    %v2519 = vld [vmem:[#allocation4 + $0x700] sm:$0xff]
    %v2520 = vld [vmem:[#allocation4 + $0x708] sm:$0xff]
    %v2521 = vld [vmem:[#allocation4 + $0x710] sm:$0xff]
    %v2522 = vld [vmem:[#allocation4 + $0x718] sm:$0xff]
    %v2523 = vld [vmem:[#allocation4 + $0x720] sm:$0xff]
    %v2524 = vld [vmem:[#allocation4 + $0x728] sm:$0xff]
    %v2525 = vld [vmem:[#allocation4 + $0x730] sm:$0xff]
    %v2526 = vld [vmem:[#allocation4 + $0x738] sm:$0xff]
    %v2527 = vld [vmem:[#allocation4 + $0x740] sm:$0xff]
    %v2528 = vld [vmem:[#allocation4 + $0x748] sm:$0xff]
    %v2529 = vld [vmem:[#allocation4 + $0x750] sm:$0xff]
    %v2530 = vld [vmem:[#allocation4 + $0x758] sm:$0xff]
    %v2531 = vld [vmem:[#allocation4 + $0x760] sm:$0xff]
    %v2532 = vld [vmem:[#allocation4 + $0x768] sm:$0xff]
    %v2533 = vld [vmem:[#allocation4 + $0x770] sm:$0xff]
    %v2534 = vld [vmem:[#allocation4 + $0x778] sm:$0xff]
    %v2535 = vld [vmem:[#allocation4 + $0x780] sm:$0xff]
    %v2536 = vld [vmem:[#allocation4 + $0x788] sm:$0xff]
    %v2537 = vld [vmem:[#allocation4 + $0x790] sm:$0xff]
    %v2538 = vld [vmem:[#allocation4 + $0x798] sm:$0xff]
    %v2539 = vld [vmem:[#allocation4 + $0x7a0] sm:$0xff]
    %v2540 = vld [vmem:[#allocation4 + $0x7a8] sm:$0xff]
    %v2541 = vld [vmem:[#allocation4 + $0x7b0] sm:$0xff]
    %v2542 = vld [vmem:[#allocation4 + $0x7b8] sm:$0xff]
    %v2543 = vld [vmem:[#allocation4 + $0x7c0] sm:$0xff]
    %v2544 = vld [vmem:[#allocation4 + $0x7c8] sm:$0xff]
    %v2545 = vld [vmem:[#allocation4 + $0x7d0] sm:$0xff]
    %v2546 = vld [vmem:[#allocation4 + $0x7d8] sm:$0xff]
    %v2547 = vld [vmem:[#allocation4 + $0x7e0] sm:$0xff]
    %v2548 = vld [vmem:[#allocation4 + $0x7e8] sm:$0xff]
    %v2549 = vld [vmem:[#allocation4 + $0x7f0] sm:$0xff]
    %v2550 = vld [vmem:[#allocation4 + $0x7f8] sm:$0xff]
    %v2551 = vld [vmem:[#allocation4 + $0x800] sm:$0xff]
    %v2552 = vld [vmem:[#allocation4 + $0x808] sm:$0xff]
    %v2553 = vld [vmem:[#allocation4 + $0x810] sm:$0xff]
    %v2554 = vld [vmem:[#allocation4 + $0x818] sm:$0xff]
    %v2555 = vld [vmem:[#allocation4 + $0x820] sm:$0xff]
    %v2556 = vld [vmem:[#allocation4 + $0x828] sm:$0xff]
    %v2557 = vld [vmem:[#allocation4 + $0x830] sm:$0xff]
    %v2558 = vld [vmem:[#allocation4 + $0x838] sm:$0xff]
    %v2559 = vld [vmem:[#allocation4 + $0x840] sm:$0xff]
    %v2560 = vld [vmem:[#allocation4 + $0x848] sm:$0xff]
    %v2561 = vld [vmem:[#allocation4 + $0x850] sm:$0xff]
    %v2562 = vld [vmem:[#allocation4 + $0x858] sm:$0xff]
    %v2563 = vld [vmem:[#allocation4 + $0x860] sm:$0xff]
    %v2564 = vld [vmem:[#allocation4 + $0x868] sm:$0xff]
    %v2565 = vld [vmem:[#allocation4 + $0x870] sm:$0xff]
    %v2566 = vld [vmem:[#allocation4 + $0x878] sm:$0xff]
    %v2567 = vld [vmem:[#allocation4 + $0x880] sm:$0xff]
    %v2568 = vld [vmem:[#allocation4 + $0x888] sm:$0xff]
    %v2569 = vld [vmem:[#allocation4 + $0x890] sm:$0xff]
    %v2570 = vld [vmem:[#allocation4 + $0x898] sm:$0xff]
    %v2571 = vld [vmem:[#allocation4 + $0x8a0] sm:$0xff]
    %v2572 = vld [vmem:[#allocation4 + $0x8a8] sm:$0xff]
    %v2573 = vld [vmem:[#allocation4 + $0x8b0] sm:$0xff]
    %v2574 = vld [vmem:[#allocation4 + $0x8b8] sm:$0xff]
    %v2575 = vld [vmem:[#allocation4 + $0x8c0] sm:$0xff]
    %v2576 = vld [vmem:[#allocation4 + $0x8c8] sm:$0xff]
    %v2577 = vld [vmem:[#allocation4 + $0x8d0] sm:$0xff]
    %v2578 = vld [vmem:[#allocation4 + $0x8d8] sm:$0xff]
    %v2579 = vld [vmem:[#allocation4 + $0x8e0] sm:$0xff]
    %v2580 = vld [vmem:[#allocation4 + $0x8e8] sm:$0xff]
    %v2581 = vld [vmem:[#allocation4 + $0x8f0] sm:$0xff]
    %v2582 = vld [vmem:[#allocation4 + $0x8f8] sm:$0xff]
    %v2583 = vld [vmem:[#allocation4 + $0x900] sm:$0xff]
    %v2584 = vld [vmem:[#allocation4 + $0x908] sm:$0xff]
    %v2585 = vld [vmem:[#allocation4 + $0x910] sm:$0xff]
    %v2586 = vld [vmem:[#allocation4 + $0x918] sm:$0xff]
    %v2587 = vld [vmem:[#allocation4 + $0x920] sm:$0xff]
    %v2588 = vld [vmem:[#allocation4 + $0x928] sm:$0xff]
    %v2589 = vld [vmem:[#allocation4 + $0x930] sm:$0xff]
    %v2590 = vld [vmem:[#allocation4 + $0x938] sm:$0xff]
    %v2591 = vld [vmem:[#allocation4 + $0x940] sm:$0xff]
    %v2592 = vld [vmem:[#allocation4 + $0x948] sm:$0xff]
    %v2593 = vld [vmem:[#allocation4 + $0x950] sm:$0xff]
    %v2594 = vld [vmem:[#allocation4 + $0x958] sm:$0xff]
    %v2595 = vld [vmem:[#allocation4 + $0x960] sm:$0xff]
    %v2596 = vld [vmem:[#allocation4 + $0x968] sm:$0xff]
    %v2597 = vld [vmem:[#allocation4 + $0x970] sm:$0xff]
    %v2598 = vld [vmem:[#allocation4 + $0x978] sm:$0xff]
    %v2599 = vld [vmem:[#allocation4 + $0x980] sm:$0xff]
    %v2600 = vld [vmem:[#allocation4 + $0x988] sm:$0xff]
    %v2601 = vld [vmem:[#allocation4 + $0x990] sm:$0xff]
    %v2602 = vld [vmem:[#allocation4 + $0x998] sm:$0xff]
    %v2603 = vld [vmem:[#allocation4 + $0x9a0] sm:$0xff]
    %v2604 = vld [vmem:[#allocation4 + $0x9a8] sm:$0xff]
    %v2605 = vld [vmem:[#allocation4 + $0x9b0] sm:$0xff]
    %v2606 = vld [vmem:[#allocation4 + $0x9b8] sm:$0xff]
    %v2607 = vld [vmem:[#allocation4 + $0x9c0] sm:$0xff]
    %v2608 = vld [vmem:[#allocation4 + $0x9c8] sm:$0xff]
    %v2609 = vld [vmem:[#allocation4 + $0x9d0] sm:$0xff]
    %v2610 = vld [vmem:[#allocation4 + $0x9d8] sm:$0xff]
    %v2611 = vld [vmem:[#allocation4 + $0x9e0] sm:$0xff]
    %v2612 = vld [vmem:[#allocation4 + $0x9e8] sm:$0xff]
    %v2613 = vld [vmem:[#allocation4 + $0x9f0] sm:$0xff]
    %v2614 = vld [vmem:[#allocation4 + $0x9f8] sm:$0xff]
    %v2615 = vld [vmem:[#allocation4 + $0xa00] sm:$0xff]
    %v2616 = vld [vmem:[#allocation4 + $0xa08] sm:$0xff]
    %v2617 = vld [vmem:[#allocation4 + $0xa10] sm:$0xff]
    %v2618 = vld [vmem:[#allocation4 + $0xa18] sm:$0xff]
    %v2619 = vld [vmem:[#allocation4 + $0xa20] sm:$0xff]
    %v2620 = vld [vmem:[#allocation4 + $0xa28] sm:$0xff]
    %v2621 = vld [vmem:[#allocation4 + $0xa30] sm:$0xff]
    %v2622 = vld [vmem:[#allocation4 + $0xa38] sm:$0xff]
    %v2623 = vld [vmem:[#allocation4 + $0xa40] sm:$0xff]
    %v2624 = vld [vmem:[#allocation4 + $0xa48] sm:$0xff]
    %v2625 = vld [vmem:[#allocation4 + $0xa50] sm:$0xff]
    %v2626 = vld [vmem:[#allocation4 + $0xa58] sm:$0xff]
    %v2627 = vld [vmem:[#allocation4 + $0xa60] sm:$0xff]
    %v2628 = vld [vmem:[#allocation4 + $0xa68] sm:$0xff]
    %v2629 = vld [vmem:[#allocation4 + $0xa70] sm:$0xff]
    %v2630 = vld [vmem:[#allocation4 + $0xa78] sm:$0xff]
    %v2631 = vld [vmem:[#allocation4 + $0xa80] sm:$0xff]
    %v2632 = vld [vmem:[#allocation4 + $0xa88] sm:$0xff]
    %v2633 = vld [vmem:[#allocation4 + $0xa90] sm:$0xff]
    %v2634 = vld [vmem:[#allocation4 + $0xa98] sm:$0xff]
    %v2635 = vld [vmem:[#allocation4 + $0xaa0] sm:$0xff]
    %v2636 = vld [vmem:[#allocation4 + $0xaa8] sm:$0xff]
    %v2637 = vld [vmem:[#allocation4 + $0xab0] sm:$0xff]
    %v2638 = vld [vmem:[#allocation4 + $0xab8] sm:$0xff]
    %v2639 = vld [vmem:[#allocation4 + $0xac0] sm:$0xff]
    %v2640 = vld [vmem:[#allocation4 + $0xac8] sm:$0xff]
    %v2641 = vld [vmem:[#allocation4 + $0xad0] sm:$0xff]
    %v2642 = vld [vmem:[#allocation4 + $0xad8] sm:$0xff]
    %v2643 = vld [vmem:[#allocation4 + $0xae0] sm:$0xff]
    %v2644 = vld [vmem:[#allocation4 + $0xae8] sm:$0xff]
    %v2645 = vld [vmem:[#allocation4 + $0xaf0] sm:$0xff]
    %v2646 = vld [vmem:[#allocation4 + $0xaf8] sm:$0xff]
    %v2647 = vld [vmem:[#allocation4 + $0xb00] sm:$0xff]
    %v2648 = vld [vmem:[#allocation4 + $0xb08] sm:$0xff]
    %v2649 = vld [vmem:[#allocation4 + $0xb10] sm:$0xff]
    %v2650 = vld [vmem:[#allocation4 + $0xb18] sm:$0xff]
    %v2651 = vld [vmem:[#allocation4 + $0xb20] sm:$0xff]
    %v2652 = vld [vmem:[#allocation4 + $0xb28] sm:$0xff]
    %v2653 = vld [vmem:[#allocation4 + $0xb30] sm:$0xff]
    %v2654 = vld [vmem:[#allocation4 + $0xb38] sm:$0xff]
    %v2655 = vld [vmem:[#allocation4 + $0xb40] sm:$0xff]
    %v2656 = vld [vmem:[#allocation4 + $0xb48] sm:$0xff]
    %v2657 = vld [vmem:[#allocation4 + $0xb50] sm:$0xff]
    %v2658 = vld [vmem:[#allocation4 + $0xb58] sm:$0xff]
    %v2659 = vld [vmem:[#allocation4 + $0xb60] sm:$0xff]
    %v2660 = vld [vmem:[#allocation4 + $0xb68] sm:$0xff]
    %v2661 = vld [vmem:[#allocation4 + $0xb70] sm:$0xff]
    %v2662 = vld [vmem:[#allocation4 + $0xb78] sm:$0xff]
    %v2663 = vld [vmem:[#allocation4 + $0xb80] sm:$0xff]
    %v2664 = vld [vmem:[#allocation4 + $0xb88] sm:$0xff]
    %v2665 = vld [vmem:[#allocation4 + $0xb90] sm:$0xff]
    %v2666 = vld [vmem:[#allocation4 + $0xb98] sm:$0xff]
    %v2667 = vld [vmem:[#allocation4 + $0xba0] sm:$0xff]
    %v2668 = vld [vmem:[#allocation4 + $0xba8] sm:$0xff]
    %v2669 = vld [vmem:[#allocation4 + $0xbb0] sm:$0xff]
    %v2670 = vld [vmem:[#allocation4 + $0xbb8] sm:$0xff]
    %v2671 = vld [vmem:[#allocation4 + $0xbc0] sm:$0xff]
    %v2672 = vld [vmem:[#allocation4 + $0xbc8] sm:$0xff]
    %v2673 = vld [vmem:[#allocation4 + $0xbd0] sm:$0xff]
    %v2674 = vld [vmem:[#allocation4 + $0xbd8] sm:$0xff]
    %v2675 = vld [vmem:[#allocation4 + $0xbe0] sm:$0xff]
    %v2676 = vld [vmem:[#allocation4 + $0xbe8] sm:$0xff]
    %v2677 = vld [vmem:[#allocation4 + $0xbf0] sm:$0xff]
    %v2678 = vld [vmem:[#allocation4 + $0xbf8] sm:$0xff]
    %v2679 = vld [vmem:[#allocation4 + $0xc00] sm:$0xff]
    %v2680 = vld [vmem:[#allocation4 + $0xc08] sm:$0xff]
    %v2681 = vld [vmem:[#allocation4 + $0xc10] sm:$0xff]
    %v2682 = vld [vmem:[#allocation4 + $0xc18] sm:$0xff]
    %v2683 = vld [vmem:[#allocation4 + $0xc20] sm:$0xff]
    %v2684 = vld [vmem:[#allocation4 + $0xc28] sm:$0xff]
    %v2685 = vld [vmem:[#allocation4 + $0xc30] sm:$0xff]
    %v2686 = vld [vmem:[#allocation4 + $0xc38] sm:$0xff]
    %v2687 = vld [vmem:[#allocation4 + $0xc40] sm:$0xff]
    %v2688 = vld [vmem:[#allocation4 + $0xc48] sm:$0xff]
    %v2689 = vld [vmem:[#allocation4 + $0xc50] sm:$0xff]
    %v2690 = vld [vmem:[#allocation4 + $0xc58] sm:$0xff]
    %v2691 = vld [vmem:[#allocation4 + $0xc60] sm:$0xff]
    %v2692 = vld [vmem:[#allocation4 + $0xc68] sm:$0xff]
    %v2693 = vld [vmem:[#allocation4 + $0xc70] sm:$0xff]
    %v2694 = vld [vmem:[#allocation4 + $0xc78] sm:$0xff]
    %v2695 = vld [vmem:[#allocation4 + $0xc80] sm:$0xff]
    %v2696 = vld [vmem:[#allocation4 + $0xc88] sm:$0xff]
    %v2697 = vld [vmem:[#allocation4 + $0xc90] sm:$0xff]
    %v2698 = vld [vmem:[#allocation4 + $0xc98] sm:$0xff]
    %v2699 = vld [vmem:[#allocation4 + $0xca0] sm:$0xff]
    %v2700 = vld [vmem:[#allocation4 + $0xca8] sm:$0xff]
    %v2701 = vld [vmem:[#allocation4 + $0xcb0] sm:$0xff]
    %v2702 = vld [vmem:[#allocation4 + $0xcb8] sm:$0xff]
    %v2703 = vld [vmem:[#allocation4 + $0xcc0] sm:$0xff]
    %v2704 = vld [vmem:[#allocation4 + $0xcc8] sm:$0xff]
    %v2705 = vld [vmem:[#allocation4 + $0xcd0] sm:$0xff]
    %v2706 = vld [vmem:[#allocation4 + $0xcd8] sm:$0xff]
    %v2707 = vld [vmem:[#allocation4 + $0xce0] sm:$0xff]
    %v2708 = vld [vmem:[#allocation4 + $0xce8] sm:$0xff]
    %v2709 = vld [vmem:[#allocation4 + $0xcf0] sm:$0xff]
    %v2710 = vld [vmem:[#allocation4 + $0xcf8] sm:$0xff]
    %v2711 = vld [vmem:[#allocation4 + $0xd00] sm:$0xff]
    %v2712 = vld [vmem:[#allocation4 + $0xd08] sm:$0xff]
    %v2713 = vld [vmem:[#allocation4 + $0xd10] sm:$0xff]
    %v2714 = vld [vmem:[#allocation4 + $0xd18] sm:$0xff]
    %v2715 = vld [vmem:[#allocation4 + $0xd20] sm:$0xff]
    %v2716 = vld [vmem:[#allocation4 + $0xd28] sm:$0xff]
    %v2717 = vld [vmem:[#allocation4 + $0xd30] sm:$0xff]
    %v2718 = vld [vmem:[#allocation4 + $0xd38] sm:$0xff]
    %v2719 = vld [vmem:[#allocation4 + $0xd40] sm:$0xff]
    %v2720 = vld [vmem:[#allocation4 + $0xd48] sm:$0xff]
    %v2721 = vld [vmem:[#allocation4 + $0xd50] sm:$0xff]
    %v2722 = vld [vmem:[#allocation4 + $0xd58] sm:$0xff]
    %v2723 = vld [vmem:[#allocation4 + $0xd60] sm:$0xff]
    %v2724 = vld [vmem:[#allocation4 + $0xd68] sm:$0xff]
    %v2725 = vld [vmem:[#allocation4 + $0xd70] sm:$0xff]
    %v2726 = vld [vmem:[#allocation4 + $0xd78] sm:$0xff]
    %v2727 = vld [vmem:[#allocation4 + $0xd80] sm:$0xff]
    %v2728 = vld [vmem:[#allocation4 + $0xd88] sm:$0xff]
    %v2729 = vld [vmem:[#allocation4 + $0xd90] sm:$0xff]
    %v2730 = vld [vmem:[#allocation4 + $0xd98] sm:$0xff]
    %v2731 = vld [vmem:[#allocation4 + $0xda0] sm:$0xff]
    %v2732 = vld [vmem:[#allocation4 + $0xda8] sm:$0xff]
    %v2733 = vld [vmem:[#allocation4 + $0xdb0] sm:$0xff]
    %v2734 = vld [vmem:[#allocation4 + $0xdb8] sm:$0xff]
    %v2735 = vld [vmem:[#allocation4 + $0xdc0] sm:$0xff]
    %v2736 = vld [vmem:[#allocation4 + $0xdc8] sm:$0xff]
    %v2737 = vld [vmem:[#allocation4 + $0xdd0] sm:$0xff]
    %v2738 = vld [vmem:[#allocation4 + $0xdd8] sm:$0xff]
    %v2739 = vld [vmem:[#allocation4 + $0xde0] sm:$0xff]
    %v2740 = vld [vmem:[#allocation4 + $0xde8] sm:$0xff]
    %v2741 = vld [vmem:[#allocation4 + $0xdf0] sm:$0xff]
    %v2742 = vld [vmem:[#allocation4 + $0xdf8] sm:$0xff]
    %v2743 = vld [vmem:[#allocation4 + $0xe00] sm:$0xff]
    %v2744 = vld [vmem:[#allocation4 + $0xe08] sm:$0xff]
    %v2745 = vld [vmem:[#allocation4 + $0xe10] sm:$0xff]
    %v2746 = vld [vmem:[#allocation4 + $0xe18] sm:$0xff]
    %v2747 = vld [vmem:[#allocation4 + $0xe20] sm:$0xff]
    %v2748 = vld [vmem:[#allocation4 + $0xe28] sm:$0xff]
    %v2749 = vld [vmem:[#allocation4 + $0xe30] sm:$0xff]
    %v2750 = vld [vmem:[#allocation4 + $0xe38] sm:$0xff]
    %v2751 = vld [vmem:[#allocation4 + $0xe40] sm:$0xff]
    %v2752 = vld [vmem:[#allocation4 + $0xe48] sm:$0xff]
    %v2753 = vld [vmem:[#allocation4 + $0xe50] sm:$0xff]
    %v2754 = vld [vmem:[#allocation4 + $0xe58] sm:$0xff]
    %v2755 = vld [vmem:[#allocation4 + $0xe60] sm:$0xff]
    %v2756 = vld [vmem:[#allocation4 + $0xe68] sm:$0xff]
    %v2757 = vld [vmem:[#allocation4 + $0xe70] sm:$0xff]
    %v2758 = vld [vmem:[#allocation4 + $0xe78] sm:$0xff]
    %v2759 = vld [vmem:[#allocation4 + $0xe80] sm:$0xff]
    %v2760 = vld [vmem:[#allocation4 + $0xe88] sm:$0xff]
    %v2761 = vld [vmem:[#allocation4 + $0xe90] sm:$0xff]
    %v2762 = vld [vmem:[#allocation4 + $0xe98] sm:$0xff]
    %v2763 = vld [vmem:[#allocation4 + $0xea0] sm:$0xff]
    %v2764 = vld [vmem:[#allocation4 + $0xea8] sm:$0xff]
    %v2765 = vld [vmem:[#allocation4 + $0xeb0] sm:$0xff]
    %v2766 = vld [vmem:[#allocation4 + $0xeb8] sm:$0xff]
    %v2767 = vld [vmem:[#allocation4 + $0xec0] sm:$0xff]
    %v2768 = vld [vmem:[#allocation4 + $0xec8] sm:$0xff]
    %v2769 = vld [vmem:[#allocation4 + $0xed0] sm:$0xff]
    %v2770 = vld [vmem:[#allocation4 + $0xed8] sm:$0xff]
    %v2771 = vld [vmem:[#allocation4 + $0xee0] sm:$0xff]
    %v2772 = vld [vmem:[#allocation4 + $0xee8] sm:$0xff]
    %v2773 = vld [vmem:[#allocation4 + $0xef0] sm:$0xff]
    %v2774 = vld [vmem:[#allocation4 + $0xef8] sm:$0xff]
    %v2775 = vld [vmem:[#allocation4 + $0xf00] sm:$0xff]
    %v2776 = vld [vmem:[#allocation4 + $0xf08] sm:$0xff]
    %v2777 = vld [vmem:[#allocation4 + $0xf10] sm:$0xff]
    %v2778 = vld [vmem:[#allocation4 + $0xf18] sm:$0xff]
    %v2779 = vld [vmem:[#allocation4 + $0xf20] sm:$0xff]
    %v2780 = vld [vmem:[#allocation4 + $0xf28] sm:$0xff]
    %v2781 = vld [vmem:[#allocation4 + $0xf30] sm:$0xff]
    %v2782 = vld [vmem:[#allocation4 + $0xf38] sm:$0xff]
    %v2783 = vld [vmem:[#allocation4 + $0xf40] sm:$0xff]
    %v2784 = vld [vmem:[#allocation4 + $0xf48] sm:$0xff]
    %v2785 = vld [vmem:[#allocation4 + $0xf50] sm:$0xff]
    %v2786 = vld [vmem:[#allocation4 + $0xf58] sm:$0xff]
    %v2787 = vld [vmem:[#allocation4 + $0xf60] sm:$0xff]
    %v2788 = vld [vmem:[#allocation4 + $0xf68] sm:$0xff]
    %v2789 = vld [vmem:[#allocation4 + $0xf70] sm:$0xff]
    %v2790 = vld [vmem:[#allocation4 + $0xf78] sm:$0xff]
    %v2791 = vld [vmem:[#allocation4 + $0xf80] sm:$0xff]
    %v2792 = vld [vmem:[#allocation4 + $0xf88] sm:$0xff]
    %v2793 = vld [vmem:[#allocation4 + $0xf90] sm:$0xff]
    %v2794 = vld [vmem:[#allocation4 + $0xf98] sm:$0xff]
    %v2795 = vld [vmem:[#allocation4 + $0xfa0] sm:$0xff]
    %v2796 = vld [vmem:[#allocation4 + $0xfa8] sm:$0xff]
    %v2797 = vld [vmem:[#allocation4 + $0xfb0] sm:$0xff]
    %v2798 = vld [vmem:[#allocation4 + $0xfb8] sm:$0xff]
    %v2799 = vld [vmem:[#allocation4 + $0xfc0] sm:$0xff]
    %v2800 = vld [vmem:[#allocation4 + $0xfc8] sm:$0xff]
    %v2801 = vld [vmem:[#allocation4 + $0xfd0] sm:$0xff]
    %v2802 = vld [vmem:[#allocation4 + $0xfd8] sm:$0xff]
    %v2803 = vld [vmem:[#allocation4 + $0xfe0] sm:$0xff]
    %v2804 = vld [vmem:[#allocation4 + $0xfe8] sm:$0xff]
    %v2805 = vld [vmem:[#allocation4 + $0xff0] sm:$0xff]
    %v2806 = vld [vmem:[#allocation4 + $0xff8] sm:$0xff]
    %v2807 = vld [vmem:[#allocation4 + $0x1000] sm:$0xff]
    %v2808 = vld [vmem:[#allocation4 + $0x1008] sm:$0xff]
    %v2809 = vld [vmem:[#allocation4 + $0x1010] sm:$0xff]
    %v2810 = vld [vmem:[#allocation4 + $0x1018] sm:$0xff]
    %v2811 = vld [vmem:[#allocation4 + $0x1020] sm:$0xff]
    %v2812 = vld [vmem:[#allocation4 + $0x1028] sm:$0xff]
    %v2813 = vld [vmem:[#allocation4 + $0x1030] sm:$0xff]
    %v2814 = vld [vmem:[#allocation4 + $0x1038] sm:$0xff]
    %v2815 = vld [vmem:[#allocation4 + $0x1040] sm:$0xff]
    %v2816 = vld [vmem:[#allocation4 + $0x1048] sm:$0xff]
    %v2817 = vld [vmem:[#allocation4 + $0x1050] sm:$0xff]
    %v2818 = vld [vmem:[#allocation4 + $0x1058] sm:$0xff]
    %v2819 = vld [vmem:[#allocation4 + $0x1060] sm:$0xff]
    %v2820 = vld [vmem:[#allocation4 + $0x1068] sm:$0xff]
    %v2821 = vld [vmem:[#allocation4 + $0x1070] sm:$0xff]
    %v2822 = vld [vmem:[#allocation4 + $0x1078] sm:$0xff]
    %v2823 = vld [vmem:[#allocation4 + $0x1080] sm:$0xff]
    %v2824 = vld [vmem:[#allocation4 + $0x1088] sm:$0xff]
    %v2825 = vld [vmem:[#allocation4 + $0x1090] sm:$0xff]
    %v2826 = vld [vmem:[#allocation4 + $0x1098] sm:$0xff]
    %v2827 = vld [vmem:[#allocation4 + $0x10a0] sm:$0xff]
    %v2828 = vld [vmem:[#allocation4 + $0x10a8] sm:$0xff]
    %v2829 = vld [vmem:[#allocation4 + $0x10b0] sm:$0xff]
    %v2830 = vld [vmem:[#allocation4 + $0x10b8] sm:$0xff]
    %v2831 = vld [vmem:[#allocation4 + $0x10c0] sm:$0xff]
    %v2832 = vld [vmem:[#allocation4 + $0x10c8] sm:$0xff]
    %v2833 = vld [vmem:[#allocation4 + $0x10d0] sm:$0xff]
    %v2834 = vld [vmem:[#allocation4 + $0x10d8] sm:$0xff]
    %v2835 = vld [vmem:[#allocation4 + $0x10e0] sm:$0xff]
    %v2836 = vld [vmem:[#allocation4 + $0x10e8] sm:$0xff]
    %v2837 = vld [vmem:[#allocation4 + $0x10f0] sm:$0xff]
    %v2838 = vld [vmem:[#allocation4 + $0x10f8] sm:$0xff]
    %v2839 = vld [vmem:[#allocation4 + $0x1100] sm:$0xff]
    %v2840 = vld [vmem:[#allocation4 + $0x1108] sm:$0xff]
    %v2841 = vld [vmem:[#allocation4 + $0x1110] sm:$0xff]
    %v2842 = vld [vmem:[#allocation4 + $0x1118] sm:$0xff]
    %v2843 = vld [vmem:[#allocation4 + $0x1120] sm:$0xff]
    %v2844 = vld [vmem:[#allocation4 + $0x1128] sm:$0xff]
    %v2845 = vld [vmem:[#allocation4 + $0x1130] sm:$0xff]
    %v2846 = vld [vmem:[#allocation4 + $0x1138] sm:$0xff]
    %v2847 = vld [vmem:[#allocation4 + $0x1140] sm:$0xff]
    %v2848 = vld [vmem:[#allocation4 + $0x1148] sm:$0xff]
    %v2849 = vld [vmem:[#allocation4 + $0x1150] sm:$0xff]
    %v2850 = vld [vmem:[#allocation4 + $0x1158] sm:$0xff]
    %v2851 = vld [vmem:[#allocation4 + $0x1160] sm:$0xff]
    %v2852 = vld [vmem:[#allocation4 + $0x1168] sm:$0xff]
    %v2853 = vld [vmem:[#allocation4 + $0x1170] sm:$0xff]
    %v2854 = vld [vmem:[#allocation4 + $0x1178] sm:$0xff]
    %v2855 = vld [vmem:[#allocation4 + $0x1180] sm:$0xff]
    %v2856 = vld [vmem:[#allocation4 + $0x1188] sm:$0xff]
    %v2857 = vld [vmem:[#allocation4 + $0x1190] sm:$0xff]
    %v2858 = vld [vmem:[#allocation4 + $0x1198] sm:$0xff]
    %v2859 = vld [vmem:[#allocation4 + $0x11a0] sm:$0xff]
    %v2860 = vld [vmem:[#allocation4 + $0x11a8] sm:$0xff]
    %v2861 = vld [vmem:[#allocation4 + $0x11b0] sm:$0xff]
    %v2862 = vld [vmem:[#allocation4 + $0x11b8] sm:$0xff]
    %v2863 = vld [vmem:[#allocation4 + $0x11c0] sm:$0xff]
    %v2864 = vld [vmem:[#allocation4 + $0x11c8] sm:$0xff]
    %v2865 = vld [vmem:[#allocation4 + $0x11d0] sm:$0xff]
    %v2866 = vld [vmem:[#allocation4 + $0x11d8] sm:$0xff]
    %v2867 = vld [vmem:[#allocation4 + $0x11e0] sm:$0xff]
    %v2868 = vld [vmem:[#allocation4 + $0x11e8] sm:$0xff]
    %v2869 = vld [vmem:[#allocation4 + $0x11f0] sm:$0xff]
    %v2870 = vld [vmem:[#allocation4 + $0x11f8] sm:$0xff]
    %v2871 = vld [vmem:[#allocation4 + $0x1200] sm:$0xff]
    %v2872 = vld [vmem:[#allocation4 + $0x1208] sm:$0xff]
    %v2873 = vld [vmem:[#allocation4 + $0x1210] sm:$0xff]
    %v2874 = vld [vmem:[#allocation4 + $0x1218] sm:$0xff]
    %v2875 = vld [vmem:[#allocation4 + $0x1220] sm:$0xff]
    %v2876 = vld [vmem:[#allocation4 + $0x1228] sm:$0xff]
    %v2877 = vld [vmem:[#allocation4 + $0x1230] sm:$0xff]
    %v2878 = vld [vmem:[#allocation4 + $0x1238] sm:$0xff]
    %v2879 = vld [vmem:[#allocation4 + $0x1240] sm:$0xff]
    %v2880 = vld [vmem:[#allocation4 + $0x1248] sm:$0xff]
    %v2881 = vld [vmem:[#allocation4 + $0x1250] sm:$0xff]
    %v2882 = vld [vmem:[#allocation4 + $0x1258] sm:$0xff]
    %v2883 = vld [vmem:[#allocation4 + $0x1260] sm:$0xff]
    %v2884 = vld [vmem:[#allocation4 + $0x1268] sm:$0xff]
    %v2885 = vld [vmem:[#allocation4 + $0x1270] sm:$0xff]
    %v2886 = vld [vmem:[#allocation4 + $0x1278] sm:$0xff]
    %v2887 = vld [vmem:[#allocation4 + $0x1280] sm:$0xff]
    %v2888 = vld [vmem:[#allocation4 + $0x1288] sm:$0xff]
    %v2889 = vld [vmem:[#allocation4 + $0x1290] sm:$0xff]
    %v2890 = vld [vmem:[#allocation4 + $0x1298] sm:$0xff]
    %v2891 = vld [vmem:[#allocation4 + $0x12a0] sm:$0xff]
    %v2892 = vld [vmem:[#allocation4 + $0x12a8] sm:$0xff]
    %v2893 = vld [vmem:[#allocation4 + $0x12b0] sm:$0xff]
    %v2894 = vld [vmem:[#allocation4 + $0x12b8] sm:$0xff]
    %v2895 = vld [vmem:[#allocation4 + $0x12c0] sm:$0xff]
    %v2896 = vld [vmem:[#allocation4 + $0x12c8] sm:$0xff]
    %v2897 = vld [vmem:[#allocation4 + $0x12d0] sm:$0xff]
    %v2898 = vld [vmem:[#allocation4 + $0x12d8] sm:$0xff]
    %v2899 = vld [vmem:[#allocation4 + $0x12e0] sm:$0xff]
    %v2900 = vld [vmem:[#allocation4 + $0x12e8] sm:$0xff]
    %v2901 = vld [vmem:[#allocation4 + $0x12f0] sm:$0xff]
    %v2902 = vld [vmem:[#allocation4 + $0x12f8] sm:$0xff]
    %v2903 = vld [vmem:[#allocation4 + $0x1300] sm:$0xff]
    %v2904 = vld [vmem:[#allocation4 + $0x1308] sm:$0xff]
    %v2905 = vld [vmem:[#allocation4 + $0x1310] sm:$0xff]
    %v2906 = vld [vmem:[#allocation4 + $0x1318] sm:$0xff]
    %v2907 = vld [vmem:[#allocation4 + $0x1320] sm:$0xff]
    %v2908 = vld [vmem:[#allocation4 + $0x1328] sm:$0xff]
    %v2909 = vld [vmem:[#allocation4 + $0x1330] sm:$0xff]
    %v2910 = vld [vmem:[#allocation4 + $0x1338] sm:$0xff]
    %v2911 = vld [vmem:[#allocation4 + $0x1340] sm:$0xff]
    %v2912 = vld [vmem:[#allocation4 + $0x1348] sm:$0xff]
    %v2913 = vld [vmem:[#allocation4 + $0x1350] sm:$0xff]
    %v2914 = vld [vmem:[#allocation4 + $0x1358] sm:$0xff]
    %v2915 = vld [vmem:[#allocation4 + $0x1360] sm:$0xff]
    %v2916 = vld [vmem:[#allocation4 + $0x1368] sm:$0xff]
    %v2917 = vld [vmem:[#allocation4 + $0x1370] sm:$0xff]
    %v2918 = vld [vmem:[#allocation4 + $0x1378] sm:$0xff]
    %v2919 = vunpack.c.l.s8.bf16 %v2295
    %v2920 = vunpack.c.l.s8.bf16 %v2296
    %v2921 = vunpack.c.l.s8.bf16 %v2297
    %v2922 = vunpack.c.l.s8.bf16 %v2298
    %v2923 = vunpack.c.l.s8.bf16 %v2299
    %v2924 = vunpack.c.l.s8.bf16 %v2300
    %v2925 = vunpack.c.l.s8.bf16 %v2301
    %v2926 = vunpack.c.l.s8.bf16 %v2302
    %v2927 = vunpack.c.l.s8.bf16 %v2303
    %v2928 = vunpack.c.l.s8.bf16 %v2304
    %v2929 = vunpack.c.l.s8.bf16 %v2305
    %v2930 = vunpack.c.l.s8.bf16 %v2306
    %v2931 = vunpack.c.h.s8.bf16 %v2295
    %v2932 = vunpack.c.h.s8.bf16 %v2296
    %v2933 = vunpack.c.h.s8.bf16 %v2297
    %v2934 = vunpack.c.h.s8.bf16 %v2298
    %v2935 = vunpack.c.h.s8.bf16 %v2299
    %v2936 = vunpack.c.h.s8.bf16 %v2300
    %v2937 = vunpack.c.h.s8.bf16 %v2301
    %v2938 = vunpack.c.h.s8.bf16 %v2302
    %v2939 = vunpack.c.h.s8.bf16 %v2303
    %v2940 = vunpack.c.h.s8.bf16 %v2304
    %v2941 = vunpack.c.h.s8.bf16 %v2305
    %v2942 = vunpack.c.h.s8.bf16 %v2306
    %v2943 = vunpack.c.l.s8.bf16 %v2307
    %v2944 = vunpack.c.l.s8.bf16 %v2308
    %v2945 = vunpack.c.l.s8.bf16 %v2309
    %v2946 = vunpack.c.l.s8.bf16 %v2310
    %v2947 = vunpack.c.l.s8.bf16 %v2311
    %v2948 = vunpack.c.l.s8.bf16 %v2312
    %v2949 = vunpack.c.l.s8.bf16 %v2313
    %v2950 = vunpack.c.l.s8.bf16 %v2314
    %v2951 = vunpack.c.l.s8.bf16 %v2315
    %v2952 = vunpack.c.l.s8.bf16 %v2316
    %v2953 = vunpack.c.l.s8.bf16 %v2317
    %v2954 = vunpack.c.l.s8.bf16 %v2318
    %v2955 = vunpack.c.h.s8.bf16 %v2307
    %v2956 = vunpack.c.h.s8.bf16 %v2308
    %v2957 = vunpack.c.h.s8.bf16 %v2309
    %v2958 = vunpack.c.h.s8.bf16 %v2310
    %v2959 = vunpack.c.h.s8.bf16 %v2311
    %v2960 = vunpack.c.h.s8.bf16 %v2312
    %v2961 = vunpack.c.h.s8.bf16 %v2313
    %v2962 = vunpack.c.h.s8.bf16 %v2314
    %v2963 = vunpack.c.h.s8.bf16 %v2315
    %v2964 = vunpack.c.h.s8.bf16 %v2316
    %v2965 = vunpack.c.h.s8.bf16 %v2317
    %v2966 = vunpack.c.h.s8.bf16 %v2318
    %v2967 = vunpack.c.l.s8.bf16 %v2319
    %v2968 = vunpack.c.l.s8.bf16 %v2320
    %v2969 = vunpack.c.l.s8.bf16 %v2321
    %v2970 = vunpack.c.l.s8.bf16 %v2322
    %v2971 = vunpack.c.l.s8.bf16 %v2323
    %v2972 = vunpack.c.l.s8.bf16 %v2324
    %v2973 = vunpack.c.l.s8.bf16 %v2325
    %v2974 = vunpack.c.l.s8.bf16 %v2326
    %v2975 = vunpack.c.l.s8.bf16 %v2327
    %v2976 = vunpack.c.l.s8.bf16 %v2328
    %v2977 = vunpack.c.l.s8.bf16 %v2329
    %v2978 = vunpack.c.l.s8.bf16 %v2330
    %v2979 = vunpack.c.h.s8.bf16 %v2319
    %v2980 = vunpack.c.h.s8.bf16 %v2320
    %v2981 = vunpack.c.h.s8.bf16 %v2321
    %v2982 = vunpack.c.h.s8.bf16 %v2322
    %v2983 = vunpack.c.h.s8.bf16 %v2323
    %v2984 = vunpack.c.h.s8.bf16 %v2324
    %v2985 = vunpack.c.h.s8.bf16 %v2325
    %v2986 = vunpack.c.h.s8.bf16 %v2326
    %v2987 = vunpack.c.h.s8.bf16 %v2327
    %v2988 = vunpack.c.h.s8.bf16 %v2328
    %v2989 = vunpack.c.h.s8.bf16 %v2329
    %v2990 = vunpack.c.h.s8.bf16 %v2330
    %v2991 = vunpack.c.l.s8.bf16 %v2331
    %v2992 = vunpack.c.l.s8.bf16 %v2332
    %v2993 = vunpack.c.l.s8.bf16 %v2333
    %v2994 = vunpack.c.l.s8.bf16 %v2334
    %v2995 = vunpack.c.l.s8.bf16 %v2335
    %v2996 = vunpack.c.l.s8.bf16 %v2336
    %v2997 = vunpack.c.l.s8.bf16 %v2337
    %v2998 = vunpack.c.l.s8.bf16 %v2338
    %v2999 = vunpack.c.l.s8.bf16 %v2339
    %v3000 = vunpack.c.l.s8.bf16 %v2340
    %v3001 = vunpack.c.l.s8.bf16 %v2341
    %v3002 = vunpack.c.l.s8.bf16 %v2342
    %v3003 = vunpack.c.h.s8.bf16 %v2331
    %v3004 = vunpack.c.h.s8.bf16 %v2332
    %v3005 = vunpack.c.h.s8.bf16 %v2333
    %v3006 = vunpack.c.h.s8.bf16 %v2334
    %v3007 = vunpack.c.h.s8.bf16 %v2335
    %v3008 = vunpack.c.h.s8.bf16 %v2336
    %v3009 = vunpack.c.h.s8.bf16 %v2337
    %v3010 = vunpack.c.h.s8.bf16 %v2338
    %v3011 = vunpack.c.h.s8.bf16 %v2339
    %v3012 = vunpack.c.h.s8.bf16 %v2340
    %v3013 = vunpack.c.h.s8.bf16 %v2341
    %v3014 = vunpack.c.h.s8.bf16 %v2342
    %v3015 = vunpack.c.l.s8.bf16 %v2343
    %v3016 = vunpack.c.l.s8.bf16 %v2344
    %v3017 = vunpack.c.l.s8.bf16 %v2345
    %v3018 = vunpack.c.l.s8.bf16 %v2346
    %v3019 = vunpack.c.l.s8.bf16 %v2347
    %v3020 = vunpack.c.l.s8.bf16 %v2348
    %v3021 = vunpack.c.l.s8.bf16 %v2349
    %v3022 = vunpack.c.l.s8.bf16 %v2350
    %v3023 = vunpack.c.l.s8.bf16 %v2351
    %v3024 = vunpack.c.l.s8.bf16 %v2352
    %v3025 = vunpack.c.l.s8.bf16 %v2353
    %v3026 = vunpack.c.l.s8.bf16 %v2354
    %v3027 = vunpack.c.h.s8.bf16 %v2343
    %v3028 = vunpack.c.h.s8.bf16 %v2344
    %v3029 = vunpack.c.h.s8.bf16 %v2345
    %v3030 = vunpack.c.h.s8.bf16 %v2346
    %v3031 = vunpack.c.h.s8.bf16 %v2347
    %v3032 = vunpack.c.h.s8.bf16 %v2348
    %v3033 = vunpack.c.h.s8.bf16 %v2349
    %v3034 = vunpack.c.h.s8.bf16 %v2350
    %v3035 = vunpack.c.h.s8.bf16 %v2351
    %v3036 = vunpack.c.h.s8.bf16 %v2352
    %v3037 = vunpack.c.h.s8.bf16 %v2353
    %v3038 = vunpack.c.h.s8.bf16 %v2354
    %v3039 = vunpack.c.l.s8.bf16 %v2355
    %v3040 = vunpack.c.l.s8.bf16 %v2356
    %v3041 = vunpack.c.l.s8.bf16 %v2357
    %v3042 = vunpack.c.l.s8.bf16 %v2358
    %v3043 = vunpack.c.l.s8.bf16 %v2359
    %v3044 = vunpack.c.l.s8.bf16 %v2360
    %v3045 = vunpack.c.l.s8.bf16 %v2361
    %v3046 = vunpack.c.l.s8.bf16 %v2362
    %v3047 = vunpack.c.l.s8.bf16 %v2363
    %v3048 = vunpack.c.l.s8.bf16 %v2364
    %v3049 = vunpack.c.l.s8.bf16 %v2365
    %v3050 = vunpack.c.l.s8.bf16 %v2366
    %v3051 = vunpack.c.h.s8.bf16 %v2355
    %v3052 = vunpack.c.h.s8.bf16 %v2356
    %v3053 = vunpack.c.h.s8.bf16 %v2357
    %v3054 = vunpack.c.h.s8.bf16 %v2358
    %v3055 = vunpack.c.h.s8.bf16 %v2359
    %v3056 = vunpack.c.h.s8.bf16 %v2360
    %v3057 = vunpack.c.h.s8.bf16 %v2361
    %v3058 = vunpack.c.h.s8.bf16 %v2362
    %v3059 = vunpack.c.h.s8.bf16 %v2363
    %v3060 = vunpack.c.h.s8.bf16 %v2364
    %v3061 = vunpack.c.h.s8.bf16 %v2365
    %v3062 = vunpack.c.h.s8.bf16 %v2366
    %v3063 = vunpack.c.l.s8.bf16 %v2367
    %v3064 = vunpack.c.l.s8.bf16 %v2368
    %v3065 = vunpack.c.l.s8.bf16 %v2369
    %v3066 = vunpack.c.l.s8.bf16 %v2370
    %v3067 = vunpack.c.l.s8.bf16 %v2371
    %v3068 = vunpack.c.l.s8.bf16 %v2372
    %v3069 = vunpack.c.l.s8.bf16 %v2373
    %v3070 = vunpack.c.l.s8.bf16 %v2374
    %v3071 = vunpack.c.l.s8.bf16 %v2375
    %v3072 = vunpack.c.l.s8.bf16 %v2376
    %v3073 = vunpack.c.l.s8.bf16 %v2377
    %v3074 = vunpack.c.l.s8.bf16 %v2378
    %v3075 = vunpack.c.h.s8.bf16 %v2367
    %v3076 = vunpack.c.h.s8.bf16 %v2368
    %v3077 = vunpack.c.h.s8.bf16 %v2369
    %v3078 = vunpack.c.h.s8.bf16 %v2370
    %v3079 = vunpack.c.h.s8.bf16 %v2371
    %v3080 = vunpack.c.h.s8.bf16 %v2372
    %v3081 = vunpack.c.h.s8.bf16 %v2373
    %v3082 = vunpack.c.h.s8.bf16 %v2374
    %v3083 = vunpack.c.h.s8.bf16 %v2375
    %v3084 = vunpack.c.h.s8.bf16 %v2376
    %v3085 = vunpack.c.h.s8.bf16 %v2377
    %v3086 = vunpack.c.h.s8.bf16 %v2378
    %v3087 = vunpack.c.l.s8.bf16 %v2379
    %v3088 = vunpack.c.l.s8.bf16 %v2380
    %v3089 = vunpack.c.l.s8.bf16 %v2381
    %v3090 = vunpack.c.l.s8.bf16 %v2382
    %v3091 = vunpack.c.l.s8.bf16 %v2383
    %v3092 = vunpack.c.l.s8.bf16 %v2384
    %v3093 = vunpack.c.l.s8.bf16 %v2385
    %v3094 = vunpack.c.l.s8.bf16 %v2386
    %v3095 = vunpack.c.l.s8.bf16 %v2387
    %v3096 = vunpack.c.l.s8.bf16 %v2388
    %v3097 = vunpack.c.l.s8.bf16 %v2389
    %v3098 = vunpack.c.l.s8.bf16 %v2390
    %v3099 = vunpack.c.h.s8.bf16 %v2379
    %v3100 = vunpack.c.h.s8.bf16 %v2380
    %v3101 = vunpack.c.h.s8.bf16 %v2381
    %v3102 = vunpack.c.h.s8.bf16 %v2382
    %v3103 = vunpack.c.h.s8.bf16 %v2383
    %v3104 = vunpack.c.h.s8.bf16 %v2384
    %v3105 = vunpack.c.h.s8.bf16 %v2385
    %v3106 = vunpack.c.h.s8.bf16 %v2386
    %v3107 = vunpack.c.h.s8.bf16 %v2387
    %v3108 = vunpack.c.h.s8.bf16 %v2388
    %v3109 = vunpack.c.h.s8.bf16 %v2389
    %v3110 = vunpack.c.h.s8.bf16 %v2390
    %v3111 = vunpack.c.l.s8.bf16 %v2391
    %v3112 = vunpack.c.l.s8.bf16 %v2392
    %v3113 = vunpack.c.l.s8.bf16 %v2393
    %v3114 = vunpack.c.l.s8.bf16 %v2394
    %v3115 = vunpack.c.l.s8.bf16 %v2395
    %v3116 = vunpack.c.l.s8.bf16 %v2396
    %v3117 = vunpack.c.l.s8.bf16 %v2397
    %v3118 = vunpack.c.l.s8.bf16 %v2398
    %v3119 = vunpack.c.l.s8.bf16 %v2399
    %v3120 = vunpack.c.l.s8.bf16 %v2400
    %v3121 = vunpack.c.l.s8.bf16 %v2401
    %v3122 = vunpack.c.l.s8.bf16 %v2402
    %v3123 = vunpack.c.h.s8.bf16 %v2391
    %v3124 = vunpack.c.h.s8.bf16 %v2392
    %v3125 = vunpack.c.h.s8.bf16 %v2393
    %v3126 = vunpack.c.h.s8.bf16 %v2394
    %v3127 = vunpack.c.h.s8.bf16 %v2395
    %v3128 = vunpack.c.h.s8.bf16 %v2396
    %v3129 = vunpack.c.h.s8.bf16 %v2397
    %v3130 = vunpack.c.h.s8.bf16 %v2398
    %v3131 = vunpack.c.h.s8.bf16 %v2399
    %v3132 = vunpack.c.h.s8.bf16 %v2400
    %v3133 = vunpack.c.h.s8.bf16 %v2401
    %v3134 = vunpack.c.h.s8.bf16 %v2402
    %v3135 = vunpack.c.l.s8.bf16 %v2403
    %v3136 = vunpack.c.l.s8.bf16 %v2404
    %v3137 = vunpack.c.l.s8.bf16 %v2405
    %v3138 = vunpack.c.l.s8.bf16 %v2406
    %v3139 = vunpack.c.l.s8.bf16 %v2407
    %v3140 = vunpack.c.l.s8.bf16 %v2408
    %v3141 = vunpack.c.l.s8.bf16 %v2409
    %v3142 = vunpack.c.l.s8.bf16 %v2410
    %v3143 = vunpack.c.l.s8.bf16 %v2411
    %v3144 = vunpack.c.l.s8.bf16 %v2412
    %v3145 = vunpack.c.l.s8.bf16 %v2413
    %v3146 = vunpack.c.l.s8.bf16 %v2414
    %v3147 = vunpack.c.h.s8.bf16 %v2403
    %v3148 = vunpack.c.h.s8.bf16 %v2404
    %v3149 = vunpack.c.h.s8.bf16 %v2405
    %v3150 = vunpack.c.h.s8.bf16 %v2406
    %v3151 = vunpack.c.h.s8.bf16 %v2407
    %v3152 = vunpack.c.h.s8.bf16 %v2408
    %v3153 = vunpack.c.h.s8.bf16 %v2409
    %v3154 = vunpack.c.h.s8.bf16 %v2410
    %v3155 = vunpack.c.h.s8.bf16 %v2411
    %v3156 = vunpack.c.h.s8.bf16 %v2412
    %v3157 = vunpack.c.h.s8.bf16 %v2413
    %v3158 = vunpack.c.h.s8.bf16 %v2414
    %v3159 = vunpack.c.l.s8.bf16 %v2415
    %v3160 = vunpack.c.l.s8.bf16 %v2416
    %v3161 = vunpack.c.l.s8.bf16 %v2417
    %v3162 = vunpack.c.l.s8.bf16 %v2418
    %v3163 = vunpack.c.l.s8.bf16 %v2419
    %v3164 = vunpack.c.l.s8.bf16 %v2420
    %v3165 = vunpack.c.l.s8.bf16 %v2421
    %v3166 = vunpack.c.l.s8.bf16 %v2422
    %v3167 = vunpack.c.l.s8.bf16 %v2423
    %v3168 = vunpack.c.l.s8.bf16 %v2424
    %v3169 = vunpack.c.l.s8.bf16 %v2425
    %v3170 = vunpack.c.l.s8.bf16 %v2426
    %v3171 = vunpack.c.h.s8.bf16 %v2415
    %v3172 = vunpack.c.h.s8.bf16 %v2416
    %v3173 = vunpack.c.h.s8.bf16 %v2417
    %v3174 = vunpack.c.h.s8.bf16 %v2418
    %v3175 = vunpack.c.h.s8.bf16 %v2419
    %v3176 = vunpack.c.h.s8.bf16 %v2420
    %v3177 = vunpack.c.h.s8.bf16 %v2421
    %v3178 = vunpack.c.h.s8.bf16 %v2422
    %v3179 = vunpack.c.h.s8.bf16 %v2423
    %v3180 = vunpack.c.h.s8.bf16 %v2424
    %v3181 = vunpack.c.h.s8.bf16 %v2425
    %v3182 = vunpack.c.h.s8.bf16 %v2426
    %v3183 = vunpack.c.l.s8.bf16 %v2427
    %v3184 = vunpack.c.l.s8.bf16 %v2428
    %v3185 = vunpack.c.l.s8.bf16 %v2429
    %v3186 = vunpack.c.l.s8.bf16 %v2430
    %v3187 = vunpack.c.l.s8.bf16 %v2431
    %v3188 = vunpack.c.l.s8.bf16 %v2432
    %v3189 = vunpack.c.l.s8.bf16 %v2433
    %v3190 = vunpack.c.l.s8.bf16 %v2434
    %v3191 = vunpack.c.l.s8.bf16 %v2435
    %v3192 = vunpack.c.l.s8.bf16 %v2436
    %v3193 = vunpack.c.l.s8.bf16 %v2437
    %v3194 = vunpack.c.l.s8.bf16 %v2438
    %v3195 = vunpack.c.h.s8.bf16 %v2427
    %v3196 = vunpack.c.h.s8.bf16 %v2428
    %v3197 = vunpack.c.h.s8.bf16 %v2429
    %v3198 = vunpack.c.h.s8.bf16 %v2430
    %v3199 = vunpack.c.h.s8.bf16 %v2431
    %v3200 = vunpack.c.h.s8.bf16 %v2432
    %v3201 = vunpack.c.h.s8.bf16 %v2433
    %v3202 = vunpack.c.h.s8.bf16 %v2434
    %v3203 = vunpack.c.h.s8.bf16 %v2435
    %v3204 = vunpack.c.h.s8.bf16 %v2436
    %v3205 = vunpack.c.h.s8.bf16 %v2437
    %v3206 = vunpack.c.h.s8.bf16 %v2438
    %v3207 = vunpack.c.l.s8.bf16 %v2439
    %v3208 = vunpack.c.l.s8.bf16 %v2440
    %v3209 = vunpack.c.l.s8.bf16 %v2441
    %v3210 = vunpack.c.l.s8.bf16 %v2442
    %v3211 = vunpack.c.l.s8.bf16 %v2443
    %v3212 = vunpack.c.l.s8.bf16 %v2444
    %v3213 = vunpack.c.l.s8.bf16 %v2445
    %v3214 = vunpack.c.l.s8.bf16 %v2446
    %v3215 = vunpack.c.l.s8.bf16 %v2447
    %v3216 = vunpack.c.l.s8.bf16 %v2448
    %v3217 = vunpack.c.l.s8.bf16 %v2449
    %v3218 = vunpack.c.l.s8.bf16 %v2450
    %v3219 = vunpack.c.h.s8.bf16 %v2439
    %v3220 = vunpack.c.h.s8.bf16 %v2440
    %v3221 = vunpack.c.h.s8.bf16 %v2441
    %v3222 = vunpack.c.h.s8.bf16 %v2442
    %v3223 = vunpack.c.h.s8.bf16 %v2443
    %v3224 = vunpack.c.h.s8.bf16 %v2444
    %v3225 = vunpack.c.h.s8.bf16 %v2445
    %v3226 = vunpack.c.h.s8.bf16 %v2446
    %v3227 = vunpack.c.h.s8.bf16 %v2447
    %v3228 = vunpack.c.h.s8.bf16 %v2448
    %v3229 = vunpack.c.h.s8.bf16 %v2449
    %v3230 = vunpack.c.h.s8.bf16 %v2450
    %v3231 = vunpack.c.l.s8.bf16 %v2451
    %v3232 = vunpack.c.l.s8.bf16 %v2452
    %v3233 = vunpack.c.l.s8.bf16 %v2453
    %v3234 = vunpack.c.l.s8.bf16 %v2454
    %v3235 = vunpack.c.l.s8.bf16 %v2455
    %v3236 = vunpack.c.l.s8.bf16 %v2456
    %v3237 = vunpack.c.l.s8.bf16 %v2457
    %v3238 = vunpack.c.l.s8.bf16 %v2458
    %v3239 = vunpack.c.l.s8.bf16 %v2459
    %v3240 = vunpack.c.l.s8.bf16 %v2460
    %v3241 = vunpack.c.l.s8.bf16 %v2461
    %v3242 = vunpack.c.l.s8.bf16 %v2462
    %v3243 = vunpack.c.h.s8.bf16 %v2451
    %v3244 = vunpack.c.h.s8.bf16 %v2452
    %v3245 = vunpack.c.h.s8.bf16 %v2453
    %v3246 = vunpack.c.h.s8.bf16 %v2454
    %v3247 = vunpack.c.h.s8.bf16 %v2455
    %v3248 = vunpack.c.h.s8.bf16 %v2456
    %v3249 = vunpack.c.h.s8.bf16 %v2457
    %v3250 = vunpack.c.h.s8.bf16 %v2458
    %v3251 = vunpack.c.h.s8.bf16 %v2459
    %v3252 = vunpack.c.h.s8.bf16 %v2460
    %v3253 = vunpack.c.h.s8.bf16 %v2461
    %v3254 = vunpack.c.h.s8.bf16 %v2462
    %v3255 = vunpack.c.l.s8.bf16 %v2463
    %v3256 = vunpack.c.l.s8.bf16 %v2464
    %v3257 = vunpack.c.l.s8.bf16 %v2465
    %v3258 = vunpack.c.l.s8.bf16 %v2466
    %v3259 = vunpack.c.l.s8.bf16 %v2467
    %v3260 = vunpack.c.l.s8.bf16 %v2468
    %v3261 = vunpack.c.l.s8.bf16 %v2469
    %v3262 = vunpack.c.l.s8.bf16 %v2470
    %v3263 = vunpack.c.l.s8.bf16 %v2471
    %v3264 = vunpack.c.l.s8.bf16 %v2472
    %v3265 = vunpack.c.l.s8.bf16 %v2473
    %v3266 = vunpack.c.l.s8.bf16 %v2474
    %v3267 = vunpack.c.h.s8.bf16 %v2463
    %v3268 = vunpack.c.h.s8.bf16 %v2464
    %v3269 = vunpack.c.h.s8.bf16 %v2465
    %v3270 = vunpack.c.h.s8.bf16 %v2466
    %v3271 = vunpack.c.h.s8.bf16 %v2467
    %v3272 = vunpack.c.h.s8.bf16 %v2468
    %v3273 = vunpack.c.h.s8.bf16 %v2469
    %v3274 = vunpack.c.h.s8.bf16 %v2470
    %v3275 = vunpack.c.h.s8.bf16 %v2471
    %v3276 = vunpack.c.h.s8.bf16 %v2472
    %v3277 = vunpack.c.h.s8.bf16 %v2473
    %v3278 = vunpack.c.h.s8.bf16 %v2474
    %v3279 = vunpack.c.l.s8.bf16 %v2475
    %v3280 = vunpack.c.l.s8.bf16 %v2476
    %v3281 = vunpack.c.l.s8.bf16 %v2477
    %v3282 = vunpack.c.l.s8.bf16 %v2478
    %v3283 = vunpack.c.l.s8.bf16 %v2479
    %v3284 = vunpack.c.l.s8.bf16 %v2480
    %v3285 = vunpack.c.l.s8.bf16 %v2481
    %v3286 = vunpack.c.l.s8.bf16 %v2482
    %v3287 = vunpack.c.l.s8.bf16 %v2483
    %v3288 = vunpack.c.l.s8.bf16 %v2484
    %v3289 = vunpack.c.l.s8.bf16 %v2485
    %v3290 = vunpack.c.l.s8.bf16 %v2486
    %v3291 = vunpack.c.h.s8.bf16 %v2475
    %v3292 = vunpack.c.h.s8.bf16 %v2476
    %v3293 = vunpack.c.h.s8.bf16 %v2477
    %v3294 = vunpack.c.h.s8.bf16 %v2478
    %v3295 = vunpack.c.h.s8.bf16 %v2479
    %v3296 = vunpack.c.h.s8.bf16 %v2480
    %v3297 = vunpack.c.h.s8.bf16 %v2481
    %v3298 = vunpack.c.h.s8.bf16 %v2482
    %v3299 = vunpack.c.h.s8.bf16 %v2483
    %v3300 = vunpack.c.h.s8.bf16 %v2484
    %v3301 = vunpack.c.h.s8.bf16 %v2485
    %v3302 = vunpack.c.h.s8.bf16 %v2486
    %v3303 = vunpack.c.l.s8.bf16 %v2487
    %v3304 = vunpack.c.l.s8.bf16 %v2488
    %v3305 = vunpack.c.l.s8.bf16 %v2489
    %v3306 = vunpack.c.l.s8.bf16 %v2490
    %v3307 = vunpack.c.l.s8.bf16 %v2491
    %v3308 = vunpack.c.l.s8.bf16 %v2492
    %v3309 = vunpack.c.l.s8.bf16 %v2493
    %v3310 = vunpack.c.l.s8.bf16 %v2494
    %v3311 = vunpack.c.l.s8.bf16 %v2495
    %v3312 = vunpack.c.l.s8.bf16 %v2496
    %v3313 = vunpack.c.l.s8.bf16 %v2497
    %v3314 = vunpack.c.l.s8.bf16 %v2498
    %v3315 = vunpack.c.h.s8.bf16 %v2487
    %v3316 = vunpack.c.h.s8.bf16 %v2488
    %v3317 = vunpack.c.h.s8.bf16 %v2489
    %v3318 = vunpack.c.h.s8.bf16 %v2490
    %v3319 = vunpack.c.h.s8.bf16 %v2491
    %v3320 = vunpack.c.h.s8.bf16 %v2492
    %v3321 = vunpack.c.h.s8.bf16 %v2493
    %v3322 = vunpack.c.h.s8.bf16 %v2494
    %v3323 = vunpack.c.h.s8.bf16 %v2495
    %v3324 = vunpack.c.h.s8.bf16 %v2496
    %v3325 = vunpack.c.h.s8.bf16 %v2497
    %v3326 = vunpack.c.h.s8.bf16 %v2498
    %v3327 = vunpack.c.l.s8.bf16 %v2499
    %v3328 = vunpack.c.l.s8.bf16 %v2500
    %v3329 = vunpack.c.l.s8.bf16 %v2501
    %v3330 = vunpack.c.l.s8.bf16 %v2502
    %v3331 = vunpack.c.l.s8.bf16 %v2503
    %v3332 = vunpack.c.l.s8.bf16 %v2504
    %v3333 = vunpack.c.l.s8.bf16 %v2505
    %v3334 = vunpack.c.l.s8.bf16 %v2506
    %v3335 = vunpack.c.l.s8.bf16 %v2507
    %v3336 = vunpack.c.l.s8.bf16 %v2508
    %v3337 = vunpack.c.l.s8.bf16 %v2509
    %v3338 = vunpack.c.l.s8.bf16 %v2510
    %v3339 = vunpack.c.h.s8.bf16 %v2499
    %v3340 = vunpack.c.h.s8.bf16 %v2500
    %v3341 = vunpack.c.h.s8.bf16 %v2501
    %v3342 = vunpack.c.h.s8.bf16 %v2502
    %v3343 = vunpack.c.h.s8.bf16 %v2503
    %v3344 = vunpack.c.h.s8.bf16 %v2504
    %v3345 = vunpack.c.h.s8.bf16 %v2505
    %v3346 = vunpack.c.h.s8.bf16 %v2506
    %v3347 = vunpack.c.h.s8.bf16 %v2507
    %v3348 = vunpack.c.h.s8.bf16 %v2508
    %v3349 = vunpack.c.h.s8.bf16 %v2509
    %v3350 = vunpack.c.h.s8.bf16 %v2510
    %v3351 = vunpack.c.l.s8.bf16 %v2511
    %v3352 = vunpack.c.l.s8.bf16 %v2512
    %v3353 = vunpack.c.l.s8.bf16 %v2513
    %v3354 = vunpack.c.l.s8.bf16 %v2514
    %v3355 = vunpack.c.l.s8.bf16 %v2515
    %v3356 = vunpack.c.l.s8.bf16 %v2516
    %v3357 = vunpack.c.l.s8.bf16 %v2517
    %v3358 = vunpack.c.l.s8.bf16 %v2518
    %v3359 = vunpack.c.l.s8.bf16 %v2519
    %v3360 = vunpack.c.l.s8.bf16 %v2520
    %v3361 = vunpack.c.l.s8.bf16 %v2521
    %v3362 = vunpack.c.l.s8.bf16 %v2522
    %v3363 = vunpack.c.h.s8.bf16 %v2511
    %v3364 = vunpack.c.h.s8.bf16 %v2512
    %v3365 = vunpack.c.h.s8.bf16 %v2513
    %v3366 = vunpack.c.h.s8.bf16 %v2514
    %v3367 = vunpack.c.h.s8.bf16 %v2515
    %v3368 = vunpack.c.h.s8.bf16 %v2516
    %v3369 = vunpack.c.h.s8.bf16 %v2517
    %v3370 = vunpack.c.h.s8.bf16 %v2518
    %v3371 = vunpack.c.h.s8.bf16 %v2519
    %v3372 = vunpack.c.h.s8.bf16 %v2520
    %v3373 = vunpack.c.h.s8.bf16 %v2521
    %v3374 = vunpack.c.h.s8.bf16 %v2522
    %v3375 = vunpack.c.l.s8.bf16 %v2523
    %v3376 = vunpack.c.l.s8.bf16 %v2524
    %v3377 = vunpack.c.l.s8.bf16 %v2525
    %v3378 = vunpack.c.l.s8.bf16 %v2526
    %v3379 = vunpack.c.l.s8.bf16 %v2527
    %v3380 = vunpack.c.l.s8.bf16 %v2528
    %v3381 = vunpack.c.l.s8.bf16 %v2529
    %v3382 = vunpack.c.l.s8.bf16 %v2530
    %v3383 = vunpack.c.l.s8.bf16 %v2531
    %v3384 = vunpack.c.l.s8.bf16 %v2532
    %v3385 = vunpack.c.l.s8.bf16 %v2533
    %v3386 = vunpack.c.l.s8.bf16 %v2534
    %v3387 = vunpack.c.h.s8.bf16 %v2523
    %v3388 = vunpack.c.h.s8.bf16 %v2524
    %v3389 = vunpack.c.h.s8.bf16 %v2525
    %v3390 = vunpack.c.h.s8.bf16 %v2526
    %v3391 = vunpack.c.h.s8.bf16 %v2527
    %v3392 = vunpack.c.h.s8.bf16 %v2528
    %v3393 = vunpack.c.h.s8.bf16 %v2529
    %v3394 = vunpack.c.h.s8.bf16 %v2530
    %v3395 = vunpack.c.h.s8.bf16 %v2531
    %v3396 = vunpack.c.h.s8.bf16 %v2532
    %v3397 = vunpack.c.h.s8.bf16 %v2533
    %v3398 = vunpack.c.h.s8.bf16 %v2534
    %v3399 = vunpack.c.l.s8.bf16 %v2535
    %v3400 = vunpack.c.l.s8.bf16 %v2536
    %v3401 = vunpack.c.l.s8.bf16 %v2537
    %v3402 = vunpack.c.l.s8.bf16 %v2538
    %v3403 = vunpack.c.l.s8.bf16 %v2539
    %v3404 = vunpack.c.l.s8.bf16 %v2540
    %v3405 = vunpack.c.l.s8.bf16 %v2541
    %v3406 = vunpack.c.l.s8.bf16 %v2542
    %v3407 = vunpack.c.l.s8.bf16 %v2543
    %v3408 = vunpack.c.l.s8.bf16 %v2544
    %v3409 = vunpack.c.l.s8.bf16 %v2545
    %v3410 = vunpack.c.l.s8.bf16 %v2546
    %v3411 = vunpack.c.h.s8.bf16 %v2535
    %v3412 = vunpack.c.h.s8.bf16 %v2536
    %v3413 = vunpack.c.h.s8.bf16 %v2537
    %v3414 = vunpack.c.h.s8.bf16 %v2538
    %v3415 = vunpack.c.h.s8.bf16 %v2539
    %v3416 = vunpack.c.h.s8.bf16 %v2540
    %v3417 = vunpack.c.h.s8.bf16 %v2541
    %v3418 = vunpack.c.h.s8.bf16 %v2542
    %v3419 = vunpack.c.h.s8.bf16 %v2543
    %v3420 = vunpack.c.h.s8.bf16 %v2544
    %v3421 = vunpack.c.h.s8.bf16 %v2545
    %v3422 = vunpack.c.h.s8.bf16 %v2546
    %v3423 = vunpack.c.l.s8.bf16 %v2547
    %v3424 = vunpack.c.l.s8.bf16 %v2548
    %v3425 = vunpack.c.l.s8.bf16 %v2549
    %v3426 = vunpack.c.l.s8.bf16 %v2550
    %v3427 = vunpack.c.l.s8.bf16 %v2551
    %v3428 = vunpack.c.l.s8.bf16 %v2552
    %v3429 = vunpack.c.l.s8.bf16 %v2553
    %v3430 = vunpack.c.l.s8.bf16 %v2554
    %v3431 = vunpack.c.l.s8.bf16 %v2555
    %v3432 = vunpack.c.l.s8.bf16 %v2556
    %v3433 = vunpack.c.l.s8.bf16 %v2557
    %v3434 = vunpack.c.l.s8.bf16 %v2558
    %v3435 = vunpack.c.h.s8.bf16 %v2547
    %v3436 = vunpack.c.h.s8.bf16 %v2548
    %v3437 = vunpack.c.h.s8.bf16 %v2549
    %v3438 = vunpack.c.h.s8.bf16 %v2550
    %v3439 = vunpack.c.h.s8.bf16 %v2551
    %v3440 = vunpack.c.h.s8.bf16 %v2552
    %v3441 = vunpack.c.h.s8.bf16 %v2553
    %v3442 = vunpack.c.h.s8.bf16 %v2554
    %v3443 = vunpack.c.h.s8.bf16 %v2555
    %v3444 = vunpack.c.h.s8.bf16 %v2556
    %v3445 = vunpack.c.h.s8.bf16 %v2557
    %v3446 = vunpack.c.h.s8.bf16 %v2558
    %v3447 = vunpack.c.l.s8.bf16 %v2559
    %v3448 = vunpack.c.l.s8.bf16 %v2560
    %v3449 = vunpack.c.l.s8.bf16 %v2561
    %v3450 = vunpack.c.l.s8.bf16 %v2562
    %v3451 = vunpack.c.l.s8.bf16 %v2563
    %v3452 = vunpack.c.l.s8.bf16 %v2564
    %v3453 = vunpack.c.l.s8.bf16 %v2565
    %v3454 = vunpack.c.l.s8.bf16 %v2566
    %v3455 = vunpack.c.l.s8.bf16 %v2567
    %v3456 = vunpack.c.l.s8.bf16 %v2568
    %v3457 = vunpack.c.l.s8.bf16 %v2569
    %v3458 = vunpack.c.l.s8.bf16 %v2570
    %v3459 = vunpack.c.h.s8.bf16 %v2559
    %v3460 = vunpack.c.h.s8.bf16 %v2560
    %v3461 = vunpack.c.h.s8.bf16 %v2561
    %v3462 = vunpack.c.h.s8.bf16 %v2562
    %v3463 = vunpack.c.h.s8.bf16 %v2563
    %v3464 = vunpack.c.h.s8.bf16 %v2564
    %v3465 = vunpack.c.h.s8.bf16 %v2565
    %v3466 = vunpack.c.h.s8.bf16 %v2566
    %v3467 = vunpack.c.h.s8.bf16 %v2567
    %v3468 = vunpack.c.h.s8.bf16 %v2568
    %v3469 = vunpack.c.h.s8.bf16 %v2569
    %v3470 = vunpack.c.h.s8.bf16 %v2570
    %v3471 = vunpack.c.l.s8.bf16 %v2571
    %v3472 = vunpack.c.l.s8.bf16 %v2572
    %v3473 = vunpack.c.l.s8.bf16 %v2573
    %v3474 = vunpack.c.l.s8.bf16 %v2574
    %v3475 = vunpack.c.l.s8.bf16 %v2575
    %v3476 = vunpack.c.l.s8.bf16 %v2576
    %v3477 = vunpack.c.l.s8.bf16 %v2577
    %v3478 = vunpack.c.l.s8.bf16 %v2578
    %v3479 = vunpack.c.l.s8.bf16 %v2579
    %v3480 = vunpack.c.l.s8.bf16 %v2580
    %v3481 = vunpack.c.l.s8.bf16 %v2581
    %v3482 = vunpack.c.l.s8.bf16 %v2582
    %v3483 = vunpack.c.h.s8.bf16 %v2571
    %v3484 = vunpack.c.h.s8.bf16 %v2572
    %v3485 = vunpack.c.h.s8.bf16 %v2573
    %v3486 = vunpack.c.h.s8.bf16 %v2574
    %v3487 = vunpack.c.h.s8.bf16 %v2575
    %v3488 = vunpack.c.h.s8.bf16 %v2576
    %v3489 = vunpack.c.h.s8.bf16 %v2577
    %v3490 = vunpack.c.h.s8.bf16 %v2578
    %v3491 = vunpack.c.h.s8.bf16 %v2579
    %v3492 = vunpack.c.h.s8.bf16 %v2580
    %v3493 = vunpack.c.h.s8.bf16 %v2581
    %v3494 = vunpack.c.h.s8.bf16 %v2582
    %v3495 = vunpack.c.l.s8.bf16 %v2583
    %v3496 = vunpack.c.l.s8.bf16 %v2584
    %v3497 = vunpack.c.l.s8.bf16 %v2585
    %v3498 = vunpack.c.l.s8.bf16 %v2586
    %v3499 = vunpack.c.l.s8.bf16 %v2587
    %v3500 = vunpack.c.l.s8.bf16 %v2588
    %v3501 = vunpack.c.l.s8.bf16 %v2589
    %v3502 = vunpack.c.l.s8.bf16 %v2590
    %v3503 = vunpack.c.l.s8.bf16 %v2591
    %v3504 = vunpack.c.l.s8.bf16 %v2592
    %v3505 = vunpack.c.l.s8.bf16 %v2593
    %v3506 = vunpack.c.l.s8.bf16 %v2594
    %v3507 = vunpack.c.h.s8.bf16 %v2583
    %v3508 = vunpack.c.h.s8.bf16 %v2584
    %v3509 = vunpack.c.h.s8.bf16 %v2585
    %v3510 = vunpack.c.h.s8.bf16 %v2586
    %v3511 = vunpack.c.h.s8.bf16 %v2587
    %v3512 = vunpack.c.h.s8.bf16 %v2588
    %v3513 = vunpack.c.h.s8.bf16 %v2589
    %v3514 = vunpack.c.h.s8.bf16 %v2590
    %v3515 = vunpack.c.h.s8.bf16 %v2591
    %v3516 = vunpack.c.h.s8.bf16 %v2592
    %v3517 = vunpack.c.h.s8.bf16 %v2593
    %v3518 = vunpack.c.h.s8.bf16 %v2594
    %v3519 = vunpack.c.l.s8.bf16 %v2595
    %v3520 = vunpack.c.l.s8.bf16 %v2596
    %v3521 = vunpack.c.l.s8.bf16 %v2597
    %v3522 = vunpack.c.l.s8.bf16 %v2598
    %v3523 = vunpack.c.l.s8.bf16 %v2599
    %v3524 = vunpack.c.l.s8.bf16 %v2600
    %v3525 = vunpack.c.l.s8.bf16 %v2601
    %v3526 = vunpack.c.l.s8.bf16 %v2602
    %v3527 = vunpack.c.l.s8.bf16 %v2603
    %v3528 = vunpack.c.l.s8.bf16 %v2604
    %v3529 = vunpack.c.l.s8.bf16 %v2605
    %v3530 = vunpack.c.l.s8.bf16 %v2606
    %v3531 = vunpack.c.h.s8.bf16 %v2595
    %v3532 = vunpack.c.h.s8.bf16 %v2596
    %v3533 = vunpack.c.h.s8.bf16 %v2597
    %v3534 = vunpack.c.h.s8.bf16 %v2598
    %v3535 = vunpack.c.h.s8.bf16 %v2599
    %v3536 = vunpack.c.h.s8.bf16 %v2600
    %v3537 = vunpack.c.h.s8.bf16 %v2601
    %v3538 = vunpack.c.h.s8.bf16 %v2602
    %v3539 = vunpack.c.h.s8.bf16 %v2603
    %v3540 = vunpack.c.h.s8.bf16 %v2604
    %v3541 = vunpack.c.h.s8.bf16 %v2605
    %v3542 = vunpack.c.h.s8.bf16 %v2606
    %v3543 = vunpack.c.l.s8.bf16 %v2607
    %v3544 = vunpack.c.l.s8.bf16 %v2608
    %v3545 = vunpack.c.l.s8.bf16 %v2609
    %v3546 = vunpack.c.l.s8.bf16 %v2610
    %v3547 = vunpack.c.l.s8.bf16 %v2611
    %v3548 = vunpack.c.l.s8.bf16 %v2612
    %v3549 = vunpack.c.l.s8.bf16 %v2613
    %v3550 = vunpack.c.l.s8.bf16 %v2614
    %v3551 = vunpack.c.l.s8.bf16 %v2615
    %v3552 = vunpack.c.l.s8.bf16 %v2616
    %v3553 = vunpack.c.l.s8.bf16 %v2617
    %v3554 = vunpack.c.l.s8.bf16 %v2618
    %v3555 = vunpack.c.h.s8.bf16 %v2607
    %v3556 = vunpack.c.h.s8.bf16 %v2608
    %v3557 = vunpack.c.h.s8.bf16 %v2609
    %v3558 = vunpack.c.h.s8.bf16 %v2610
    %v3559 = vunpack.c.h.s8.bf16 %v2611
    %v3560 = vunpack.c.h.s8.bf16 %v2612
    %v3561 = vunpack.c.h.s8.bf16 %v2613
    %v3562 = vunpack.c.h.s8.bf16 %v2614
    %v3563 = vunpack.c.h.s8.bf16 %v2615
    %v3564 = vunpack.c.h.s8.bf16 %v2616
    %v3565 = vunpack.c.h.s8.bf16 %v2617
    %v3566 = vunpack.c.h.s8.bf16 %v2618
    %v3567 = vunpack.c.l.s8.bf16 %v2619
    %v3568 = vunpack.c.l.s8.bf16 %v2620
    %v3569 = vunpack.c.l.s8.bf16 %v2621
    %v3570 = vunpack.c.l.s8.bf16 %v2622
    %v3571 = vunpack.c.l.s8.bf16 %v2623
    %v3572 = vunpack.c.l.s8.bf16 %v2624
    %v3573 = vunpack.c.l.s8.bf16 %v2625
    %v3574 = vunpack.c.l.s8.bf16 %v2626
    %v3575 = vunpack.c.l.s8.bf16 %v2627
    %v3576 = vunpack.c.l.s8.bf16 %v2628
    %v3577 = vunpack.c.l.s8.bf16 %v2629
    %v3578 = vunpack.c.l.s8.bf16 %v2630
    %v3579 = vunpack.c.h.s8.bf16 %v2619
    %v3580 = vunpack.c.h.s8.bf16 %v2620
    %v3581 = vunpack.c.h.s8.bf16 %v2621
    %v3582 = vunpack.c.h.s8.bf16 %v2622
    %v3583 = vunpack.c.h.s8.bf16 %v2623
    %v3584 = vunpack.c.h.s8.bf16 %v2624
    %v3585 = vunpack.c.h.s8.bf16 %v2625
    %v3586 = vunpack.c.h.s8.bf16 %v2626
    %v3587 = vunpack.c.h.s8.bf16 %v2627
    %v3588 = vunpack.c.h.s8.bf16 %v2628
    %v3589 = vunpack.c.h.s8.bf16 %v2629
    %v3590 = vunpack.c.h.s8.bf16 %v2630
    %v3591 = vunpack.c.l.s8.bf16 %v2631
    %v3592 = vunpack.c.l.s8.bf16 %v2632
    %v3593 = vunpack.c.l.s8.bf16 %v2633
    %v3594 = vunpack.c.l.s8.bf16 %v2634
    %v3595 = vunpack.c.l.s8.bf16 %v2635
    %v3596 = vunpack.c.l.s8.bf16 %v2636
    %v3597 = vunpack.c.l.s8.bf16 %v2637
    %v3598 = vunpack.c.l.s8.bf16 %v2638
    %v3599 = vunpack.c.l.s8.bf16 %v2639
    %v3600 = vunpack.c.l.s8.bf16 %v2640
    %v3601 = vunpack.c.l.s8.bf16 %v2641
    %v3602 = vunpack.c.l.s8.bf16 %v2642
    %v3603 = vunpack.c.h.s8.bf16 %v2631
    %v3604 = vunpack.c.h.s8.bf16 %v2632
    %v3605 = vunpack.c.h.s8.bf16 %v2633
    %v3606 = vunpack.c.h.s8.bf16 %v2634
    %v3607 = vunpack.c.h.s8.bf16 %v2635
    %v3608 = vunpack.c.h.s8.bf16 %v2636
    %v3609 = vunpack.c.h.s8.bf16 %v2637
    %v3610 = vunpack.c.h.s8.bf16 %v2638
    %v3611 = vunpack.c.h.s8.bf16 %v2639
    %v3612 = vunpack.c.h.s8.bf16 %v2640
    %v3613 = vunpack.c.h.s8.bf16 %v2641
    %v3614 = vunpack.c.h.s8.bf16 %v2642
    %v3615 = vunpack.c.l.s8.bf16 %v2643
    %v3616 = vunpack.c.l.s8.bf16 %v2644
    %v3617 = vunpack.c.l.s8.bf16 %v2645
    %v3618 = vunpack.c.l.s8.bf16 %v2646
    %v3619 = vunpack.c.l.s8.bf16 %v2647
    %v3620 = vunpack.c.l.s8.bf16 %v2648
    %v3621 = vunpack.c.l.s8.bf16 %v2649
    %v3622 = vunpack.c.l.s8.bf16 %v2650
    %v3623 = vunpack.c.l.s8.bf16 %v2651
    %v3624 = vunpack.c.l.s8.bf16 %v2652
    %v3625 = vunpack.c.l.s8.bf16 %v2653
    %v3626 = vunpack.c.l.s8.bf16 %v2654
    %v3627 = vunpack.c.h.s8.bf16 %v2643
    %v3628 = vunpack.c.h.s8.bf16 %v2644
    %v3629 = vunpack.c.h.s8.bf16 %v2645
    %v3630 = vunpack.c.h.s8.bf16 %v2646
    %v3631 = vunpack.c.h.s8.bf16 %v2647
    %v3632 = vunpack.c.h.s8.bf16 %v2648
    %v3633 = vunpack.c.h.s8.bf16 %v2649
    %v3634 = vunpack.c.h.s8.bf16 %v2650
    %v3635 = vunpack.c.h.s8.bf16 %v2651
    %v3636 = vunpack.c.h.s8.bf16 %v2652
    %v3637 = vunpack.c.h.s8.bf16 %v2653
    %v3638 = vunpack.c.h.s8.bf16 %v2654
    %v3639 = vunpack.c.l.s8.bf16 %v2655
    %v3640 = vunpack.c.l.s8.bf16 %v2656
    %v3641 = vunpack.c.l.s8.bf16 %v2657
    %v3642 = vunpack.c.l.s8.bf16 %v2658
    %v3643 = vunpack.c.l.s8.bf16 %v2659
    %v3644 = vunpack.c.l.s8.bf16 %v2660
    %v3645 = vunpack.c.l.s8.bf16 %v2661
    %v3646 = vunpack.c.l.s8.bf16 %v2662
    %v3647 = vunpack.c.l.s8.bf16 %v2663
    %v3648 = vunpack.c.l.s8.bf16 %v2664
    %v3649 = vunpack.c.l.s8.bf16 %v2665
    %v3650 = vunpack.c.l.s8.bf16 %v2666
    %v3651 = vunpack.c.h.s8.bf16 %v2655
    %v3652 = vunpack.c.h.s8.bf16 %v2656
    %v3653 = vunpack.c.h.s8.bf16 %v2657
    %v3654 = vunpack.c.h.s8.bf16 %v2658
    %v3655 = vunpack.c.h.s8.bf16 %v2659
    %v3656 = vunpack.c.h.s8.bf16 %v2660
    %v3657 = vunpack.c.h.s8.bf16 %v2661
    %v3658 = vunpack.c.h.s8.bf16 %v2662
    %v3659 = vunpack.c.h.s8.bf16 %v2663
    %v3660 = vunpack.c.h.s8.bf16 %v2664
    %v3661 = vunpack.c.h.s8.bf16 %v2665
    %v3662 = vunpack.c.h.s8.bf16 %v2666
    %v3663 = vunpack.c.l.s8.bf16 %v2667
    %v3664 = vunpack.c.l.s8.bf16 %v2668
    %v3665 = vunpack.c.l.s8.bf16 %v2669
    %v3666 = vunpack.c.l.s8.bf16 %v2670
    %v3667 = vunpack.c.l.s8.bf16 %v2671
    %v3668 = vunpack.c.l.s8.bf16 %v2672
    %v3669 = vunpack.c.l.s8.bf16 %v2673
    %v3670 = vunpack.c.l.s8.bf16 %v2674
    %v3671 = vunpack.c.l.s8.bf16 %v2675
    %v3672 = vunpack.c.l.s8.bf16 %v2676
    %v3673 = vunpack.c.l.s8.bf16 %v2677
    %v3674 = vunpack.c.l.s8.bf16 %v2678
    %v3675 = vunpack.c.h.s8.bf16 %v2667
    %v3676 = vunpack.c.h.s8.bf16 %v2668
    %v3677 = vunpack.c.h.s8.bf16 %v2669
    %v3678 = vunpack.c.h.s8.bf16 %v2670
    %v3679 = vunpack.c.h.s8.bf16 %v2671
    %v3680 = vunpack.c.h.s8.bf16 %v2672
    %v3681 = vunpack.c.h.s8.bf16 %v2673
    %v3682 = vunpack.c.h.s8.bf16 %v2674
    %v3683 = vunpack.c.h.s8.bf16 %v2675
    %v3684 = vunpack.c.h.s8.bf16 %v2676
    %v3685 = vunpack.c.h.s8.bf16 %v2677
    %v3686 = vunpack.c.h.s8.bf16 %v2678
    %v3687 = vunpack.c.l.s8.bf16 %v2679
    %v3688 = vunpack.c.l.s8.bf16 %v2680
    %v3689 = vunpack.c.l.s8.bf16 %v2681
    %v3690 = vunpack.c.l.s8.bf16 %v2682
    %v3691 = vunpack.c.l.s8.bf16 %v2683
    %v3692 = vunpack.c.l.s8.bf16 %v2684
    %v3693 = vunpack.c.l.s8.bf16 %v2685
    %v3694 = vunpack.c.l.s8.bf16 %v2686
    %v3695 = vunpack.c.l.s8.bf16 %v2687
    %v3696 = vunpack.c.l.s8.bf16 %v2688
    %v3697 = vunpack.c.l.s8.bf16 %v2689
    %v3698 = vunpack.c.l.s8.bf16 %v2690
    %v3699 = vunpack.c.h.s8.bf16 %v2679
    %v3700 = vunpack.c.h.s8.bf16 %v2680
    %v3701 = vunpack.c.h.s8.bf16 %v2681
    %v3702 = vunpack.c.h.s8.bf16 %v2682
    %v3703 = vunpack.c.h.s8.bf16 %v2683
    %v3704 = vunpack.c.h.s8.bf16 %v2684
    %v3705 = vunpack.c.h.s8.bf16 %v2685
    %v3706 = vunpack.c.h.s8.bf16 %v2686
    %v3707 = vunpack.c.h.s8.bf16 %v2687
    %v3708 = vunpack.c.h.s8.bf16 %v2688
    %v3709 = vunpack.c.h.s8.bf16 %v2689
    %v3710 = vunpack.c.h.s8.bf16 %v2690
    %v3711 = vunpack.c.l.s8.bf16 %v2691
    %v3712 = vunpack.c.l.s8.bf16 %v2692
    %v3713 = vunpack.c.l.s8.bf16 %v2693
    %v3714 = vunpack.c.l.s8.bf16 %v2694
    %v3715 = vunpack.c.l.s8.bf16 %v2695
    %v3716 = vunpack.c.l.s8.bf16 %v2696
    %v3717 = vunpack.c.l.s8.bf16 %v2697
    %v3718 = vunpack.c.l.s8.bf16 %v2698
    %v3719 = vunpack.c.l.s8.bf16 %v2699
    %v3720 = vunpack.c.l.s8.bf16 %v2700
    %v3721 = vunpack.c.l.s8.bf16 %v2701
    %v3722 = vunpack.c.l.s8.bf16 %v2702
    %v3723 = vunpack.c.h.s8.bf16 %v2691
    %v3724 = vunpack.c.h.s8.bf16 %v2692
    %v3725 = vunpack.c.h.s8.bf16 %v2693
    %v3726 = vunpack.c.h.s8.bf16 %v2694
    %v3727 = vunpack.c.h.s8.bf16 %v2695
    %v3728 = vunpack.c.h.s8.bf16 %v2696
    %v3729 = vunpack.c.h.s8.bf16 %v2697
    %v3730 = vunpack.c.h.s8.bf16 %v2698
    %v3731 = vunpack.c.h.s8.bf16 %v2699
    %v3732 = vunpack.c.h.s8.bf16 %v2700
    %v3733 = vunpack.c.h.s8.bf16 %v2701
    %v3734 = vunpack.c.h.s8.bf16 %v2702
    %v3735 = vunpack.c.l.s8.bf16 %v2703
    %v3736 = vunpack.c.l.s8.bf16 %v2704
    %v3737 = vunpack.c.l.s8.bf16 %v2705
    %v3738 = vunpack.c.l.s8.bf16 %v2706
    %v3739 = vunpack.c.l.s8.bf16 %v2707
    %v3740 = vunpack.c.l.s8.bf16 %v2708
    %v3741 = vunpack.c.l.s8.bf16 %v2709
    %v3742 = vunpack.c.l.s8.bf16 %v2710
    %v3743 = vunpack.c.l.s8.bf16 %v2711
    %v3744 = vunpack.c.l.s8.bf16 %v2712
    %v3745 = vunpack.c.l.s8.bf16 %v2713
    %v3746 = vunpack.c.l.s8.bf16 %v2714
    %v3747 = vunpack.c.h.s8.bf16 %v2703
    %v3748 = vunpack.c.h.s8.bf16 %v2704
    %v3749 = vunpack.c.h.s8.bf16 %v2705
    %v3750 = vunpack.c.h.s8.bf16 %v2706
    %v3751 = vunpack.c.h.s8.bf16 %v2707
    %v3752 = vunpack.c.h.s8.bf16 %v2708
    %v3753 = vunpack.c.h.s8.bf16 %v2709
    %v3754 = vunpack.c.h.s8.bf16 %v2710
    %v3755 = vunpack.c.h.s8.bf16 %v2711
    %v3756 = vunpack.c.h.s8.bf16 %v2712
    %v3757 = vunpack.c.h.s8.bf16 %v2713
    %v3758 = vunpack.c.h.s8.bf16 %v2714
    %v3759 = vunpack.c.l.s8.bf16 %v2715
    %v3760 = vunpack.c.l.s8.bf16 %v2716
    %v3761 = vunpack.c.l.s8.bf16 %v2717
    %v3762 = vunpack.c.l.s8.bf16 %v2718
    %v3763 = vunpack.c.l.s8.bf16 %v2719
    %v3764 = vunpack.c.l.s8.bf16 %v2720
    %v3765 = vunpack.c.l.s8.bf16 %v2721
    %v3766 = vunpack.c.l.s8.bf16 %v2722
    %v3767 = vunpack.c.l.s8.bf16 %v2723
    %v3768 = vunpack.c.l.s8.bf16 %v2724
    %v3769 = vunpack.c.l.s8.bf16 %v2725
    %v3770 = vunpack.c.l.s8.bf16 %v2726
    %v3771 = vunpack.c.h.s8.bf16 %v2715
    %v3772 = vunpack.c.h.s8.bf16 %v2716
    %v3773 = vunpack.c.h.s8.bf16 %v2717
    %v3774 = vunpack.c.h.s8.bf16 %v2718
    %v3775 = vunpack.c.h.s8.bf16 %v2719
    %v3776 = vunpack.c.h.s8.bf16 %v2720
    %v3777 = vunpack.c.h.s8.bf16 %v2721
    %v3778 = vunpack.c.h.s8.bf16 %v2722
    %v3779 = vunpack.c.h.s8.bf16 %v2723
    %v3780 = vunpack.c.h.s8.bf16 %v2724
    %v3781 = vunpack.c.h.s8.bf16 %v2725
    %v3782 = vunpack.c.h.s8.bf16 %v2726
    %v3783 = vunpack.c.l.s8.bf16 %v2727
    %v3784 = vunpack.c.l.s8.bf16 %v2728
    %v3785 = vunpack.c.l.s8.bf16 %v2729
    %v3786 = vunpack.c.l.s8.bf16 %v2730
    %v3787 = vunpack.c.l.s8.bf16 %v2731
    %v3788 = vunpack.c.l.s8.bf16 %v2732
    %v3789 = vunpack.c.l.s8.bf16 %v2733
    %v3790 = vunpack.c.l.s8.bf16 %v2734
    %v3791 = vunpack.c.l.s8.bf16 %v2735
    %v3792 = vunpack.c.l.s8.bf16 %v2736
    %v3793 = vunpack.c.l.s8.bf16 %v2737
    %v3794 = vunpack.c.l.s8.bf16 %v2738
    %v3795 = vunpack.c.h.s8.bf16 %v2727
    %v3796 = vunpack.c.h.s8.bf16 %v2728
    %v3797 = vunpack.c.h.s8.bf16 %v2729
    %v3798 = vunpack.c.h.s8.bf16 %v2730
    %v3799 = vunpack.c.h.s8.bf16 %v2731
    %v3800 = vunpack.c.h.s8.bf16 %v2732
    %v3801 = vunpack.c.h.s8.bf16 %v2733
    %v3802 = vunpack.c.h.s8.bf16 %v2734
    %v3803 = vunpack.c.h.s8.bf16 %v2735
    %v3804 = vunpack.c.h.s8.bf16 %v2736
    %v3805 = vunpack.c.h.s8.bf16 %v2737
    %v3806 = vunpack.c.h.s8.bf16 %v2738
    %v3807 = vunpack.c.l.s8.bf16 %v2739
    %v3808 = vunpack.c.l.s8.bf16 %v2740
    %v3809 = vunpack.c.l.s8.bf16 %v2741
    %v3810 = vunpack.c.l.s8.bf16 %v2742
    %v3811 = vunpack.c.l.s8.bf16 %v2743
    %v3812 = vunpack.c.l.s8.bf16 %v2744
    %v3813 = vunpack.c.l.s8.bf16 %v2745
    %v3814 = vunpack.c.l.s8.bf16 %v2746
    %v3815 = vunpack.c.l.s8.bf16 %v2747
    %v3816 = vunpack.c.l.s8.bf16 %v2748
    %v3817 = vunpack.c.l.s8.bf16 %v2749
    %v3818 = vunpack.c.l.s8.bf16 %v2750
    %v3819 = vunpack.c.h.s8.bf16 %v2739
    %v3820 = vunpack.c.h.s8.bf16 %v2740
    %v3821 = vunpack.c.h.s8.bf16 %v2741
    %v3822 = vunpack.c.h.s8.bf16 %v2742
    %v3823 = vunpack.c.h.s8.bf16 %v2743
    %v3824 = vunpack.c.h.s8.bf16 %v2744
    %v3825 = vunpack.c.h.s8.bf16 %v2745
    %v3826 = vunpack.c.h.s8.bf16 %v2746
    %v3827 = vunpack.c.h.s8.bf16 %v2747
    %v3828 = vunpack.c.h.s8.bf16 %v2748
    %v3829 = vunpack.c.h.s8.bf16 %v2749
    %v3830 = vunpack.c.h.s8.bf16 %v2750
    %v3831 = vunpack.c.l.s8.bf16 %v2751
    %v3832 = vunpack.c.l.s8.bf16 %v2752
    %v3833 = vunpack.c.l.s8.bf16 %v2753
    %v3834 = vunpack.c.l.s8.bf16 %v2754
    %v3835 = vunpack.c.l.s8.bf16 %v2755
    %v3836 = vunpack.c.l.s8.bf16 %v2756
    %v3837 = vunpack.c.l.s8.bf16 %v2757
    %v3838 = vunpack.c.l.s8.bf16 %v2758
    %v3839 = vunpack.c.l.s8.bf16 %v2759
    %v3840 = vunpack.c.l.s8.bf16 %v2760
    %v3841 = vunpack.c.l.s8.bf16 %v2761
    %v3842 = vunpack.c.l.s8.bf16 %v2762
    %v3843 = vunpack.c.h.s8.bf16 %v2751
    %v3844 = vunpack.c.h.s8.bf16 %v2752
    %v3845 = vunpack.c.h.s8.bf16 %v2753
    %v3846 = vunpack.c.h.s8.bf16 %v2754
    %v3847 = vunpack.c.h.s8.bf16 %v2755
    %v3848 = vunpack.c.h.s8.bf16 %v2756
    %v3849 = vunpack.c.h.s8.bf16 %v2757
    %v3850 = vunpack.c.h.s8.bf16 %v2758
    %v3851 = vunpack.c.h.s8.bf16 %v2759
    %v3852 = vunpack.c.h.s8.bf16 %v2760
    %v3853 = vunpack.c.h.s8.bf16 %v2761
    %v3854 = vunpack.c.h.s8.bf16 %v2762
    %v3855 = vunpack.c.l.s8.bf16 %v2763
    %v3856 = vunpack.c.l.s8.bf16 %v2764
    %v3857 = vunpack.c.l.s8.bf16 %v2765
    %v3858 = vunpack.c.l.s8.bf16 %v2766
    %v3859 = vunpack.c.l.s8.bf16 %v2767
    %v3860 = vunpack.c.l.s8.bf16 %v2768
    %v3861 = vunpack.c.l.s8.bf16 %v2769
    %v3862 = vunpack.c.l.s8.bf16 %v2770
    %v3863 = vunpack.c.l.s8.bf16 %v2771
    %v3864 = vunpack.c.l.s8.bf16 %v2772
    %v3865 = vunpack.c.l.s8.bf16 %v2773
    %v3866 = vunpack.c.l.s8.bf16 %v2774
    %v3867 = vunpack.c.h.s8.bf16 %v2763
    %v3868 = vunpack.c.h.s8.bf16 %v2764
    %v3869 = vunpack.c.h.s8.bf16 %v2765
    %v3870 = vunpack.c.h.s8.bf16 %v2766
    %v3871 = vunpack.c.h.s8.bf16 %v2767
    %v3872 = vunpack.c.h.s8.bf16 %v2768
    %v3873 = vunpack.c.h.s8.bf16 %v2769
    %v3874 = vunpack.c.h.s8.bf16 %v2770
    %v3875 = vunpack.c.h.s8.bf16 %v2771
    %v3876 = vunpack.c.h.s8.bf16 %v2772
    %v3877 = vunpack.c.h.s8.bf16 %v2773
    %v3878 = vunpack.c.h.s8.bf16 %v2774
    %v3879 = vunpack.c.l.s8.bf16 %v2775
    %v3880 = vunpack.c.l.s8.bf16 %v2776
    %v3881 = vunpack.c.l.s8.bf16 %v2777
    %v3882 = vunpack.c.l.s8.bf16 %v2778
    %v3883 = vunpack.c.l.s8.bf16 %v2779
    %v3884 = vunpack.c.l.s8.bf16 %v2780
    %v3885 = vunpack.c.l.s8.bf16 %v2781
    %v3886 = vunpack.c.l.s8.bf16 %v2782
    %v3887 = vunpack.c.l.s8.bf16 %v2783
    %v3888 = vunpack.c.l.s8.bf16 %v2784
    %v3889 = vunpack.c.l.s8.bf16 %v2785
    %v3890 = vunpack.c.l.s8.bf16 %v2786
    %v3891 = vunpack.c.h.s8.bf16 %v2775
    %v3892 = vunpack.c.h.s8.bf16 %v2776
    %v3893 = vunpack.c.h.s8.bf16 %v2777
    %v3894 = vunpack.c.h.s8.bf16 %v2778
    %v3895 = vunpack.c.h.s8.bf16 %v2779
    %v3896 = vunpack.c.h.s8.bf16 %v2780
    %v3897 = vunpack.c.h.s8.bf16 %v2781
    %v3898 = vunpack.c.h.s8.bf16 %v2782
    %v3899 = vunpack.c.h.s8.bf16 %v2783
    %v3900 = vunpack.c.h.s8.bf16 %v2784
    %v3901 = vunpack.c.h.s8.bf16 %v2785
    %v3902 = vunpack.c.h.s8.bf16 %v2786
    %v3903 = vunpack.c.l.s8.bf16 %v2787
    %v3904 = vunpack.c.l.s8.bf16 %v2788
    %v3905 = vunpack.c.l.s8.bf16 %v2789
    %v3906 = vunpack.c.l.s8.bf16 %v2790
    %v3907 = vunpack.c.l.s8.bf16 %v2791
    %v3908 = vunpack.c.l.s8.bf16 %v2792
    %v3909 = vunpack.c.l.s8.bf16 %v2793
    %v3910 = vunpack.c.l.s8.bf16 %v2794
    %v3911 = vunpack.c.l.s8.bf16 %v2795
    %v3912 = vunpack.c.l.s8.bf16 %v2796
    %v3913 = vunpack.c.l.s8.bf16 %v2797
    %v3914 = vunpack.c.l.s8.bf16 %v2798
    %v3915 = vunpack.c.h.s8.bf16 %v2787
    %v3916 = vunpack.c.h.s8.bf16 %v2788
    %v3917 = vunpack.c.h.s8.bf16 %v2789
    %v3918 = vunpack.c.h.s8.bf16 %v2790
    %v3919 = vunpack.c.h.s8.bf16 %v2791
    %v3920 = vunpack.c.h.s8.bf16 %v2792
    %v3921 = vunpack.c.h.s8.bf16 %v2793
    %v3922 = vunpack.c.h.s8.bf16 %v2794
    %v3923 = vunpack.c.h.s8.bf16 %v2795
    %v3924 = vunpack.c.h.s8.bf16 %v2796
    %v3925 = vunpack.c.h.s8.bf16 %v2797
    %v3926 = vunpack.c.h.s8.bf16 %v2798
    %v3927 = vunpack.c.l.s8.bf16 %v2799
    %v3928 = vunpack.c.l.s8.bf16 %v2800
    %v3929 = vunpack.c.l.s8.bf16 %v2801
    %v3930 = vunpack.c.l.s8.bf16 %v2802
    %v3931 = vunpack.c.l.s8.bf16 %v2803
    %v3932 = vunpack.c.l.s8.bf16 %v2804
    %v3933 = vunpack.c.l.s8.bf16 %v2805
    %v3934 = vunpack.c.l.s8.bf16 %v2806
    %v3935 = vunpack.c.l.s8.bf16 %v2807
    %v3936 = vunpack.c.l.s8.bf16 %v2808
    %v3937 = vunpack.c.l.s8.bf16 %v2809
    %v3938 = vunpack.c.l.s8.bf16 %v2810
    %v3939 = vunpack.c.h.s8.bf16 %v2799
    %v3940 = vunpack.c.h.s8.bf16 %v2800
    %v3941 = vunpack.c.h.s8.bf16 %v2801
    %v3942 = vunpack.c.h.s8.bf16 %v2802
    %v3943 = vunpack.c.h.s8.bf16 %v2803
    %v3944 = vunpack.c.h.s8.bf16 %v2804
    %v3945 = vunpack.c.h.s8.bf16 %v2805
    %v3946 = vunpack.c.h.s8.bf16 %v2806
    %v3947 = vunpack.c.h.s8.bf16 %v2807
    %v3948 = vunpack.c.h.s8.bf16 %v2808
    %v3949 = vunpack.c.h.s8.bf16 %v2809
    %v3950 = vunpack.c.h.s8.bf16 %v2810
    %v3951 = vunpack.c.l.s8.bf16 %v2811
    %v3952 = vunpack.c.l.s8.bf16 %v2812
    %v3953 = vunpack.c.l.s8.bf16 %v2813
    %v3954 = vunpack.c.l.s8.bf16 %v2814
    %v3955 = vunpack.c.l.s8.bf16 %v2815
    %v3956 = vunpack.c.l.s8.bf16 %v2816
    %v3957 = vunpack.c.l.s8.bf16 %v2817
    %v3958 = vunpack.c.l.s8.bf16 %v2818
    %v3959 = vunpack.c.l.s8.bf16 %v2819
    %v3960 = vunpack.c.l.s8.bf16 %v2820
    %v3961 = vunpack.c.l.s8.bf16 %v2821
    %v3962 = vunpack.c.l.s8.bf16 %v2822
    %v3963 = vunpack.c.h.s8.bf16 %v2811
    %v3964 = vunpack.c.h.s8.bf16 %v2812
    %v3965 = vunpack.c.h.s8.bf16 %v2813
    %v3966 = vunpack.c.h.s8.bf16 %v2814
    %v3967 = vunpack.c.h.s8.bf16 %v2815
    %v3968 = vunpack.c.h.s8.bf16 %v2816
    %v3969 = vunpack.c.h.s8.bf16 %v2817
    %v3970 = vunpack.c.h.s8.bf16 %v2818
    %v3971 = vunpack.c.h.s8.bf16 %v2819
    %v3972 = vunpack.c.h.s8.bf16 %v2820
    %v3973 = vunpack.c.h.s8.bf16 %v2821
    %v3974 = vunpack.c.h.s8.bf16 %v2822
    %v3975 = vunpack.c.l.s8.bf16 %v2823
    %v3976 = vunpack.c.l.s8.bf16 %v2824
    %v3977 = vunpack.c.l.s8.bf16 %v2825
    %v3978 = vunpack.c.l.s8.bf16 %v2826
    %v3979 = vunpack.c.l.s8.bf16 %v2827
    %v3980 = vunpack.c.l.s8.bf16 %v2828
    %v3981 = vunpack.c.l.s8.bf16 %v2829
    %v3982 = vunpack.c.l.s8.bf16 %v2830
    %v3983 = vunpack.c.l.s8.bf16 %v2831
    %v3984 = vunpack.c.l.s8.bf16 %v2832
    %v3985 = vunpack.c.l.s8.bf16 %v2833
    %v3986 = vunpack.c.l.s8.bf16 %v2834
    %v3987 = vunpack.c.h.s8.bf16 %v2823
    %v3988 = vunpack.c.h.s8.bf16 %v2824
    %v3989 = vunpack.c.h.s8.bf16 %v2825
    %v3990 = vunpack.c.h.s8.bf16 %v2826
    %v3991 = vunpack.c.h.s8.bf16 %v2827
    %v3992 = vunpack.c.h.s8.bf16 %v2828
    %v3993 = vunpack.c.h.s8.bf16 %v2829
    %v3994 = vunpack.c.h.s8.bf16 %v2830
    %v3995 = vunpack.c.h.s8.bf16 %v2831
    %v3996 = vunpack.c.h.s8.bf16 %v2832
    %v3997 = vunpack.c.h.s8.bf16 %v2833
    %v3998 = vunpack.c.h.s8.bf16 %v2834
    %v3999 = vunpack.c.l.s8.bf16 %v2835
    %v4000 = vunpack.c.l.s8.bf16 %v2836
    %v4001 = vunpack.c.l.s8.bf16 %v2837
    %v4002 = vunpack.c.l.s8.bf16 %v2838
    %v4003 = vunpack.c.l.s8.bf16 %v2839
    %v4004 = vunpack.c.l.s8.bf16 %v2840
    %v4005 = vunpack.c.l.s8.bf16 %v2841
    %v4006 = vunpack.c.l.s8.bf16 %v2842
    %v4007 = vunpack.c.l.s8.bf16 %v2843
    %v4008 = vunpack.c.l.s8.bf16 %v2844
    %v4009 = vunpack.c.l.s8.bf16 %v2845
    %v4010 = vunpack.c.l.s8.bf16 %v2846
    %v4011 = vunpack.c.h.s8.bf16 %v2835
    %v4012 = vunpack.c.h.s8.bf16 %v2836
    %v4013 = vunpack.c.h.s8.bf16 %v2837
    %v4014 = vunpack.c.h.s8.bf16 %v2838
    %v4015 = vunpack.c.h.s8.bf16 %v2839
    %v4016 = vunpack.c.h.s8.bf16 %v2840
    %v4017 = vunpack.c.h.s8.bf16 %v2841
    %v4018 = vunpack.c.h.s8.bf16 %v2842
    %v4019 = vunpack.c.h.s8.bf16 %v2843
    %v4020 = vunpack.c.h.s8.bf16 %v2844
    %v4021 = vunpack.c.h.s8.bf16 %v2845
    %v4022 = vunpack.c.h.s8.bf16 %v2846
    %v4023 = vunpack.c.l.s8.bf16 %v2847
    %v4024 = vunpack.c.l.s8.bf16 %v2848
    %v4025 = vunpack.c.l.s8.bf16 %v2849
    %v4026 = vunpack.c.l.s8.bf16 %v2850
    %v4027 = vunpack.c.l.s8.bf16 %v2851
    %v4028 = vunpack.c.l.s8.bf16 %v2852
    %v4029 = vunpack.c.l.s8.bf16 %v2853
    %v4030 = vunpack.c.l.s8.bf16 %v2854
    %v4031 = vunpack.c.l.s8.bf16 %v2855
    %v4032 = vunpack.c.l.s8.bf16 %v2856
    %v4033 = vunpack.c.l.s8.bf16 %v2857
    %v4034 = vunpack.c.l.s8.bf16 %v2858
    %v4035 = vunpack.c.h.s8.bf16 %v2847
    %v4036 = vunpack.c.h.s8.bf16 %v2848
    %v4037 = vunpack.c.h.s8.bf16 %v2849
    %v4038 = vunpack.c.h.s8.bf16 %v2850
    %v4039 = vunpack.c.h.s8.bf16 %v2851
    %v4040 = vunpack.c.h.s8.bf16 %v2852
    %v4041 = vunpack.c.h.s8.bf16 %v2853
    %v4042 = vunpack.c.h.s8.bf16 %v2854
    %v4043 = vunpack.c.h.s8.bf16 %v2855
    %v4044 = vunpack.c.h.s8.bf16 %v2856
    %v4045 = vunpack.c.h.s8.bf16 %v2857
    %v4046 = vunpack.c.h.s8.bf16 %v2858
    %v4047 = vunpack.c.l.s8.bf16 %v2859
    %v4048 = vunpack.c.l.s8.bf16 %v2860
    %v4049 = vunpack.c.l.s8.bf16 %v2861
    %v4050 = vunpack.c.l.s8.bf16 %v2862
    %v4051 = vunpack.c.l.s8.bf16 %v2863
    %v4052 = vunpack.c.l.s8.bf16 %v2864
    %v4053 = vunpack.c.l.s8.bf16 %v2865
    %v4054 = vunpack.c.l.s8.bf16 %v2866
    %v4055 = vunpack.c.l.s8.bf16 %v2867
    %v4056 = vunpack.c.l.s8.bf16 %v2868
    %v4057 = vunpack.c.l.s8.bf16 %v2869
    %v4058 = vunpack.c.l.s8.bf16 %v2870
    %v4059 = vunpack.c.h.s8.bf16 %v2859
    %v4060 = vunpack.c.h.s8.bf16 %v2860
    %v4061 = vunpack.c.h.s8.bf16 %v2861
    %v4062 = vunpack.c.h.s8.bf16 %v2862
    %v4063 = vunpack.c.h.s8.bf16 %v2863
    %v4064 = vunpack.c.h.s8.bf16 %v2864
    %v4065 = vunpack.c.h.s8.bf16 %v2865
    %v4066 = vunpack.c.h.s8.bf16 %v2866
    %v4067 = vunpack.c.h.s8.bf16 %v2867
    %v4068 = vunpack.c.h.s8.bf16 %v2868
    %v4069 = vunpack.c.h.s8.bf16 %v2869
    %v4070 = vunpack.c.h.s8.bf16 %v2870
    %v4071 = vunpack.c.l.s8.bf16 %v2871
    %v4072 = vunpack.c.l.s8.bf16 %v2872
    %v4073 = vunpack.c.l.s8.bf16 %v2873
    %v4074 = vunpack.c.l.s8.bf16 %v2874
    %v4075 = vunpack.c.l.s8.bf16 %v2875
    %v4076 = vunpack.c.l.s8.bf16 %v2876
    %v4077 = vunpack.c.l.s8.bf16 %v2877
    %v4078 = vunpack.c.l.s8.bf16 %v2878
    %v4079 = vunpack.c.l.s8.bf16 %v2879
    %v4080 = vunpack.c.l.s8.bf16 %v2880
    %v4081 = vunpack.c.l.s8.bf16 %v2881
    %v4082 = vunpack.c.l.s8.bf16 %v2882
    %v4083 = vunpack.c.h.s8.bf16 %v2871
    %v4084 = vunpack.c.h.s8.bf16 %v2872
    %v4085 = vunpack.c.h.s8.bf16 %v2873
    %v4086 = vunpack.c.h.s8.bf16 %v2874
    %v4087 = vunpack.c.h.s8.bf16 %v2875
    %v4088 = vunpack.c.h.s8.bf16 %v2876
    %v4089 = vunpack.c.h.s8.bf16 %v2877
    %v4090 = vunpack.c.h.s8.bf16 %v2878
    %v4091 = vunpack.c.h.s8.bf16 %v2879
    %v4092 = vunpack.c.h.s8.bf16 %v2880
    %v4093 = vunpack.c.h.s8.bf16 %v2881
    %v4094 = vunpack.c.h.s8.bf16 %v2882
    %v4095 = vunpack.c.l.s8.bf16 %v2883
    %v4096 = vunpack.c.l.s8.bf16 %v2884
    %v4097 = vunpack.c.l.s8.bf16 %v2885
    %v4098 = vunpack.c.l.s8.bf16 %v2886
    %v4099 = vunpack.c.l.s8.bf16 %v2887
    %v4100 = vunpack.c.l.s8.bf16 %v2888
    %v4101 = vunpack.c.l.s8.bf16 %v2889
    %v4102 = vunpack.c.l.s8.bf16 %v2890
    %v4103 = vunpack.c.l.s8.bf16 %v2891
    %v4104 = vunpack.c.l.s8.bf16 %v2892
    %v4105 = vunpack.c.l.s8.bf16 %v2893
    %v4106 = vunpack.c.l.s8.bf16 %v2894
    %v4107 = vunpack.c.h.s8.bf16 %v2883
    %v4108 = vunpack.c.h.s8.bf16 %v2884
    %v4109 = vunpack.c.h.s8.bf16 %v2885
    %v4110 = vunpack.c.h.s8.bf16 %v2886
    %v4111 = vunpack.c.h.s8.bf16 %v2887
    %v4112 = vunpack.c.h.s8.bf16 %v2888
    %v4113 = vunpack.c.h.s8.bf16 %v2889
    %v4114 = vunpack.c.h.s8.bf16 %v2890
    %v4115 = vunpack.c.h.s8.bf16 %v2891
    %v4116 = vunpack.c.h.s8.bf16 %v2892
    %v4117 = vunpack.c.h.s8.bf16 %v2893
    %v4118 = vunpack.c.h.s8.bf16 %v2894
    %v4119 = vunpack.c.l.s8.bf16 %v2895
    %v4120 = vunpack.c.l.s8.bf16 %v2896
    %v4121 = vunpack.c.l.s8.bf16 %v2897
    %v4122 = vunpack.c.l.s8.bf16 %v2898
    %v4123 = vunpack.c.l.s8.bf16 %v2899
    %v4124 = vunpack.c.l.s8.bf16 %v2900
    %v4125 = vunpack.c.l.s8.bf16 %v2901
    %v4126 = vunpack.c.l.s8.bf16 %v2902
    %v4127 = vunpack.c.l.s8.bf16 %v2903
    %v4128 = vunpack.c.l.s8.bf16 %v2904
    %v4129 = vunpack.c.l.s8.bf16 %v2905
    %v4130 = vunpack.c.l.s8.bf16 %v2906
    %v4131 = vunpack.c.h.s8.bf16 %v2895
    %v4132 = vunpack.c.h.s8.bf16 %v2896
    %v4133 = vunpack.c.h.s8.bf16 %v2897
    %v4134 = vunpack.c.h.s8.bf16 %v2898
    %v4135 = vunpack.c.h.s8.bf16 %v2899
    %v4136 = vunpack.c.h.s8.bf16 %v2900
    %v4137 = vunpack.c.h.s8.bf16 %v2901
    %v4138 = vunpack.c.h.s8.bf16 %v2902
    %v4139 = vunpack.c.h.s8.bf16 %v2903
    %v4140 = vunpack.c.h.s8.bf16 %v2904
    %v4141 = vunpack.c.h.s8.bf16 %v2905
    %v4142 = vunpack.c.h.s8.bf16 %v2906
    %v4143 = vunpack.c.l.s8.bf16 %v2907
    %v4144 = vunpack.c.l.s8.bf16 %v2908
    %v4145 = vunpack.c.l.s8.bf16 %v2909
    %v4146 = vunpack.c.l.s8.bf16 %v2910
    %v4147 = vunpack.c.l.s8.bf16 %v2911
    %v4148 = vunpack.c.l.s8.bf16 %v2912
    %v4149 = vunpack.c.l.s8.bf16 %v2913
    %v4150 = vunpack.c.l.s8.bf16 %v2914
    %v4151 = vunpack.c.l.s8.bf16 %v2915
    %v4152 = vunpack.c.l.s8.bf16 %v2916
    %v4153 = vunpack.c.l.s8.bf16 %v2917
    %v4154 = vunpack.c.l.s8.bf16 %v2918
    %v4155 = vunpack.c.h.s8.bf16 %v2907
    %v4156 = vunpack.c.h.s8.bf16 %v2908
    %v4157 = vunpack.c.h.s8.bf16 %v2909
    %v4158 = vunpack.c.h.s8.bf16 %v2910
    %v4159 = vunpack.c.h.s8.bf16 %v2911
    %v4160 = vunpack.c.h.s8.bf16 %v2912
    %v4161 = vunpack.c.h.s8.bf16 %v2913
    %v4162 = vunpack.c.h.s8.bf16 %v2914
    %v4163 = vunpack.c.h.s8.bf16 %v2915
    %v4164 = vunpack.c.h.s8.bf16 %v2916
    %v4165 = vunpack.c.h.s8.bf16 %v2917
    %v4166 = vunpack.c.h.s8.bf16 %v2918
    %4167 = vmatprep.subr.bf16.mxu0 %v2920
    %4168 = vmatpush1.bf16.msra.mxu0 %v2919
    %4169 = vmatprep.subr.bf16.mxu0 %v2932
    %4170 = vmatpush1.bf16.msra.mxu0 %v2931
    %4171 = vmatprep.subr.bf16.mxu0 %v2944
    %4172 = vmatpush1.bf16.msra.mxu0 %v2943
    %4173 = vmatprep.subr.bf16.mxu0 %v2956
    %4174 = vmatpush1.bf16.msra.mxu0 %v2955
    %4175 = vmatprep.subr.bf16.mxu0 %v2968
    %4176 = vmatpush1.bf16.msra.mxu0 %v2967
    %4177 = vmatprep.subr.bf16.mxu0 %v2980
    %4178 = vmatpush1.bf16.msra.mxu0 %v2979
    %4179 = vmatprep.subr.bf16.mxu0 %v2992
    %4180 = vmatpush1.bf16.msra.mxu0 %v2991
    %4181 = vmatprep.subr.bf16.mxu0 %v3004
    %4182 = vmatpush1.bf16.msra.mxu0 %v3003
    %4183 = vmatprep.subr.bf16.mxu0 %v3016
    %4184 = vmatpush1.bf16.msra.mxu0 %v3015
    %4185 = vmatprep.subr.bf16.mxu0 %v3028
    %4186 = vmatpush1.bf16.msra.mxu0 %v3027
    %4187 = vmatprep.subr.bf16.mxu0 %v3040
    %4188 = vmatpush1.bf16.msra.mxu0 %v3039
    %4189 = vmatprep.subr.bf16.mxu0 %v3052
    %4190 = vmatpush1.bf16.msra.mxu0 %v3051
    %4191 = vmatprep.subr.bf16.mxu0 %v3064
    %4192 = vmatpush1.bf16.msra.mxu0 %v3063
    %4193 = vmatprep.subr.bf16.mxu0 %v3076
    %4194 = vmatpush1.bf16.msra.mxu0 %v3075
    %4195 = vmatprep.subr.bf16.mxu0 %v3088
    %4196 = vmatpush1.bf16.msra.mxu0 %v3087
    %4197 = vmatprep.subr.bf16.mxu0 %v3100
    %4198 = vmatpush1.bf16.msra.mxu0 %v3099
    %4199 = vmatprep.mubr.bf16.mxu0 %v2283
    %4200 = vmatmul.mubr.bf16.gmra.mrb[0].mxu0 %v2282
    %v4201 = vpop.f32.mrb[0].mxu0
    %v4202 = vadd.f32 0.0, %v4201
    %v4203 = vpop.f32.mrb[0].mxu0
    %v4204 = vadd.f32 0.0, %v4203
    %v4205 = vpop.f32.mrb[0].mxu0
    %v4206 = vadd.f32 0.0, %v4205
    %v4207 = vpop.f32.mrb[0].mxu0
    %v4208 = vadd.f32 0.0, %v4207
    %4209 = vdwg.mxu0
    %4210 = vmatprep.subr.bf16.mxu0 %v3112
    %4211 = vmatpush1.bf16.msra.mxu0 %v3111
    %4212 = vmatprep.subr.bf16.mxu0 %v3124
    %4213 = vmatpush1.bf16.msra.mxu0 %v3123
    %4214 = vmatprep.subr.bf16.mxu0 %v3136
    %4215 = vmatpush1.bf16.msra.mxu0 %v3135
    %4216 = vmatprep.subr.bf16.mxu0 %v3148
    %4217 = vmatpush1.bf16.msra.mxu0 %v3147
    %4218 = vmatprep.subr.bf16.mxu0 %v3160
    %4219 = vmatpush1.bf16.msra.mxu0 %v3159
    %4220 = vmatprep.subr.bf16.mxu0 %v3172
    %4221 = vmatpush1.bf16.msra.mxu0 %v3171
    %4222 = vmatprep.subr.bf16.mxu0 %v3184
    %4223 = vmatpush1.bf16.msra.mxu0 %v3183
    %4224 = vmatprep.subr.bf16.mxu0 %v3196
    %4225 = vmatpush1.bf16.msra.mxu0 %v3195
    %4226 = vmatprep.subr.bf16.mxu0 %v3208
    %4227 = vmatpush1.bf16.msra.mxu0 %v3207
    %4228 = vmatprep.subr.bf16.mxu0 %v3220
    %4229 = vmatpush1.bf16.msra.mxu0 %v3219
    %4230 = vmatprep.subr.bf16.mxu0 %v3232
    %4231 = vmatpush1.bf16.msra.mxu0 %v3231
    %4232 = vmatprep.subr.bf16.mxu0 %v3244
    %4233 = vmatpush1.bf16.msra.mxu0 %v3243
    %4234 = vmatprep.subr.bf16.mxu0 %v3256
    %4235 = vmatpush1.bf16.msra.mxu0 %v3255
    %4236 = vmatprep.subr.bf16.mxu0 %v3268
    %4237 = vmatpush1.bf16.msra.mxu0 %v3267
    %4238 = vmatprep.subr.bf16.mxu0 %v3280
    %4239 = vmatpush1.bf16.msra.mxu0 %v3279
    %4240 = vmatprep.subr.bf16.mxu0 %v3292
    %4241 = vmatpush1.bf16.msra.mxu0 %v3291
    %4242 = vmatprep.mubr.bf16.mxu0 %v2285
    %4243 = vmatmul.mubr.bf16.gmra.mrb[0].mxu0 %v2284
    %v4244 = vpop.f32.mrb[0].mxu0
    %v4245 = vadd.f32 %v4202, %v4244
    %v4246 = vpop.f32.mrb[0].mxu0
    %v4247 = vadd.f32 %v4204, %v4246
    %v4248 = vpop.f32.mrb[0].mxu0
    %v4249 = vadd.f32 %v4206, %v4248
    %v4250 = vpop.f32.mrb[0].mxu0
    %v4251 = vadd.f32 %v4208, %v4250
    %4252 = vdwg.mxu0
    %4253 = vmatprep.subr.bf16.mxu0 %v3304
    %4254 = vmatpush1.bf16.msra.mxu0 %v3303
    %4255 = vmatprep.subr.bf16.mxu0 %v3316
    %4256 = vmatpush1.bf16.msra.mxu0 %v3315
    %4257 = vmatprep.subr.bf16.mxu0 %v3328
    %4258 = vmatpush1.bf16.msra.mxu0 %v3327
    %4259 = vmatprep.subr.bf16.mxu0 %v3340
    %4260 = vmatpush1.bf16.msra.mxu0 %v3339
    %4261 = vmatprep.subr.bf16.mxu0 %v3352
    %4262 = vmatpush1.bf16.msra.mxu0 %v3351
    %4263 = vmatprep.subr.bf16.mxu0 %v3364
    %4264 = vmatpush1.bf16.msra.mxu0 %v3363
    %4265 = vmatprep.subr.bf16.mxu0 %v3376
    %4266 = vmatpush1.bf16.msra.mxu0 %v3375
    %4267 = vmatprep.subr.bf16.mxu0 %v3388
    %4268 = vmatpush1.bf16.msra.mxu0 %v3387
    %4269 = vmatprep.subr.bf16.mxu0 %v3400
    %4270 = vmatpush1.bf16.msra.mxu0 %v3399
    %4271 = vmatprep.subr.bf16.mxu0 %v3412
    %4272 = vmatpush1.bf16.msra.mxu0 %v3411
    %4273 = vmatprep.subr.bf16.mxu0 %v3424
    %4274 = vmatpush1.bf16.msra.mxu0 %v3423
    %4275 = vmatprep.subr.bf16.mxu0 %v3436
    %4276 = vmatpush1.bf16.msra.mxu0 %v3435
    %4277 = vmatprep.subr.bf16.mxu0 %v3448
    %4278 = vmatpush1.bf16.msra.mxu0 %v3447
    %4279 = vmatprep.subr.bf16.mxu0 %v3460
    %4280 = vmatpush1.bf16.msra.mxu0 %v3459
    %4281 = vmatprep.subr.bf16.mxu0 %v3472
    %4282 = vmatpush1.bf16.msra.mxu0 %v3471
    %4283 = vmatprep.subr.bf16.mxu0 %v3484
    %4284 = vmatpush1.bf16.msra.mxu0 %v3483
    %4285 = vmatprep.mubr.bf16.mxu0 %v2287
    %4286 = vmatmul.mubr.bf16.gmra.mrb[0].mxu0 %v2286
    %v4287 = vpop.f32.mrb[0].mxu0
    %v4288 = vadd.f32 %v4245, %v4287
    %v4289 = vpop.f32.mrb[0].mxu0
    %v4290 = vadd.f32 %v4247, %v4289
    %v4291 = vpop.f32.mrb[0].mxu0
    %v4292 = vadd.f32 %v4249, %v4291
    %v4293 = vpop.f32.mrb[0].mxu0
    %v4294 = vadd.f32 %v4251, %v4293
    %4295 = vdwg.mxu0
    %4296 = vmatprep.subr.bf16.mxu0 %v3496
    %4297 = vmatpush1.bf16.msra.mxu0 %v3495
    %4298 = vmatprep.subr.bf16.mxu0 %v3508
    %4299 = vmatpush1.bf16.msra.mxu0 %v3507
    %4300 = vmatprep.subr.bf16.mxu0 %v3520
    %4301 = vmatpush1.bf16.msra.mxu0 %v3519
    %4302 = vmatprep.subr.bf16.mxu0 %v3532
    %4303 = vmatpush1.bf16.msra.mxu0 %v3531
    %4304 = vmatprep.subr.bf16.mxu0 %v3544
    %4305 = vmatpush1.bf16.msra.mxu0 %v3543
    %4306 = vmatprep.subr.bf16.mxu0 %v3556
    %4307 = vmatpush1.bf16.msra.mxu0 %v3555
    %4308 = vmatprep.subr.bf16.mxu0 %v3568
    %4309 = vmatpush1.bf16.msra.mxu0 %v3567
    %4310 = vmatprep.subr.bf16.mxu0 %v3580
    %4311 = vmatpush1.bf16.msra.mxu0 %v3579
    %4312 = vmatprep.subr.bf16.mxu0 %v3592
    %4313 = vmatpush1.bf16.msra.mxu0 %v3591
    %4314 = vmatprep.subr.bf16.mxu0 %v3604
    %4315 = vmatpush1.bf16.msra.mxu0 %v3603
    %4316 = vmatprep.subr.bf16.mxu0 %v3616
    %4317 = vmatpush1.bf16.msra.mxu0 %v3615
    %4318 = vmatprep.subr.bf16.mxu0 %v3628
    %4319 = vmatpush1.bf16.msra.mxu0 %v3627
    %4320 = vmatprep.subr.bf16.mxu0 %v3640
    %4321 = vmatpush1.bf16.msra.mxu0 %v3639
    %4322 = vmatprep.subr.bf16.mxu0 %v3652
    %4323 = vmatpush1.bf16.msra.mxu0 %v3651
    %4324 = vmatprep.subr.bf16.mxu0 %v3664
    %4325 = vmatpush1.bf16.msra.mxu0 %v3663
    %4326 = vmatprep.subr.bf16.mxu0 %v3676
    %4327 = vmatpush1.bf16.msra.mxu0 %v3675
    %4328 = vmatprep.mubr.bf16.mxu0 %v2289
    %4329 = vmatmul.mubr.bf16.gmra.mrb[0].mxu0 %v2288
    %v4330 = vpop.f32.mrb[0].mxu0
    %v4331 = vadd.f32 %v4288, %v4330
    %v4332 = vpop.f32.mrb[0].mxu0
    %v4333 = vadd.f32 %v4290, %v4332
    %v4334 = vpop.f32.mrb[0].mxu0
    %v4335 = vadd.f32 %v4292, %v4334
    %v4336 = vpop.f32.mrb[0].mxu0
    %v4337 = vadd.f32 %v4294, %v4336
    %4338 = vdwg.mxu0
    %4339 = vmatprep.subr.bf16.mxu0 %v3688
    %4340 = vmatpush1.bf16.msra.mxu0 %v3687
    %4341 = vmatprep.subr.bf16.mxu0 %v3700
    %4342 = vmatpush1.bf16.msra.mxu0 %v3699
    %4343 = vmatprep.subr.bf16.mxu0 %v3712
    %4344 = vmatpush1.bf16.msra.mxu0 %v3711
    %4345 = vmatprep.subr.bf16.mxu0 %v3724
    %4346 = vmatpush1.bf16.msra.mxu0 %v3723
    %4347 = vmatprep.subr.bf16.mxu0 %v3736
    %4348 = vmatpush1.bf16.msra.mxu0 %v3735
    %4349 = vmatprep.subr.bf16.mxu0 %v3748
    %4350 = vmatpush1.bf16.msra.mxu0 %v3747
    %4351 = vmatprep.subr.bf16.mxu0 %v3760
    %4352 = vmatpush1.bf16.msra.mxu0 %v3759
    %4353 = vmatprep.subr.bf16.mxu0 %v3772
    %4354 = vmatpush1.bf16.msra.mxu0 %v3771
    %4355 = vmatprep.subr.bf16.mxu0 %v3784
    %4356 = vmatpush1.bf16.msra.mxu0 %v3783
    %4357 = vmatprep.subr.bf16.mxu0 %v3796
    %4358 = vmatpush1.bf16.msra.mxu0 %v3795
    %4359 = vmatprep.subr.bf16.mxu0 %v3808
    %4360 = vmatpush1.bf16.msra.mxu0 %v3807
    %4361 = vmatprep.subr.bf16.mxu0 %v3820
    %4362 = vmatpush1.bf16.msra.mxu0 %v3819
    %4363 = vmatprep.subr.bf16.mxu0 %v3832
    %4364 = vmatpush1.bf16.msra.mxu0 %v3831
    %4365 = vmatprep.subr.bf16.mxu0 %v3844
    %4366 = vmatpush1.bf16.msra.mxu0 %v3843
    %4367 = vmatprep.subr.bf16.mxu0 %v3856
    %4368 = vmatpush1.bf16.msra.mxu0 %v3855
    %4369 = vmatprep.subr.bf16.mxu0 %v3868
    %4370 = vmatpush1.bf16.msra.mxu0 %v3867
    %4371 = vmatprep.mubr.bf16.mxu0 %v2291
    %4372 = vmatmul.mubr.bf16.gmra.mrb[0].mxu0 %v2290
    %v4373 = vpop.f32.mrb[0].mxu0
    %v4374 = vadd.f32 %v4331, %v4373
    %v4375 = vpop.f32.mrb[0].mxu0
    %v4376 = vadd.f32 %v4333, %v4375
    %v4377 = vpop.f32.mrb[0].mxu0
    %v4378 = vadd.f32 %v4335, %v4377
    %v4379 = vpop.f32.mrb[0].mxu0
    %v4380 = vadd.f32 %v4337, %v4379
    %4381 = vdwg.mxu0
    %4382 = vmatprep.subr.bf16.mxu0 %v3880
    %4383 = vmatpush1.bf16.msra.mxu0 %v3879
    %4384 = vmatprep.subr.bf16.mxu0 %v3892
    %4385 = vmatpush1.bf16.msra.mxu0 %v3891
    %4386 = vmatprep.subr.bf16.mxu0 %v3904
    %4387 = vmatpush1.bf16.msra.mxu0 %v3903
    %4388 = vmatprep.subr.bf16.mxu0 %v3916
    %4389 = vmatpush1.bf16.msra.mxu0 %v3915
    %4390 = vmatprep.subr.bf16.mxu0 %v3928
    %4391 = vmatpush1.bf16.msra.mxu0 %v3927
    %4392 = vmatprep.subr.bf16.mxu0 %v3940
    %4393 = vmatpush1.bf16.msra.mxu0 %v3939
    %4394 = vmatprep.subr.bf16.mxu0 %v3952
    %4395 = vmatpush1.bf16.msra.mxu0 %v3951
    %4396 = vmatprep.subr.bf16.mxu0 %v3964
    %4397 = vmatpush1.bf16.msra.mxu0 %v3963
    %4398 = vmatprep.subr.bf16.mxu0 %v3976
    %4399 = vmatpush1.bf16.msra.mxu0 %v3975
    %4400 = vmatprep.subr.bf16.mxu0 %v3988
    %4401 = vmatpush1.bf16.msra.mxu0 %v3987
    %4402 = vmatprep.subr.bf16.mxu0 %v4000
    %4403 = vmatpush1.bf16.msra.mxu0 %v3999
    %4404 = vmatprep.subr.bf16.mxu0 %v4012
    %4405 = vmatpush1.bf16.msra.mxu0 %v4011
    %4406 = vmatprep.subr.bf16.mxu0 %v4024
    %4407 = vmatpush1.bf16.msra.mxu0 %v4023
    %4408 = vmatprep.subr.bf16.mxu0 %v4036
    %4409 = vmatpush1.bf16.msra.mxu0 %v4035
    %4410 = vmatprep.subr.bf16.mxu0 %v4048
    %4411 = vmatpush1.bf16.msra.mxu0 %v4047
    %4412 = vmatprep.subr.bf16.mxu0 %v4060
    %4413 = vmatpush1.bf16.msra.mxu0 %v4059
    %4414 = vmatprep.mubr.bf16.mxu0 %v2293
    %4415 = vmatmul.mubr.bf16.gmra.mrb[0].mxu0 %v2292
    %v4416 = vpop.f32.mrb[0].mxu0
    %v4417 = vadd.f32 %v4374, %v4416
    %v4418 = vpop.f32.mrb[0].mxu0
    %v4419 = vadd.f32 %v4376, %v4418
    %v4420 = vpop.f32.mrb[0].mxu0
    %v4421 = vadd.f32 %v4378, %v4420
    %v4422 = vpop.f32.mrb[0].mxu0
    %v4423 = vadd.f32 %v4380, %v4422
    %4424 = vdwg.mxu0
    %4425 = vmatprep.subr.bf16.mxu0 %v4072
    %4426 = vmatpush1.bf16.msra.mxu0 %v4071
    %4427 = vmatprep.subr.bf16.mxu0 %v4084
    %4428 = vmatpush1.bf16.msra.mxu0 %v4083
    %4429 = vmatprep.subr.bf16.mxu0 %v4096
    %4430 = vmatpush1.bf16.msra.mxu0 %v4095
    %4431 = vmatprep.subr.bf16.mxu0 %v4108
    %4432 = vmatpush1.bf16.msra.mxu0 %v4107
    %4433 = vmatprep.subr.bf16.mxu0 %v4120
    %4434 = vmatpush1.bf16.msra.mxu0 %v4119
    %4435 = vmatprep.subr.bf16.mxu0 %v4132
    %4436 = vmatpush1.bf16.msra.mxu0 %v4131
    %4437 = vmatprep.subr.bf16.mxu0 %v4144
    %4438 = vmatpush1.bf16.msra.mxu0 %v4143
    %4439 = vmatprep.subr.bf16.mxu0 %v4156
    %4440 = vmatpush1.bf16.msra.mxu0 %v4155
    %4441 = vmatprep.subr.bf16.mxu0 0
    %4442 = vmatpush1.bf16.msra.mxu0 0
    %4443 = vmatprep.subr.bf16.mxu0 0
    %4444 = vmatpush1.bf16.msra.mxu0 0
    %4445 = vmatprep.subr.bf16.mxu0 0
    %4446 = vmatpush1.bf16.msra.mxu0 0
    %4447 = vmatprep.subr.bf16.mxu0 0
    %4448 = vmatpush1.bf16.msra.mxu0 0
    %4449 = vmatprep.subr.bf16.mxu0 0
    %4450 = vmatpush1.bf16.msra.mxu0 0
    %4451 = vmatprep.subr.bf16.mxu0 0
    %4452 = vmatpush1.bf16.msra.mxu0 0
    %4453 = vmatprep.subr.bf16.mxu0 0
    %4454 = vmatpush1.bf16.msra.mxu0 0
    %4455 = vmatprep.subr.bf16.mxu0 0
    %4456 = vmatpush1.bf16.msra.mxu0 0
    %4457 = vmatprep.mubr.bf16.mxu0 0
    %4458 = vmatmul.mubr.bf16.gmra.mrb[0].mxu0 %v2294
    %v4459 = vpop.f32.mrb[0].mxu0
    %v4460 = vadd.f32 %v4417, %v4459
    %v4461 = vpop.f32.mrb[0].mxu0
    %v4462 = vadd.f32 %v4419, %v4461
    %v4463 = vpop.f32.mrb[0].mxu0
    %v4464 = vadd.f32 %v4421, %v4463
    %v4465 = vpop.f32.mrb[0].mxu0
    %v4466 = vadd.f32 %v4423, %v4465
    %4467 = vdwg.mxu0
    %4468 = vmatprep.subr.bf16.mxu0 %v2922
    %4469 = vmatpush1.bf16.msra.mxu0 %v2921
    %4470 = vmatprep.subr.bf16.mxu0 %v2934
    %4471 = vmatpush1.bf16.msra.mxu0 %v2933
    %4472 = vmatprep.subr.bf16.mxu0 %v2946
    %4473 = vmatpush1.bf16.msra.mxu0 %v2945
    %4474 = vmatprep.subr.bf16.mxu0 %v2958
    %4475 = vmatpush1.bf16.msra.mxu0 %v2957
    %4476 = vmatprep.subr.bf16.mxu0 %v2970
    %4477 = vmatpush1.bf16.msra.mxu0 %v2969
    %4478 = vmatprep.subr.bf16.mxu0 %v2982
    %4479 = vmatpush1.bf16.msra.mxu0 %v2981
    %4480 = vmatprep.subr.bf16.mxu0 %v2994
    %4481 = vmatpush1.bf16.msra.mxu0 %v2993
    %4482 = vmatprep.subr.bf16.mxu0 %v3006
    %4483 = vmatpush1.bf16.msra.mxu0 %v3005
    %4484 = vmatprep.subr.bf16.mxu0 %v3018
    %4485 = vmatpush1.bf16.msra.mxu0 %v3017
    %4486 = vmatprep.subr.bf16.mxu0 %v3030
    %4487 = vmatpush1.bf16.msra.mxu0 %v3029
    %4488 = vmatprep.subr.bf16.mxu0 %v3042
    %4489 = vmatpush1.bf16.msra.mxu0 %v3041
    %4490 = vmatprep.subr.bf16.mxu0 %v3054
    %4491 = vmatpush1.bf16.msra.mxu0 %v3053
    %4492 = vmatprep.subr.bf16.mxu0 %v3066
    %4493 = vmatpush1.bf16.msra.mxu0 %v3065
    %4494 = vmatprep.subr.bf16.mxu0 %v3078
    %4495 = vmatpush1.bf16.msra.mxu0 %v3077
    %4496 = vmatprep.subr.bf16.mxu0 %v3090
    %4497 = vmatpush1.bf16.msra.mxu0 %v3089
    %4498 = vmatprep.subr.bf16.mxu0 %v3102
    %4499 = vmatpush1.bf16.msra.mxu0 %v3101
    %4500 = vmatprep.mubr.bf16.mxu0 %v2283
    %4501 = vmatmul.mubr.bf16.gmra.mrb[0].mxu0 %v2282
    %v4502 = vpop.f32.mrb[0].mxu0
    %v4503 = vadd.f32 0.0, %v4502
    %v4504 = vpop.f32.mrb[0].mxu0
    %v4505 = vadd.f32 0.0, %v4504
    %v4506 = vpop.f32.mrb[0].mxu0
    %v4507 = vadd.f32 0.0, %v4506
    %v4508 = vpop.f32.mrb[0].mxu0
    %v4509 = vadd.f32 0.0, %v4508
    %4510 = vdwg.mxu0
    %4511 = vmatprep.subr.bf16.mxu0 %v3114
    %4512 = vmatpush1.bf16.msra.mxu0 %v3113
    %4513 = vmatprep.subr.bf16.mxu0 %v3126
    %4514 = vmatpush1.bf16.msra.mxu0 %v3125
    %4515 = vmatprep.subr.bf16.mxu0 %v3138
    %4516 = vmatpush1.bf16.msra.mxu0 %v3137
    %4517 = vmatprep.subr.bf16.mxu0 %v3150
    %4518 = vmatpush1.bf16.msra.mxu0 %v3149
    %4519 = vmatprep.subr.bf16.mxu0 %v3162
    %4520 = vmatpush1.bf16.msra.mxu0 %v3161
    %4521 = vmatprep.subr.bf16.mxu0 %v3174
    %4522 = vmatpush1.bf16.msra.mxu0 %v3173
    %4523 = vmatprep.subr.bf16.mxu0 %v3186
    %4524 = vmatpush1.bf16.msra.mxu0 %v3185
    %4525 = vmatprep.subr.bf16.mxu0 %v3198
    %4526 = vmatpush1.bf16.msra.mxu0 %v3197
    %4527 = vmatprep.subr.bf16.mxu0 %v3210
    %4528 = vmatpush1.bf16.msra.mxu0 %v3209
    %4529 = vmatprep.subr.bf16.mxu0 %v3222
    %4530 = vmatpush1.bf16.msra.mxu0 %v3221
    %4531 = vmatprep.subr.bf16.mxu0 %v3234
    %4532 = vmatpush1.bf16.msra.mxu0 %v3233
    %4533 = vmatprep.subr.bf16.mxu0 %v3246
    %4534 = vmatpush1.bf16.msra.mxu0 %v3245
    %4535 = vmatprep.subr.bf16.mxu0 %v3258
    %4536 = vmatpush1.bf16.msra.mxu0 %v3257
    %4537 = vmatprep.subr.bf16.mxu0 %v3270
    %4538 = vmatpush1.bf16.msra.mxu0 %v3269
    %4539 = vmatprep.subr.bf16.mxu0 %v3282
    %4540 = vmatpush1.bf16.msra.mxu0 %v3281
    %4541 = vmatprep.subr.bf16.mxu0 %v3294
    %4542 = vmatpush1.bf16.msra.mxu0 %v3293
    %4543 = vmatprep.mubr.bf16.mxu0 %v2285
    %4544 = vmatmul.mubr.bf16.gmra.mrb[0].mxu0 %v2284
    %v4545 = vpop.f32.mrb[0].mxu0
    %v4546 = vadd.f32 %v4503, %v4545
    %v4547 = vpop.f32.mrb[0].mxu0
    %v4548 = vadd.f32 %v4505, %v4547
    %v4549 = vpop.f32.mrb[0].mxu0
    %v4550 = vadd.f32 %v4507, %v4549
    %v4551 = vpop.f32.mrb[0].mxu0
    %v4552 = vadd.f32 %v4509, %v4551
    %4553 = vdwg.mxu0
    %4554 = vmatprep.subr.bf16.mxu0 %v3306
    %4555 = vmatpush1.bf16.msra.mxu0 %v3305
    %4556 = vmatprep.subr.bf16.mxu0 %v3318
    %4557 = vmatpush1.bf16.msra.mxu0 %v3317
    %4558 = vmatprep.subr.bf16.mxu0 %v3330
    %4559 = vmatpush1.bf16.msra.mxu0 %v3329
    %4560 = vmatprep.subr.bf16.mxu0 %v3342
    %4561 = vmatpush1.bf16.msra.mxu0 %v3341
    %4562 = vmatprep.subr.bf16.mxu0 %v3354
    %4563 = vmatpush1.bf16.msra.mxu0 %v3353
    %4564 = vmatprep.subr.bf16.mxu0 %v3366
    %4565 = vmatpush1.bf16.msra.mxu0 %v3365
    %4566 = vmatprep.subr.bf16.mxu0 %v3378
    %4567 = vmatpush1.bf16.msra.mxu0 %v3377
    %4568 = vmatprep.subr.bf16.mxu0 %v3390
    %4569 = vmatpush1.bf16.msra.mxu0 %v3389
    %4570 = vmatprep.subr.bf16.mxu0 %v3402
    %4571 = vmatpush1.bf16.msra.mxu0 %v3401
    %4572 = vmatprep.subr.bf16.mxu0 %v3414
    %4573 = vmatpush1.bf16.msra.mxu0 %v3413
    %4574 = vmatprep.subr.bf16.mxu0 %v3426
    %4575 = vmatpush1.bf16.msra.mxu0 %v3425
    %4576 = vmatprep.subr.bf16.mxu0 %v3438
    %4577 = vmatpush1.bf16.msra.mxu0 %v3437
    %4578 = vmatprep.subr.bf16.mxu0 %v3450
    %4579 = vmatpush1.bf16.msra.mxu0 %v3449
    %4580 = vmatprep.subr.bf16.mxu0 %v3462
    %4581 = vmatpush1.bf16.msra.mxu0 %v3461
    %4582 = vmatprep.subr.bf16.mxu0 %v3474
    %4583 = vmatpush1.bf16.msra.mxu0 %v3473
    %4584 = vmatprep.subr.bf16.mxu0 %v3486
    %4585 = vmatpush1.bf16.msra.mxu0 %v3485
    %4586 = vmatprep.mubr.bf16.mxu0 %v2287
    %4587 = vmatmul.mubr.bf16.gmra.mrb[0].mxu0 %v2286
    %v4588 = vpop.f32.mrb[0].mxu0
    %v4589 = vadd.f32 %v4546, %v4588
    %v4590 = vpop.f32.mrb[0].mxu0
    %v4591 = vadd.f32 %v4548, %v4590
    %v4592 = vpop.f32.mrb[0].mxu0
    %v4593 = vadd.f32 %v4550, %v4592
    %v4594 = vpop.f32.mrb[0].mxu0
    %v4595 = vadd.f32 %v4552, %v4594
    %4596 = vdwg.mxu0
    %4597 = vmatprep.subr.bf16.mxu0 %v3498
    %4598 = vmatpush1.bf16.msra.mxu0 %v3497
    %4599 = vmatprep.subr.bf16.mxu0 %v3510
    %4600 = vmatpush1.bf16.msra.mxu0 %v3509
    %4601 = vmatprep.subr.bf16.mxu0 %v3522
    %4602 = vmatpush1.bf16.msra.mxu0 %v3521
    %4603 = vmatprep.subr.bf16.mxu0 %v3534
    %4604 = vmatpush1.bf16.msra.mxu0 %v3533
    %4605 = vmatprep.subr.bf16.mxu0 %v3546
    %4606 = vmatpush1.bf16.msra.mxu0 %v3545
    %4607 = vmatprep.subr.bf16.mxu0 %v3558
    %4608 = vmatpush1.bf16.msra.mxu0 %v3557
    %4609 = vmatprep.subr.bf16.mxu0 %v3570
    %4610 = vmatpush1.bf16.msra.mxu0 %v3569
    %4611 = vmatprep.subr.bf16.mxu0 %v3582
    %4612 = vmatpush1.bf16.msra.mxu0 %v3581
    %4613 = vmatprep.subr.bf16.mxu0 %v3594
    %4614 = vmatpush1.bf16.msra.mxu0 %v3593
    %4615 = vmatprep.subr.bf16.mxu0 %v3606
    %4616 = vmatpush1.bf16.msra.mxu0 %v3605
    %4617 = vmatprep.subr.bf16.mxu0 %v3618
    %4618 = vmatpush1.bf16.msra.mxu0 %v3617
    %4619 = vmatprep.subr.bf16.mxu0 %v3630
    %4620 = vmatpush1.bf16.msra.mxu0 %v3629
    %4621 = vmatprep.subr.bf16.mxu0 %v3642
    %4622 = vmatpush1.bf16.msra.mxu0 %v3641
    %4623 = vmatprep.subr.bf16.mxu0 %v3654
    %4624 = vmatpush1.bf16.msra.mxu0 %v3653
    %4625 = vmatprep.subr.bf16.mxu0 %v3666
    %4626 = vmatpush1.bf16.msra.mxu0 %v3665
    %4627 = vmatprep.subr.bf16.mxu0 %v3678
    %4628 = vmatpush1.bf16.msra.mxu0 %v3677
    %4629 = vmatprep.mubr.bf16.mxu0 %v2289
    %4630 = vmatmul.mubr.bf16.gmra.mrb[0].mxu0 %v2288
    %v4631 = vpop.f32.mrb[0].mxu0
    %v4632 = vadd.f32 %v4589, %v4631
    %v4633 = vpop.f32.mrb[0].mxu0
    %v4634 = vadd.f32 %v4591, %v4633
    %v4635 = vpop.f32.mrb[0].mxu0
    %v4636 = vadd.f32 %v4593, %v4635
    %v4637 = vpop.f32.mrb[0].mxu0
    %v4638 = vadd.f32 %v4595, %v4637
    %4639 = vdwg.mxu0
    %4640 = vmatprep.subr.bf16.mxu0 %v3690
    %4641 = vmatpush1.bf16.msra.mxu0 %v3689
    %4642 = vmatprep.subr.bf16.mxu0 %v3702
    %4643 = vmatpush1.bf16.msra.mxu0 %v3701
    %4644 = vmatprep.subr.bf16.mxu0 %v3714
    %4645 = vmatpush1.bf16.msra.mxu0 %v3713
    %4646 = vmatprep.subr.bf16.mxu0 %v3726
    %4647 = vmatpush1.bf16.msra.mxu0 %v3725
    %4648 = vmatprep.subr.bf16.mxu0 %v3738
    %4649 = vmatpush1.bf16.msra.mxu0 %v3737
    %4650 = vmatprep.subr.bf16.mxu0 %v3750
    %4651 = vmatpush1.bf16.msra.mxu0 %v3749
    %4652 = vmatprep.subr.bf16.mxu0 %v3762
    %4653 = vmatpush1.bf16.msra.mxu0 %v3761
    %4654 = vmatprep.subr.bf16.mxu0 %v3774
    %4655 = vmatpush1.bf16.msra.mxu0 %v3773
    %4656 = vmatprep.subr.bf16.mxu0 %v3786
    %4657 = vmatpush1.bf16.msra.mxu0 %v3785
    %4658 = vmatprep.subr.bf16.mxu0 %v3798
    %4659 = vmatpush1.bf16.msra.mxu0 %v3797
    %4660 = vmatprep.subr.bf16.mxu0 %v3810
    %4661 = vmatpush1.bf16.msra.mxu0 %v3809
    %4662 = vmatprep.subr.bf16.mxu0 %v3822
    %4663 = vmatpush1.bf16.msra.mxu0 %v3821
    %4664 = vmatprep.subr.bf16.mxu0 %v3834
    %4665 = vmatpush1.bf16.msra.mxu0 %v3833
    %4666 = vmatprep.subr.bf16.mxu0 %v3846
    %4667 = vmatpush1.bf16.msra.mxu0 %v3845
    %4668 = vmatprep.subr.bf16.mxu0 %v3858
    %4669 = vmatpush1.bf16.msra.mxu0 %v3857
    %4670 = vmatprep.subr.bf16.mxu0 %v3870
    %4671 = vmatpush1.bf16.msra.mxu0 %v3869
    %4672 = vmatprep.mubr.bf16.mxu0 %v2291
    %4673 = vmatmul.mubr.bf16.gmra.mrb[0].mxu0 %v2290
    %v4674 = vpop.f32.mrb[0].mxu0
    %v4675 = vadd.f32 %v4632, %v4674
    %v4676 = vpop.f32.mrb[0].mxu0
    %v4677 = vadd.f32 %v4634, %v4676
    %v4678 = vpop.f32.mrb[0].mxu0
    %v4679 = vadd.f32 %v4636, %v4678
    %v4680 = vpop.f32.mrb[0].mxu0
    %v4681 = vadd.f32 %v4638, %v4680
    %4682 = vdwg.mxu0
    %4683 = vmatprep.subr.bf16.mxu0 %v3882
    %4684 = vmatpush1.bf16.msra.mxu0 %v3881
    %4685 = vmatprep.subr.bf16.mxu0 %v3894
    %4686 = vmatpush1.bf16.msra.mxu0 %v3893
    %4687 = vmatprep.subr.bf16.mxu0 %v3906
    %4688 = vmatpush1.bf16.msra.mxu0 %v3905
    %4689 = vmatprep.subr.bf16.mxu0 %v3918
    %4690 = vmatpush1.bf16.msra.mxu0 %v3917
    %4691 = vmatprep.subr.bf16.mxu0 %v3930
    %4692 = vmatpush1.bf16.msra.mxu0 %v3929
    %4693 = vmatprep.subr.bf16.mxu0 %v3942
    %4694 = vmatpush1.bf16.msra.mxu0 %v3941
    %4695 = vmatprep.subr.bf16.mxu0 %v3954
    %4696 = vmatpush1.bf16.msra.mxu0 %v3953
    %4697 = vmatprep.subr.bf16.mxu0 %v3966
    %4698 = vmatpush1.bf16.msra.mxu0 %v3965
    %4699 = vmatprep.subr.bf16.mxu0 %v3978
    %4700 = vmatpush1.bf16.msra.mxu0 %v3977
    %4701 = vmatprep.subr.bf16.mxu0 %v3990
    %4702 = vmatpush1.bf16.msra.mxu0 %v3989
    %4703 = vmatprep.subr.bf16.mxu0 %v4002
    %4704 = vmatpush1.bf16.msra.mxu0 %v4001
    %4705 = vmatprep.subr.bf16.mxu0 %v4014
    %4706 = vmatpush1.bf16.msra.mxu0 %v4013
    %4707 = vmatprep.subr.bf16.mxu0 %v4026
    %4708 = vmatpush1.bf16.msra.mxu0 %v4025
    %4709 = vmatprep.subr.bf16.mxu0 %v4038
    %4710 = vmatpush1.bf16.msra.mxu0 %v4037
    %4711 = vmatprep.subr.bf16.mxu0 %v4050
    %4712 = vmatpush1.bf16.msra.mxu0 %v4049
    %4713 = vmatprep.subr.bf16.mxu0 %v4062
    %4714 = vmatpush1.bf16.msra.mxu0 %v4061
    %4715 = vmatprep.mubr.bf16.mxu0 %v2293
    %4716 = vmatmul.mubr.bf16.gmra.mrb[0].mxu0 %v2292
    %v4717 = vpop.f32.mrb[0].mxu0
    %v4718 = vadd.f32 %v4675, %v4717
    %v4719 = vpop.f32.mrb[0].mxu0
    %v4720 = vadd.f32 %v4677, %v4719
    %v4721 = vpop.f32.mrb[0].mxu0
    %v4722 = vadd.f32 %v4679, %v4721
    %v4723 = vpop.f32.mrb[0].mxu0
    %v4724 = vadd.f32 %v4681, %v4723
    %4725 = vdwg.mxu0
    %4726 = vmatprep.subr.bf16.mxu0 %v4074
    %4727 = vmatpush1.bf16.msra.mxu0 %v4073
    %4728 = vmatprep.subr.bf16.mxu0 %v4086
    %4729 = vmatpush1.bf16.msra.mxu0 %v4085
    %4730 = vmatprep.subr.bf16.mxu0 %v4098
    %4731 = vmatpush1.bf16.msra.mxu0 %v4097
    %4732 = vmatprep.subr.bf16.mxu0 %v4110
    %4733 = vmatpush1.bf16.msra.mxu0 %v4109
    %4734 = vmatprep.subr.bf16.mxu0 %v4122
    %4735 = vmatpush1.bf16.msra.mxu0 %v4121
    %4736 = vmatprep.subr.bf16.mxu0 %v4134
    %4737 = vmatpush1.bf16.msra.mxu0 %v4133
    %4738 = vmatprep.subr.bf16.mxu0 %v4146
    %4739 = vmatpush1.bf16.msra.mxu0 %v4145
    %4740 = vmatprep.subr.bf16.mxu0 %v4158
    %4741 = vmatpush1.bf16.msra.mxu0 %v4157
    %4742 = vmatprep.subr.bf16.mxu0 0
    %4743 = vmatpush1.bf16.msra.mxu0 0
    %4744 = vmatprep.subr.bf16.mxu0 0
    %4745 = vmatpush1.bf16.msra.mxu0 0
    %4746 = vmatprep.subr.bf16.mxu0 0
    %4747 = vmatpush1.bf16.msra.mxu0 0
    %4748 = vmatprep.subr.bf16.mxu0 0
    %4749 = vmatpush1.bf16.msra.mxu0 0
    %4750 = vmatprep.subr.bf16.mxu0 0
    %4751 = vmatpush1.bf16.msra.mxu0 0
    %4752 = vmatprep.subr.bf16.mxu0 0
    %4753 = vmatpush1.bf16.msra.mxu0 0
    %4754 = vmatprep.subr.bf16.mxu0 0
    %4755 = vmatpush1.bf16.msra.mxu0 0
    %4756 = vmatprep.subr.bf16.mxu0 0
    %4757 = vmatpush1.bf16.msra.mxu0 0
    %4758 = vmatprep.mubr.bf16.mxu0 0
    %4759 = vmatmul.mubr.bf16.gmra.mrb[0].mxu0 %v2294
    %v4760 = vpop.f32.mrb[0].mxu0
    %v4761 = vadd.f32 %v4718, %v4760
    %v4762 = vpop.f32.mrb[0].mxu0
    %v4763 = vadd.f32 %v4720, %v4762
    %v4764 = vpop.f32.mrb[0].mxu0
    %v4765 = vadd.f32 %v4722, %v4764
    %v4766 = vpop.f32.mrb[0].mxu0
    %v4767 = vadd.f32 %v4724, %v4766
    %4768 = vdwg.mxu0
    %4769 = vmatprep.subr.bf16.mxu0 %v2924
    %4770 = vmatpush1.bf16.msra.mxu0 %v2923
    %4771 = vmatprep.subr.bf16.mxu0 %v2936
    %4772 = vmatpush1.bf16.msra.mxu0 %v2935
    %4773 = vmatprep.subr.bf16.mxu0 %v2948
    %4774 = vmatpush1.bf16.msra.mxu0 %v2947
    %4775 = vmatprep.subr.bf16.mxu0 %v2960
    %4776 = vmatpush1.bf16.msra.mxu0 %v2959
    %4777 = vmatprep.subr.bf16.mxu0 %v2972
    %4778 = vmatpush1.bf16.msra.mxu0 %v2971
    %4779 = vmatprep.subr.bf16.mxu0 %v2984
    %4780 = vmatpush1.bf16.msra.mxu0 %v2983
    %4781 = vmatprep.subr.bf16.mxu0 %v2996
    %4782 = vmatpush1.bf16.msra.mxu0 %v2995
    %4783 = vmatprep.subr.bf16.mxu0 %v3008
    %4784 = vmatpush1.bf16.msra.mxu0 %v3007
    %4785 = vmatprep.subr.bf16.mxu0 %v3020
    %4786 = vmatpush1.bf16.msra.mxu0 %v3019
    %4787 = vmatprep.subr.bf16.mxu0 %v3032
    %4788 = vmatpush1.bf16.msra.mxu0 %v3031
    %4789 = vmatprep.subr.bf16.mxu0 %v3044
    %4790 = vmatpush1.bf16.msra.mxu0 %v3043
    %4791 = vmatprep.subr.bf16.mxu0 %v3056
    %4792 = vmatpush1.bf16.msra.mxu0 %v3055
    %4793 = vmatprep.subr.bf16.mxu0 %v3068
    %4794 = vmatpush1.bf16.msra.mxu0 %v3067
    %4795 = vmatprep.subr.bf16.mxu0 %v3080
    %4796 = vmatpush1.bf16.msra.mxu0 %v3079
    %4797 = vmatprep.subr.bf16.mxu0 %v3092
    %4798 = vmatpush1.bf16.msra.mxu0 %v3091
    %4799 = vmatprep.subr.bf16.mxu0 %v3104
    %4800 = vmatpush1.bf16.msra.mxu0 %v3103
    %4801 = vmatprep.mubr.bf16.mxu0 %v2283
    %4802 = vmatmul.mubr.bf16.gmra.mrb[0].mxu0 %v2282
    %v4803 = vpop.f32.mrb[0].mxu0
    %v4804 = vadd.f32 0.0, %v4803
    %v4805 = vpop.f32.mrb[0].mxu0
    %v4806 = vadd.f32 0.0, %v4805
    %v4807 = vpop.f32.mrb[0].mxu0
    %v4808 = vadd.f32 0.0, %v4807
    %v4809 = vpop.f32.mrb[0].mxu0
    %v4810 = vadd.f32 0.0, %v4809
    %4811 = vdwg.mxu0
    %4812 = vmatprep.subr.bf16.mxu0 %v3116
    %4813 = vmatpush1.bf16.msra.mxu0 %v3115
    %4814 = vmatprep.subr.bf16.mxu0 %v3128
    %4815 = vmatpush1.bf16.msra.mxu0 %v3127
    %4816 = vmatprep.subr.bf16.mxu0 %v3140
    %4817 = vmatpush1.bf16.msra.mxu0 %v3139
    %4818 = vmatprep.subr.bf16.mxu0 %v3152
    %4819 = vmatpush1.bf16.msra.mxu0 %v3151
    %4820 = vmatprep.subr.bf16.mxu0 %v3164
    %4821 = vmatpush1.bf16.msra.mxu0 %v3163
    %4822 = vmatprep.subr.bf16.mxu0 %v3176
    %4823 = vmatpush1.bf16.msra.mxu0 %v3175
    %4824 = vmatprep.subr.bf16.mxu0 %v3188
    %4825 = vmatpush1.bf16.msra.mxu0 %v3187
    %4826 = vmatprep.subr.bf16.mxu0 %v3200
    %4827 = vmatpush1.bf16.msra.mxu0 %v3199
    %4828 = vmatprep.subr.bf16.mxu0 %v3212
    %4829 = vmatpush1.bf16.msra.mxu0 %v3211
    %4830 = vmatprep.subr.bf16.mxu0 %v3224
    %4831 = vmatpush1.bf16.msra.mxu0 %v3223
    %4832 = vmatprep.subr.bf16.mxu0 %v3236
    %4833 = vmatpush1.bf16.msra.mxu0 %v3235
    %4834 = vmatprep.subr.bf16.mxu0 %v3248
    %4835 = vmatpush1.bf16.msra.mxu0 %v3247
    %4836 = vmatprep.subr.bf16.mxu0 %v3260
    %4837 = vmatpush1.bf16.msra.mxu0 %v3259
    %4838 = vmatprep.subr.bf16.mxu0 %v3272
    %4839 = vmatpush1.bf16.msra.mxu0 %v3271
    %4840 = vmatprep.subr.bf16.mxu0 %v3284
    %4841 = vmatpush1.bf16.msra.mxu0 %v3283
    %4842 = vmatprep.subr.bf16.mxu0 %v3296
    %4843 = vmatpush1.bf16.msra.mxu0 %v3295
    %4844 = vmatprep.mubr.bf16.mxu0 %v2285
    %4845 = vmatmul.mubr.bf16.gmra.mrb[0].mxu0 %v2284
    %v4846 = vpop.f32.mrb[0].mxu0
    %v4847 = vadd.f32 %v4804, %v4846
    %v4848 = vpop.f32.mrb[0].mxu0
    %v4849 = vadd.f32 %v4806, %v4848
    %v4850 = vpop.f32.mrb[0].mxu0
    %v4851 = vadd.f32 %v4808, %v4850
    %v4852 = vpop.f32.mrb[0].mxu0
    %v4853 = vadd.f32 %v4810, %v4852
    %4854 = vdwg.mxu0
    %4855 = vmatprep.subr.bf16.mxu0 %v3308
    %4856 = vmatpush1.bf16.msra.mxu0 %v3307
    %4857 = vmatprep.subr.bf16.mxu0 %v3320
    %4858 = vmatpush1.bf16.msra.mxu0 %v3319
    %4859 = vmatprep.subr.bf16.mxu0 %v3332
    %4860 = vmatpush1.bf16.msra.mxu0 %v3331
    %4861 = vmatprep.subr.bf16.mxu0 %v3344
    %4862 = vmatpush1.bf16.msra.mxu0 %v3343
    %4863 = vmatprep.subr.bf16.mxu0 %v3356
    %4864 = vmatpush1.bf16.msra.mxu0 %v3355
    %4865 = vmatprep.subr.bf16.mxu0 %v3368
    %4866 = vmatpush1.bf16.msra.mxu0 %v3367
    %4867 = vmatprep.subr.bf16.mxu0 %v3380
    %4868 = vmatpush1.bf16.msra.mxu0 %v3379
    %4869 = vmatprep.subr.bf16.mxu0 %v3392
    %4870 = vmatpush1.bf16.msra.mxu0 %v3391
    %4871 = vmatprep.subr.bf16.mxu0 %v3404
    %4872 = vmatpush1.bf16.msra.mxu0 %v3403
    %4873 = vmatprep.subr.bf16.mxu0 %v3416
    %4874 = vmatpush1.bf16.msra.mxu0 %v3415
    %4875 = vmatprep.subr.bf16.mxu0 %v3428
    %4876 = vmatpush1.bf16.msra.mxu0 %v3427
    %4877 = vmatprep.subr.bf16.mxu0 %v3440
    %4878 = vmatpush1.bf16.msra.mxu0 %v3439
    %4879 = vmatprep.subr.bf16.mxu0 %v3452
    %4880 = vmatpush1.bf16.msra.mxu0 %v3451
    %4881 = vmatprep.subr.bf16.mxu0 %v3464
    %4882 = vmatpush1.bf16.msra.mxu0 %v3463
    %4883 = vmatprep.subr.bf16.mxu0 %v3476
    %4884 = vmatpush1.bf16.msra.mxu0 %v3475
    %4885 = vmatprep.subr.bf16.mxu0 %v3488
    %4886 = vmatpush1.bf16.msra.mxu0 %v3487
    %4887 = vmatprep.mubr.bf16.mxu0 %v2287
    %4888 = vmatmul.mubr.bf16.gmra.mrb[0].mxu0 %v2286
    %v4889 = vpop.f32.mrb[0].mxu0
    %v4890 = vadd.f32 %v4847, %v4889
    %v4891 = vpop.f32.mrb[0].mxu0
    %v4892 = vadd.f32 %v4849, %v4891
    %v4893 = vpop.f32.mrb[0].mxu0
    %v4894 = vadd.f32 %v4851, %v4893
    %v4895 = vpop.f32.mrb[0].mxu0
    %v4896 = vadd.f32 %v4853, %v4895
    %4897 = vdwg.mxu0
    %4898 = vmatprep.subr.bf16.mxu0 %v3500
    %4899 = vmatpush1.bf16.msra.mxu0 %v3499
    %4900 = vmatprep.subr.bf16.mxu0 %v3512
    %4901 = vmatpush1.bf16.msra.mxu0 %v3511
    %4902 = vmatprep.subr.bf16.mxu0 %v3524
    %4903 = vmatpush1.bf16.msra.mxu0 %v3523
    %4904 = vmatprep.subr.bf16.mxu0 %v3536
    %4905 = vmatpush1.bf16.msra.mxu0 %v3535
    %4906 = vmatprep.subr.bf16.mxu0 %v3548
    %4907 = vmatpush1.bf16.msra.mxu0 %v3547
    %4908 = vmatprep.subr.bf16.mxu0 %v3560
    %4909 = vmatpush1.bf16.msra.mxu0 %v3559
    %4910 = vmatprep.subr.bf16.mxu0 %v3572
    %4911 = vmatpush1.bf16.msra.mxu0 %v3571
    %4912 = vmatprep.subr.bf16.mxu0 %v3584
    %4913 = vmatpush1.bf16.msra.mxu0 %v3583
    %4914 = vmatprep.subr.bf16.mxu0 %v3596
    %4915 = vmatpush1.bf16.msra.mxu0 %v3595
    %4916 = vmatprep.subr.bf16.mxu0 %v3608
    %4917 = vmatpush1.bf16.msra.mxu0 %v3607
    %4918 = vmatprep.subr.bf16.mxu0 %v3620
    %4919 = vmatpush1.bf16.msra.mxu0 %v3619
    %4920 = vmatprep.subr.bf16.mxu0 %v3632
    %4921 = vmatpush1.bf16.msra.mxu0 %v3631
    %4922 = vmatprep.subr.bf16.mxu0 %v3644
    %4923 = vmatpush1.bf16.msra.mxu0 %v3643
    %4924 = vmatprep.subr.bf16.mxu0 %v3656
    %4925 = vmatpush1.bf16.msra.mxu0 %v3655
    %4926 = vmatprep.subr.bf16.mxu0 %v3668
    %4927 = vmatpush1.bf16.msra.mxu0 %v3667
    %4928 = vmatprep.subr.bf16.mxu0 %v3680
    %4929 = vmatpush1.bf16.msra.mxu0 %v3679
    %4930 = vmatprep.mubr.bf16.mxu0 %v2289
    %4931 = vmatmul.mubr.bf16.gmra.mrb[0].mxu0 %v2288
    %v4932 = vpop.f32.mrb[0].mxu0
    %v4933 = vadd.f32 %v4890, %v4932
    %v4934 = vpop.f32.mrb[0].mxu0
    %v4935 = vadd.f32 %v4892, %v4934
    %v4936 = vpop.f32.mrb[0].mxu0
    %v4937 = vadd.f32 %v4894, %v4936
    %v4938 = vpop.f32.mrb[0].mxu0
    %v4939 = vadd.f32 %v4896, %v4938
    %4940 = vdwg.mxu0
    %4941 = vmatprep.subr.bf16.mxu0 %v3692
    %4942 = vmatpush1.bf16.msra.mxu0 %v3691
    %4943 = vmatprep.subr.bf16.mxu0 %v3704
    %4944 = vmatpush1.bf16.msra.mxu0 %v3703
    %4945 = vmatprep.subr.bf16.mxu0 %v3716
    %4946 = vmatpush1.bf16.msra.mxu0 %v3715
    %4947 = vmatprep.subr.bf16.mxu0 %v3728
    %4948 = vmatpush1.bf16.msra.mxu0 %v3727
    %4949 = vmatprep.subr.bf16.mxu0 %v3740
    %4950 = vmatpush1.bf16.msra.mxu0 %v3739
    %4951 = vmatprep.subr.bf16.mxu0 %v3752
    %4952 = vmatpush1.bf16.msra.mxu0 %v3751
    %4953 = vmatprep.subr.bf16.mxu0 %v3764
    %4954 = vmatpush1.bf16.msra.mxu0 %v3763
    %4955 = vmatprep.subr.bf16.mxu0 %v3776
    %4956 = vmatpush1.bf16.msra.mxu0 %v3775
    %4957 = vmatprep.subr.bf16.mxu0 %v3788
    %4958 = vmatpush1.bf16.msra.mxu0 %v3787
    %4959 = vmatprep.subr.bf16.mxu0 %v3800
    %4960 = vmatpush1.bf16.msra.mxu0 %v3799
    %4961 = vmatprep.subr.bf16.mxu0 %v3812
    %4962 = vmatpush1.bf16.msra.mxu0 %v3811
    %4963 = vmatprep.subr.bf16.mxu0 %v3824
    %4964 = vmatpush1.bf16.msra.mxu0 %v3823
    %4965 = vmatprep.subr.bf16.mxu0 %v3836
    %4966 = vmatpush1.bf16.msra.mxu0 %v3835
    %4967 = vmatprep.subr.bf16.mxu0 %v3848
    %4968 = vmatpush1.bf16.msra.mxu0 %v3847
    %4969 = vmatprep.subr.bf16.mxu0 %v3860
    %4970 = vmatpush1.bf16.msra.mxu0 %v3859
    %4971 = vmatprep.subr.bf16.mxu0 %v3872
    %4972 = vmatpush1.bf16.msra.mxu0 %v3871
    %4973 = vmatprep.mubr.bf16.mxu0 %v2291
    %4974 = vmatmul.mubr.bf16.gmra.mrb[0].mxu0 %v2290
    %v4975 = vpop.f32.mrb[0].mxu0
    %v4976 = vadd.f32 %v4933, %v4975
    %v4977 = vpop.f32.mrb[0].mxu0
    %v4978 = vadd.f32 %v4935, %v4977
    %v4979 = vpop.f32.mrb[0].mxu0
    %v4980 = vadd.f32 %v4937, %v4979
    %v4981 = vpop.f32.mrb[0].mxu0
    %v4982 = vadd.f32 %v4939, %v4981
    %4983 = vdwg.mxu0
    %4984 = vmatprep.subr.bf16.mxu0 %v3884
    %4985 = vmatpush1.bf16.msra.mxu0 %v3883
    %4986 = vmatprep.subr.bf16.mxu0 %v3896
    %4987 = vmatpush1.bf16.msra.mxu0 %v3895
    %4988 = vmatprep.subr.bf16.mxu0 %v3908
    %4989 = vmatpush1.bf16.msra.mxu0 %v3907
    %4990 = vmatprep.subr.bf16.mxu0 %v3920
    %4991 = vmatpush1.bf16.msra.mxu0 %v3919
    %4992 = vmatprep.subr.bf16.mxu0 %v3932
    %4993 = vmatpush1.bf16.msra.mxu0 %v3931
    %4994 = vmatprep.subr.bf16.mxu0 %v3944
    %4995 = vmatpush1.bf16.msra.mxu0 %v3943
    %4996 = vmatprep.subr.bf16.mxu0 %v3956
    %4997 = vmatpush1.bf16.msra.mxu0 %v3955
    %4998 = vmatprep.subr.bf16.mxu0 %v3968
    %4999 = vmatpush1.bf16.msra.mxu0 %v3967
    %5000 = vmatprep.subr.bf16.mxu0 %v3980
    %5001 = vmatpush1.bf16.msra.mxu0 %v3979
    %5002 = vmatprep.subr.bf16.mxu0 %v3992
    %5003 = vmatpush1.bf16.msra.mxu0 %v3991
    %5004 = vmatprep.subr.bf16.mxu0 %v4004
    %5005 = vmatpush1.bf16.msra.mxu0 %v4003
    %5006 = vmatprep.subr.bf16.mxu0 %v4016
    %5007 = vmatpush1.bf16.msra.mxu0 %v4015
    %5008 = vmatprep.subr.bf16.mxu0 %v4028
    %5009 = vmatpush1.bf16.msra.mxu0 %v4027
    %5010 = vmatprep.subr.bf16.mxu0 %v4040
    %5011 = vmatpush1.bf16.msra.mxu0 %v4039
    %5012 = vmatprep.subr.bf16.mxu0 %v4052
    %5013 = vmatpush1.bf16.msra.mxu0 %v4051
    %5014 = vmatprep.subr.bf16.mxu0 %v4064
    %5015 = vmatpush1.bf16.msra.mxu0 %v4063
    %5016 = vmatprep.mubr.bf16.mxu0 %v2293
    %5017 = vmatmul.mubr.bf16.gmra.mrb[0].mxu0 %v2292
    %v5018 = vpop.f32.mrb[0].mxu0
    %v5019 = vadd.f32 %v4976, %v5018
    %v5020 = vpop.f32.mrb[0].mxu0
    %v5021 = vadd.f32 %v4978, %v5020
    %v5022 = vpop.f32.mrb[0].mxu0
    %v5023 = vadd.f32 %v4980, %v5022
    %v5024 = vpop.f32.mrb[0].mxu0
    %v5025 = vadd.f32 %v4982, %v5024
    %5026 = vdwg.mxu0
    %5027 = vmatprep.subr.bf16.mxu0 %v4076
    %5028 = vmatpush1.bf16.msra.mxu0 %v4075
    %5029 = vmatprep.subr.bf16.mxu0 %v4088
    %5030 = vmatpush1.bf16.msra.mxu0 %v4087
    %5031 = vmatprep.subr.bf16.mxu0 %v4100
    %5032 = vmatpush1.bf16.msra.mxu0 %v4099
    %5033 = vmatprep.subr.bf16.mxu0 %v4112
    %5034 = vmatpush1.bf16.msra.mxu0 %v4111
    %5035 = vmatprep.subr.bf16.mxu0 %v4124
    %5036 = vmatpush1.bf16.msra.mxu0 %v4123
    %5037 = vmatprep.subr.bf16.mxu0 %v4136
    %5038 = vmatpush1.bf16.msra.mxu0 %v4135
    %5039 = vmatprep.subr.bf16.mxu0 %v4148
    %5040 = vmatpush1.bf16.msra.mxu0 %v4147
    %5041 = vmatprep.subr.bf16.mxu0 %v4160
    %5042 = vmatpush1.bf16.msra.mxu0 %v4159
    %5043 = vmatprep.subr.bf16.mxu0 0
    %5044 = vmatpush1.bf16.msra.mxu0 0
    %5045 = vmatprep.subr.bf16.mxu0 0
    %5046 = vmatpush1.bf16.msra.mxu0 0
    %5047 = vmatprep.subr.bf16.mxu0 0
    %5048 = vmatpush1.bf16.msra.mxu0 0
    %5049 = vmatprep.subr.bf16.mxu0 0
    %5050 = vmatpush1.bf16.msra.mxu0 0
    %5051 = vmatprep.subr.bf16.mxu0 0
    %5052 = vmatpush1.bf16.msra.mxu0 0
    %5053 = vmatprep.subr.bf16.mxu0 0
    %5054 = vmatpush1.bf16.msra.mxu0 0
    %5055 = vmatprep.subr.bf16.mxu0 0
    %5056 = vmatpush1.bf16.msra.mxu0 0
    %5057 = vmatprep.subr.bf16.mxu0 0
    %5058 = vmatpush1.bf16.msra.mxu0 0
    %5059 = vmatprep.mubr.bf16.mxu0 0
    %5060 = vmatmul.mubr.bf16.gmra.mrb[0].mxu0 %v2294
    %v5061 = vpop.f32.mrb[0].mxu0
    %v5062 = vadd.f32 %v5019, %v5061
    %v5063 = vpop.f32.mrb[0].mxu0
    %v5064 = vadd.f32 %v5021, %v5063
    %v5065 = vpop.f32.mrb[0].mxu0
    %v5066 = vadd.f32 %v5023, %v5065
    %v5067 = vpop.f32.mrb[0].mxu0
    %v5068 = vadd.f32 %v5025, %v5067
    %5069 = vdwg.mxu0
    %5070 = vmatprep.subr.bf16.mxu0 %v2926
    %5071 = vmatpush1.bf16.msra.mxu0 %v2925
    %5072 = vmatprep.subr.bf16.mxu0 %v2938
    %5073 = vmatpush1.bf16.msra.mxu0 %v2937
    %5074 = vmatprep.subr.bf16.mxu0 %v2950
    %5075 = vmatpush1.bf16.msra.mxu0 %v2949
    %5076 = vmatprep.subr.bf16.mxu0 %v2962
    %5077 = vmatpush1.bf16.msra.mxu0 %v2961
    %5078 = vmatprep.subr.bf16.mxu0 %v2974
    %5079 = vmatpush1.bf16.msra.mxu0 %v2973
    %5080 = vmatprep.subr.bf16.mxu0 %v2986
    %5081 = vmatpush1.bf16.msra.mxu0 %v2985
    %5082 = vmatprep.subr.bf16.mxu0 %v2998
    %5083 = vmatpush1.bf16.msra.mxu0 %v2997
    %5084 = vmatprep.subr.bf16.mxu0 %v3010
    %5085 = vmatpush1.bf16.msra.mxu0 %v3009
    %5086 = vmatprep.subr.bf16.mxu0 %v3022
    %5087 = vmatpush1.bf16.msra.mxu0 %v3021
    %5088 = vmatprep.subr.bf16.mxu0 %v3034
    %5089 = vmatpush1.bf16.msra.mxu0 %v3033
    %5090 = vmatprep.subr.bf16.mxu0 %v3046
    %5091 = vmatpush1.bf16.msra.mxu0 %v3045
    %5092 = vmatprep.subr.bf16.mxu0 %v3058
    %5093 = vmatpush1.bf16.msra.mxu0 %v3057
    %5094 = vmatprep.subr.bf16.mxu0 %v3070
    %5095 = vmatpush1.bf16.msra.mxu0 %v3069
    %5096 = vmatprep.subr.bf16.mxu0 %v3082
    %5097 = vmatpush1.bf16.msra.mxu0 %v3081
    %5098 = vmatprep.subr.bf16.mxu0 %v3094
    %5099 = vmatpush1.bf16.msra.mxu0 %v3093
    %5100 = vmatprep.subr.bf16.mxu0 %v3106
    %5101 = vmatpush1.bf16.msra.mxu0 %v3105
    %5102 = vmatprep.mubr.bf16.mxu0 %v2283
    %5103 = vmatmul.mubr.bf16.gmra.mrb[0].mxu0 %v2282
    %v5104 = vpop.f32.mrb[0].mxu0
    %v5105 = vadd.f32 0.0, %v5104
    %v5106 = vpop.f32.mrb[0].mxu0
    %v5107 = vadd.f32 0.0, %v5106
    %v5108 = vpop.f32.mrb[0].mxu0
    %v5109 = vadd.f32 0.0, %v5108
    %v5110 = vpop.f32.mrb[0].mxu0
    %v5111 = vadd.f32 0.0, %v5110
    %5112 = vdwg.mxu0
    %5113 = vmatprep.subr.bf16.mxu0 %v3118
    %5114 = vmatpush1.bf16.msra.mxu0 %v3117
    %5115 = vmatprep.subr.bf16.mxu0 %v3130
    %5116 = vmatpush1.bf16.msra.mxu0 %v3129
    %5117 = vmatprep.subr.bf16.mxu0 %v3142
    %5118 = vmatpush1.bf16.msra.mxu0 %v3141
    %5119 = vmatprep.subr.bf16.mxu0 %v3154
    %5120 = vmatpush1.bf16.msra.mxu0 %v3153
    %5121 = vmatprep.subr.bf16.mxu0 %v3166
    %5122 = vmatpush1.bf16.msra.mxu0 %v3165
    %5123 = vmatprep.subr.bf16.mxu0 %v3178
    %5124 = vmatpush1.bf16.msra.mxu0 %v3177
    %5125 = vmatprep.subr.bf16.mxu0 %v3190
    %5126 = vmatpush1.bf16.msra.mxu0 %v3189
    %5127 = vmatprep.subr.bf16.mxu0 %v3202
    %5128 = vmatpush1.bf16.msra.mxu0 %v3201
    %5129 = vmatprep.subr.bf16.mxu0 %v3214
    %5130 = vmatpush1.bf16.msra.mxu0 %v3213
    %5131 = vmatprep.subr.bf16.mxu0 %v3226
    %5132 = vmatpush1.bf16.msra.mxu0 %v3225
    %5133 = vmatprep.subr.bf16.mxu0 %v3238
    %5134 = vmatpush1.bf16.msra.mxu0 %v3237
    %5135 = vmatprep.subr.bf16.mxu0 %v3250
    %5136 = vmatpush1.bf16.msra.mxu0 %v3249
    %5137 = vmatprep.subr.bf16.mxu0 %v3262
    %5138 = vmatpush1.bf16.msra.mxu0 %v3261
    %5139 = vmatprep.subr.bf16.mxu0 %v3274
    %5140 = vmatpush1.bf16.msra.mxu0 %v3273
    %5141 = vmatprep.subr.bf16.mxu0 %v3286
    %5142 = vmatpush1.bf16.msra.mxu0 %v3285
    %5143 = vmatprep.subr.bf16.mxu0 %v3298
    %5144 = vmatpush1.bf16.msra.mxu0 %v3297
    %5145 = vmatprep.mubr.bf16.mxu0 %v2285
    %5146 = vmatmul.mubr.bf16.gmra.mrb[0].mxu0 %v2284
    %v5147 = vpop.f32.mrb[0].mxu0
    %v5148 = vadd.f32 %v5105, %v5147
    %v5149 = vpop.f32.mrb[0].mxu0
    %v5150 = vadd.f32 %v5107, %v5149
    %v5151 = vpop.f32.mrb[0].mxu0
    %v5152 = vadd.f32 %v5109, %v5151
    %v5153 = vpop.f32.mrb[0].mxu0
    %v5154 = vadd.f32 %v5111, %v5153
    %5155 = vdwg.mxu0
    %5156 = vmatprep.subr.bf16.mxu0 %v3310
    %5157 = vmatpush1.bf16.msra.mxu0 %v3309
    %5158 = vmatprep.subr.bf16.mxu0 %v3322
    %5159 = vmatpush1.bf16.msra.mxu0 %v3321
    %5160 = vmatprep.subr.bf16.mxu0 %v3334
    %5161 = vmatpush1.bf16.msra.mxu0 %v3333
    %5162 = vmatprep.subr.bf16.mxu0 %v3346
    %5163 = vmatpush1.bf16.msra.mxu0 %v3345
    %5164 = vmatprep.subr.bf16.mxu0 %v3358
    %5165 = vmatpush1.bf16.msra.mxu0 %v3357
    %5166 = vmatprep.subr.bf16.mxu0 %v3370
    %5167 = vmatpush1.bf16.msra.mxu0 %v3369
    %5168 = vmatprep.subr.bf16.mxu0 %v3382
    %5169 = vmatpush1.bf16.msra.mxu0 %v3381
    %5170 = vmatprep.subr.bf16.mxu0 %v3394
    %5171 = vmatpush1.bf16.msra.mxu0 %v3393
    %5172 = vmatprep.subr.bf16.mxu0 %v3406
    %5173 = vmatpush1.bf16.msra.mxu0 %v3405
    %5174 = vmatprep.subr.bf16.mxu0 %v3418
    %5175 = vmatpush1.bf16.msra.mxu0 %v3417
    %5176 = vmatprep.subr.bf16.mxu0 %v3430
    %5177 = vmatpush1.bf16.msra.mxu0 %v3429
    %5178 = vmatprep.subr.bf16.mxu0 %v3442
    %5179 = vmatpush1.bf16.msra.mxu0 %v3441
    %5180 = vmatprep.subr.bf16.mxu0 %v3454
    %5181 = vmatpush1.bf16.msra.mxu0 %v3453
    %5182 = vmatprep.subr.bf16.mxu0 %v3466
    %5183 = vmatpush1.bf16.msra.mxu0 %v3465
    %5184 = vmatprep.subr.bf16.mxu0 %v3478
    %5185 = vmatpush1.bf16.msra.mxu0 %v3477
    %5186 = vmatprep.subr.bf16.mxu0 %v3490
    %5187 = vmatpush1.bf16.msra.mxu0 %v3489
    %5188 = vmatprep.mubr.bf16.mxu0 %v2287
    %5189 = vmatmul.mubr.bf16.gmra.mrb[0].mxu0 %v2286
    %v5190 = vpop.f32.mrb[0].mxu0
    %v5191 = vadd.f32 %v5148, %v5190
    %v5192 = vpop.f32.mrb[0].mxu0
    %v5193 = vadd.f32 %v5150, %v5192
    %v5194 = vpop.f32.mrb[0].mxu0
    %v5195 = vadd.f32 %v5152, %v5194
    %v5196 = vpop.f32.mrb[0].mxu0
    %v5197 = vadd.f32 %v5154, %v5196
    %5198 = vdwg.mxu0
    %5199 = vmatprep.subr.bf16.mxu0 %v3502
    %5200 = vmatpush1.bf16.msra.mxu0 %v3501
    %5201 = vmatprep.subr.bf16.mxu0 %v3514
    %5202 = vmatpush1.bf16.msra.mxu0 %v3513
    %5203 = vmatprep.subr.bf16.mxu0 %v3526
    %5204 = vmatpush1.bf16.msra.mxu0 %v3525
    %5205 = vmatprep.subr.bf16.mxu0 %v3538
    %5206 = vmatpush1.bf16.msra.mxu0 %v3537
    %5207 = vmatprep.subr.bf16.mxu0 %v3550
    %5208 = vmatpush1.bf16.msra.mxu0 %v3549
    %5209 = vmatprep.subr.bf16.mxu0 %v3562
    %5210 = vmatpush1.bf16.msra.mxu0 %v3561
    %5211 = vmatprep.subr.bf16.mxu0 %v3574
    %5212 = vmatpush1.bf16.msra.mxu0 %v3573
    %5213 = vmatprep.subr.bf16.mxu0 %v3586
    %5214 = vmatpush1.bf16.msra.mxu0 %v3585
    %5215 = vmatprep.subr.bf16.mxu0 %v3598
    %5216 = vmatpush1.bf16.msra.mxu0 %v3597
    %5217 = vmatprep.subr.bf16.mxu0 %v3610
    %5218 = vmatpush1.bf16.msra.mxu0 %v3609
    %5219 = vmatprep.subr.bf16.mxu0 %v3622
    %5220 = vmatpush1.bf16.msra.mxu0 %v3621
    %5221 = vmatprep.subr.bf16.mxu0 %v3634
    %5222 = vmatpush1.bf16.msra.mxu0 %v3633
    %5223 = vmatprep.subr.bf16.mxu0 %v3646
    %5224 = vmatpush1.bf16.msra.mxu0 %v3645
    %5225 = vmatprep.subr.bf16.mxu0 %v3658
    %5226 = vmatpush1.bf16.msra.mxu0 %v3657
    %5227 = vmatprep.subr.bf16.mxu0 %v3670
    %5228 = vmatpush1.bf16.msra.mxu0 %v3669
    %5229 = vmatprep.subr.bf16.mxu0 %v3682
    %5230 = vmatpush1.bf16.msra.mxu0 %v3681
    %5231 = vmatprep.mubr.bf16.mxu0 %v2289
    %5232 = vmatmul.mubr.bf16.gmra.mrb[0].mxu0 %v2288
    %v5233 = vpop.f32.mrb[0].mxu0
    %v5234 = vadd.f32 %v5191, %v5233
    %v5235 = vpop.f32.mrb[0].mxu0
    %v5236 = vadd.f32 %v5193, %v5235
    %v5237 = vpop.f32.mrb[0].mxu0
    %v5238 = vadd.f32 %v5195, %v5237
    %v5239 = vpop.f32.mrb[0].mxu0
    %v5240 = vadd.f32 %v5197, %v5239
    %5241 = vdwg.mxu0
    %5242 = vmatprep.subr.bf16.mxu0 %v3694
    %5243 = vmatpush1.bf16.msra.mxu0 %v3693
    %5244 = vmatprep.subr.bf16.mxu0 %v3706
    %5245 = vmatpush1.bf16.msra.mxu0 %v3705
    %5246 = vmatprep.subr.bf16.mxu0 %v3718
    %5247 = vmatpush1.bf16.msra.mxu0 %v3717
    %5248 = vmatprep.subr.bf16.mxu0 %v3730
    %5249 = vmatpush1.bf16.msra.mxu0 %v3729
    %5250 = vmatprep.subr.bf16.mxu0 %v3742
    %5251 = vmatpush1.bf16.msra.mxu0 %v3741
    %5252 = vmatprep.subr.bf16.mxu0 %v3754
    %5253 = vmatpush1.bf16.msra.mxu0 %v3753
    %5254 = vmatprep.subr.bf16.mxu0 %v3766
    %5255 = vmatpush1.bf16.msra.mxu0 %v3765
    %5256 = vmatprep.subr.bf16.mxu0 %v3778
    %5257 = vmatpush1.bf16.msra.mxu0 %v3777
    %5258 = vmatprep.subr.bf16.mxu0 %v3790
    %5259 = vmatpush1.bf16.msra.mxu0 %v3789
    %5260 = vmatprep.subr.bf16.mxu0 %v3802
    %5261 = vmatpush1.bf16.msra.mxu0 %v3801
    %5262 = vmatprep.subr.bf16.mxu0 %v3814
    %5263 = vmatpush1.bf16.msra.mxu0 %v3813
    %5264 = vmatprep.subr.bf16.mxu0 %v3826
    %5265 = vmatpush1.bf16.msra.mxu0 %v3825
    %5266 = vmatprep.subr.bf16.mxu0 %v3838
    %5267 = vmatpush1.bf16.msra.mxu0 %v3837
    %5268 = vmatprep.subr.bf16.mxu0 %v3850
    %5269 = vmatpush1.bf16.msra.mxu0 %v3849
    %5270 = vmatprep.subr.bf16.mxu0 %v3862
    %5271 = vmatpush1.bf16.msra.mxu0 %v3861
    %5272 = vmatprep.subr.bf16.mxu0 %v3874
    %5273 = vmatpush1.bf16.msra.mxu0 %v3873
    %5274 = vmatprep.mubr.bf16.mxu0 %v2291
    %5275 = vmatmul.mubr.bf16.gmra.mrb[0].mxu0 %v2290
    %v5276 = vpop.f32.mrb[0].mxu0
    %v5277 = vadd.f32 %v5234, %v5276
    %v5278 = vpop.f32.mrb[0].mxu0
    %v5279 = vadd.f32 %v5236, %v5278
    %v5280 = vpop.f32.mrb[0].mxu0
    %v5281 = vadd.f32 %v5238, %v5280
    %v5282 = vpop.f32.mrb[0].mxu0
    %v5283 = vadd.f32 %v5240, %v5282
    %5284 = vdwg.mxu0
    %5285 = vmatprep.subr.bf16.mxu0 %v3886
    %5286 = vmatpush1.bf16.msra.mxu0 %v3885
    %5287 = vmatprep.subr.bf16.mxu0 %v3898
    %5288 = vmatpush1.bf16.msra.mxu0 %v3897
    %5289 = vmatprep.subr.bf16.mxu0 %v3910
    %5290 = vmatpush1.bf16.msra.mxu0 %v3909
    %5291 = vmatprep.subr.bf16.mxu0 %v3922
    %5292 = vmatpush1.bf16.msra.mxu0 %v3921
    %5293 = vmatprep.subr.bf16.mxu0 %v3934
    %5294 = vmatpush1.bf16.msra.mxu0 %v3933
    %5295 = vmatprep.subr.bf16.mxu0 %v3946
    %5296 = vmatpush1.bf16.msra.mxu0 %v3945
    %5297 = vmatprep.subr.bf16.mxu0 %v3958
    %5298 = vmatpush1.bf16.msra.mxu0 %v3957
    %5299 = vmatprep.subr.bf16.mxu0 %v3970
    %5300 = vmatpush1.bf16.msra.mxu0 %v3969
    %5301 = vmatprep.subr.bf16.mxu0 %v3982
    %5302 = vmatpush1.bf16.msra.mxu0 %v3981
    %5303 = vmatprep.subr.bf16.mxu0 %v3994
    %5304 = vmatpush1.bf16.msra.mxu0 %v3993
    %5305 = vmatprep.subr.bf16.mxu0 %v4006
    %5306 = vmatpush1.bf16.msra.mxu0 %v4005
    %5307 = vmatprep.subr.bf16.mxu0 %v4018
    %5308 = vmatpush1.bf16.msra.mxu0 %v4017
    %5309 = vmatprep.subr.bf16.mxu0 %v4030
    %5310 = vmatpush1.bf16.msra.mxu0 %v4029
    %5311 = vmatprep.subr.bf16.mxu0 %v4042
    %5312 = vmatpush1.bf16.msra.mxu0 %v4041
    %5313 = vmatprep.subr.bf16.mxu0 %v4054
    %5314 = vmatpush1.bf16.msra.mxu0 %v4053
    %5315 = vmatprep.subr.bf16.mxu0 %v4066
    %5316 = vmatpush1.bf16.msra.mxu0 %v4065
    %5317 = vmatprep.mubr.bf16.mxu0 %v2293
    %5318 = vmatmul.mubr.bf16.gmra.mrb[0].mxu0 %v2292
    %v5319 = vpop.f32.mrb[0].mxu0
    %v5320 = vadd.f32 %v5277, %v5319
    %v5321 = vpop.f32.mrb[0].mxu0
    %v5322 = vadd.f32 %v5279, %v5321
    %v5323 = vpop.f32.mrb[0].mxu0
    %v5324 = vadd.f32 %v5281, %v5323
    %v5325 = vpop.f32.mrb[0].mxu0
    %v5326 = vadd.f32 %v5283, %v5325
    %5327 = vdwg.mxu0
    %5328 = vmatprep.subr.bf16.mxu0 %v4078
    %5329 = vmatpush1.bf16.msra.mxu0 %v4077
    %5330 = vmatprep.subr.bf16.mxu0 %v4090
    %5331 = vmatpush1.bf16.msra.mxu0 %v4089
    %5332 = vmatprep.subr.bf16.mxu0 %v4102
    %5333 = vmatpush1.bf16.msra.mxu0 %v4101
    %5334 = vmatprep.subr.bf16.mxu0 %v4114
    %5335 = vmatpush1.bf16.msra.mxu0 %v4113
    %5336 = vmatprep.subr.bf16.mxu0 %v4126
    %5337 = vmatpush1.bf16.msra.mxu0 %v4125
    %5338 = vmatprep.subr.bf16.mxu0 %v4138
    %5339 = vmatpush1.bf16.msra.mxu0 %v4137
    %5340 = vmatprep.subr.bf16.mxu0 %v4150
    %5341 = vmatpush1.bf16.msra.mxu0 %v4149
    %5342 = vmatprep.subr.bf16.mxu0 %v4162
    %5343 = vmatpush1.bf16.msra.mxu0 %v4161
    %5344 = vmatprep.subr.bf16.mxu0 0
    %5345 = vmatpush1.bf16.msra.mxu0 0
    %5346 = vmatprep.subr.bf16.mxu0 0
    %5347 = vmatpush1.bf16.msra.mxu0 0
    %5348 = vmatprep.subr.bf16.mxu0 0
    %5349 = vmatpush1.bf16.msra.mxu0 0
    %5350 = vmatprep.subr.bf16.mxu0 0
    %5351 = vmatpush1.bf16.msra.mxu0 0
    %5352 = vmatprep.subr.bf16.mxu0 0
    %5353 = vmatpush1.bf16.msra.mxu0 0
    %5354 = vmatprep.subr.bf16.mxu0 0
    %5355 = vmatpush1.bf16.msra.mxu0 0
    %5356 = vmatprep.subr.bf16.mxu0 0
    %5357 = vmatpush1.bf16.msra.mxu0 0
    %5358 = vmatprep.subr.bf16.mxu0 0
    %5359 = vmatpush1.bf16.msra.mxu0 0
    %5360 = vmatprep.mubr.bf16.mxu0 0
    %5361 = vmatmul.mubr.bf16.gmra.mrb[0].mxu0 %v2294
    %v5362 = vpop.f32.mrb[0].mxu0
    %v5363 = vadd.f32 %v5320, %v5362
    %v5364 = vpop.f32.mrb[0].mxu0
    %v5365 = vadd.f32 %v5322, %v5364
    %v5366 = vpop.f32.mrb[0].mxu0
    %v5367 = vadd.f32 %v5324, %v5366
    %v5368 = vpop.f32.mrb[0].mxu0
    %v5369 = vadd.f32 %v5326, %v5368
    %5370 = vdwg.mxu0
    %5371 = vmatprep.subr.bf16.mxu0 %v2928
    %5372 = vmatpush1.bf16.msra.mxu0 %v2927
    %5373 = vmatprep.subr.bf16.mxu0 %v2940
    %5374 = vmatpush1.bf16.msra.mxu0 %v2939
    %5375 = vmatprep.subr.bf16.mxu0 %v2952
    %5376 = vmatpush1.bf16.msra.mxu0 %v2951
    %5377 = vmatprep.subr.bf16.mxu0 %v2964
    %5378 = vmatpush1.bf16.msra.mxu0 %v2963
    %5379 = vmatprep.subr.bf16.mxu0 %v2976
    %5380 = vmatpush1.bf16.msra.mxu0 %v2975
    %5381 = vmatprep.subr.bf16.mxu0 %v2988
    %5382 = vmatpush1.bf16.msra.mxu0 %v2987
    %5383 = vmatprep.subr.bf16.mxu0 %v3000
    %5384 = vmatpush1.bf16.msra.mxu0 %v2999
    %5385 = vmatprep.subr.bf16.mxu0 %v3012
    %5386 = vmatpush1.bf16.msra.mxu0 %v3011
    %5387 = vmatprep.subr.bf16.mxu0 %v3024
    %5388 = vmatpush1.bf16.msra.mxu0 %v3023
    %5389 = vmatprep.subr.bf16.mxu0 %v3036
    %5390 = vmatpush1.bf16.msra.mxu0 %v3035
    %5391 = vmatprep.subr.bf16.mxu0 %v3048
    %5392 = vmatpush1.bf16.msra.mxu0 %v3047
    %5393 = vmatprep.subr.bf16.mxu0 %v3060
    %5394 = vmatpush1.bf16.msra.mxu0 %v3059
    %5395 = vmatprep.subr.bf16.mxu0 %v3072
    %5396 = vmatpush1.bf16.msra.mxu0 %v3071
    %5397 = vmatprep.subr.bf16.mxu0 %v3084
    %5398 = vmatpush1.bf16.msra.mxu0 %v3083
    %5399 = vmatprep.subr.bf16.mxu0 %v3096
    %5400 = vmatpush1.bf16.msra.mxu0 %v3095
    %5401 = vmatprep.subr.bf16.mxu0 %v3108
    %5402 = vmatpush1.bf16.msra.mxu0 %v3107
    %5403 = vmatprep.mubr.bf16.mxu0 %v2283
    %5404 = vmatmul.mubr.bf16.gmra.mrb[0].mxu0 %v2282
    %v5405 = vpop.f32.mrb[0].mxu0
    %v5406 = vadd.f32 0.0, %v5405
    %v5407 = vpop.f32.mrb[0].mxu0
    %v5408 = vadd.f32 0.0, %v5407
    %v5409 = vpop.f32.mrb[0].mxu0
    %v5410 = vadd.f32 0.0, %v5409
    %v5411 = vpop.f32.mrb[0].mxu0
    %v5412 = vadd.f32 0.0, %v5411
    %5413 = vdwg.mxu0
    %5414 = vmatprep.subr.bf16.mxu0 %v3120
    %5415 = vmatpush1.bf16.msra.mxu0 %v3119
    %5416 = vmatprep.subr.bf16.mxu0 %v3132
    %5417 = vmatpush1.bf16.msra.mxu0 %v3131
    %5418 = vmatprep.subr.bf16.mxu0 %v3144
    %5419 = vmatpush1.bf16.msra.mxu0 %v3143
    %5420 = vmatprep.subr.bf16.mxu0 %v3156
    %5421 = vmatpush1.bf16.msra.mxu0 %v3155
    %5422 = vmatprep.subr.bf16.mxu0 %v3168
    %5423 = vmatpush1.bf16.msra.mxu0 %v3167
    %5424 = vmatprep.subr.bf16.mxu0 %v3180
    %5425 = vmatpush1.bf16.msra.mxu0 %v3179
    %5426 = vmatprep.subr.bf16.mxu0 %v3192
    %5427 = vmatpush1.bf16.msra.mxu0 %v3191
    %5428 = vmatprep.subr.bf16.mxu0 %v3204
    %5429 = vmatpush1.bf16.msra.mxu0 %v3203
    %5430 = vmatprep.subr.bf16.mxu0 %v3216
    %5431 = vmatpush1.bf16.msra.mxu0 %v3215
    %5432 = vmatprep.subr.bf16.mxu0 %v3228
    %5433 = vmatpush1.bf16.msra.mxu0 %v3227
    %5434 = vmatprep.subr.bf16.mxu0 %v3240
    %5435 = vmatpush1.bf16.msra.mxu0 %v3239
    %5436 = vmatprep.subr.bf16.mxu0 %v3252
    %5437 = vmatpush1.bf16.msra.mxu0 %v3251
    %5438 = vmatprep.subr.bf16.mxu0 %v3264
    %5439 = vmatpush1.bf16.msra.mxu0 %v3263
    %5440 = vmatprep.subr.bf16.mxu0 %v3276
    %5441 = vmatpush1.bf16.msra.mxu0 %v3275
    %5442 = vmatprep.subr.bf16.mxu0 %v3288
    %5443 = vmatpush1.bf16.msra.mxu0 %v3287
    %5444 = vmatprep.subr.bf16.mxu0 %v3300
    %5445 = vmatpush1.bf16.msra.mxu0 %v3299
    %5446 = vmatprep.mubr.bf16.mxu0 %v2285
    %5447 = vmatmul.mubr.bf16.gmra.mrb[0].mxu0 %v2284
    %v5448 = vpop.f32.mrb[0].mxu0
    %v5449 = vadd.f32 %v5406, %v5448
    %v5450 = vpop.f32.mrb[0].mxu0
    %v5451 = vadd.f32 %v5408, %v5450
    %v5452 = vpop.f32.mrb[0].mxu0
    %v5453 = vadd.f32 %v5410, %v5452
    %v5454 = vpop.f32.mrb[0].mxu0
    %v5455 = vadd.f32 %v5412, %v5454
    %5456 = vdwg.mxu0
    %5457 = vmatprep.subr.bf16.mxu0 %v3312
    %5458 = vmatpush1.bf16.msra.mxu0 %v3311
    %5459 = vmatprep.subr.bf16.mxu0 %v3324
    %5460 = vmatpush1.bf16.msra.mxu0 %v3323
    %5461 = vmatprep.subr.bf16.mxu0 %v3336
    %5462 = vmatpush1.bf16.msra.mxu0 %v3335
    %5463 = vmatprep.subr.bf16.mxu0 %v3348
    %5464 = vmatpush1.bf16.msra.mxu0 %v3347
    %5465 = vmatprep.subr.bf16.mxu0 %v3360
    %5466 = vmatpush1.bf16.msra.mxu0 %v3359
    %5467 = vmatprep.subr.bf16.mxu0 %v3372
    %5468 = vmatpush1.bf16.msra.mxu0 %v3371
    %5469 = vmatprep.subr.bf16.mxu0 %v3384
    %5470 = vmatpush1.bf16.msra.mxu0 %v3383
    %5471 = vmatprep.subr.bf16.mxu0 %v3396
    %5472 = vmatpush1.bf16.msra.mxu0 %v3395
    %5473 = vmatprep.subr.bf16.mxu0 %v3408
    %5474 = vmatpush1.bf16.msra.mxu0 %v3407
    %5475 = vmatprep.subr.bf16.mxu0 %v3420
    %5476 = vmatpush1.bf16.msra.mxu0 %v3419
    %5477 = vmatprep.subr.bf16.mxu0 %v3432
    %5478 = vmatpush1.bf16.msra.mxu0 %v3431
    %5479 = vmatprep.subr.bf16.mxu0 %v3444
    %5480 = vmatpush1.bf16.msra.mxu0 %v3443
    %5481 = vmatprep.subr.bf16.mxu0 %v3456
    %5482 = vmatpush1.bf16.msra.mxu0 %v3455
    %5483 = vmatprep.subr.bf16.mxu0 %v3468
    %5484 = vmatpush1.bf16.msra.mxu0 %v3467
    %5485 = vmatprep.subr.bf16.mxu0 %v3480
    %5486 = vmatpush1.bf16.msra.mxu0 %v3479
    %5487 = vmatprep.subr.bf16.mxu0 %v3492
    %5488 = vmatpush1.bf16.msra.mxu0 %v3491
    %5489 = vmatprep.mubr.bf16.mxu0 %v2287
    %5490 = vmatmul.mubr.bf16.gmra.mrb[0].mxu0 %v2286
    %v5491 = vpop.f32.mrb[0].mxu0
    %v5492 = vadd.f32 %v5449, %v5491
    %v5493 = vpop.f32.mrb[0].mxu0
    %v5494 = vadd.f32 %v5451, %v5493
    %v5495 = vpop.f32.mrb[0].mxu0
    %v5496 = vadd.f32 %v5453, %v5495
    %v5497 = vpop.f32.mrb[0].mxu0
    %v5498 = vadd.f32 %v5455, %v5497
    %5499 = vdwg.mxu0
    %5500 = vmatprep.subr.bf16.mxu0 %v3504
    %5501 = vmatpush1.bf16.msra.mxu0 %v3503
    %5502 = vmatprep.subr.bf16.mxu0 %v3516
    %5503 = vmatpush1.bf16.msra.mxu0 %v3515
    %5504 = vmatprep.subr.bf16.mxu0 %v3528
    %5505 = vmatpush1.bf16.msra.mxu0 %v3527
    %5506 = vmatprep.subr.bf16.mxu0 %v3540
    %5507 = vmatpush1.bf16.msra.mxu0 %v3539
    %5508 = vmatprep.subr.bf16.mxu0 %v3552
    %5509 = vmatpush1.bf16.msra.mxu0 %v3551
    %5510 = vmatprep.subr.bf16.mxu0 %v3564
    %5511 = vmatpush1.bf16.msra.mxu0 %v3563
    %5512 = vmatprep.subr.bf16.mxu0 %v3576
    %5513 = vmatpush1.bf16.msra.mxu0 %v3575
    %5514 = vmatprep.subr.bf16.mxu0 %v3588
    %5515 = vmatpush1.bf16.msra.mxu0 %v3587
    %5516 = vmatprep.subr.bf16.mxu0 %v3600
    %5517 = vmatpush1.bf16.msra.mxu0 %v3599
    %5518 = vmatprep.subr.bf16.mxu0 %v3612
    %5519 = vmatpush1.bf16.msra.mxu0 %v3611
    %5520 = vmatprep.subr.bf16.mxu0 %v3624
    %5521 = vmatpush1.bf16.msra.mxu0 %v3623
    %5522 = vmatprep.subr.bf16.mxu0 %v3636
    %5523 = vmatpush1.bf16.msra.mxu0 %v3635
    %5524 = vmatprep.subr.bf16.mxu0 %v3648
    %5525 = vmatpush1.bf16.msra.mxu0 %v3647
    %5526 = vmatprep.subr.bf16.mxu0 %v3660
    %5527 = vmatpush1.bf16.msra.mxu0 %v3659
    %5528 = vmatprep.subr.bf16.mxu0 %v3672
    %5529 = vmatpush1.bf16.msra.mxu0 %v3671
    %5530 = vmatprep.subr.bf16.mxu0 %v3684
    %5531 = vmatpush1.bf16.msra.mxu0 %v3683
    %5532 = vmatprep.mubr.bf16.mxu0 %v2289
    %5533 = vmatmul.mubr.bf16.gmra.mrb[0].mxu0 %v2288
    %v5534 = vpop.f32.mrb[0].mxu0
    %v5535 = vadd.f32 %v5492, %v5534
    %v5536 = vpop.f32.mrb[0].mxu0
    %v5537 = vadd.f32 %v5494, %v5536
    %v5538 = vpop.f32.mrb[0].mxu0
    %v5539 = vadd.f32 %v5496, %v5538
    %v5540 = vpop.f32.mrb[0].mxu0
    %v5541 = vadd.f32 %v5498, %v5540
    %5542 = vdwg.mxu0
    %5543 = vmatprep.subr.bf16.mxu0 %v3696
    %5544 = vmatpush1.bf16.msra.mxu0 %v3695
    %5545 = vmatprep.subr.bf16.mxu0 %v3708
    %5546 = vmatpush1.bf16.msra.mxu0 %v3707
    %5547 = vmatprep.subr.bf16.mxu0 %v3720
    %5548 = vmatpush1.bf16.msra.mxu0 %v3719
    %5549 = vmatprep.subr.bf16.mxu0 %v3732
    %5550 = vmatpush1.bf16.msra.mxu0 %v3731
    %5551 = vmatprep.subr.bf16.mxu0 %v3744
    %5552 = vmatpush1.bf16.msra.mxu0 %v3743
    %5553 = vmatprep.subr.bf16.mxu0 %v3756
    %5554 = vmatpush1.bf16.msra.mxu0 %v3755
    %5555 = vmatprep.subr.bf16.mxu0 %v3768
    %5556 = vmatpush1.bf16.msra.mxu0 %v3767
    %5557 = vmatprep.subr.bf16.mxu0 %v3780
    %5558 = vmatpush1.bf16.msra.mxu0 %v3779
    %5559 = vmatprep.subr.bf16.mxu0 %v3792
    %5560 = vmatpush1.bf16.msra.mxu0 %v3791
    %5561 = vmatprep.subr.bf16.mxu0 %v3804
    %5562 = vmatpush1.bf16.msra.mxu0 %v3803
    %5563 = vmatprep.subr.bf16.mxu0 %v3816
    %5564 = vmatpush1.bf16.msra.mxu0 %v3815
    %5565 = vmatprep.subr.bf16.mxu0 %v3828
    %5566 = vmatpush1.bf16.msra.mxu0 %v3827
    %5567 = vmatprep.subr.bf16.mxu0 %v3840
    %5568 = vmatpush1.bf16.msra.mxu0 %v3839
    %5569 = vmatprep.subr.bf16.mxu0 %v3852
    %5570 = vmatpush1.bf16.msra.mxu0 %v3851
    %5571 = vmatprep.subr.bf16.mxu0 %v3864
    %5572 = vmatpush1.bf16.msra.mxu0 %v3863
    %5573 = vmatprep.subr.bf16.mxu0 %v3876
    %5574 = vmatpush1.bf16.msra.mxu0 %v3875
    %5575 = vmatprep.mubr.bf16.mxu0 %v2291
    %5576 = vmatmul.mubr.bf16.gmra.mrb[0].mxu0 %v2290
    %v5577 = vpop.f32.mrb[0].mxu0
    %v5578 = vadd.f32 %v5535, %v5577
    %v5579 = vpop.f32.mrb[0].mxu0
    %v5580 = vadd.f32 %v5537, %v5579
    %v5581 = vpop.f32.mrb[0].mxu0
    %v5582 = vadd.f32 %v5539, %v5581
    %v5583 = vpop.f32.mrb[0].mxu0
    %v5584 = vadd.f32 %v5541, %v5583
    %5585 = vdwg.mxu0
    %5586 = vmatprep.subr.bf16.mxu0 %v3888
    %5587 = vmatpush1.bf16.msra.mxu0 %v3887
    %5588 = vmatprep.subr.bf16.mxu0 %v3900
    %5589 = vmatpush1.bf16.msra.mxu0 %v3899
    %5590 = vmatprep.subr.bf16.mxu0 %v3912
    %5591 = vmatpush1.bf16.msra.mxu0 %v3911
    %5592 = vmatprep.subr.bf16.mxu0 %v3924
    %5593 = vmatpush1.bf16.msra.mxu0 %v3923
    %5594 = vmatprep.subr.bf16.mxu0 %v3936
    %5595 = vmatpush1.bf16.msra.mxu0 %v3935
    %5596 = vmatprep.subr.bf16.mxu0 %v3948
    %5597 = vmatpush1.bf16.msra.mxu0 %v3947
    %5598 = vmatprep.subr.bf16.mxu0 %v3960
    %5599 = vmatpush1.bf16.msra.mxu0 %v3959
    %5600 = vmatprep.subr.bf16.mxu0 %v3972
    %5601 = vmatpush1.bf16.msra.mxu0 %v3971
    %5602 = vmatprep.subr.bf16.mxu0 %v3984
    %5603 = vmatpush1.bf16.msra.mxu0 %v3983
    %5604 = vmatprep.subr.bf16.mxu0 %v3996
    %5605 = vmatpush1.bf16.msra.mxu0 %v3995
    %5606 = vmatprep.subr.bf16.mxu0 %v4008
    %5607 = vmatpush1.bf16.msra.mxu0 %v4007
    %5608 = vmatprep.subr.bf16.mxu0 %v4020
    %5609 = vmatpush1.bf16.msra.mxu0 %v4019
    %5610 = vmatprep.subr.bf16.mxu0 %v4032
    %5611 = vmatpush1.bf16.msra.mxu0 %v4031
    %5612 = vmatprep.subr.bf16.mxu0 %v4044
    %5613 = vmatpush1.bf16.msra.mxu0 %v4043
    %5614 = vmatprep.subr.bf16.mxu0 %v4056
    %5615 = vmatpush1.bf16.msra.mxu0 %v4055
    %5616 = vmatprep.subr.bf16.mxu0 %v4068
    %5617 = vmatpush1.bf16.msra.mxu0 %v4067
    %5618 = vmatprep.mubr.bf16.mxu0 %v2293
    %5619 = vmatmul.mubr.bf16.gmra.mrb[0].mxu0 %v2292
    %v5620 = vpop.f32.mrb[0].mxu0
    %v5621 = vadd.f32 %v5578, %v5620
    %v5622 = vpop.f32.mrb[0].mxu0
    %v5623 = vadd.f32 %v5580, %v5622
    %v5624 = vpop.f32.mrb[0].mxu0
    %v5625 = vadd.f32 %v5582, %v5624
    %v5626 = vpop.f32.mrb[0].mxu0
    %v5627 = vadd.f32 %v5584, %v5626
    %5628 = vdwg.mxu0
    %5629 = vmatprep.subr.bf16.mxu0 %v4080
    %5630 = vmatpush1.bf16.msra.mxu0 %v4079
    %5631 = vmatprep.subr.bf16.mxu0 %v4092
    %5632 = vmatpush1.bf16.msra.mxu0 %v4091
    %5633 = vmatprep.subr.bf16.mxu0 %v4104
    %5634 = vmatpush1.bf16.msra.mxu0 %v4103
    %5635 = vmatprep.subr.bf16.mxu0 %v4116
    %5636 = vmatpush1.bf16.msra.mxu0 %v4115
    %5637 = vmatprep.subr.bf16.mxu0 %v4128
    %5638 = vmatpush1.bf16.msra.mxu0 %v4127
    %5639 = vmatprep.subr.bf16.mxu0 %v4140
    %5640 = vmatpush1.bf16.msra.mxu0 %v4139
    %5641 = vmatprep.subr.bf16.mxu0 %v4152
    %5642 = vmatpush1.bf16.msra.mxu0 %v4151
    %5643 = vmatprep.subr.bf16.mxu0 %v4164
    %5644 = vmatpush1.bf16.msra.mxu0 %v4163
    %5645 = vmatprep.subr.bf16.mxu0 0
    %5646 = vmatpush1.bf16.msra.mxu0 0
    %5647 = vmatprep.subr.bf16.mxu0 0
    %5648 = vmatpush1.bf16.msra.mxu0 0
    %5649 = vmatprep.subr.bf16.mxu0 0
    %5650 = vmatpush1.bf16.msra.mxu0 0
    %5651 = vmatprep.subr.bf16.mxu0 0
    %5652 = vmatpush1.bf16.msra.mxu0 0
    %5653 = vmatprep.subr.bf16.mxu0 0
    %5654 = vmatpush1.bf16.msra.mxu0 0
    %5655 = vmatprep.subr.bf16.mxu0 0
    %5656 = vmatpush1.bf16.msra.mxu0 0
    %5657 = vmatprep.subr.bf16.mxu0 0
    %5658 = vmatpush1.bf16.msra.mxu0 0
    %5659 = vmatprep.subr.bf16.mxu0 0
    %5660 = vmatpush1.bf16.msra.mxu0 0
    %5661 = vmatprep.mubr.bf16.mxu0 0
    %5662 = vmatmul.mubr.bf16.gmra.mrb[0].mxu0 %v2294
    %v5663 = vpop.f32.mrb[0].mxu0
    %v5664 = vadd.f32 %v5621, %v5663
    %v5665 = vpop.f32.mrb[0].mxu0
    %v5666 = vadd.f32 %v5623, %v5665
    %v5667 = vpop.f32.mrb[0].mxu0
    %v5668 = vadd.f32 %v5625, %v5667
    %v5669 = vpop.f32.mrb[0].mxu0
    %v5670 = vadd.f32 %v5627, %v5669
    %5671 = vdwg.mxu0
    %5672 = vmatprep.subr.bf16.mxu0 %v2930
    %5673 = vmatpush1.bf16.msra.mxu0 %v2929
    %5674 = vmatprep.subr.bf16.mxu0 %v2942
    %5675 = vmatpush1.bf16.msra.mxu0 %v2941
    %5676 = vmatprep.subr.bf16.mxu0 %v2954
    %5677 = vmatpush1.bf16.msra.mxu0 %v2953
    %5678 = vmatprep.subr.bf16.mxu0 %v2966
    %5679 = vmatpush1.bf16.msra.mxu0 %v2965
    %5680 = vmatprep.subr.bf16.mxu0 %v2978
    %5681 = vmatpush1.bf16.msra.mxu0 %v2977
    %5682 = vmatprep.subr.bf16.mxu0 %v2990
    %5683 = vmatpush1.bf16.msra.mxu0 %v2989
    %5684 = vmatprep.subr.bf16.mxu0 %v3002
    %5685 = vmatpush1.bf16.msra.mxu0 %v3001
    %5686 = vmatprep.subr.bf16.mxu0 %v3014
    %5687 = vmatpush1.bf16.msra.mxu0 %v3013
    %5688 = vmatprep.subr.bf16.mxu0 %v3026
    %5689 = vmatpush1.bf16.msra.mxu0 %v3025
    %5690 = vmatprep.subr.bf16.mxu0 %v3038
    %5691 = vmatpush1.bf16.msra.mxu0 %v3037
    %5692 = vmatprep.subr.bf16.mxu0 %v3050
    %5693 = vmatpush1.bf16.msra.mxu0 %v3049
    %5694 = vmatprep.subr.bf16.mxu0 %v3062
    %5695 = vmatpush1.bf16.msra.mxu0 %v3061
    %5696 = vmatprep.subr.bf16.mxu0 %v3074
    %5697 = vmatpush1.bf16.msra.mxu0 %v3073
    %5698 = vmatprep.subr.bf16.mxu0 %v3086
    %5699 = vmatpush1.bf16.msra.mxu0 %v3085
    %5700 = vmatprep.subr.bf16.mxu0 %v3098
    %5701 = vmatpush1.bf16.msra.mxu0 %v3097
    %5702 = vmatprep.subr.bf16.mxu0 %v3110
    %5703 = vmatpush1.bf16.msra.mxu0 %v3109
    %5704 = vmatprep.mubr.bf16.mxu0 %v2283
    %5705 = vmatmul.mubr.bf16.gmra.mrb[0].mxu0 %v2282
    %v5706 = vpop.f32.mrb[0].mxu0
    %v5707 = vadd.f32 0.0, %v5706
    %v5708 = vpop.f32.mrb[0].mxu0
    %v5709 = vadd.f32 0.0, %v5708
    %v5710 = vpop.f32.mrb[0].mxu0
    %v5711 = vadd.f32 0.0, %v5710
    %v5712 = vpop.f32.mrb[0].mxu0
    %v5713 = vadd.f32 0.0, %v5712
    %5714 = vdwg.mxu0
    %5715 = vmatprep.subr.bf16.mxu0 %v3122
    %5716 = vmatpush1.bf16.msra.mxu0 %v3121
    %5717 = vmatprep.subr.bf16.mxu0 %v3134
    %5718 = vmatpush1.bf16.msra.mxu0 %v3133
    %5719 = vmatprep.subr.bf16.mxu0 %v3146
    %5720 = vmatpush1.bf16.msra.mxu0 %v3145
    %5721 = vmatprep.subr.bf16.mxu0 %v3158
    %5722 = vmatpush1.bf16.msra.mxu0 %v3157
    %5723 = vmatprep.subr.bf16.mxu0 %v3170
    %5724 = vmatpush1.bf16.msra.mxu0 %v3169
    %5725 = vmatprep.subr.bf16.mxu0 %v3182
    %5726 = vmatpush1.bf16.msra.mxu0 %v3181
    %5727 = vmatprep.subr.bf16.mxu0 %v3194
    %5728 = vmatpush1.bf16.msra.mxu0 %v3193
    %5729 = vmatprep.subr.bf16.mxu0 %v3206
    %5730 = vmatpush1.bf16.msra.mxu0 %v3205
    %5731 = vmatprep.subr.bf16.mxu0 %v3218
    %5732 = vmatpush1.bf16.msra.mxu0 %v3217
    %5733 = vmatprep.subr.bf16.mxu0 %v3230
    %5734 = vmatpush1.bf16.msra.mxu0 %v3229
    %5735 = vmatprep.subr.bf16.mxu0 %v3242
    %5736 = vmatpush1.bf16.msra.mxu0 %v3241
    %5737 = vmatprep.subr.bf16.mxu0 %v3254
    %5738 = vmatpush1.bf16.msra.mxu0 %v3253
    %5739 = vmatprep.subr.bf16.mxu0 %v3266
    %5740 = vmatpush1.bf16.msra.mxu0 %v3265
    %5741 = vmatprep.subr.bf16.mxu0 %v3278
    %5742 = vmatpush1.bf16.msra.mxu0 %v3277
    %5743 = vmatprep.subr.bf16.mxu0 %v3290
    %5744 = vmatpush1.bf16.msra.mxu0 %v3289
    %5745 = vmatprep.subr.bf16.mxu0 %v3302
    %5746 = vmatpush1.bf16.msra.mxu0 %v3301
    %5747 = vmatprep.mubr.bf16.mxu0 %v2285
    %5748 = vmatmul.mubr.bf16.gmra.mrb[0].mxu0 %v2284
    %v5749 = vpop.f32.mrb[0].mxu0
    %v5750 = vadd.f32 %v5707, %v5749
    %v5751 = vpop.f32.mrb[0].mxu0
    %v5752 = vadd.f32 %v5709, %v5751
    %v5753 = vpop.f32.mrb[0].mxu0
    %v5754 = vadd.f32 %v5711, %v5753
    %v5755 = vpop.f32.mrb[0].mxu0
    %v5756 = vadd.f32 %v5713, %v5755
    %5757 = vdwg.mxu0
    %5758 = vmatprep.subr.bf16.mxu0 %v3314
    %5759 = vmatpush1.bf16.msra.mxu0 %v3313
    %5760 = vmatprep.subr.bf16.mxu0 %v3326
    %5761 = vmatpush1.bf16.msra.mxu0 %v3325
    %5762 = vmatprep.subr.bf16.mxu0 %v3338
    %5763 = vmatpush1.bf16.msra.mxu0 %v3337
    %5764 = vmatprep.subr.bf16.mxu0 %v3350
    %5765 = vmatpush1.bf16.msra.mxu0 %v3349
    %5766 = vmatprep.subr.bf16.mxu0 %v3362
    %5767 = vmatpush1.bf16.msra.mxu0 %v3361
    %5768 = vmatprep.subr.bf16.mxu0 %v3374
    %5769 = vmatpush1.bf16.msra.mxu0 %v3373
    %5770 = vmatprep.subr.bf16.mxu0 %v3386
    %5771 = vmatpush1.bf16.msra.mxu0 %v3385
    %5772 = vmatprep.subr.bf16.mxu0 %v3398
    %5773 = vmatpush1.bf16.msra.mxu0 %v3397
    %5774 = vmatprep.subr.bf16.mxu0 %v3410
    %5775 = vmatpush1.bf16.msra.mxu0 %v3409
    %5776 = vmatprep.subr.bf16.mxu0 %v3422
    %5777 = vmatpush1.bf16.msra.mxu0 %v3421
    %5778 = vmatprep.subr.bf16.mxu0 %v3434
    %5779 = vmatpush1.bf16.msra.mxu0 %v3433
    %5780 = vmatprep.subr.bf16.mxu0 %v3446
    %5781 = vmatpush1.bf16.msra.mxu0 %v3445
    %5782 = vmatprep.subr.bf16.mxu0 %v3458
    %5783 = vmatpush1.bf16.msra.mxu0 %v3457
    %5784 = vmatprep.subr.bf16.mxu0 %v3470
    %5785 = vmatpush1.bf16.msra.mxu0 %v3469
    %5786 = vmatprep.subr.bf16.mxu0 %v3482
    %5787 = vmatpush1.bf16.msra.mxu0 %v3481
    %5788 = vmatprep.subr.bf16.mxu0 %v3494
    %5789 = vmatpush1.bf16.msra.mxu0 %v3493
    %5790 = vmatprep.mubr.bf16.mxu0 %v2287
    %5791 = vmatmul.mubr.bf16.gmra.mrb[0].mxu0 %v2286
    %v5792 = vpop.f32.mrb[0].mxu0
    %v5793 = vadd.f32 %v5750, %v5792
    %v5794 = vpop.f32.mrb[0].mxu0
    %v5795 = vadd.f32 %v5752, %v5794
    %v5796 = vpop.f32.mrb[0].mxu0
    %v5797 = vadd.f32 %v5754, %v5796
    %v5798 = vpop.f32.mrb[0].mxu0
    %v5799 = vadd.f32 %v5756, %v5798
    %5800 = vdwg.mxu0
    %5801 = vmatprep.subr.bf16.mxu0 %v3506
    %5802 = vmatpush1.bf16.msra.mxu0 %v3505
    %5803 = vmatprep.subr.bf16.mxu0 %v3518
    %5804 = vmatpush1.bf16.msra.mxu0 %v3517
    %5805 = vmatprep.subr.bf16.mxu0 %v3530
    %5806 = vmatpush1.bf16.msra.mxu0 %v3529
    %5807 = vmatprep.subr.bf16.mxu0 %v3542
    %5808 = vmatpush1.bf16.msra.mxu0 %v3541
    %5809 = vmatprep.subr.bf16.mxu0 %v3554
    %5810 = vmatpush1.bf16.msra.mxu0 %v3553
    %5811 = vmatprep.subr.bf16.mxu0 %v3566
    %5812 = vmatpush1.bf16.msra.mxu0 %v3565
    %5813 = vmatprep.subr.bf16.mxu0 %v3578
    %5814 = vmatpush1.bf16.msra.mxu0 %v3577
    %5815 = vmatprep.subr.bf16.mxu0 %v3590
    %5816 = vmatpush1.bf16.msra.mxu0 %v3589
    %5817 = vmatprep.subr.bf16.mxu0 %v3602
    %5818 = vmatpush1.bf16.msra.mxu0 %v3601
    %5819 = vmatprep.subr.bf16.mxu0 %v3614
    %5820 = vmatpush1.bf16.msra.mxu0 %v3613
    %5821 = vmatprep.subr.bf16.mxu0 %v3626
    %5822 = vmatpush1.bf16.msra.mxu0 %v3625
    %5823 = vmatprep.subr.bf16.mxu0 %v3638
    %5824 = vmatpush1.bf16.msra.mxu0 %v3637
    %5825 = vmatprep.subr.bf16.mxu0 %v3650
    %5826 = vmatpush1.bf16.msra.mxu0 %v3649
    %5827 = vmatprep.subr.bf16.mxu0 %v3662
    %5828 = vmatpush1.bf16.msra.mxu0 %v3661
    %5829 = vmatprep.subr.bf16.mxu0 %v3674
    %5830 = vmatpush1.bf16.msra.mxu0 %v3673
    %5831 = vmatprep.subr.bf16.mxu0 %v3686
    %5832 = vmatpush1.bf16.msra.mxu0 %v3685
    %5833 = vmatprep.mubr.bf16.mxu0 %v2289
    %5834 = vmatmul.mubr.bf16.gmra.mrb[0].mxu0 %v2288
    %v5835 = vpop.f32.mrb[0].mxu0
    %v5836 = vadd.f32 %v5793, %v5835
    %v5837 = vpop.f32.mrb[0].mxu0
    %v5838 = vadd.f32 %v5795, %v5837
    %v5839 = vpop.f32.mrb[0].mxu0
    %v5840 = vadd.f32 %v5797, %v5839
    %v5841 = vpop.f32.mrb[0].mxu0
    %v5842 = vadd.f32 %v5799, %v5841
    %5843 = vdwg.mxu0
    %5844 = vmatprep.subr.bf16.mxu0 %v3698
    %5845 = vmatpush1.bf16.msra.mxu0 %v3697
    %5846 = vmatprep.subr.bf16.mxu0 %v3710
    %5847 = vmatpush1.bf16.msra.mxu0 %v3709
    %5848 = vmatprep.subr.bf16.mxu0 %v3722
    %5849 = vmatpush1.bf16.msra.mxu0 %v3721
    %5850 = vmatprep.subr.bf16.mxu0 %v3734
    %5851 = vmatpush1.bf16.msra.mxu0 %v3733
    %5852 = vmatprep.subr.bf16.mxu0 %v3746
    %5853 = vmatpush1.bf16.msra.mxu0 %v3745
    %5854 = vmatprep.subr.bf16.mxu0 %v3758
    %5855 = vmatpush1.bf16.msra.mxu0 %v3757
    %5856 = vmatprep.subr.bf16.mxu0 %v3770
    %5857 = vmatpush1.bf16.msra.mxu0 %v3769
    %5858 = vmatprep.subr.bf16.mxu0 %v3782
    %5859 = vmatpush1.bf16.msra.mxu0 %v3781
    %5860 = vmatprep.subr.bf16.mxu0 %v3794
    %5861 = vmatpush1.bf16.msra.mxu0 %v3793
    %5862 = vmatprep.subr.bf16.mxu0 %v3806
    %5863 = vmatpush1.bf16.msra.mxu0 %v3805
    %5864 = vmatprep.subr.bf16.mxu0 %v3818
    %5865 = vmatpush1.bf16.msra.mxu0 %v3817
    %5866 = vmatprep.subr.bf16.mxu0 %v3830
    %5867 = vmatpush1.bf16.msra.mxu0 %v3829
    %5868 = vmatprep.subr.bf16.mxu0 %v3842
    %5869 = vmatpush1.bf16.msra.mxu0 %v3841
    %5870 = vmatprep.subr.bf16.mxu0 %v3854
    %5871 = vmatpush1.bf16.msra.mxu0 %v3853
    %5872 = vmatprep.subr.bf16.mxu0 %v3866
    %5873 = vmatpush1.bf16.msra.mxu0 %v3865
    %5874 = vmatprep.subr.bf16.mxu0 %v3878
    %5875 = vmatpush1.bf16.msra.mxu0 %v3877
    %5876 = vmatprep.mubr.bf16.mxu0 %v2291
    %5877 = vmatmul.mubr.bf16.gmra.mrb[0].mxu0 %v2290
    %v5878 = vpop.f32.mrb[0].mxu0
    %v5879 = vadd.f32 %v5836, %v5878
    %v5880 = vpop.f32.mrb[0].mxu0
    %v5881 = vadd.f32 %v5838, %v5880
    %v5882 = vpop.f32.mrb[0].mxu0
    %v5883 = vadd.f32 %v5840, %v5882
    %v5884 = vpop.f32.mrb[0].mxu0
    %v5885 = vadd.f32 %v5842, %v5884
    %5886 = vdwg.mxu0
    %5887 = vmatprep.subr.bf16.mxu0 %v3890
    %5888 = vmatpush1.bf16.msra.mxu0 %v3889
    %5889 = vmatprep.subr.bf16.mxu0 %v3902
    %5890 = vmatpush1.bf16.msra.mxu0 %v3901
    %5891 = vmatprep.subr.bf16.mxu0 %v3914
    %5892 = vmatpush1.bf16.msra.mxu0 %v3913
    %5893 = vmatprep.subr.bf16.mxu0 %v3926
    %5894 = vmatpush1.bf16.msra.mxu0 %v3925
    %5895 = vmatprep.subr.bf16.mxu0 %v3938
    %5896 = vmatpush1.bf16.msra.mxu0 %v3937
    %5897 = vmatprep.subr.bf16.mxu0 %v3950
    %5898 = vmatpush1.bf16.msra.mxu0 %v3949
    %5899 = vmatprep.subr.bf16.mxu0 %v3962
    %5900 = vmatpush1.bf16.msra.mxu0 %v3961
    %5901 = vmatprep.subr.bf16.mxu0 %v3974
    %5902 = vmatpush1.bf16.msra.mxu0 %v3973
    %5903 = vmatprep.subr.bf16.mxu0 %v3986
    %5904 = vmatpush1.bf16.msra.mxu0 %v3985
    %5905 = vmatprep.subr.bf16.mxu0 %v3998
    %5906 = vmatpush1.bf16.msra.mxu0 %v3997
    %5907 = vmatprep.subr.bf16.mxu0 %v4010
    %5908 = vmatpush1.bf16.msra.mxu0 %v4009
    %5909 = vmatprep.subr.bf16.mxu0 %v4022
    %5910 = vmatpush1.bf16.msra.mxu0 %v4021
    %5911 = vmatprep.subr.bf16.mxu0 %v4034
    %5912 = vmatpush1.bf16.msra.mxu0 %v4033
    %5913 = vmatprep.subr.bf16.mxu0 %v4046
    %5914 = vmatpush1.bf16.msra.mxu0 %v4045
    %5915 = vmatprep.subr.bf16.mxu0 %v4058
    %5916 = vmatpush1.bf16.msra.mxu0 %v4057
    %5917 = vmatprep.subr.bf16.mxu0 %v4070
    %5918 = vmatpush1.bf16.msra.mxu0 %v4069
    %5919 = vmatprep.mubr.bf16.mxu0 %v2293
    %5920 = vmatmul.mubr.bf16.gmra.mrb[0].mxu0 %v2292
    %v5921 = vpop.f32.mrb[0].mxu0
    %v5922 = vadd.f32 %v5879, %v5921
    %v5923 = vpop.f32.mrb[0].mxu0
    %v5924 = vadd.f32 %v5881, %v5923
    %v5925 = vpop.f32.mrb[0].mxu0
    %v5926 = vadd.f32 %v5883, %v5925
    %v5927 = vpop.f32.mrb[0].mxu0
    %v5928 = vadd.f32 %v5885, %v5927
    %5929 = vdwg.mxu0
    %5930 = vmatprep.subr.bf16.mxu0 %v4082
    %5931 = vmatpush1.bf16.msra.mxu0 %v4081
    %5932 = vmatprep.subr.bf16.mxu0 %v4094
    %5933 = vmatpush1.bf16.msra.mxu0 %v4093
    %5934 = vmatprep.subr.bf16.mxu0 %v4106
    %5935 = vmatpush1.bf16.msra.mxu0 %v4105
    %5936 = vmatprep.subr.bf16.mxu0 %v4118
    %5937 = vmatpush1.bf16.msra.mxu0 %v4117
    %5938 = vmatprep.subr.bf16.mxu0 %v4130
    %5939 = vmatpush1.bf16.msra.mxu0 %v4129
    %5940 = vmatprep.subr.bf16.mxu0 %v4142
    %5941 = vmatpush1.bf16.msra.mxu0 %v4141
    %5942 = vmatprep.subr.bf16.mxu0 %v4154
    %5943 = vmatpush1.bf16.msra.mxu0 %v4153
    %5944 = vmatprep.subr.bf16.mxu0 %v4166
    %5945 = vmatpush1.bf16.msra.mxu0 %v4165
    %5946 = vmatprep.subr.bf16.mxu0 0
    %5947 = vmatpush1.bf16.msra.mxu0 0
    %5948 = vmatprep.subr.bf16.mxu0 0
    %5949 = vmatpush1.bf16.msra.mxu0 0
    %5950 = vmatprep.subr.bf16.mxu0 0
    %5951 = vmatpush1.bf16.msra.mxu0 0
    %5952 = vmatprep.subr.bf16.mxu0 0
    %5953 = vmatpush1.bf16.msra.mxu0 0
    %5954 = vmatprep.subr.bf16.mxu0 0
    %5955 = vmatpush1.bf16.msra.mxu0 0
    %5956 = vmatprep.subr.bf16.mxu0 0
    %5957 = vmatpush1.bf16.msra.mxu0 0
    %5958 = vmatprep.subr.bf16.mxu0 0
    %5959 = vmatpush1.bf16.msra.mxu0 0
    %5960 = vmatprep.subr.bf16.mxu0 0
    %5961 = vmatpush1.bf16.msra.mxu0 0
    %5962 = vmatprep.mubr.bf16.mxu0 0
    %5963 = vmatmul.mubr.bf16.gmra.mrb[0].mxu0 %v2294
    %v5964 = vpop.f32.mrb[0].mxu0
    %v5965 = vadd.f32 %v5922, %v5964
    %v5966 = vpop.f32.mrb[0].mxu0
    %v5967 = vadd.f32 %v5924, %v5966
    %v5968 = vpop.f32.mrb[0].mxu0
    %v5969 = vadd.f32 %v5926, %v5968
    %v5970 = vpop.f32.mrb[0].mxu0
    %v5971 = vadd.f32 %v5928, %v5970
    %5972 = vdwg.mxu0
    %s5973 = scalar_lea.vmem [#allocation10], 6
    %v5974 = vld [vmem:[%s5973] ss:$8 sm:$0xf]
    %v5975 = vld [vmem:[%s5973] ss:$8 sm:$0xf0]
    %v5976 = vor.u32 %v5974, %v5975
    %s5977 = scalar_lea.vmem [#allocation10], 70
    %v5978 = vld [vmem:[%s5977] ss:$8 sm:$0xf]
    %v5981 = vlaneseq
    %v5982 = vshrl.u32 %v5981, 7
    %v5983 = vsub.s32 0, %v5982
    %v5984 = vrot.slane %v5976, %v5983
    %v5985 = vlaneseq
    %v5986 = vshrl.u32 %v5985, 7
    %v5987 = vsub.s32 1, %v5986
    %v5988 = vrot.slane %v5976, %v5987
    %v5989 = vlaneseq
    %v5990 = vshrl.u32 %v5989, 7
    %v5991 = vsub.s32 2, %v5990
    %v5992 = vrot.slane %v5976, %v5991
    %v5993 = vlaneseq
    %v5994 = vshrl.u32 %v5993, 7
    %v5995 = vsub.s32 3, %v5994
    %v5996 = vrot.slane %v5976, %v5995
    %v5997 = vlaneseq
    %v5998 = vshrl.u32 %v5997, 7
    %v5999 = vsub.s32 4, %v5998
    %v6000 = vrot.slane %v5976, %v5999
    %v6001 = vlaneseq
    %v6002 = vshrl.u32 %v6001, 7
    %v6003 = vsub.s32 5, %v6002
    %v6004 = vrot.slane %v5976, %v6003
    %v6005 = vlaneseq
    %v6006 = vshrl.u32 %v6005, 7
    %v6007 = vsub.s32 6, %v6006
    %v6008 = vrot.slane %v5976, %v6007
    %v6009 = vlaneseq
    %v6010 = vshrl.u32 %v6009, 7
    %v6011 = vsub.s32 7, %v6010
    %v6012 = vrot.slane %v5976, %v6011
    %v6013 = vlaneseq
    %v6014 = vshrl.u32 %v6013, 7
    %v6015 = vsub.s32 0, %v6014
    %v6016 = vrot.slane %v5978, %v6015
    %v6017 = vlaneseq
    %v6018 = vshrl.u32 %v6017, 7
    %v6019 = vsub.s32 1, %v6018
    %v6020 = vrot.slane %v5978, %v6019
    %v6021 = vlaneseq
    %v6022 = vshrl.u32 %v6021, 7
    %v6023 = vsub.s32 2, %v6022
    %v6024 = vrot.slane %v5978, %v6023
    %v6025 = vlaneseq
    %v6026 = vshrl.u32 %v6025, 7
    %v6027 = vsub.s32 3, %v6026
    %v6028 = vrot.slane %v5978, %v6027
    %v6041 = vmul.f32 %v4460, %v5984
    %v6042 = vmul.f32 %v4462, %v5988
    %v6043 = vmul.f32 %v4761, %v5992
    %v6044 = vmul.f32 %v4763, %v5996
    %v6045 = vmul.f32 %v5062, %v6000
    %v6046 = vmul.f32 %v5064, %v6004
    %v6047 = vmul.f32 %v5363, %v6008
    %v6048 = vmul.f32 %v5365, %v6012
    %v6049 = vmul.f32 %v5664, %v6016
    %v6050 = vmul.f32 %v5666, %v6020
    %v6051 = vmul.f32 %v5965, %v6024
    %v6052 = vmul.f32 %v5967, %v6028
    %v6053 = vmul.f32 %v4464, %v5984
    %v6054 = vmul.f32 %v4466, %v5988
    %v6055 = vmul.f32 %v4765, %v5992
    %v6056 = vmul.f32 %v4767, %v5996
    %v6057 = vmul.f32 %v5066, %v6000
    %v6058 = vmul.f32 %v5068, %v6004
    %v6059 = vmul.f32 %v5367, %v6008
    %v6060 = vmul.f32 %v5369, %v6012
    %v6061 = vmul.f32 %v5668, %v6016
    %v6062 = vmul.f32 %v5670, %v6020
    %v6063 = vmul.f32 %v5969, %v6024
    %v6064 = vmul.f32 %v5971, %v6028
    %s6065 = scalar_lea.vmem [#allocation10], 1
    %v6066 = vld [vmem:[%s6065] ss:$8 sm:$0xf]
    %v6067 = vld [vmem:[%s6065] ss:$8 sm:$0xf0]
    %v6068 = vor.u32 %v6066, %v6067
    %s6069 = scalar_lea.vmem [#allocation10], 65
    %v6070 = vld [vmem:[%s6069] ss:$8 sm:$0xf]
    %v6073 = vlaneseq
    %v6074 = vshrl.u32 %v6073, 7
    %v6075 = vsub.s32 0, %v6074
    %v6076 = vrot.slane %v6068, %v6075
    %v6077 = vlaneseq
    %v6078 = vshrl.u32 %v6077, 7
    %v6079 = vsub.s32 1, %v6078
    %v6080 = vrot.slane %v6068, %v6079
    %v6081 = vlaneseq
    %v6082 = vshrl.u32 %v6081, 7
    %v6083 = vsub.s32 2, %v6082
    %v6084 = vrot.slane %v6068, %v6083
    %v6085 = vlaneseq
    %v6086 = vshrl.u32 %v6085, 7
    %v6087 = vsub.s32 3, %v6086
    %v6088 = vrot.slane %v6068, %v6087
    %v6089 = vlaneseq
    %v6090 = vshrl.u32 %v6089, 7
    %v6091 = vsub.s32 4, %v6090
    %v6092 = vrot.slane %v6068, %v6091
    %v6093 = vlaneseq
    %v6094 = vshrl.u32 %v6093, 7
    %v6095 = vsub.s32 5, %v6094
    %v6096 = vrot.slane %v6068, %v6095
    %v6097 = vlaneseq
    %v6098 = vshrl.u32 %v6097, 7
    %v6099 = vsub.s32 6, %v6098
    %v6100 = vrot.slane %v6068, %v6099
    %v6101 = vlaneseq
    %v6102 = vshrl.u32 %v6101, 7
    %v6103 = vsub.s32 7, %v6102
    %v6104 = vrot.slane %v6068, %v6103
    %v6105 = vlaneseq
    %v6106 = vshrl.u32 %v6105, 7
    %v6107 = vsub.s32 0, %v6106
    %v6108 = vrot.slane %v6070, %v6107
    %v6109 = vlaneseq
    %v6110 = vshrl.u32 %v6109, 7
    %v6111 = vsub.s32 1, %v6110
    %v6112 = vrot.slane %v6070, %v6111
    %v6113 = vlaneseq
    %v6114 = vshrl.u32 %v6113, 7
    %v6115 = vsub.s32 2, %v6114
    %v6116 = vrot.slane %v6070, %v6115
    %v6117 = vlaneseq
    %v6118 = vshrl.u32 %v6117, 7
    %v6119 = vsub.s32 3, %v6118
    %v6120 = vrot.slane %v6070, %v6119
    %v6133 = vadd.f32 %v6041, %v6076
    %v6134 = vadd.f32 %v6042, %v6080
    %v6135 = vadd.f32 %v6043, %v6084
    %v6136 = vadd.f32 %v6044, %v6088
    %v6137 = vadd.f32 %v6045, %v6092
    %v6138 = vadd.f32 %v6046, %v6096
    %v6139 = vadd.f32 %v6047, %v6100
    %v6140 = vadd.f32 %v6048, %v6104
    %v6141 = vadd.f32 %v6049, %v6108
    %v6142 = vadd.f32 %v6050, %v6112
    %v6143 = vadd.f32 %v6051, %v6116
    %v6144 = vadd.f32 %v6052, %v6120
    %v6145 = vadd.f32 %v6053, %v6076
    %v6146 = vadd.f32 %v6054, %v6080
    %v6147 = vadd.f32 %v6055, %v6084
    %v6148 = vadd.f32 %v6056, %v6088
    %v6149 = vadd.f32 %v6057, %v6092
    %v6150 = vadd.f32 %v6058, %v6096
    %v6151 = vadd.f32 %v6059, %v6100
    %v6152 = vadd.f32 %v6060, %v6104
    %v6153 = vadd.f32 %v6061, %v6108
    %v6154 = vadd.f32 %v6062, %v6112
    %v6155 = vadd.f32 %v6063, %v6116
    %v6156 = vadd.f32 %v6064, %v6120
    %v6157 = vand.u32 2147483647, %v6133
    %v6158 = vand.u32 2147483647, %v6134
    %v6159 = vand.u32 2147483647, %v6135
    %v6160 = vand.u32 2147483647, %v6136
    %v6161 = vand.u32 2147483647, %v6137
    %v6162 = vand.u32 2147483647, %v6138
    %v6163 = vand.u32 2147483647, %v6139
    %v6164 = vand.u32 2147483647, %v6140
    %v6165 = vand.u32 2147483647, %v6141
    %v6166 = vand.u32 2147483647, %v6142
    %v6167 = vand.u32 2147483647, %v6143
    %v6168 = vand.u32 2147483647, %v6144
    %v6169 = vand.u32 2147483647, %v6145
    %v6170 = vand.u32 2147483647, %v6146
    %v6171 = vand.u32 2147483647, %v6147
    %v6172 = vand.u32 2147483647, %v6148
    %v6173 = vand.u32 2147483647, %v6149
    %v6174 = vand.u32 2147483647, %v6150
    %v6175 = vand.u32 2147483647, %v6151
    %v6176 = vand.u32 2147483647, %v6152
    %v6177 = vand.u32 2147483647, %v6153
    %v6178 = vand.u32 2147483647, %v6154
    %v6179 = vand.u32 2147483647, %v6155
    %v6180 = vand.u32 2147483647, %v6156
    %vm6181 = vcmp.lt.f32.partialorder %v6157, 0.01
    %vm6182 = vcmp.lt.f32.partialorder %v6158, 0.01
    %vm6183 = vcmp.lt.f32.partialorder %v6159, 0.01
    %vm6184 = vcmp.lt.f32.partialorder %v6160, 0.01
    %vm6185 = vcmp.lt.f32.partialorder %v6161, 0.01
    %vm6186 = vcmp.lt.f32.partialorder %v6162, 0.01
    %vm6187 = vcmp.lt.f32.partialorder %v6163, 0.01
    %vm6188 = vcmp.lt.f32.partialorder %v6164, 0.01
    %vm6189 = vcmp.lt.f32.partialorder %v6165, 0.01
    %vm6190 = vcmp.lt.f32.partialorder %v6166, 0.01
    %vm6191 = vcmp.lt.f32.partialorder %v6167, 0.01
    %vm6192 = vcmp.lt.f32.partialorder %v6168, 0.01
    %vm6193 = vcmp.lt.f32.partialorder %v6169, 0.01
    %vm6194 = vcmp.lt.f32.partialorder %v6170, 0.01
    %vm6195 = vcmp.lt.f32.partialorder %v6171, 0.01
    %vm6196 = vcmp.lt.f32.partialorder %v6172, 0.01
    %vm6197 = vcmp.lt.f32.partialorder %v6173, 0.01
    %vm6198 = vcmp.lt.f32.partialorder %v6174, 0.01
    %vm6199 = vcmp.lt.f32.partialorder %v6175, 0.01
    %vm6200 = vcmp.lt.f32.partialorder %v6176, 0.01
    %vm6201 = vcmp.lt.f32.partialorder %v6177, 0.01
    %vm6202 = vcmp.lt.f32.partialorder %v6178, 0.01
    %vm6203 = vcmp.lt.f32.partialorder %v6179, 0.01
    %vm6204 = vcmp.lt.f32.partialorder %v6180, 0.01
    %v6205 = vmul.f32 %v6133, 0.16666667
    %v6206 = vmul.f32 %v6134, 0.16666667
    %v6207 = vmul.f32 %v6135, 0.16666667
    %v6208 = vmul.f32 %v6136, 0.16666667
    %v6209 = vmul.f32 %v6137, 0.16666667
    %v6210 = vmul.f32 %v6138, 0.16666667
    %v6211 = vmul.f32 %v6139, 0.16666667
    %v6212 = vmul.f32 %v6140, 0.16666667
    %v6213 = vmul.f32 %v6141, 0.16666667
    %v6214 = vmul.f32 %v6142, 0.16666667
    %v6215 = vmul.f32 %v6143, 0.16666667
    %v6216 = vmul.f32 %v6144, 0.16666667
    %v6217 = vmul.f32 %v6145, 0.16666667
    %v6218 = vmul.f32 %v6146, 0.16666667
    %v6219 = vmul.f32 %v6147, 0.16666667
    %v6220 = vmul.f32 %v6148, 0.16666667
    %v6221 = vmul.f32 %v6149, 0.16666667
    %v6222 = vmul.f32 %v6150, 0.16666667
    %v6223 = vmul.f32 %v6151, 0.16666667
    %v6224 = vmul.f32 %v6152, 0.16666667
    %v6225 = vmul.f32 %v6153, 0.16666667
    %v6226 = vmul.f32 %v6154, 0.16666667
    %v6227 = vmul.f32 %v6155, 0.16666667
    %v6228 = vmul.f32 %v6156, 0.16666667
    %v6229 = vadd.f32 %v6205, 0.5
    %v6230 = vadd.f32 %v6206, 0.5
    %v6231 = vadd.f32 %v6207, 0.5
    %v6232 = vadd.f32 %v6208, 0.5
    %v6233 = vadd.f32 %v6209, 0.5
    %v6234 = vadd.f32 %v6210, 0.5
    %v6235 = vadd.f32 %v6211, 0.5
    %v6236 = vadd.f32 %v6212, 0.5
    %v6237 = vadd.f32 %v6213, 0.5
    %v6238 = vadd.f32 %v6214, 0.5
    %v6239 = vadd.f32 %v6215, 0.5
    %v6240 = vadd.f32 %v6216, 0.5
    %v6241 = vadd.f32 %v6217, 0.5
    %v6242 = vadd.f32 %v6218, 0.5
    %v6243 = vadd.f32 %v6219, 0.5
    %v6244 = vadd.f32 %v6220, 0.5
    %v6245 = vadd.f32 %v6221, 0.5
    %v6246 = vadd.f32 %v6222, 0.5
    %v6247 = vadd.f32 %v6223, 0.5
    %v6248 = vadd.f32 %v6224, 0.5
    %v6249 = vadd.f32 %v6225, 0.5
    %v6250 = vadd.f32 %v6226, 0.5
    %v6251 = vadd.f32 %v6227, 0.5
    %v6252 = vadd.f32 %v6228, 0.5
    %v6253 = vmul.f32 %v6133, %v6229
    %v6254 = vmul.f32 %v6134, %v6230
    %v6255 = vmul.f32 %v6135, %v6231
    %v6256 = vmul.f32 %v6136, %v6232
    %v6257 = vmul.f32 %v6137, %v6233
    %v6258 = vmul.f32 %v6138, %v6234
    %v6259 = vmul.f32 %v6139, %v6235
    %v6260 = vmul.f32 %v6140, %v6236
    %v6261 = vmul.f32 %v6141, %v6237
    %v6262 = vmul.f32 %v6142, %v6238
    %v6263 = vmul.f32 %v6143, %v6239
    %v6264 = vmul.f32 %v6144, %v6240
    %v6265 = vmul.f32 %v6145, %v6241
    %v6266 = vmul.f32 %v6146, %v6242
    %v6267 = vmul.f32 %v6147, %v6243
    %v6268 = vmul.f32 %v6148, %v6244
    %v6269 = vmul.f32 %v6149, %v6245
    %v6270 = vmul.f32 %v6150, %v6246
    %v6271 = vmul.f32 %v6151, %v6247
    %v6272 = vmul.f32 %v6152, %v6248
    %v6273 = vmul.f32 %v6153, %v6249
    %v6274 = vmul.f32 %v6154, %v6250
    %v6275 = vmul.f32 %v6155, %v6251
    %v6276 = vmul.f32 %v6156, %v6252
    %v6277 = vadd.f32 %v6253, 1.0
    %v6278 = vadd.f32 %v6254, 1.0
    %v6279 = vadd.f32 %v6255, 1.0
    %v6280 = vadd.f32 %v6256, 1.0
    %v6281 = vadd.f32 %v6257, 1.0
    %v6282 = vadd.f32 %v6258, 1.0
    %v6283 = vadd.f32 %v6259, 1.0
    %v6284 = vadd.f32 %v6260, 1.0
    %v6285 = vadd.f32 %v6261, 1.0
    %v6286 = vadd.f32 %v6262, 1.0
    %v6287 = vadd.f32 %v6263, 1.0
    %v6288 = vadd.f32 %v6264, 1.0
    %v6289 = vadd.f32 %v6265, 1.0
    %v6290 = vadd.f32 %v6266, 1.0
    %v6291 = vadd.f32 %v6267, 1.0
    %v6292 = vadd.f32 %v6268, 1.0
    %v6293 = vadd.f32 %v6269, 1.0
    %v6294 = vadd.f32 %v6270, 1.0
    %v6295 = vadd.f32 %v6271, 1.0
    %v6296 = vadd.f32 %v6272, 1.0
    %v6297 = vadd.f32 %v6273, 1.0
    %v6298 = vadd.f32 %v6274, 1.0
    %v6299 = vadd.f32 %v6275, 1.0
    %v6300 = vadd.f32 %v6276, 1.0
    %v6301 = vmul.f32 %v6133, %v6277
    %v6302 = vmul.f32 %v6134, %v6278
    %v6303 = vmul.f32 %v6135, %v6279
    %v6304 = vmul.f32 %v6136, %v6280
    %v6305 = vmul.f32 %v6137, %v6281
    %v6306 = vmul.f32 %v6138, %v6282
    %v6307 = vmul.f32 %v6139, %v6283
    %v6308 = vmul.f32 %v6140, %v6284
    %v6309 = vmul.f32 %v6141, %v6285
    %v6310 = vmul.f32 %v6142, %v6286
    %v6311 = vmul.f32 %v6143, %v6287
    %v6312 = vmul.f32 %v6144, %v6288
    %v6313 = vmul.f32 %v6145, %v6289
    %v6314 = vmul.f32 %v6146, %v6290
    %v6315 = vmul.f32 %v6147, %v6291
    %v6316 = vmul.f32 %v6148, %v6292
    %v6317 = vmul.f32 %v6149, %v6293
    %v6318 = vmul.f32 %v6150, %v6294
    %v6319 = vmul.f32 %v6151, %v6295
    %v6320 = vmul.f32 %v6152, %v6296
    %v6321 = vmul.f32 %v6153, %v6297
    %v6322 = vmul.f32 %v6154, %v6298
    %v6323 = vmul.f32 %v6155, %v6299
    %v6324 = vmul.f32 %v6156, %v6300
    %v6325 = vmul.f32 %v6133, 1.442695
    %v6326 = vpow.pop %v6325
    %v6327 = vmul.f32 %v6134, 1.442695
    %v6328 = vpow.pop %v6327
    %v6329 = vmul.f32 %v6135, 1.442695
    %v6330 = vpow.pop %v6329
    %v6331 = vmul.f32 %v6136, 1.442695
    %v6332 = vpow.pop %v6331
    %v6333 = vmul.f32 %v6137, 1.442695
    %v6334 = vpow.pop %v6333
    %v6335 = vmul.f32 %v6138, 1.442695
    %v6336 = vpow.pop %v6335
    %v6337 = vmul.f32 %v6139, 1.442695
    %v6338 = vpow.pop %v6337
    %v6339 = vmul.f32 %v6140, 1.442695
    %v6340 = vpow.pop %v6339
    %v6341 = vmul.f32 %v6141, 1.442695
    %v6342 = vpow.pop %v6341
    %v6343 = vmul.f32 %v6142, 1.442695
    %v6344 = vpow.pop %v6343
    %v6345 = vmul.f32 %v6143, 1.442695
    %v6346 = vpow.pop %v6345
    %v6347 = vmul.f32 %v6144, 1.442695
    %v6348 = vpow.pop %v6347
    %v6349 = vmul.f32 %v6145, 1.442695
    %v6350 = vpow.pop %v6349
    %v6351 = vmul.f32 %v6146, 1.442695
    %v6352 = vpow.pop %v6351
    %v6353 = vmul.f32 %v6147, 1.442695
    %v6354 = vpow.pop %v6353
    %v6355 = vmul.f32 %v6148, 1.442695
    %v6356 = vpow.pop %v6355
    %v6357 = vmul.f32 %v6149, 1.442695
    %v6358 = vpow.pop %v6357
    %v6359 = vmul.f32 %v6150, 1.442695
    %v6360 = vpow.pop %v6359
    %v6361 = vmul.f32 %v6151, 1.442695
    %v6362 = vpow.pop %v6361
    %v6363 = vmul.f32 %v6152, 1.442695
    %v6364 = vpow.pop %v6363
    %v6365 = vmul.f32 %v6153, 1.442695
    %v6366 = vpow.pop %v6365
    %v6367 = vmul.f32 %v6154, 1.442695
    %v6368 = vpow.pop %v6367
    %v6369 = vmul.f32 %v6155, 1.442695
    %v6370 = vpow.pop %v6369
    %v6371 = vmul.f32 %v6156, 1.442695
    %v6372 = vpow.pop %v6371
    %v6373 = vsub.f32 %v6326, 1.0
    %v6374 = vsub.f32 %v6328, 1.0
    %v6375 = vsub.f32 %v6330, 1.0
    %v6376 = vsub.f32 %v6332, 1.0
    %v6377 = vsub.f32 %v6334, 1.0
    %v6378 = vsub.f32 %v6336, 1.0
    %v6379 = vsub.f32 %v6338, 1.0
    %v6380 = vsub.f32 %v6340, 1.0
    %v6381 = vsub.f32 %v6342, 1.0
    %v6382 = vsub.f32 %v6344, 1.0
    %v6383 = vsub.f32 %v6346, 1.0
    %v6384 = vsub.f32 %v6348, 1.0
    %v6385 = vsub.f32 %v6350, 1.0
    %v6386 = vsub.f32 %v6352, 1.0
    %v6387 = vsub.f32 %v6354, 1.0
    %v6388 = vsub.f32 %v6356, 1.0
    %v6389 = vsub.f32 %v6358, 1.0
    %v6390 = vsub.f32 %v6360, 1.0
    %v6391 = vsub.f32 %v6362, 1.0
    %v6392 = vsub.f32 %v6364, 1.0
    %v6393 = vsub.f32 %v6366, 1.0
    %v6394 = vsub.f32 %v6368, 1.0
    %v6395 = vsub.f32 %v6370, 1.0
    %v6396 = vsub.f32 %v6372, 1.0
    %v6397 = vsel %vm6181, %v6301, %v6373
    %v6398 = vsel %vm6182, %v6302, %v6374
    %v6399 = vsel %vm6183, %v6303, %v6375
    %v6400 = vsel %vm6184, %v6304, %v6376
    %v6401 = vsel %vm6185, %v6305, %v6377
    %v6402 = vsel %vm6186, %v6306, %v6378
    %v6403 = vsel %vm6187, %v6307, %v6379
    %v6404 = vsel %vm6188, %v6308, %v6380
    %v6405 = vsel %vm6189, %v6309, %v6381
    %v6406 = vsel %vm6190, %v6310, %v6382
    %v6407 = vsel %vm6191, %v6311, %v6383
    %v6408 = vsel %vm6192, %v6312, %v6384
    %v6409 = vsel %vm6193, %v6313, %v6385
    %v6410 = vsel %vm6194, %v6314, %v6386
    %v6411 = vsel %vm6195, %v6315, %v6387
    %v6412 = vsel %vm6196, %v6316, %v6388
    %v6413 = vsel %vm6197, %v6317, %v6389
    %v6414 = vsel %vm6198, %v6318, %v6390
    %v6415 = vsel %vm6199, %v6319, %v6391
    %v6416 = vsel %vm6200, %v6320, %v6392
    %v6417 = vsel %vm6201, %v6321, %v6393
    %v6418 = vsel %vm6202, %v6322, %v6394
    %v6419 = vsel %vm6203, %v6323, %v6395
    %v6420 = vsel %vm6204, %v6324, %v6396
    %vm6421 = vcmp.gt.f32.partialorder %v6133, 0.0
    %vm6422 = vcmp.gt.f32.partialorder %v6134, 0.0
    %vm6423 = vcmp.gt.f32.partialorder %v6135, 0.0
    %vm6424 = vcmp.gt.f32.partialorder %v6136, 0.0
    %vm6425 = vcmp.gt.f32.partialorder %v6137, 0.0
    %vm6426 = vcmp.gt.f32.partialorder %v6138, 0.0
    %vm6427 = vcmp.gt.f32.partialorder %v6139, 0.0
    %vm6428 = vcmp.gt.f32.partialorder %v6140, 0.0
    %vm6429 = vcmp.gt.f32.partialorder %v6141, 0.0
    %vm6430 = vcmp.gt.f32.partialorder %v6142, 0.0
    %vm6431 = vcmp.gt.f32.partialorder %v6143, 0.0
    %vm6432 = vcmp.gt.f32.partialorder %v6144, 0.0
    %vm6433 = vcmp.gt.f32.partialorder %v6145, 0.0
    %vm6434 = vcmp.gt.f32.partialorder %v6146, 0.0
    %vm6435 = vcmp.gt.f32.partialorder %v6147, 0.0
    %vm6436 = vcmp.gt.f32.partialorder %v6148, 0.0
    %vm6437 = vcmp.gt.f32.partialorder %v6149, 0.0
    %vm6438 = vcmp.gt.f32.partialorder %v6150, 0.0
    %vm6439 = vcmp.gt.f32.partialorder %v6151, 0.0
    %vm6440 = vcmp.gt.f32.partialorder %v6152, 0.0
    %vm6441 = vcmp.gt.f32.partialorder %v6153, 0.0
    %vm6442 = vcmp.gt.f32.partialorder %v6154, 0.0
    %vm6443 = vcmp.gt.f32.partialorder %v6155, 0.0
    %vm6444 = vcmp.gt.f32.partialorder %v6156, 0.0
    %v6445 = vsel %vm6421, %v6133, %v6397
    %v6446 = vsel %vm6422, %v6134, %v6398
    %v6447 = vsel %vm6423, %v6135, %v6399
    %v6448 = vsel %vm6424, %v6136, %v6400
    %v6449 = vsel %vm6425, %v6137, %v6401
    %v6450 = vsel %vm6426, %v6138, %v6402
    %v6451 = vsel %vm6427, %v6139, %v6403
    %v6452 = vsel %vm6428, %v6140, %v6404
    %v6453 = vsel %vm6429, %v6141, %v6405
    %v6454 = vsel %vm6430, %v6142, %v6406
    %v6455 = vsel %vm6431, %v6143, %v6407
    %v6456 = vsel %vm6432, %v6144, %v6408
    %v6457 = vsel %vm6433, %v6145, %v6409
    %v6458 = vsel %vm6434, %v6146, %v6410
    %v6459 = vsel %vm6435, %v6147, %v6411
    %v6460 = vsel %vm6436, %v6148, %v6412
    %v6461 = vsel %vm6437, %v6149, %v6413
    %v6462 = vsel %vm6438, %v6150, %v6414
    %v6463 = vsel %vm6439, %v6151, %v6415
    %v6464 = vsel %vm6440, %v6152, %v6416
    %v6465 = vsel %vm6441, %v6153, %v6417
    %v6466 = vsel %vm6442, %v6154, %v6418
    %v6467 = vsel %vm6443, %v6155, %v6419
    %v6468 = vsel %vm6444, %v6156, %v6420
    %v6469 = vpack.c.bf16 %v6457, %v6445
    %v6470 = vpack.c.bf16 %v6458, %v6446
    %v6471 = vpack.c.bf16 %v6459, %v6447
    %v6472 = vpack.c.bf16 %v6460, %v6448
    %v6473 = vpack.c.bf16 %v6461, %v6449
    %v6474 = vpack.c.bf16 %v6462, %v6450
    %v6475 = vpack.c.bf16 %v6463, %v6451
    %v6476 = vpack.c.bf16 %v6464, %v6452
    %v6477 = vpack.c.bf16 %v6465, %v6453
    %v6478 = vpack.c.bf16 %v6466, %v6454
    %v6479 = vpack.c.bf16 %v6467, %v6455
    %v6480 = vpack.c.bf16 %v6468, %v6456
    %v6481 = vld [vmem:[#allocation6] sm:$0xff]
    %v6482 = vld [vmem:[#allocation6 + $0x8] sm:$0xff]
    %v6483 = vld [vmem:[#allocation6 + $0x10] sm:$0xff]
    %v6484 = vld [vmem:[#allocation6 + $0x18] sm:$0xff]
    %v6485 = vld [vmem:[#allocation6 + $0x20] sm:$0xff]
    %v6486 = vld [vmem:[#allocation6 + $0x28] sm:$0xff]
    %v6487 = vld [vmem:[#allocation6 + $0x30] sm:$0xff]
    %v6488 = vld [vmem:[#allocation6 + $0x38] sm:$0xff]
    %v6489 = vld [vmem:[#allocation6 + $0x40] sm:$0xff]
    %v6490 = vld [vmem:[#allocation6 + $0x48] sm:$0xff]
    %v6491 = vld [vmem:[#allocation6 + $0x50] sm:$0xff]
    %v6492 = vld [vmem:[#allocation6 + $0x58] sm:$0xff]
    %v6493 = vld [vmem:[#allocation6 + $0x60] sm:$0xff]
    %v6494 = vld [vmem:[#allocation6 + $0x68] sm:$0xff]
    %v6495 = vld [vmem:[#allocation6 + $0x70] sm:$0xff]
    %v6496 = vld [vmem:[#allocation6 + $0x78] sm:$0xff]
    %v6497 = vld [vmem:[#allocation6 + $0x80] sm:$0xff]
    %v6498 = vld [vmem:[#allocation6 + $0x88] sm:$0xff]
    %v6499 = vld [vmem:[#allocation6 + $0x90] sm:$0xff]
    %v6500 = vld [vmem:[#allocation6 + $0x98] sm:$0xff]
    %v6501 = vld [vmem:[#allocation6 + $0xa0] sm:$0xff]
    %v6502 = vld [vmem:[#allocation6 + $0xa8] sm:$0xff]
    %v6503 = vld [vmem:[#allocation6 + $0xb0] sm:$0xff]
    %v6504 = vld [vmem:[#allocation6 + $0xb8] sm:$0xff]
    %v6505 = vld [vmem:[#allocation6 + $0xc0] sm:$0xff]
    %v6506 = vld [vmem:[#allocation6 + $0xc8] sm:$0xff]
    %v6507 = vld [vmem:[#allocation6 + $0xd0] sm:$0xff]
    %v6508 = vld [vmem:[#allocation6 + $0xd8] sm:$0xff]
    %v6509 = vld [vmem:[#allocation6 + $0xe0] sm:$0xff]
    %v6510 = vld [vmem:[#allocation6 + $0xe8] sm:$0xff]
    %v6511 = vld [vmem:[#allocation6 + $0xf0] sm:$0xff]
    %v6512 = vld [vmem:[#allocation6 + $0xf8] sm:$0xff]
    %v6513 = vld [vmem:[#allocation6 + $0x100] sm:$0xff]
    %v6514 = vld [vmem:[#allocation6 + $0x108] sm:$0xff]
    %v6515 = vld [vmem:[#allocation6 + $0x110] sm:$0xff]
    %v6516 = vld [vmem:[#allocation6 + $0x118] sm:$0xff]
    %v6517 = vld [vmem:[#allocation6 + $0x120] sm:$0xff]
    %v6518 = vld [vmem:[#allocation6 + $0x128] sm:$0xff]
    %v6519 = vld [vmem:[#allocation6 + $0x130] sm:$0xff]
    %v6520 = vld [vmem:[#allocation6 + $0x138] sm:$0xff]
    %v6521 = vld [vmem:[#allocation6 + $0x140] sm:$0xff]
    %v6522 = vld [vmem:[#allocation6 + $0x148] sm:$0xff]
    %v6523 = vld [vmem:[#allocation6 + $0x150] sm:$0xff]
    %v6524 = vld [vmem:[#allocation6 + $0x158] sm:$0xff]
    %v6525 = vld [vmem:[#allocation6 + $0x160] sm:$0xff]
    %v6526 = vld [vmem:[#allocation6 + $0x168] sm:$0xff]
    %v6527 = vld [vmem:[#allocation6 + $0x170] sm:$0xff]
    %v6528 = vld [vmem:[#allocation6 + $0x178] sm:$0xff]
    %v6529 = vld [vmem:[#allocation6 + $0x180] sm:$0xff]
    %v6530 = vld [vmem:[#allocation6 + $0x188] sm:$0xff]
    %v6531 = vld [vmem:[#allocation6 + $0x190] sm:$0xff]
    %v6532 = vld [vmem:[#allocation6 + $0x198] sm:$0xff]
    %v6533 = vld [vmem:[#allocation6 + $0x1a0] sm:$0xff]
    %v6534 = vld [vmem:[#allocation6 + $0x1a8] sm:$0xff]
    %v6535 = vld [vmem:[#allocation6 + $0x1b0] sm:$0xff]
    %v6536 = vld [vmem:[#allocation6 + $0x1b8] sm:$0xff]
    %v6537 = vld [vmem:[#allocation6 + $0x1c0] sm:$0xff]
    %v6538 = vld [vmem:[#allocation6 + $0x1c8] sm:$0xff]
    %v6539 = vld [vmem:[#allocation6 + $0x1d0] sm:$0xff]
    %v6540 = vld [vmem:[#allocation6 + $0x1d8] sm:$0xff]
    %v6541 = vld [vmem:[#allocation6 + $0x1e0] sm:$0xff]
    %v6542 = vld [vmem:[#allocation6 + $0x1e8] sm:$0xff]
    %v6543 = vld [vmem:[#allocation6 + $0x1f0] sm:$0xff]
    %v6544 = vld [vmem:[#allocation6 + $0x1f8] sm:$0xff]
    %v6545 = vld [vmem:[#allocation6 + $0x200] sm:$0xff]
    %v6546 = vld [vmem:[#allocation6 + $0x208] sm:$0xff]
    %v6547 = vld [vmem:[#allocation6 + $0x210] sm:$0xff]
    %v6548 = vld [vmem:[#allocation6 + $0x218] sm:$0xff]
    %v6549 = vld [vmem:[#allocation6 + $0x220] sm:$0xff]
    %v6550 = vld [vmem:[#allocation6 + $0x228] sm:$0xff]
    %v6551 = vld [vmem:[#allocation6 + $0x230] sm:$0xff]
    %v6552 = vld [vmem:[#allocation6 + $0x238] sm:$0xff]
    %v6553 = vld [vmem:[#allocation6 + $0x240] sm:$0xff]
    %v6554 = vld [vmem:[#allocation6 + $0x248] sm:$0xff]
    %v6555 = vld [vmem:[#allocation6 + $0x250] sm:$0xff]
    %v6556 = vld [vmem:[#allocation6 + $0x258] sm:$0xff]
    %v6557 = vld [vmem:[#allocation6 + $0x260] sm:$0xff]
    %v6558 = vld [vmem:[#allocation6 + $0x268] sm:$0xff]
    %v6559 = vld [vmem:[#allocation6 + $0x270] sm:$0xff]
    %v6560 = vld [vmem:[#allocation6 + $0x278] sm:$0xff]
    %v6561 = vld [vmem:[#allocation6 + $0x280] sm:$0xff]
    %v6562 = vld [vmem:[#allocation6 + $0x288] sm:$0xff]
    %v6563 = vld [vmem:[#allocation6 + $0x290] sm:$0xff]
    %v6564 = vld [vmem:[#allocation6 + $0x298] sm:$0xff]
    %v6565 = vld [vmem:[#allocation6 + $0x2a0] sm:$0xff]
    %v6566 = vld [vmem:[#allocation6 + $0x2a8] sm:$0xff]
    %v6567 = vld [vmem:[#allocation6 + $0x2b0] sm:$0xff]
    %v6568 = vld [vmem:[#allocation6 + $0x2b8] sm:$0xff]
    %v6569 = vld [vmem:[#allocation6 + $0x2c0] sm:$0xff]
    %v6570 = vld [vmem:[#allocation6 + $0x2c8] sm:$0xff]
    %v6571 = vld [vmem:[#allocation6 + $0x2d0] sm:$0xff]
    %v6572 = vld [vmem:[#allocation6 + $0x2d8] sm:$0xff]
    %v6573 = vld [vmem:[#allocation6 + $0x2e0] sm:$0xff]
    %v6574 = vld [vmem:[#allocation6 + $0x2e8] sm:$0xff]
    %v6575 = vld [vmem:[#allocation6 + $0x2f0] sm:$0xff]
    %v6576 = vld [vmem:[#allocation6 + $0x2f8] sm:$0xff]
    %v6577 = vld [vmem:[#allocation6 + $0x300] sm:$0xff]
    %v6578 = vld [vmem:[#allocation6 + $0x308] sm:$0xff]
    %v6579 = vld [vmem:[#allocation6 + $0x310] sm:$0xff]
    %v6580 = vld [vmem:[#allocation6 + $0x318] sm:$0xff]
    %v6581 = vld [vmem:[#allocation6 + $0x320] sm:$0xff]
    %v6582 = vld [vmem:[#allocation6 + $0x328] sm:$0xff]
    %v6583 = vld [vmem:[#allocation6 + $0x330] sm:$0xff]
    %v6584 = vld [vmem:[#allocation6 + $0x338] sm:$0xff]
    %v6585 = vld [vmem:[#allocation6 + $0x340] sm:$0xff]
    %v6586 = vld [vmem:[#allocation6 + $0x348] sm:$0xff]
    %v6587 = vld [vmem:[#allocation6 + $0x350] sm:$0xff]
    %v6588 = vld [vmem:[#allocation6 + $0x358] sm:$0xff]
    %v6589 = vld [vmem:[#allocation6 + $0x360] sm:$0xff]
    %v6590 = vld [vmem:[#allocation6 + $0x368] sm:$0xff]
    %v6591 = vld [vmem:[#allocation6 + $0x370] sm:$0xff]
    %v6592 = vld [vmem:[#allocation6 + $0x378] sm:$0xff]
    %v6593 = vld [vmem:[#allocation6 + $0x380] sm:$0xff]
    %v6594 = vld [vmem:[#allocation6 + $0x388] sm:$0xff]
    %v6595 = vld [vmem:[#allocation6 + $0x390] sm:$0xff]
    %v6596 = vld [vmem:[#allocation6 + $0x398] sm:$0xff]
    %v6597 = vld [vmem:[#allocation6 + $0x3a0] sm:$0xff]
    %v6598 = vld [vmem:[#allocation6 + $0x3a8] sm:$0xff]
    %v6599 = vld [vmem:[#allocation6 + $0x3b0] sm:$0xff]
    %v6600 = vld [vmem:[#allocation6 + $0x3b8] sm:$0xff]
    %v6601 = vld [vmem:[#allocation6 + $0x3c0] sm:$0xff]
    %v6602 = vld [vmem:[#allocation6 + $0x3c8] sm:$0xff]
    %v6603 = vld [vmem:[#allocation6 + $0x3d0] sm:$0xff]
    %v6604 = vld [vmem:[#allocation6 + $0x3d8] sm:$0xff]
    %v6605 = vld [vmem:[#allocation6 + $0x3e0] sm:$0xff]
    %v6606 = vld [vmem:[#allocation6 + $0x3e8] sm:$0xff]
    %v6607 = vld [vmem:[#allocation6 + $0x3f0] sm:$0xff]
    %v6608 = vld [vmem:[#allocation6 + $0x3f8] sm:$0xff]
    %v6609 = vld [vmem:[#allocation6 + $0x400] sm:$0xff]
    %v6610 = vld [vmem:[#allocation6 + $0x408] sm:$0xff]
    %v6611 = vld [vmem:[#allocation6 + $0x410] sm:$0xff]
    %v6612 = vld [vmem:[#allocation6 + $0x418] sm:$0xff]
    %v6613 = vld [vmem:[#allocation6 + $0x420] sm:$0xff]
    %v6614 = vld [vmem:[#allocation6 + $0x428] sm:$0xff]
    %v6615 = vld [vmem:[#allocation6 + $0x430] sm:$0xff]
    %v6616 = vld [vmem:[#allocation6 + $0x438] sm:$0xff]
    %v6617 = vld [vmem:[#allocation6 + $0x440] sm:$0xff]
    %v6618 = vld [vmem:[#allocation6 + $0x448] sm:$0xff]
    %v6619 = vld [vmem:[#allocation6 + $0x450] sm:$0xff]
    %v6620 = vld [vmem:[#allocation6 + $0x458] sm:$0xff]
    %v6621 = vld [vmem:[#allocation6 + $0x460] sm:$0xff]
    %v6622 = vld [vmem:[#allocation6 + $0x468] sm:$0xff]
    %v6623 = vld [vmem:[#allocation6 + $0x470] sm:$0xff]
    %v6624 = vld [vmem:[#allocation6 + $0x478] sm:$0xff]
    %v6625 = vld [vmem:[#allocation6 + $0x480] sm:$0xff]
    %v6626 = vld [vmem:[#allocation6 + $0x488] sm:$0xff]
    %v6627 = vld [vmem:[#allocation6 + $0x490] sm:$0xff]
    %v6628 = vld [vmem:[#allocation6 + $0x498] sm:$0xff]
    %v6629 = vld [vmem:[#allocation6 + $0x4a0] sm:$0xff]
    %v6630 = vld [vmem:[#allocation6 + $0x4a8] sm:$0xff]
    %v6631 = vld [vmem:[#allocation6 + $0x4b0] sm:$0xff]
    %v6632 = vld [vmem:[#allocation6 + $0x4b8] sm:$0xff]
    %v6633 = vld [vmem:[#allocation6 + $0x4c0] sm:$0xff]
    %v6634 = vld [vmem:[#allocation6 + $0x4c8] sm:$0xff]
    %v6635 = vld [vmem:[#allocation6 + $0x4d0] sm:$0xff]
    %v6636 = vld [vmem:[#allocation6 + $0x4d8] sm:$0xff]
    %v6637 = vld [vmem:[#allocation6 + $0x4e0] sm:$0xff]
    %v6638 = vld [vmem:[#allocation6 + $0x4e8] sm:$0xff]
    %v6639 = vld [vmem:[#allocation6 + $0x4f0] sm:$0xff]
    %v6640 = vld [vmem:[#allocation6 + $0x4f8] sm:$0xff]
    %v6641 = vld [vmem:[#allocation6 + $0x500] sm:$0xff]
    %v6642 = vld [vmem:[#allocation6 + $0x508] sm:$0xff]
    %v6643 = vld [vmem:[#allocation6 + $0x510] sm:$0xff]
    %v6644 = vld [vmem:[#allocation6 + $0x518] sm:$0xff]
    %v6645 = vld [vmem:[#allocation6 + $0x520] sm:$0xff]
    %v6646 = vld [vmem:[#allocation6 + $0x528] sm:$0xff]
    %v6647 = vld [vmem:[#allocation6 + $0x530] sm:$0xff]
    %v6648 = vld [vmem:[#allocation6 + $0x538] sm:$0xff]
    %v6649 = vld [vmem:[#allocation6 + $0x540] sm:$0xff]
    %v6650 = vld [vmem:[#allocation6 + $0x548] sm:$0xff]
    %v6651 = vld [vmem:[#allocation6 + $0x550] sm:$0xff]
    %v6652 = vld [vmem:[#allocation6 + $0x558] sm:$0xff]
    %v6653 = vld [vmem:[#allocation6 + $0x560] sm:$0xff]
    %v6654 = vld [vmem:[#allocation6 + $0x568] sm:$0xff]
    %v6655 = vld [vmem:[#allocation6 + $0x570] sm:$0xff]
    %v6656 = vld [vmem:[#allocation6 + $0x578] sm:$0xff]
    %v6657 = vld [vmem:[#allocation6 + $0x580] sm:$0xff]
    %v6658 = vld [vmem:[#allocation6 + $0x588] sm:$0xff]
    %v6659 = vld [vmem:[#allocation6 + $0x590] sm:$0xff]
    %v6660 = vld [vmem:[#allocation6 + $0x598] sm:$0xff]
    %v6661 = vld [vmem:[#allocation6 + $0x5a0] sm:$0xff]
    %v6662 = vld [vmem:[#allocation6 + $0x5a8] sm:$0xff]
    %v6663 = vld [vmem:[#allocation6 + $0x5b0] sm:$0xff]
    %v6664 = vld [vmem:[#allocation6 + $0x5b8] sm:$0xff]
    %v6665 = vld [vmem:[#allocation6 + $0x5c0] sm:$0xff]
    %v6666 = vld [vmem:[#allocation6 + $0x5c8] sm:$0xff]
    %v6667 = vld [vmem:[#allocation6 + $0x5d0] sm:$0xff]
    %v6668 = vld [vmem:[#allocation6 + $0x5d8] sm:$0xff]
    %v6669 = vld [vmem:[#allocation6 + $0x5e0] sm:$0xff]
    %v6670 = vld [vmem:[#allocation6 + $0x5e8] sm:$0xff]
    %v6671 = vld [vmem:[#allocation6 + $0x5f0] sm:$0xff]
    %v6672 = vld [vmem:[#allocation6 + $0x5f8] sm:$0xff]
    %v6673 = vunpack.c.l.s8.bf16 %v6481
    %v6674 = vunpack.c.l.s8.bf16 %v6482
    %v6675 = vunpack.c.l.s8.bf16 %v6483
    %v6676 = vunpack.c.l.s8.bf16 %v6484
    %v6677 = vunpack.c.h.s8.bf16 %v6481
    %v6678 = vunpack.c.h.s8.bf16 %v6482
    %v6679 = vunpack.c.h.s8.bf16 %v6483
    %v6680 = vunpack.c.h.s8.bf16 %v6484
    %v6681 = vunpack.c.l.s8.bf16 %v6485
    %v6682 = vunpack.c.l.s8.bf16 %v6486
    %v6683 = vunpack.c.l.s8.bf16 %v6487
    %v6684 = vunpack.c.l.s8.bf16 %v6488
    %v6685 = vunpack.c.h.s8.bf16 %v6485
    %v6686 = vunpack.c.h.s8.bf16 %v6486
    %v6687 = vunpack.c.h.s8.bf16 %v6487
    %v6688 = vunpack.c.h.s8.bf16 %v6488
    %v6689 = vunpack.c.l.s8.bf16 %v6489
    %v6690 = vunpack.c.l.s8.bf16 %v6490
    %v6691 = vunpack.c.l.s8.bf16 %v6491
    %v6692 = vunpack.c.l.s8.bf16 %v6492
    %v6693 = vunpack.c.h.s8.bf16 %v6489
    %v6694 = vunpack.c.h.s8.bf16 %v6490
    %v6695 = vunpack.c.h.s8.bf16 %v6491
    %v6696 = vunpack.c.h.s8.bf16 %v6492
    %v6697 = vunpack.c.l.s8.bf16 %v6493
    %v6698 = vunpack.c.l.s8.bf16 %v6494
    %v6699 = vunpack.c.l.s8.bf16 %v6495
    %v6700 = vunpack.c.l.s8.bf16 %v6496
    %v6701 = vunpack.c.h.s8.bf16 %v6493
    %v6702 = vunpack.c.h.s8.bf16 %v6494
    %v6703 = vunpack.c.h.s8.bf16 %v6495
    %v6704 = vunpack.c.h.s8.bf16 %v6496
    %v6705 = vunpack.c.l.s8.bf16 %v6497
    %v6706 = vunpack.c.l.s8.bf16 %v6498
    %v6707 = vunpack.c.l.s8.bf16 %v6499
    %v6708 = vunpack.c.l.s8.bf16 %v6500
    %v6709 = vunpack.c.h.s8.bf16 %v6497
    %v6710 = vunpack.c.h.s8.bf16 %v6498
    %v6711 = vunpack.c.h.s8.bf16 %v6499
    %v6712 = vunpack.c.h.s8.bf16 %v6500
    %v6713 = vunpack.c.l.s8.bf16 %v6501
    %v6714 = vunpack.c.l.s8.bf16 %v6502
    %v6715 = vunpack.c.l.s8.bf16 %v6503
    %v6716 = vunpack.c.l.s8.bf16 %v6504
    %v6717 = vunpack.c.h.s8.bf16 %v6501
    %v6718 = vunpack.c.h.s8.bf16 %v6502
    %v6719 = vunpack.c.h.s8.bf16 %v6503
    %v6720 = vunpack.c.h.s8.bf16 %v6504
    %v6721 = vunpack.c.l.s8.bf16 %v6505
    %v6722 = vunpack.c.l.s8.bf16 %v6506
    %v6723 = vunpack.c.l.s8.bf16 %v6507
    %v6724 = vunpack.c.l.s8.bf16 %v6508
    %v6725 = vunpack.c.h.s8.bf16 %v6505
    %v6726 = vunpack.c.h.s8.bf16 %v6506
    %v6727 = vunpack.c.h.s8.bf16 %v6507
    %v6728 = vunpack.c.h.s8.bf16 %v6508
    %v6729 = vunpack.c.l.s8.bf16 %v6509
    %v6730 = vunpack.c.l.s8.bf16 %v6510
    %v6731 = vunpack.c.l.s8.bf16 %v6511
    %v6732 = vunpack.c.l.s8.bf16 %v6512
    %v6733 = vunpack.c.h.s8.bf16 %v6509
    %v6734 = vunpack.c.h.s8.bf16 %v6510
    %v6735 = vunpack.c.h.s8.bf16 %v6511
    %v6736 = vunpack.c.h.s8.bf16 %v6512
    %v6737 = vunpack.c.l.s8.bf16 %v6513
    %v6738 = vunpack.c.l.s8.bf16 %v6514
    %v6739 = vunpack.c.l.s8.bf16 %v6515
    %v6740 = vunpack.c.l.s8.bf16 %v6516
    %v6741 = vunpack.c.h.s8.bf16 %v6513
    %v6742 = vunpack.c.h.s8.bf16 %v6514
    %v6743 = vunpack.c.h.s8.bf16 %v6515
    %v6744 = vunpack.c.h.s8.bf16 %v6516
    %v6745 = vunpack.c.l.s8.bf16 %v6517
    %v6746 = vunpack.c.l.s8.bf16 %v6518
    %v6747 = vunpack.c.l.s8.bf16 %v6519
    %v6748 = vunpack.c.l.s8.bf16 %v6520
    %v6749 = vunpack.c.h.s8.bf16 %v6517
    %v6750 = vunpack.c.h.s8.bf16 %v6518
    %v6751 = vunpack.c.h.s8.bf16 %v6519
    %v6752 = vunpack.c.h.s8.bf16 %v6520
    %v6753 = vunpack.c.l.s8.bf16 %v6521
    %v6754 = vunpack.c.l.s8.bf16 %v6522
    %v6755 = vunpack.c.l.s8.bf16 %v6523
    %v6756 = vunpack.c.l.s8.bf16 %v6524
    %v6757 = vunpack.c.h.s8.bf16 %v6521
    %v6758 = vunpack.c.h.s8.bf16 %v6522
    %v6759 = vunpack.c.h.s8.bf16 %v6523
    %v6760 = vunpack.c.h.s8.bf16 %v6524
    %v6761 = vunpack.c.l.s8.bf16 %v6525
    %v6762 = vunpack.c.l.s8.bf16 %v6526
    %v6763 = vunpack.c.l.s8.bf16 %v6527
    %v6764 = vunpack.c.l.s8.bf16 %v6528
    %v6765 = vunpack.c.h.s8.bf16 %v6525
    %v6766 = vunpack.c.h.s8.bf16 %v6526
    %v6767 = vunpack.c.h.s8.bf16 %v6527
    %v6768 = vunpack.c.h.s8.bf16 %v6528
    %v6769 = vunpack.c.l.s8.bf16 %v6529
    %v6770 = vunpack.c.l.s8.bf16 %v6530
    %v6771 = vunpack.c.l.s8.bf16 %v6531
    %v6772 = vunpack.c.l.s8.bf16 %v6532
    %v6773 = vunpack.c.h.s8.bf16 %v6529
    %v6774 = vunpack.c.h.s8.bf16 %v6530
    %v6775 = vunpack.c.h.s8.bf16 %v6531
    %v6776 = vunpack.c.h.s8.bf16 %v6532
    %v6777 = vunpack.c.l.s8.bf16 %v6533
    %v6778 = vunpack.c.l.s8.bf16 %v6534
    %v6779 = vunpack.c.l.s8.bf16 %v6535
    %v6780 = vunpack.c.l.s8.bf16 %v6536
    %v6781 = vunpack.c.h.s8.bf16 %v6533
    %v6782 = vunpack.c.h.s8.bf16 %v6534
    %v6783 = vunpack.c.h.s8.bf16 %v6535
    %v6784 = vunpack.c.h.s8.bf16 %v6536
    %v6785 = vunpack.c.l.s8.bf16 %v6537
    %v6786 = vunpack.c.l.s8.bf16 %v6538
    %v6787 = vunpack.c.l.s8.bf16 %v6539
    %v6788 = vunpack.c.l.s8.bf16 %v6540
    %v6789 = vunpack.c.h.s8.bf16 %v6537
    %v6790 = vunpack.c.h.s8.bf16 %v6538
    %v6791 = vunpack.c.h.s8.bf16 %v6539
    %v6792 = vunpack.c.h.s8.bf16 %v6540
    %v6793 = vunpack.c.l.s8.bf16 %v6541
    %v6794 = vunpack.c.l.s8.bf16 %v6542
    %v6795 = vunpack.c.l.s8.bf16 %v6543
    %v6796 = vunpack.c.l.s8.bf16 %v6544
    %v6797 = vunpack.c.h.s8.bf16 %v6541
    %v6798 = vunpack.c.h.s8.bf16 %v6542
    %v6799 = vunpack.c.h.s8.bf16 %v6543
    %v6800 = vunpack.c.h.s8.bf16 %v6544
    %v6801 = vunpack.c.l.s8.bf16 %v6545
    %v6802 = vunpack.c.l.s8.bf16 %v6546
    %v6803 = vunpack.c.l.s8.bf16 %v6547
    %v6804 = vunpack.c.l.s8.bf16 %v6548
    %v6805 = vunpack.c.h.s8.bf16 %v6545
    %v6806 = vunpack.c.h.s8.bf16 %v6546
    %v6807 = vunpack.c.h.s8.bf16 %v6547
    %v6808 = vunpack.c.h.s8.bf16 %v6548
    %v6809 = vunpack.c.l.s8.bf16 %v6549
    %v6810 = vunpack.c.l.s8.bf16 %v6550
    %v6811 = vunpack.c.l.s8.bf16 %v6551
    %v6812 = vunpack.c.l.s8.bf16 %v6552
    %v6813 = vunpack.c.h.s8.bf16 %v6549
    %v6814 = vunpack.c.h.s8.bf16 %v6550
    %v6815 = vunpack.c.h.s8.bf16 %v6551
    %v6816 = vunpack.c.h.s8.bf16 %v6552
    %v6817 = vunpack.c.l.s8.bf16 %v6553
    %v6818 = vunpack.c.l.s8.bf16 %v6554
    %v6819 = vunpack.c.l.s8.bf16 %v6555
    %v6820 = vunpack.c.l.s8.bf16 %v6556
    %v6821 = vunpack.c.h.s8.bf16 %v6553
    %v6822 = vunpack.c.h.s8.bf16 %v6554
    %v6823 = vunpack.c.h.s8.bf16 %v6555
    %v6824 = vunpack.c.h.s8.bf16 %v6556
    %v6825 = vunpack.c.l.s8.bf16 %v6557
    %v6826 = vunpack.c.l.s8.bf16 %v6558
    %v6827 = vunpack.c.l.s8.bf16 %v6559
    %v6828 = vunpack.c.l.s8.bf16 %v6560
    %v6829 = vunpack.c.h.s8.bf16 %v6557
    %v6830 = vunpack.c.h.s8.bf16 %v6558
    %v6831 = vunpack.c.h.s8.bf16 %v6559
    %v6832 = vunpack.c.h.s8.bf16 %v6560
    %v6833 = vunpack.c.l.s8.bf16 %v6561
    %v6834 = vunpack.c.l.s8.bf16 %v6562
    %v6835 = vunpack.c.l.s8.bf16 %v6563
    %v6836 = vunpack.c.l.s8.bf16 %v6564
    %v6837 = vunpack.c.h.s8.bf16 %v6561
    %v6838 = vunpack.c.h.s8.bf16 %v6562
    %v6839 = vunpack.c.h.s8.bf16 %v6563
    %v6840 = vunpack.c.h.s8.bf16 %v6564
    %v6841 = vunpack.c.l.s8.bf16 %v6565
    %v6842 = vunpack.c.l.s8.bf16 %v6566
    %v6843 = vunpack.c.l.s8.bf16 %v6567
    %v6844 = vunpack.c.l.s8.bf16 %v6568
    %v6845 = vunpack.c.h.s8.bf16 %v6565
    %v6846 = vunpack.c.h.s8.bf16 %v6566
    %v6847 = vunpack.c.h.s8.bf16 %v6567
    %v6848 = vunpack.c.h.s8.bf16 %v6568
    %v6849 = vunpack.c.l.s8.bf16 %v6569
    %v6850 = vunpack.c.l.s8.bf16 %v6570
    %v6851 = vunpack.c.l.s8.bf16 %v6571
    %v6852 = vunpack.c.l.s8.bf16 %v6572
    %v6853 = vunpack.c.h.s8.bf16 %v6569
    %v6854 = vunpack.c.h.s8.bf16 %v6570
    %v6855 = vunpack.c.h.s8.bf16 %v6571
    %v6856 = vunpack.c.h.s8.bf16 %v6572
    %v6857 = vunpack.c.l.s8.bf16 %v6573
    %v6858 = vunpack.c.l.s8.bf16 %v6574
    %v6859 = vunpack.c.l.s8.bf16 %v6575
    %v6860 = vunpack.c.l.s8.bf16 %v6576
    %v6861 = vunpack.c.h.s8.bf16 %v6573
    %v6862 = vunpack.c.h.s8.bf16 %v6574
    %v6863 = vunpack.c.h.s8.bf16 %v6575
    %v6864 = vunpack.c.h.s8.bf16 %v6576
    %v6865 = vunpack.c.l.s8.bf16 %v6577
    %v6866 = vunpack.c.l.s8.bf16 %v6578
    %v6867 = vunpack.c.l.s8.bf16 %v6579
    %v6868 = vunpack.c.l.s8.bf16 %v6580
    %v6869 = vunpack.c.h.s8.bf16 %v6577
    %v6870 = vunpack.c.h.s8.bf16 %v6578
    %v6871 = vunpack.c.h.s8.bf16 %v6579
    %v6872 = vunpack.c.h.s8.bf16 %v6580
    %v6873 = vunpack.c.l.s8.bf16 %v6581
    %v6874 = vunpack.c.l.s8.bf16 %v6582
    %v6875 = vunpack.c.l.s8.bf16 %v6583
    %v6876 = vunpack.c.l.s8.bf16 %v6584
    %v6877 = vunpack.c.h.s8.bf16 %v6581
    %v6878 = vunpack.c.h.s8.bf16 %v6582
    %v6879 = vunpack.c.h.s8.bf16 %v6583
    %v6880 = vunpack.c.h.s8.bf16 %v6584
    %v6881 = vunpack.c.l.s8.bf16 %v6585
    %v6882 = vunpack.c.l.s8.bf16 %v6586
    %v6883 = vunpack.c.l.s8.bf16 %v6587
    %v6884 = vunpack.c.l.s8.bf16 %v6588
    %v6885 = vunpack.c.h.s8.bf16 %v6585
    %v6886 = vunpack.c.h.s8.bf16 %v6586
    %v6887 = vunpack.c.h.s8.bf16 %v6587
    %v6888 = vunpack.c.h.s8.bf16 %v6588
    %v6889 = vunpack.c.l.s8.bf16 %v6589
    %v6890 = vunpack.c.l.s8.bf16 %v6590
    %v6891 = vunpack.c.l.s8.bf16 %v6591
    %v6892 = vunpack.c.l.s8.bf16 %v6592
    %v6893 = vunpack.c.h.s8.bf16 %v6589
    %v6894 = vunpack.c.h.s8.bf16 %v6590
    %v6895 = vunpack.c.h.s8.bf16 %v6591
    %v6896 = vunpack.c.h.s8.bf16 %v6592
    %v6897 = vunpack.c.l.s8.bf16 %v6593
    %v6898 = vunpack.c.l.s8.bf16 %v6594
    %v6899 = vunpack.c.l.s8.bf16 %v6595
    %v6900 = vunpack.c.l.s8.bf16 %v6596
    %v6901 = vunpack.c.h.s8.bf16 %v6593
    %v6902 = vunpack.c.h.s8.bf16 %v6594
    %v6903 = vunpack.c.h.s8.bf16 %v6595
    %v6904 = vunpack.c.h.s8.bf16 %v6596
    %v6905 = vunpack.c.l.s8.bf16 %v6597
    %v6906 = vunpack.c.l.s8.bf16 %v6598
    %v6907 = vunpack.c.l.s8.bf16 %v6599
    %v6908 = vunpack.c.l.s8.bf16 %v6600
    %v6909 = vunpack.c.h.s8.bf16 %v6597
    %v6910 = vunpack.c.h.s8.bf16 %v6598
    %v6911 = vunpack.c.h.s8.bf16 %v6599
    %v6912 = vunpack.c.h.s8.bf16 %v6600
    %v6913 = vunpack.c.l.s8.bf16 %v6601
    %v6914 = vunpack.c.l.s8.bf16 %v6602
    %v6915 = vunpack.c.l.s8.bf16 %v6603
    %v6916 = vunpack.c.l.s8.bf16 %v6604
    %v6917 = vunpack.c.h.s8.bf16 %v6601
    %v6918 = vunpack.c.h.s8.bf16 %v6602
    %v6919 = vunpack.c.h.s8.bf16 %v6603
    %v6920 = vunpack.c.h.s8.bf16 %v6604
    %v6921 = vunpack.c.l.s8.bf16 %v6605
    %v6922 = vunpack.c.l.s8.bf16 %v6606
    %v6923 = vunpack.c.l.s8.bf16 %v6607
    %v6924 = vunpack.c.l.s8.bf16 %v6608
    %v6925 = vunpack.c.h.s8.bf16 %v6605
    %v6926 = vunpack.c.h.s8.bf16 %v6606
    %v6927 = vunpack.c.h.s8.bf16 %v6607
    %v6928 = vunpack.c.h.s8.bf16 %v6608
    %v6929 = vunpack.c.l.s8.bf16 %v6609
    %v6930 = vunpack.c.l.s8.bf16 %v6610
    %v6931 = vunpack.c.l.s8.bf16 %v6611
    %v6932 = vunpack.c.l.s8.bf16 %v6612
    %v6933 = vunpack.c.h.s8.bf16 %v6609
    %v6934 = vunpack.c.h.s8.bf16 %v6610
    %v6935 = vunpack.c.h.s8.bf16 %v6611
    %v6936 = vunpack.c.h.s8.bf16 %v6612
    %v6937 = vunpack.c.l.s8.bf16 %v6613
    %v6938 = vunpack.c.l.s8.bf16 %v6614
    %v6939 = vunpack.c.l.s8.bf16 %v6615
    %v6940 = vunpack.c.l.s8.bf16 %v6616
    %v6941 = vunpack.c.h.s8.bf16 %v6613
    %v6942 = vunpack.c.h.s8.bf16 %v6614
    %v6943 = vunpack.c.h.s8.bf16 %v6615
    %v6944 = vunpack.c.h.s8.bf16 %v6616
    %v6945 = vunpack.c.l.s8.bf16 %v6617
    %v6946 = vunpack.c.l.s8.bf16 %v6618
    %v6947 = vunpack.c.l.s8.bf16 %v6619
    %v6948 = vunpack.c.l.s8.bf16 %v6620
    %v6949 = vunpack.c.h.s8.bf16 %v6617
    %v6950 = vunpack.c.h.s8.bf16 %v6618
    %v6951 = vunpack.c.h.s8.bf16 %v6619
    %v6952 = vunpack.c.h.s8.bf16 %v6620
    %v6953 = vunpack.c.l.s8.bf16 %v6621
    %v6954 = vunpack.c.l.s8.bf16 %v6622
    %v6955 = vunpack.c.l.s8.bf16 %v6623
    %v6956 = vunpack.c.l.s8.bf16 %v6624
    %v6957 = vunpack.c.h.s8.bf16 %v6621
    %v6958 = vunpack.c.h.s8.bf16 %v6622
    %v6959 = vunpack.c.h.s8.bf16 %v6623
    %v6960 = vunpack.c.h.s8.bf16 %v6624
    %v6961 = vunpack.c.l.s8.bf16 %v6625
    %v6962 = vunpack.c.l.s8.bf16 %v6626
    %v6963 = vunpack.c.l.s8.bf16 %v6627
    %v6964 = vunpack.c.l.s8.bf16 %v6628
    %v6965 = vunpack.c.h.s8.bf16 %v6625
    %v6966 = vunpack.c.h.s8.bf16 %v6626
    %v6967 = vunpack.c.h.s8.bf16 %v6627
    %v6968 = vunpack.c.h.s8.bf16 %v6628
    %v6969 = vunpack.c.l.s8.bf16 %v6629
    %v6970 = vunpack.c.l.s8.bf16 %v6630
    %v6971 = vunpack.c.l.s8.bf16 %v6631
    %v6972 = vunpack.c.l.s8.bf16 %v6632
    %v6973 = vunpack.c.h.s8.bf16 %v6629
    %v6974 = vunpack.c.h.s8.bf16 %v6630
    %v6975 = vunpack.c.h.s8.bf16 %v6631
    %v6976 = vunpack.c.h.s8.bf16 %v6632
    %v6977 = vunpack.c.l.s8.bf16 %v6633
    %v6978 = vunpack.c.l.s8.bf16 %v6634
    %v6979 = vunpack.c.l.s8.bf16 %v6635
    %v6980 = vunpack.c.l.s8.bf16 %v6636
    %v6981 = vunpack.c.h.s8.bf16 %v6633
    %v6982 = vunpack.c.h.s8.bf16 %v6634
    %v6983 = vunpack.c.h.s8.bf16 %v6635
    %v6984 = vunpack.c.h.s8.bf16 %v6636
    %v6985 = vunpack.c.l.s8.bf16 %v6637
    %v6986 = vunpack.c.l.s8.bf16 %v6638
    %v6987 = vunpack.c.l.s8.bf16 %v6639
    %v6988 = vunpack.c.l.s8.bf16 %v6640
    %v6989 = vunpack.c.h.s8.bf16 %v6637
    %v6990 = vunpack.c.h.s8.bf16 %v6638
    %v6991 = vunpack.c.h.s8.bf16 %v6639
    %v6992 = vunpack.c.h.s8.bf16 %v6640
    %v6993 = vunpack.c.l.s8.bf16 %v6641
    %v6994 = vunpack.c.l.s8.bf16 %v6642
    %v6995 = vunpack.c.l.s8.bf16 %v6643
    %v6996 = vunpack.c.l.s8.bf16 %v6644
    %v6997 = vunpack.c.h.s8.bf16 %v6641
    %v6998 = vunpack.c.h.s8.bf16 %v6642
    %v6999 = vunpack.c.h.s8.bf16 %v6643
    %v7000 = vunpack.c.h.s8.bf16 %v6644
    %v7001 = vunpack.c.l.s8.bf16 %v6645
    %v7002 = vunpack.c.l.s8.bf16 %v6646
    %v7003 = vunpack.c.l.s8.bf16 %v6647
    %v7004 = vunpack.c.l.s8.bf16 %v6648
    %v7005 = vunpack.c.h.s8.bf16 %v6645
    %v7006 = vunpack.c.h.s8.bf16 %v6646
    %v7007 = vunpack.c.h.s8.bf16 %v6647
    %v7008 = vunpack.c.h.s8.bf16 %v6648
    %v7009 = vunpack.c.l.s8.bf16 %v6649
    %v7010 = vunpack.c.l.s8.bf16 %v6650
    %v7011 = vunpack.c.l.s8.bf16 %v6651
    %v7012 = vunpack.c.l.s8.bf16 %v6652
    %v7013 = vunpack.c.h.s8.bf16 %v6649
    %v7014 = vunpack.c.h.s8.bf16 %v6650
    %v7015 = vunpack.c.h.s8.bf16 %v6651
    %v7016 = vunpack.c.h.s8.bf16 %v6652
    %v7017 = vunpack.c.l.s8.bf16 %v6653
    %v7018 = vunpack.c.l.s8.bf16 %v6654
    %v7019 = vunpack.c.l.s8.bf16 %v6655
    %v7020 = vunpack.c.l.s8.bf16 %v6656
    %v7021 = vunpack.c.h.s8.bf16 %v6653
    %v7022 = vunpack.c.h.s8.bf16 %v6654
    %v7023 = vunpack.c.h.s8.bf16 %v6655
    %v7024 = vunpack.c.h.s8.bf16 %v6656
    %v7025 = vunpack.c.l.s8.bf16 %v6657
    %v7026 = vunpack.c.l.s8.bf16 %v6658
    %v7027 = vunpack.c.l.s8.bf16 %v6659
    %v7028 = vunpack.c.l.s8.bf16 %v6660
    %v7029 = vunpack.c.h.s8.bf16 %v6657
    %v7030 = vunpack.c.h.s8.bf16 %v6658
    %v7031 = vunpack.c.h.s8.bf16 %v6659
    %v7032 = vunpack.c.h.s8.bf16 %v6660
    %v7033 = vunpack.c.l.s8.bf16 %v6661
    %v7034 = vunpack.c.l.s8.bf16 %v6662
    %v7035 = vunpack.c.l.s8.bf16 %v6663
    %v7036 = vunpack.c.l.s8.bf16 %v6664
    %v7037 = vunpack.c.h.s8.bf16 %v6661
    %v7038 = vunpack.c.h.s8.bf16 %v6662
    %v7039 = vunpack.c.h.s8.bf16 %v6663
    %v7040 = vunpack.c.h.s8.bf16 %v6664
    %v7041 = vunpack.c.l.s8.bf16 %v6665
    %v7042 = vunpack.c.l.s8.bf16 %v6666
    %v7043 = vunpack.c.l.s8.bf16 %v6667
    %v7044 = vunpack.c.l.s8.bf16 %v6668
    %v7045 = vunpack.c.h.s8.bf16 %v6665
    %v7046 = vunpack.c.h.s8.bf16 %v6666
    %v7047 = vunpack.c.h.s8.bf16 %v6667
    %v7048 = vunpack.c.h.s8.bf16 %v6668
    %v7049 = vunpack.c.l.s8.bf16 %v6669
    %v7050 = vunpack.c.l.s8.bf16 %v6670
    %v7051 = vunpack.c.l.s8.bf16 %v6671
    %v7052 = vunpack.c.l.s8.bf16 %v6672
    %v7053 = vunpack.c.h.s8.bf16 %v6669
    %v7054 = vunpack.c.h.s8.bf16 %v6670
    %v7055 = vunpack.c.h.s8.bf16 %v6671
    %v7056 = vunpack.c.h.s8.bf16 %v6672
    %7057 = vmatprep.subr.bf16.mxu0 %v6674
    %7058 = vmatpush1.bf16.msra.mxu0 %v6673
    %7059 = vmatprep.subr.bf16.mxu0 %v6678
    %7060 = vmatpush1.bf16.msra.mxu0 %v6677
    %7061 = vmatprep.subr.bf16.mxu0 %v6682
    %7062 = vmatpush1.bf16.msra.mxu0 %v6681
    %7063 = vmatprep.subr.bf16.mxu0 %v6686
    %7064 = vmatpush1.bf16.msra.mxu0 %v6685
    %7065 = vmatprep.subr.bf16.mxu0 %v6690
    %7066 = vmatpush1.bf16.msra.mxu0 %v6689
    %7067 = vmatprep.subr.bf16.mxu0 %v6694
    %7068 = vmatpush1.bf16.msra.mxu0 %v6693
    %7069 = vmatprep.subr.bf16.mxu0 %v6698
    %7070 = vmatpush1.bf16.msra.mxu0 %v6697
    %7071 = vmatprep.subr.bf16.mxu0 %v6702
    %7072 = vmatpush1.bf16.msra.mxu0 %v6701
    %7073 = vmatprep.subr.bf16.mxu0 %v6706
    %7074 = vmatpush1.bf16.msra.mxu0 %v6705
    %7075 = vmatprep.subr.bf16.mxu0 %v6710
    %7076 = vmatpush1.bf16.msra.mxu0 %v6709
    %7077 = vmatprep.subr.bf16.mxu0 %v6714
    %7078 = vmatpush1.bf16.msra.mxu0 %v6713
    %7079 = vmatprep.subr.bf16.mxu0 %v6718
    %7080 = vmatpush1.bf16.msra.mxu0 %v6717
    %7081 = vmatprep.subr.bf16.mxu0 %v6722
    %7082 = vmatpush1.bf16.msra.mxu0 %v6721
    %7083 = vmatprep.subr.bf16.mxu0 %v6726
    %7084 = vmatpush1.bf16.msra.mxu0 %v6725
    %7085 = vmatprep.subr.bf16.mxu0 %v6730
    %7086 = vmatpush1.bf16.msra.mxu0 %v6729
    %7087 = vmatprep.subr.bf16.mxu0 %v6734
    %7088 = vmatpush1.bf16.msra.mxu0 %v6733
    %7089 = vmatprep.mubr.bf16.mxu0 %v6470
    %7090 = vmatmul.mubr.bf16.gmra.mrb[0].mxu0 %v6469
    %v7091 = vpop.f32.mrb[0].mxu0
    %v7092 = vadd.f32 0.0, %v7091
    %v7093 = vpop.f32.mrb[0].mxu0
    %v7094 = vadd.f32 0.0, %v7093
    %v7095 = vpop.f32.mrb[0].mxu0
    %v7096 = vadd.f32 0.0, %v7095
    %v7097 = vpop.f32.mrb[0].mxu0
    %v7098 = vadd.f32 0.0, %v7097
    %7099 = vdwg.mxu0
    %7100 = vmatprep.subr.bf16.mxu0 %v6738
    %7101 = vmatpush1.bf16.msra.mxu0 %v6737
    %7102 = vmatprep.subr.bf16.mxu0 %v6742
    %7103 = vmatpush1.bf16.msra.mxu0 %v6741
    %7104 = vmatprep.subr.bf16.mxu0 %v6746
    %7105 = vmatpush1.bf16.msra.mxu0 %v6745
    %7106 = vmatprep.subr.bf16.mxu0 %v6750
    %7107 = vmatpush1.bf16.msra.mxu0 %v6749
    %7108 = vmatprep.subr.bf16.mxu0 %v6754
    %7109 = vmatpush1.bf16.msra.mxu0 %v6753
    %7110 = vmatprep.subr.bf16.mxu0 %v6758
    %7111 = vmatpush1.bf16.msra.mxu0 %v6757
    %7112 = vmatprep.subr.bf16.mxu0 %v6762
    %7113 = vmatpush1.bf16.msra.mxu0 %v6761
    %7114 = vmatprep.subr.bf16.mxu0 %v6766
    %7115 = vmatpush1.bf16.msra.mxu0 %v6765
    %7116 = vmatprep.subr.bf16.mxu0 %v6770
    %7117 = vmatpush1.bf16.msra.mxu0 %v6769
    %7118 = vmatprep.subr.bf16.mxu0 %v6774
    %7119 = vmatpush1.bf16.msra.mxu0 %v6773
    %7120 = vmatprep.subr.bf16.mxu0 %v6778
    %7121 = vmatpush1.bf16.msra.mxu0 %v6777
    %7122 = vmatprep.subr.bf16.mxu0 %v6782
    %7123 = vmatpush1.bf16.msra.mxu0 %v6781
    %7124 = vmatprep.subr.bf16.mxu0 %v6786
    %7125 = vmatpush1.bf16.msra.mxu0 %v6785
    %7126 = vmatprep.subr.bf16.mxu0 %v6790
    %7127 = vmatpush1.bf16.msra.mxu0 %v6789
    %7128 = vmatprep.subr.bf16.mxu0 %v6794
    %7129 = vmatpush1.bf16.msra.mxu0 %v6793
    %7130 = vmatprep.subr.bf16.mxu0 %v6798
    %7131 = vmatpush1.bf16.msra.mxu0 %v6797
    %7132 = vmatprep.mubr.bf16.mxu0 %v6472
    %7133 = vmatmul.mubr.bf16.gmra.mrb[0].mxu0 %v6471
    %v7134 = vpop.f32.mrb[0].mxu0
    %v7135 = vadd.f32 %v7092, %v7134
    %v7136 = vpop.f32.mrb[0].mxu0
    %v7137 = vadd.f32 %v7094, %v7136
    %v7138 = vpop.f32.mrb[0].mxu0
    %v7139 = vadd.f32 %v7096, %v7138
    %v7140 = vpop.f32.mrb[0].mxu0
    %v7141 = vadd.f32 %v7098, %v7140
    %7142 = vdwg.mxu0
    %7143 = vmatprep.subr.bf16.mxu0 %v6802
    %7144 = vmatpush1.bf16.msra.mxu0 %v6801
    %7145 = vmatprep.subr.bf16.mxu0 %v6806
    %7146 = vmatpush1.bf16.msra.mxu0 %v6805
    %7147 = vmatprep.subr.bf16.mxu0 %v6810
    %7148 = vmatpush1.bf16.msra.mxu0 %v6809
    %7149 = vmatprep.subr.bf16.mxu0 %v6814
    %7150 = vmatpush1.bf16.msra.mxu0 %v6813
    %7151 = vmatprep.subr.bf16.mxu0 %v6818
    %7152 = vmatpush1.bf16.msra.mxu0 %v6817
    %7153 = vmatprep.subr.bf16.mxu0 %v6822
    %7154 = vmatpush1.bf16.msra.mxu0 %v6821
    %7155 = vmatprep.subr.bf16.mxu0 %v6826
    %7156 = vmatpush1.bf16.msra.mxu0 %v6825
    %7157 = vmatprep.subr.bf16.mxu0 %v6830
    %7158 = vmatpush1.bf16.msra.mxu0 %v6829
    %7159 = vmatprep.subr.bf16.mxu0 %v6834
    %7160 = vmatpush1.bf16.msra.mxu0 %v6833
    %7161 = vmatprep.subr.bf16.mxu0 %v6838
    %7162 = vmatpush1.bf16.msra.mxu0 %v6837
    %7163 = vmatprep.subr.bf16.mxu0 %v6842
    %7164 = vmatpush1.bf16.msra.mxu0 %v6841
    %7165 = vmatprep.subr.bf16.mxu0 %v6846
    %7166 = vmatpush1.bf16.msra.mxu0 %v6845
    %7167 = vmatprep.subr.bf16.mxu0 %v6850
    %7168 = vmatpush1.bf16.msra.mxu0 %v6849
    %7169 = vmatprep.subr.bf16.mxu0 %v6854
    %7170 = vmatpush1.bf16.msra.mxu0 %v6853
    %7171 = vmatprep.subr.bf16.mxu0 %v6858
    %7172 = vmatpush1.bf16.msra.mxu0 %v6857
    %7173 = vmatprep.subr.bf16.mxu0 %v6862
    %7174 = vmatpush1.bf16.msra.mxu0 %v6861
    %7175 = vmatprep.mubr.bf16.mxu0 %v6474
    %7176 = vmatmul.mubr.bf16.gmra.mrb[0].mxu0 %v6473
    %v7177 = vpop.f32.mrb[0].mxu0
    %v7178 = vadd.f32 %v7135, %v7177
    %v7179 = vpop.f32.mrb[0].mxu0
    %v7180 = vadd.f32 %v7137, %v7179
    %v7181 = vpop.f32.mrb[0].mxu0
    %v7182 = vadd.f32 %v7139, %v7181
    %v7183 = vpop.f32.mrb[0].mxu0
    %v7184 = vadd.f32 %v7141, %v7183
    %7185 = vdwg.mxu0
    %7186 = vmatprep.subr.bf16.mxu0 %v6866
    %7187 = vmatpush1.bf16.msra.mxu0 %v6865
    %7188 = vmatprep.subr.bf16.mxu0 %v6870
    %7189 = vmatpush1.bf16.msra.mxu0 %v6869
    %7190 = vmatprep.subr.bf16.mxu0 %v6874
    %7191 = vmatpush1.bf16.msra.mxu0 %v6873
    %7192 = vmatprep.subr.bf16.mxu0 %v6878
    %7193 = vmatpush1.bf16.msra.mxu0 %v6877
    %7194 = vmatprep.subr.bf16.mxu0 %v6882
    %7195 = vmatpush1.bf16.msra.mxu0 %v6881
    %7196 = vmatprep.subr.bf16.mxu0 %v6886
    %7197 = vmatpush1.bf16.msra.mxu0 %v6885
    %7198 = vmatprep.subr.bf16.mxu0 %v6890
    %7199 = vmatpush1.bf16.msra.mxu0 %v6889
    %7200 = vmatprep.subr.bf16.mxu0 %v6894
    %7201 = vmatpush1.bf16.msra.mxu0 %v6893
    %7202 = vmatprep.subr.bf16.mxu0 %v6898
    %7203 = vmatpush1.bf16.msra.mxu0 %v6897
    %7204 = vmatprep.subr.bf16.mxu0 %v6902
    %7205 = vmatpush1.bf16.msra.mxu0 %v6901
    %7206 = vmatprep.subr.bf16.mxu0 %v6906
    %7207 = vmatpush1.bf16.msra.mxu0 %v6905
    %7208 = vmatprep.subr.bf16.mxu0 %v6910
    %7209 = vmatpush1.bf16.msra.mxu0 %v6909
    %7210 = vmatprep.subr.bf16.mxu0 %v6914
    %7211 = vmatpush1.bf16.msra.mxu0 %v6913
    %7212 = vmatprep.subr.bf16.mxu0 %v6918
    %7213 = vmatpush1.bf16.msra.mxu0 %v6917
    %7214 = vmatprep.subr.bf16.mxu0 %v6922
    %7215 = vmatpush1.bf16.msra.mxu0 %v6921
    %7216 = vmatprep.subr.bf16.mxu0 %v6926
    %7217 = vmatpush1.bf16.msra.mxu0 %v6925
    %7218 = vmatprep.mubr.bf16.mxu0 %v6476
    %7219 = vmatmul.mubr.bf16.gmra.mrb[0].mxu0 %v6475
    %v7220 = vpop.f32.mrb[0].mxu0
    %v7221 = vadd.f32 %v7178, %v7220
    %v7222 = vpop.f32.mrb[0].mxu0
    %v7223 = vadd.f32 %v7180, %v7222
    %v7224 = vpop.f32.mrb[0].mxu0
    %v7225 = vadd.f32 %v7182, %v7224
    %v7226 = vpop.f32.mrb[0].mxu0
    %v7227 = vadd.f32 %v7184, %v7226
    %7228 = vdwg.mxu0
    %7229 = vmatprep.subr.bf16.mxu0 %v6930
    %7230 = vmatpush1.bf16.msra.mxu0 %v6929
    %7231 = vmatprep.subr.bf16.mxu0 %v6934
    %7232 = vmatpush1.bf16.msra.mxu0 %v6933
    %7233 = vmatprep.subr.bf16.mxu0 %v6938
    %7234 = vmatpush1.bf16.msra.mxu0 %v6937
    %7235 = vmatprep.subr.bf16.mxu0 %v6942
    %7236 = vmatpush1.bf16.msra.mxu0 %v6941
    %7237 = vmatprep.subr.bf16.mxu0 %v6946
    %7238 = vmatpush1.bf16.msra.mxu0 %v6945
    %7239 = vmatprep.subr.bf16.mxu0 %v6950
    %7240 = vmatpush1.bf16.msra.mxu0 %v6949
    %7241 = vmatprep.subr.bf16.mxu0 %v6954
    %7242 = vmatpush1.bf16.msra.mxu0 %v6953
    %7243 = vmatprep.subr.bf16.mxu0 %v6958
    %7244 = vmatpush1.bf16.msra.mxu0 %v6957
    %7245 = vmatprep.subr.bf16.mxu0 %v6962
    %7246 = vmatpush1.bf16.msra.mxu0 %v6961
    %7247 = vmatprep.subr.bf16.mxu0 %v6966
    %7248 = vmatpush1.bf16.msra.mxu0 %v6965
    %7249 = vmatprep.subr.bf16.mxu0 %v6970
    %7250 = vmatpush1.bf16.msra.mxu0 %v6969
    %7251 = vmatprep.subr.bf16.mxu0 %v6974
    %7252 = vmatpush1.bf16.msra.mxu0 %v6973
    %7253 = vmatprep.subr.bf16.mxu0 %v6978
    %7254 = vmatpush1.bf16.msra.mxu0 %v6977
    %7255 = vmatprep.subr.bf16.mxu0 %v6982
    %7256 = vmatpush1.bf16.msra.mxu0 %v6981
    %7257 = vmatprep.subr.bf16.mxu0 %v6986
    %7258 = vmatpush1.bf16.msra.mxu0 %v6985
    %7259 = vmatprep.subr.bf16.mxu0 %v6990
    %7260 = vmatpush1.bf16.msra.mxu0 %v6989
    %7261 = vmatprep.mubr.bf16.mxu0 %v6478
    %7262 = vmatmul.mubr.bf16.gmra.mrb[0].mxu0 %v6477
    %v7263 = vpop.f32.mrb[0].mxu0
    %v7264 = vadd.f32 %v7221, %v7263
    %v7265 = vpop.f32.mrb[0].mxu0
    %v7266 = vadd.f32 %v7223, %v7265
    %v7267 = vpop.f32.mrb[0].mxu0
    %v7268 = vadd.f32 %v7225, %v7267
    %v7269 = vpop.f32.mrb[0].mxu0
    %v7270 = vadd.f32 %v7227, %v7269
    %7271 = vdwg.mxu0
    %7272 = vmatprep.subr.bf16.mxu0 %v6994
    %7273 = vmatpush1.bf16.msra.mxu0 %v6993
    %7274 = vmatprep.subr.bf16.mxu0 %v6998
    %7275 = vmatpush1.bf16.msra.mxu0 %v6997
    %7276 = vmatprep.subr.bf16.mxu0 %v7002
    %7277 = vmatpush1.bf16.msra.mxu0 %v7001
    %7278 = vmatprep.subr.bf16.mxu0 %v7006
    %7279 = vmatpush1.bf16.msra.mxu0 %v7005
    %7280 = vmatprep.subr.bf16.mxu0 %v7010
    %7281 = vmatpush1.bf16.msra.mxu0 %v7009
    %7282 = vmatprep.subr.bf16.mxu0 %v7014
    %7283 = vmatpush1.bf16.msra.mxu0 %v7013
    %7284 = vmatprep.subr.bf16.mxu0 %v7018
    %7285 = vmatpush1.bf16.msra.mxu0 %v7017
    %7286 = vmatprep.subr.bf16.mxu0 %v7022
    %7287 = vmatpush1.bf16.msra.mxu0 %v7021
    %7288 = vmatprep.subr.bf16.mxu0 %v7026
    %7289 = vmatpush1.bf16.msra.mxu0 %v7025
    %7290 = vmatprep.subr.bf16.mxu0 %v7030
    %7291 = vmatpush1.bf16.msra.mxu0 %v7029
    %7292 = vmatprep.subr.bf16.mxu0 %v7034
    %7293 = vmatpush1.bf16.msra.mxu0 %v7033
    %7294 = vmatprep.subr.bf16.mxu0 %v7038
    %7295 = vmatpush1.bf16.msra.mxu0 %v7037
    %7296 = vmatprep.subr.bf16.mxu0 %v7042
    %7297 = vmatpush1.bf16.msra.mxu0 %v7041
    %7298 = vmatprep.subr.bf16.mxu0 %v7046
    %7299 = vmatpush1.bf16.msra.mxu0 %v7045
    %7300 = vmatprep.subr.bf16.mxu0 %v7050
    %7301 = vmatpush1.bf16.msra.mxu0 %v7049
    %7302 = vmatprep.subr.bf16.mxu0 %v7054
    %7303 = vmatpush1.bf16.msra.mxu0 %v7053
    %7304 = vmatprep.mubr.bf16.mxu0 %v6480
    %7305 = vmatmul.mubr.bf16.gmra.mrb[0].mxu0 %v6479
    %v7306 = vpop.f32.mrb[0].mxu0
    %v7307 = vadd.f32 %v7264, %v7306
    %v7308 = vpop.f32.mrb[0].mxu0
    %v7309 = vadd.f32 %v7266, %v7308
    %v7310 = vpop.f32.mrb[0].mxu0
    %v7311 = vadd.f32 %v7268, %v7310
    %v7312 = vpop.f32.mrb[0].mxu0
    %v7313 = vadd.f32 %v7270, %v7312
    %7314 = vdwg.mxu0
    %7315 = vmatprep.subr.bf16.mxu0 %v6676
    %7316 = vmatpush1.bf16.msra.mxu0 %v6675
    %7317 = vmatprep.subr.bf16.mxu0 %v6680
    %7318 = vmatpush1.bf16.msra.mxu0 %v6679
    %7319 = vmatprep.subr.bf16.mxu0 %v6684
    %7320 = vmatpush1.bf16.msra.mxu0 %v6683
    %7321 = vmatprep.subr.bf16.mxu0 %v6688
    %7322 = vmatpush1.bf16.msra.mxu0 %v6687
    %7323 = vmatprep.subr.bf16.mxu0 %v6692
    %7324 = vmatpush1.bf16.msra.mxu0 %v6691
    %7325 = vmatprep.subr.bf16.mxu0 %v6696
    %7326 = vmatpush1.bf16.msra.mxu0 %v6695
    %7327 = vmatprep.subr.bf16.mxu0 %v6700
    %7328 = vmatpush1.bf16.msra.mxu0 %v6699
    %7329 = vmatprep.subr.bf16.mxu0 %v6704
    %7330 = vmatpush1.bf16.msra.mxu0 %v6703
    %7331 = vmatprep.subr.bf16.mxu0 %v6708
    %7332 = vmatpush1.bf16.msra.mxu0 %v6707
    %7333 = vmatprep.subr.bf16.mxu0 %v6712
    %7334 = vmatpush1.bf16.msra.mxu0 %v6711
    %7335 = vmatprep.subr.bf16.mxu0 %v6716
    %7336 = vmatpush1.bf16.msra.mxu0 %v6715
    %7337 = vmatprep.subr.bf16.mxu0 %v6720
    %7338 = vmatpush1.bf16.msra.mxu0 %v6719
    %7339 = vmatprep.subr.bf16.mxu0 %v6724
    %7340 = vmatpush1.bf16.msra.mxu0 %v6723
    %7341 = vmatprep.subr.bf16.mxu0 %v6728
    %7342 = vmatpush1.bf16.msra.mxu0 %v6727
    %7343 = vmatprep.subr.bf16.mxu0 %v6732
    %7344 = vmatpush1.bf16.msra.mxu0 %v6731
    %7345 = vmatprep.subr.bf16.mxu0 %v6736
    %7346 = vmatpush1.bf16.msra.mxu0 %v6735
    %7347 = vmatprep.mubr.bf16.mxu0 %v6470
    %7348 = vmatmul.mubr.bf16.gmra.mrb[0].mxu0 %v6469
    %v7349 = vpop.f32.mrb[0].mxu0
    %v7350 = vadd.f32 0.0, %v7349
    %v7351 = vpop.f32.mrb[0].mxu0
    %v7352 = vadd.f32 0.0, %v7351
    %v7353 = vpop.f32.mrb[0].mxu0
    %v7354 = vadd.f32 0.0, %v7353
    %v7355 = vpop.f32.mrb[0].mxu0
    %v7356 = vadd.f32 0.0, %v7355
    %7357 = vdwg.mxu0
    %7358 = vmatprep.subr.bf16.mxu0 %v6740
    %7359 = vmatpush1.bf16.msra.mxu0 %v6739
    %7360 = vmatprep.subr.bf16.mxu0 %v6744
    %7361 = vmatpush1.bf16.msra.mxu0 %v6743
    %7362 = vmatprep.subr.bf16.mxu0 %v6748
    %7363 = vmatpush1.bf16.msra.mxu0 %v6747
    %7364 = vmatprep.subr.bf16.mxu0 %v6752
    %7365 = vmatpush1.bf16.msra.mxu0 %v6751
    %7366 = vmatprep.subr.bf16.mxu0 %v6756
    %7367 = vmatpush1.bf16.msra.mxu0 %v6755
    %7368 = vmatprep.subr.bf16.mxu0 %v6760
    %7369 = vmatpush1.bf16.msra.mxu0 %v6759
    %7370 = vmatprep.subr.bf16.mxu0 %v6764
    %7371 = vmatpush1.bf16.msra.mxu0 %v6763
    %7372 = vmatprep.subr.bf16.mxu0 %v6768
    %7373 = vmatpush1.bf16.msra.mxu0 %v6767
    %7374 = vmatprep.subr.bf16.mxu0 %v6772
    %7375 = vmatpush1.bf16.msra.mxu0 %v6771
    %7376 = vmatprep.subr.bf16.mxu0 %v6776
    %7377 = vmatpush1.bf16.msra.mxu0 %v6775
    %7378 = vmatprep.subr.bf16.mxu0 %v6780
    %7379 = vmatpush1.bf16.msra.mxu0 %v6779
    %7380 = vmatprep.subr.bf16.mxu0 %v6784
    %7381 = vmatpush1.bf16.msra.mxu0 %v6783
    %7382 = vmatprep.subr.bf16.mxu0 %v6788
    %7383 = vmatpush1.bf16.msra.mxu0 %v6787
    %7384 = vmatprep.subr.bf16.mxu0 %v6792
    %7385 = vmatpush1.bf16.msra.mxu0 %v6791
    %7386 = vmatprep.subr.bf16.mxu0 %v6796
    %7387 = vmatpush1.bf16.msra.mxu0 %v6795
    %7388 = vmatprep.subr.bf16.mxu0 %v6800
    %7389 = vmatpush1.bf16.msra.mxu0 %v6799
    %7390 = vmatprep.mubr.bf16.mxu0 %v6472
    %7391 = vmatmul.mubr.bf16.gmra.mrb[0].mxu0 %v6471
    %v7392 = vpop.f32.mrb[0].mxu0
    %v7393 = vadd.f32 %v7350, %v7392
    %v7394 = vpop.f32.mrb[0].mxu0
    %v7395 = vadd.f32 %v7352, %v7394
    %v7396 = vpop.f32.mrb[0].mxu0
    %v7397 = vadd.f32 %v7354, %v7396
    %v7398 = vpop.f32.mrb[0].mxu0
    %v7399 = vadd.f32 %v7356, %v7398
    %7400 = vdwg.mxu0
    %7401 = vmatprep.subr.bf16.mxu0 %v6804
    %7402 = vmatpush1.bf16.msra.mxu0 %v6803
    %7403 = vmatprep.subr.bf16.mxu0 %v6808
    %7404 = vmatpush1.bf16.msra.mxu0 %v6807
    %7405 = vmatprep.subr.bf16.mxu0 %v6812
    %7406 = vmatpush1.bf16.msra.mxu0 %v6811
    %7407 = vmatprep.subr.bf16.mxu0 %v6816
    %7408 = vmatpush1.bf16.msra.mxu0 %v6815
    %7409 = vmatprep.subr.bf16.mxu0 %v6820
    %7410 = vmatpush1.bf16.msra.mxu0 %v6819
    %7411 = vmatprep.subr.bf16.mxu0 %v6824
    %7412 = vmatpush1.bf16.msra.mxu0 %v6823
    %7413 = vmatprep.subr.bf16.mxu0 %v6828
    %7414 = vmatpush1.bf16.msra.mxu0 %v6827
    %7415 = vmatprep.subr.bf16.mxu0 %v6832
    %7416 = vmatpush1.bf16.msra.mxu0 %v6831
    %7417 = vmatprep.subr.bf16.mxu0 %v6836
    %7418 = vmatpush1.bf16.msra.mxu0 %v6835
    %7419 = vmatprep.subr.bf16.mxu0 %v6840
    %7420 = vmatpush1.bf16.msra.mxu0 %v6839
    %7421 = vmatprep.subr.bf16.mxu0 %v6844
    %7422 = vmatpush1.bf16.msra.mxu0 %v6843
    %7423 = vmatprep.subr.bf16.mxu0 %v6848
    %7424 = vmatpush1.bf16.msra.mxu0 %v6847
    %7425 = vmatprep.subr.bf16.mxu0 %v6852
    %7426 = vmatpush1.bf16.msra.mxu0 %v6851
    %7427 = vmatprep.subr.bf16.mxu0 %v6856
    %7428 = vmatpush1.bf16.msra.mxu0 %v6855
    %7429 = vmatprep.subr.bf16.mxu0 %v6860
    %7430 = vmatpush1.bf16.msra.mxu0 %v6859
    %7431 = vmatprep.subr.bf16.mxu0 %v6864
    %7432 = vmatpush1.bf16.msra.mxu0 %v6863
    %7433 = vmatprep.mubr.bf16.mxu0 %v6474
    %7434 = vmatmul.mubr.bf16.gmra.mrb[0].mxu0 %v6473
    %v7435 = vpop.f32.mrb[0].mxu0
    %v7436 = vadd.f32 %v7393, %v7435
    %v7437 = vpop.f32.mrb[0].mxu0
    %v7438 = vadd.f32 %v7395, %v7437
    %v7439 = vpop.f32.mrb[0].mxu0
    %v7440 = vadd.f32 %v7397, %v7439
    %v7441 = vpop.f32.mrb[0].mxu0
    %v7442 = vadd.f32 %v7399, %v7441
    %7443 = vdwg.mxu0
    %7444 = vmatprep.subr.bf16.mxu0 %v6868
    %7445 = vmatpush1.bf16.msra.mxu0 %v6867
    %7446 = vmatprep.subr.bf16.mxu0 %v6872
    %7447 = vmatpush1.bf16.msra.mxu0 %v6871
    %7448 = vmatprep.subr.bf16.mxu0 %v6876
    %7449 = vmatpush1.bf16.msra.mxu0 %v6875
    %7450 = vmatprep.subr.bf16.mxu0 %v6880
    %7451 = vmatpush1.bf16.msra.mxu0 %v6879
    %7452 = vmatprep.subr.bf16.mxu0 %v6884
    %7453 = vmatpush1.bf16.msra.mxu0 %v6883
    %7454 = vmatprep.subr.bf16.mxu0 %v6888
    %7455 = vmatpush1.bf16.msra.mxu0 %v6887
    %7456 = vmatprep.subr.bf16.mxu0 %v6892
    %7457 = vmatpush1.bf16.msra.mxu0 %v6891
    %7458 = vmatprep.subr.bf16.mxu0 %v6896
    %7459 = vmatpush1.bf16.msra.mxu0 %v6895
    %7460 = vmatprep.subr.bf16.mxu0 %v6900
    %7461 = vmatpush1.bf16.msra.mxu0 %v6899
    %7462 = vmatprep.subr.bf16.mxu0 %v6904
    %7463 = vmatpush1.bf16.msra.mxu0 %v6903
    %7464 = vmatprep.subr.bf16.mxu0 %v6908
    %7465 = vmatpush1.bf16.msra.mxu0 %v6907
    %7466 = vmatprep.subr.bf16.mxu0 %v6912
    %7467 = vmatpush1.bf16.msra.mxu0 %v6911
    %7468 = vmatprep.subr.bf16.mxu0 %v6916
    %7469 = vmatpush1.bf16.msra.mxu0 %v6915
    %7470 = vmatprep.subr.bf16.mxu0 %v6920
    %7471 = vmatpush1.bf16.msra.mxu0 %v6919
    %7472 = vmatprep.subr.bf16.mxu0 %v6924
    %7473 = vmatpush1.bf16.msra.mxu0 %v6923
    %7474 = vmatprep.subr.bf16.mxu0 %v6928
    %7475 = vmatpush1.bf16.msra.mxu0 %v6927
    %7476 = vmatprep.mubr.bf16.mxu0 %v6476
    %7477 = vmatmul.mubr.bf16.gmra.mrb[0].mxu0 %v6475
    %v7478 = vpop.f32.mrb[0].mxu0
    %v7479 = vadd.f32 %v7436, %v7478
    %v7480 = vpop.f32.mrb[0].mxu0
    %v7481 = vadd.f32 %v7438, %v7480
    %v7482 = vpop.f32.mrb[0].mxu0
    %v7483 = vadd.f32 %v7440, %v7482
    %v7484 = vpop.f32.mrb[0].mxu0
    %v7485 = vadd.f32 %v7442, %v7484
    %7486 = vdwg.mxu0
    %7487 = vmatprep.subr.bf16.mxu0 %v6932
    %7488 = vmatpush1.bf16.msra.mxu0 %v6931
    %7489 = vmatprep.subr.bf16.mxu0 %v6936
    %7490 = vmatpush1.bf16.msra.mxu0 %v6935
    %7491 = vmatprep.subr.bf16.mxu0 %v6940
    %7492 = vmatpush1.bf16.msra.mxu0 %v6939
    %7493 = vmatprep.subr.bf16.mxu0 %v6944
    %7494 = vmatpush1.bf16.msra.mxu0 %v6943
    %7495 = vmatprep.subr.bf16.mxu0 %v6948
    %7496 = vmatpush1.bf16.msra.mxu0 %v6947
    %7497 = vmatprep.subr.bf16.mxu0 %v6952
    %7498 = vmatpush1.bf16.msra.mxu0 %v6951
    %7499 = vmatprep.subr.bf16.mxu0 %v6956
    %7500 = vmatpush1.bf16.msra.mxu0 %v6955
    %7501 = vmatprep.subr.bf16.mxu0 %v6960
    %7502 = vmatpush1.bf16.msra.mxu0 %v6959
    %7503 = vmatprep.subr.bf16.mxu0 %v6964
    %7504 = vmatpush1.bf16.msra.mxu0 %v6963
    %7505 = vmatprep.subr.bf16.mxu0 %v6968
    %7506 = vmatpush1.bf16.msra.mxu0 %v6967
    %7507 = vmatprep.subr.bf16.mxu0 %v6972
    %7508 = vmatpush1.bf16.msra.mxu0 %v6971
    %7509 = vmatprep.subr.bf16.mxu0 %v6976
    %7510 = vmatpush1.bf16.msra.mxu0 %v6975
    %7511 = vmatprep.subr.bf16.mxu0 %v6980
    %7512 = vmatpush1.bf16.msra.mxu0 %v6979
    %7513 = vmatprep.subr.bf16.mxu0 %v6984
    %7514 = vmatpush1.bf16.msra.mxu0 %v6983
    %7515 = vmatprep.subr.bf16.mxu0 %v6988
    %7516 = vmatpush1.bf16.msra.mxu0 %v6987
    %7517 = vmatprep.subr.bf16.mxu0 %v6992
    %7518 = vmatpush1.bf16.msra.mxu0 %v6991
    %7519 = vmatprep.mubr.bf16.mxu0 %v6478
    %7520 = vmatmul.mubr.bf16.gmra.mrb[0].mxu0 %v6477
    %v7521 = vpop.f32.mrb[0].mxu0
    %v7522 = vadd.f32 %v7479, %v7521
    %v7523 = vpop.f32.mrb[0].mxu0
    %v7524 = vadd.f32 %v7481, %v7523
    %v7525 = vpop.f32.mrb[0].mxu0
    %v7526 = vadd.f32 %v7483, %v7525
    %v7527 = vpop.f32.mrb[0].mxu0
    %v7528 = vadd.f32 %v7485, %v7527
    %7529 = vdwg.mxu0
    %7530 = vmatprep.subr.bf16.mxu0 %v6996
    %7531 = vmatpush1.bf16.msra.mxu0 %v6995
    %7532 = vmatprep.subr.bf16.mxu0 %v7000
    %7533 = vmatpush1.bf16.msra.mxu0 %v6999
    %7534 = vmatprep.subr.bf16.mxu0 %v7004
    %7535 = vmatpush1.bf16.msra.mxu0 %v7003
    %7536 = vmatprep.subr.bf16.mxu0 %v7008
    %7537 = vmatpush1.bf16.msra.mxu0 %v7007
    %7538 = vmatprep.subr.bf16.mxu0 %v7012
    %7539 = vmatpush1.bf16.msra.mxu0 %v7011
    %7540 = vmatprep.subr.bf16.mxu0 %v7016
    %7541 = vmatpush1.bf16.msra.mxu0 %v7015
    %7542 = vmatprep.subr.bf16.mxu0 %v7020
    %7543 = vmatpush1.bf16.msra.mxu0 %v7019
    %7544 = vmatprep.subr.bf16.mxu0 %v7024
    %7545 = vmatpush1.bf16.msra.mxu0 %v7023
    %7546 = vmatprep.subr.bf16.mxu0 %v7028
    %7547 = vmatpush1.bf16.msra.mxu0 %v7027
    %7548 = vmatprep.subr.bf16.mxu0 %v7032
    %7549 = vmatpush1.bf16.msra.mxu0 %v7031
    %7550 = vmatprep.subr.bf16.mxu0 %v7036
    %7551 = vmatpush1.bf16.msra.mxu0 %v7035
    %7552 = vmatprep.subr.bf16.mxu0 %v7040
    %7553 = vmatpush1.bf16.msra.mxu0 %v7039
    %7554 = vmatprep.subr.bf16.mxu0 %v7044
    %7555 = vmatpush1.bf16.msra.mxu0 %v7043
    %7556 = vmatprep.subr.bf16.mxu0 %v7048
    %7557 = vmatpush1.bf16.msra.mxu0 %v7047
    %7558 = vmatprep.subr.bf16.mxu0 %v7052
    %7559 = vmatpush1.bf16.msra.mxu0 %v7051
    %7560 = vmatprep.subr.bf16.mxu0 %v7056
    %7561 = vmatpush1.bf16.msra.mxu0 %v7055
    %7562 = vmatprep.mubr.bf16.mxu0 %v6480
    %7563 = vmatmul.mubr.bf16.gmra.mrb[0].mxu0 %v6479
    %v7564 = vpop.f32.mrb[0].mxu0
    %v7565 = vadd.f32 %v7522, %v7564
    %v7566 = vpop.f32.mrb[0].mxu0
    %v7567 = vadd.f32 %v7524, %v7566
    %v7568 = vpop.f32.mrb[0].mxu0
    %v7569 = vadd.f32 %v7526, %v7568
    %v7570 = vpop.f32.mrb[0].mxu0
    %v7571 = vadd.f32 %v7528, %v7570
    %7572 = vdwg.mxu0
    %s7573 = scalar_lea.vmem [#allocation10], 7
    %v7574 = vld [vmem:[%s7573] ss:$8 sm:$0xf]
    %v7576 = vlaneseq
    %v7577 = vshrl.u32 %v7576, 7
    %v7578 = vsub.s32 0, %v7577
    %v7579 = vrot.slane %v7574, %v7578
    %v7580 = vlaneseq
    %v7581 = vshrl.u32 %v7580, 7
    %v7582 = vsub.s32 1, %v7581
    %v7583 = vrot.slane %v7574, %v7582
    %v7584 = vlaneseq
    %v7585 = vshrl.u32 %v7584, 7
    %v7586 = vsub.s32 2, %v7585
    %v7587 = vrot.slane %v7574, %v7586
    %v7588 = vlaneseq
    %v7589 = vshrl.u32 %v7588, 7
    %v7590 = vsub.s32 3, %v7589
    %v7591 = vrot.slane %v7574, %v7590
    %v7596 = vmul.f32 %v7307, %v7579
    %v7597 = vmul.f32 %v7309, %v7583
    %v7598 = vmul.f32 %v7565, %v7587
    %v7599 = vmul.f32 %v7567, %v7591
    %v7600 = vmul.f32 %v7311, %v7579
    %v7601 = vmul.f32 %v7313, %v7583
    %v7602 = vmul.f32 %v7569, %v7587
    %v7603 = vmul.f32 %v7571, %v7591
    %s7604 = scalar_lea.vmem [#allocation10], 2
    %v7605 = vld [vmem:[%s7604] ss:$8 sm:$0xf]
    %v7607 = vlaneseq
    %v7608 = vshrl.u32 %v7607, 7
    %v7609 = vsub.s32 0, %v7608
    %v7610 = vrot.slane %v7605, %v7609
    %v7611 = vlaneseq
    %v7612 = vshrl.u32 %v7611, 7
    %v7613 = vsub.s32 1, %v7612
    %v7614 = vrot.slane %v7605, %v7613
    %v7615 = vlaneseq
    %v7616 = vshrl.u32 %v7615, 7
    %v7617 = vsub.s32 2, %v7616
    %v7618 = vrot.slane %v7605, %v7617
    %v7619 = vlaneseq
    %v7620 = vshrl.u32 %v7619, 7
    %v7621 = vsub.s32 3, %v7620
    %v7622 = vrot.slane %v7605, %v7621
    %v7627 = vadd.f32 %v7596, %v7610
    %v7628 = vadd.f32 %v7597, %v7614
    %v7629 = vadd.f32 %v7598, %v7618
    %v7630 = vadd.f32 %v7599, %v7622
    %v7631 = vadd.f32 %v7600, %v7610
    %v7632 = vadd.f32 %v7601, %v7614
    %v7633 = vadd.f32 %v7602, %v7618
    %v7634 = vadd.f32 %v7603, %v7622
    %v7635 = vand.u32 2147483647, %v7627
    %v7636 = vand.u32 2147483647, %v7628
    %v7637 = vand.u32 2147483647, %v7629
    %v7638 = vand.u32 2147483647, %v7630
    %v7639 = vand.u32 2147483647, %v7631
    %v7640 = vand.u32 2147483647, %v7632
    %v7641 = vand.u32 2147483647, %v7633
    %v7642 = vand.u32 2147483647, %v7634
    %vm7643 = vcmp.lt.f32.partialorder %v7635, 0.01
    %vm7644 = vcmp.lt.f32.partialorder %v7636, 0.01
    %vm7645 = vcmp.lt.f32.partialorder %v7637, 0.01
    %vm7646 = vcmp.lt.f32.partialorder %v7638, 0.01
    %vm7647 = vcmp.lt.f32.partialorder %v7639, 0.01
    %vm7648 = vcmp.lt.f32.partialorder %v7640, 0.01
    %vm7649 = vcmp.lt.f32.partialorder %v7641, 0.01
    %vm7650 = vcmp.lt.f32.partialorder %v7642, 0.01
    %v7651 = vmul.f32 %v7627, 0.16666667
    %v7652 = vmul.f32 %v7628, 0.16666667
    %v7653 = vmul.f32 %v7629, 0.16666667
    %v7654 = vmul.f32 %v7630, 0.16666667
    %v7655 = vmul.f32 %v7631, 0.16666667
    %v7656 = vmul.f32 %v7632, 0.16666667
    %v7657 = vmul.f32 %v7633, 0.16666667
    %v7658 = vmul.f32 %v7634, 0.16666667
    %v7659 = vadd.f32 %v7651, 0.5
    %v7660 = vadd.f32 %v7652, 0.5
    %v7661 = vadd.f32 %v7653, 0.5
    %v7662 = vadd.f32 %v7654, 0.5
    %v7663 = vadd.f32 %v7655, 0.5
    %v7664 = vadd.f32 %v7656, 0.5
    %v7665 = vadd.f32 %v7657, 0.5
    %v7666 = vadd.f32 %v7658, 0.5
    %v7667 = vmul.f32 %v7627, %v7659
    %v7668 = vmul.f32 %v7628, %v7660
    %v7669 = vmul.f32 %v7629, %v7661
    %v7670 = vmul.f32 %v7630, %v7662
    %v7671 = vmul.f32 %v7631, %v7663
    %v7672 = vmul.f32 %v7632, %v7664
    %v7673 = vmul.f32 %v7633, %v7665
    %v7674 = vmul.f32 %v7634, %v7666
    %v7675 = vadd.f32 %v7667, 1.0
    %v7676 = vadd.f32 %v7668, 1.0
    %v7677 = vadd.f32 %v7669, 1.0
    %v7678 = vadd.f32 %v7670, 1.0
    %v7679 = vadd.f32 %v7671, 1.0
    %v7680 = vadd.f32 %v7672, 1.0
    %v7681 = vadd.f32 %v7673, 1.0
    %v7682 = vadd.f32 %v7674, 1.0
    %v7683 = vmul.f32 %v7627, %v7675
    %v7684 = vmul.f32 %v7628, %v7676
    %v7685 = vmul.f32 %v7629, %v7677
    %v7686 = vmul.f32 %v7630, %v7678
    %v7687 = vmul.f32 %v7631, %v7679
    %v7688 = vmul.f32 %v7632, %v7680
    %v7689 = vmul.f32 %v7633, %v7681
    %v7690 = vmul.f32 %v7634, %v7682
    %v7691 = vmul.f32 %v7627, 1.442695
    %v7692 = vpow.pop %v7691
    %v7693 = vmul.f32 %v7628, 1.442695
    %v7694 = vpow.pop %v7693
    %v7695 = vmul.f32 %v7629, 1.442695
    %v7696 = vpow.pop %v7695
    %v7697 = vmul.f32 %v7630, 1.442695
    %v7698 = vpow.pop %v7697
    %v7699 = vmul.f32 %v7631, 1.442695
    %v7700 = vpow.pop %v7699
    %v7701 = vmul.f32 %v7632, 1.442695
    %v7702 = vpow.pop %v7701
    %v7703 = vmul.f32 %v7633, 1.442695
    %v7704 = vpow.pop %v7703
    %v7705 = vmul.f32 %v7634, 1.442695
    %v7706 = vpow.pop %v7705
    %v7707 = vsub.f32 %v7692, 1.0
    %v7708 = vsub.f32 %v7694, 1.0
    %v7709 = vsub.f32 %v7696, 1.0
    %v7710 = vsub.f32 %v7698, 1.0
    %v7711 = vsub.f32 %v7700, 1.0
    %v7712 = vsub.f32 %v7702, 1.0
    %v7713 = vsub.f32 %v7704, 1.0
    %v7714 = vsub.f32 %v7706, 1.0
    %v7715 = vsel %vm7643, %v7683, %v7707
    %v7716 = vsel %vm7644, %v7684, %v7708
    %v7717 = vsel %vm7645, %v7685, %v7709
    %v7718 = vsel %vm7646, %v7686, %v7710
    %v7719 = vsel %vm7647, %v7687, %v7711
    %v7720 = vsel %vm7648, %v7688, %v7712
    %v7721 = vsel %vm7649, %v7689, %v7713
    %v7722 = vsel %vm7650, %v7690, %v7714
    %vm7723 = vcmp.gt.f32.partialorder %v7627, 0.0
    %vm7724 = vcmp.gt.f32.partialorder %v7628, 0.0
    %vm7725 = vcmp.gt.f32.partialorder %v7629, 0.0
    %vm7726 = vcmp.gt.f32.partialorder %v7630, 0.0
    %vm7727 = vcmp.gt.f32.partialorder %v7631, 0.0
    %vm7728 = vcmp.gt.f32.partialorder %v7632, 0.0
    %vm7729 = vcmp.gt.f32.partialorder %v7633, 0.0
    %vm7730 = vcmp.gt.f32.partialorder %v7634, 0.0
    %v7731 = vsel %vm7723, %v7627, %v7715
    %v7732 = vsel %vm7724, %v7628, %v7716
    %v7733 = vsel %vm7725, %v7629, %v7717
    %v7734 = vsel %vm7726, %v7630, %v7718
    %v7735 = vsel %vm7727, %v7631, %v7719
    %v7736 = vsel %vm7728, %v7632, %v7720
    %v7737 = vsel %vm7729, %v7633, %v7721
    %v7738 = vsel %vm7730, %v7634, %v7722
    %v7739 = vpack.c.bf16 %v7735, %v7731
    %v7740 = vpack.c.bf16 %v7736, %v7732
    %v7741 = vpack.c.bf16 %v7737, %v7733
    %v7742 = vpack.c.bf16 %v7738, %v7734
    %v7743 = vld [vmem:[#allocation7] sm:$0xf]
    %v7744 = vld [vmem:[#allocation7 + $0x4] sm:$0xf]
    %v7745 = vld [vmem:[#allocation7 + $0x8] sm:$0xf]
    %v7746 = vld [vmem:[#allocation7 + $0xc] sm:$0xf]
    %v7747 = vld [vmem:[#allocation7 + $0x10] sm:$0xf]
    %v7748 = vld [vmem:[#allocation7 + $0x14] sm:$0xf]
    %v7749 = vld [vmem:[#allocation7 + $0x18] sm:$0xf]
    %v7750 = vld [vmem:[#allocation7 + $0x1c] sm:$0xf]
    %v7751 = vld [vmem:[#allocation7 + $0x20] sm:$0xf]
    %v7752 = vld [vmem:[#allocation7 + $0x24] sm:$0xf]
    %v7753 = vld [vmem:[#allocation7 + $0x28] sm:$0xf]
    %v7754 = vld [vmem:[#allocation7 + $0x2c] sm:$0xf]
    %v7755 = vld [vmem:[#allocation7 + $0x30] sm:$0xf]
    %v7756 = vld [vmem:[#allocation7 + $0x34] sm:$0xf]
    %v7757 = vld [vmem:[#allocation7 + $0x38] sm:$0xf]
    %v7758 = vld [vmem:[#allocation7 + $0x3c] sm:$0xf]
    %v7759 = vld [vmem:[#allocation7 + $0x40] sm:$0xf]
    %v7760 = vld [vmem:[#allocation7 + $0x44] sm:$0xf]
    %v7761 = vld [vmem:[#allocation7 + $0x48] sm:$0xf]
    %v7762 = vld [vmem:[#allocation7 + $0x4c] sm:$0xf]
    %v7763 = vld [vmem:[#allocation7 + $0x50] sm:$0xf]
    %v7764 = vld [vmem:[#allocation7 + $0x54] sm:$0xf]
    %v7765 = vld [vmem:[#allocation7 + $0x58] sm:$0xf]
    %v7766 = vld [vmem:[#allocation7 + $0x5c] sm:$0xf]
    %v7767 = vld [vmem:[#allocation7 + $0x60] sm:$0xf]
    %v7768 = vld [vmem:[#allocation7 + $0x64] sm:$0xf]
    %v7769 = vld [vmem:[#allocation7 + $0x68] sm:$0xf]
    %v7770 = vld [vmem:[#allocation7 + $0x6c] sm:$0xf]
    %v7771 = vld [vmem:[#allocation7 + $0x70] sm:$0xf]
    %v7772 = vld [vmem:[#allocation7 + $0x74] sm:$0xf]
    %v7773 = vld [vmem:[#allocation7 + $0x78] sm:$0xf]
    %v7774 = vld [vmem:[#allocation7 + $0x7c] sm:$0xf]
    %v7775 = vld [vmem:[#allocation7 + $0x80] sm:$0xf]
    %v7776 = vld [vmem:[#allocation7 + $0x84] sm:$0xf]
    %v7777 = vld [vmem:[#allocation7 + $0x88] sm:$0xf]
    %v7778 = vld [vmem:[#allocation7 + $0x8c] sm:$0xf]
    %v7779 = vld [vmem:[#allocation7 + $0x90] sm:$0xf]
    %v7780 = vld [vmem:[#allocation7 + $0x94] sm:$0xf]
    %v7781 = vld [vmem:[#allocation7 + $0x98] sm:$0xf]
    %v7782 = vld [vmem:[#allocation7 + $0x9c] sm:$0xf]
    %v7783 = vld [vmem:[#allocation7 + $0xa0] sm:$0xf]
    %v7784 = vld [vmem:[#allocation7 + $0xa4] sm:$0xf]
    %v7785 = vld [vmem:[#allocation7 + $0xa8] sm:$0xf]
    %v7786 = vld [vmem:[#allocation7 + $0xac] sm:$0xf]
    %v7787 = vld [vmem:[#allocation7 + $0xb0] sm:$0xf]
    %v7788 = vld [vmem:[#allocation7 + $0xb4] sm:$0xf]
    %v7789 = vld [vmem:[#allocation7 + $0xb8] sm:$0xf]
    %v7790 = vld [vmem:[#allocation7 + $0xbc] sm:$0xf]
    %v7791 = vld [vmem:[#allocation7 + $0xc0] sm:$0xf]
    %v7792 = vld [vmem:[#allocation7 + $0xc4] sm:$0xf]
    %v7793 = vld [vmem:[#allocation7 + $0xc8] sm:$0xf]
    %v7794 = vld [vmem:[#allocation7 + $0xcc] sm:$0xf]
    %v7795 = vld [vmem:[#allocation7 + $0xd0] sm:$0xf]
    %v7796 = vld [vmem:[#allocation7 + $0xd4] sm:$0xf]
    %v7797 = vld [vmem:[#allocation7 + $0xd8] sm:$0xf]
    %v7798 = vld [vmem:[#allocation7 + $0xdc] sm:$0xf]
    %v7799 = vld [vmem:[#allocation7 + $0xe0] sm:$0xf]
    %v7800 = vld [vmem:[#allocation7 + $0xe4] sm:$0xf]
    %v7801 = vld [vmem:[#allocation7 + $0xe8] sm:$0xf]
    %v7802 = vld [vmem:[#allocation7 + $0xec] sm:$0xf]
    %v7803 = vld [vmem:[#allocation7 + $0xf0] sm:$0xf]
    %v7804 = vld [vmem:[#allocation7 + $0xf4] sm:$0xf]
    %v7805 = vld [vmem:[#allocation7 + $0xf8] sm:$0xf]
    %v7806 = vld [vmem:[#allocation7 + $0xfc] sm:$0xf]
    %v7871 = vunpack.c.l.b16 %v7743
    %v7872 = vunpack.c.l.b16 %v7744
    %v7873 = vunpack.c.l.b16 %v7745
    %v7874 = vunpack.c.l.b16 %v7746
    %v7875 = vunpack.c.l.b16 %v7747
    %v7876 = vunpack.c.l.b16 %v7748
    %v7877 = vunpack.c.l.b16 %v7749
    %v7878 = vunpack.c.l.b16 %v7750
    %v7879 = vunpack.c.l.b16 %v7751
    %v7880 = vunpack.c.l.b16 %v7752
    %v7881 = vunpack.c.l.b16 %v7753
    %v7882 = vunpack.c.l.b16 %v7754
    %v7883 = vunpack.c.l.b16 %v7755
    %v7884 = vunpack.c.l.b16 %v7756
    %v7885 = vunpack.c.l.b16 %v7757
    %v7886 = vunpack.c.l.b16 %v7758
    %v7887 = vunpack.c.l.b16 %v7759
    %v7888 = vunpack.c.l.b16 %v7760
    %v7889 = vunpack.c.l.b16 %v7761
    %v7890 = vunpack.c.l.b16 %v7762
    %v7891 = vunpack.c.l.b16 %v7763
    %v7892 = vunpack.c.l.b16 %v7764
    %v7893 = vunpack.c.l.b16 %v7765
    %v7894 = vunpack.c.l.b16 %v7766
    %v7895 = vunpack.c.l.b16 %v7767
    %v7896 = vunpack.c.l.b16 %v7768
    %v7897 = vunpack.c.l.b16 %v7769
    %v7898 = vunpack.c.l.b16 %v7770
    %v7899 = vunpack.c.l.b16 %v7771
    %v7900 = vunpack.c.l.b16 %v7772
    %v7901 = vunpack.c.l.b16 %v7773
    %v7902 = vunpack.c.l.b16 %v7774
    %v7903 = vunpack.c.l.b16 %v7775
    %v7904 = vunpack.c.l.b16 %v7776
    %v7905 = vunpack.c.l.b16 %v7777
    %v7906 = vunpack.c.l.b16 %v7778
    %v7907 = vunpack.c.l.b16 %v7779
    %v7908 = vunpack.c.l.b16 %v7780
    %v7909 = vunpack.c.l.b16 %v7781
    %v7910 = vunpack.c.l.b16 %v7782
    %v7911 = vunpack.c.l.b16 %v7783
    %v7912 = vunpack.c.l.b16 %v7784
    %v7913 = vunpack.c.l.b16 %v7785
    %v7914 = vunpack.c.l.b16 %v7786
    %v7915 = vunpack.c.l.b16 %v7787
    %v7916 = vunpack.c.l.b16 %v7788
    %v7917 = vunpack.c.l.b16 %v7789
    %v7918 = vunpack.c.l.b16 %v7790
    %v7919 = vunpack.c.l.b16 %v7791
    %v7920 = vunpack.c.l.b16 %v7792
    %v7921 = vunpack.c.l.b16 %v7793
    %v7922 = vunpack.c.l.b16 %v7794
    %v7923 = vunpack.c.l.b16 %v7795
    %v7924 = vunpack.c.l.b16 %v7796
    %v7925 = vunpack.c.l.b16 %v7797
    %v7926 = vunpack.c.l.b16 %v7798
    %v7927 = vunpack.c.l.b16 %v7799
    %v7928 = vunpack.c.l.b16 %v7800
    %v7929 = vunpack.c.l.b16 %v7801
    %v7930 = vunpack.c.l.b16 %v7802
    %v7931 = vunpack.c.l.b16 %v7803
    %v7932 = vunpack.c.l.b16 %v7804
    %v7933 = vunpack.c.l.b16 %v7805
    %v7934 = vunpack.c.l.b16 %v7806
    %v7935 = vpack.c.b16 %v7872, %v7871
    %v7936 = vpack.c.b16 %v7874, %v7873
    %v7937 = vpack.c.b16 %v7876, %v7875
    %v7938 = vpack.c.b16 %v7878, %v7877
    %v7939 = vpack.c.b16 %v7880, %v7879
    %v7940 = vpack.c.b16 %v7882, %v7881
    %v7941 = vpack.c.b16 %v7884, %v7883
    %v7942 = vpack.c.b16 %v7886, %v7885
    %v7943 = vpack.c.b16 %v7888, %v7887
    %v7944 = vpack.c.b16 %v7890, %v7889
    %v7945 = vpack.c.b16 %v7892, %v7891
    %v7946 = vpack.c.b16 %v7894, %v7893
    %v7947 = vpack.c.b16 %v7896, %v7895
    %v7948 = vpack.c.b16 %v7898, %v7897
    %v7949 = vpack.c.b16 %v7900, %v7899
    %v7950 = vpack.c.b16 %v7902, %v7901
    %v7951 = vpack.c.b16 %v7904, %v7903
    %v7952 = vpack.c.b16 %v7906, %v7905
    %v7953 = vpack.c.b16 %v7908, %v7907
    %v7954 = vpack.c.b16 %v7910, %v7909
    %v7955 = vpack.c.b16 %v7912, %v7911
    %v7956 = vpack.c.b16 %v7914, %v7913
    %v7957 = vpack.c.b16 %v7916, %v7915
    %v7958 = vpack.c.b16 %v7918, %v7917
    %v7959 = vpack.c.b16 %v7920, %v7919
    %v7960 = vpack.c.b16 %v7922, %v7921
    %v7961 = vpack.c.b16 %v7924, %v7923
    %v7962 = vpack.c.b16 %v7926, %v7925
    %v7963 = vpack.c.b16 %v7928, %v7927
    %v7964 = vpack.c.b16 %v7930, %v7929
    %v7965 = vpack.c.b16 %v7932, %v7931
    %v7966 = vpack.c.b16 %v7934, %v7933
    %7999 = vmatprep.subr.bf16.mxu0 0
    %8000 = vmatpush1.bf16.msra.mxu0 %v7935
    %8001 = vmatprep.subr.bf16.mxu0 0
    %8002 = vmatpush1.bf16.msra.mxu0 %v7936
    %8003 = vmatprep.subr.bf16.mxu0 0
    %8004 = vmatpush1.bf16.msra.mxu0 %v7937
    %8005 = vmatprep.subr.bf16.mxu0 0
    %8006 = vmatpush1.bf16.msra.mxu0 %v7938
    %8007 = vmatprep.subr.bf16.mxu0 0
    %8008 = vmatpush1.bf16.msra.mxu0 %v7939
    %8009 = vmatprep.subr.bf16.mxu0 0
    %8010 = vmatpush1.bf16.msra.mxu0 %v7940
    %8011 = vmatprep.subr.bf16.mxu0 0
    %8012 = vmatpush1.bf16.msra.mxu0 %v7941
    %8013 = vmatprep.subr.bf16.mxu0 0
    %8014 = vmatpush1.bf16.msra.mxu0 %v7942
    %8015 = vmatprep.subr.bf16.mxu0 0
    %8016 = vmatpush1.bf16.msra.mxu0 %v7943
    %8017 = vmatprep.subr.bf16.mxu0 0
    %8018 = vmatpush1.bf16.msra.mxu0 %v7944
    %8019 = vmatprep.subr.bf16.mxu0 0
    %8020 = vmatpush1.bf16.msra.mxu0 %v7945
    %8021 = vmatprep.subr.bf16.mxu0 0
    %8022 = vmatpush1.bf16.msra.mxu0 %v7946
    %8023 = vmatprep.subr.bf16.mxu0 0
    %8024 = vmatpush1.bf16.msra.mxu0 %v7947
    %8025 = vmatprep.subr.bf16.mxu0 0
    %8026 = vmatpush1.bf16.msra.mxu0 %v7948
    %8027 = vmatprep.subr.bf16.mxu0 0
    %8028 = vmatpush1.bf16.msra.mxu0 %v7949
    %8029 = vmatprep.subr.bf16.mxu0 0
    %8030 = vmatpush1.bf16.msra.mxu0 %v7950
    %8031 = vmatprep.mubr.bf16.mxu0 %v7740
    %8032 = vmatmul.mubr.bf16.gmra.mrb[0].mxu0 %v7739
    %v8033 = vpop.f32.mrb[0].mxu0
    %v8034 = vadd.f32 0.0, %v8033
    %v8035 = vpop.f32.mrb[0].mxu0
    %v8036 = vpop.f32.mrb[0].mxu0
    %v8037 = vadd.f32 0.0, %v8036
    %v8038 = vpop.f32.mrb[0].mxu0
    %8039 = vdwg.mxu0
    %8040 = vmatprep.subr.bf16.mxu0 0
    %8041 = vmatpush1.bf16.msra.mxu0 %v7951
    %8042 = vmatprep.subr.bf16.mxu0 0
    %8043 = vmatpush1.bf16.msra.mxu0 %v7952
    %8044 = vmatprep.subr.bf16.mxu0 0
    %8045 = vmatpush1.bf16.msra.mxu0 %v7953
    %8046 = vmatprep.subr.bf16.mxu0 0
    %8047 = vmatpush1.bf16.msra.mxu0 %v7954
    %8048 = vmatprep.subr.bf16.mxu0 0
    %8049 = vmatpush1.bf16.msra.mxu0 %v7955
    %8050 = vmatprep.subr.bf16.mxu0 0
    %8051 = vmatpush1.bf16.msra.mxu0 %v7956
    %8052 = vmatprep.subr.bf16.mxu0 0
    %8053 = vmatpush1.bf16.msra.mxu0 %v7957
    %8054 = vmatprep.subr.bf16.mxu0 0
    %8055 = vmatpush1.bf16.msra.mxu0 %v7958
    %8056 = vmatprep.subr.bf16.mxu0 0
    %8057 = vmatpush1.bf16.msra.mxu0 %v7959
    %8058 = vmatprep.subr.bf16.mxu0 0
    %8059 = vmatpush1.bf16.msra.mxu0 %v7960
    %8060 = vmatprep.subr.bf16.mxu0 0
    %8061 = vmatpush1.bf16.msra.mxu0 %v7961
    %8062 = vmatprep.subr.bf16.mxu0 0
    %8063 = vmatpush1.bf16.msra.mxu0 %v7962
    %8064 = vmatprep.subr.bf16.mxu0 0
    %8065 = vmatpush1.bf16.msra.mxu0 %v7963
    %8066 = vmatprep.subr.bf16.mxu0 0
    %8067 = vmatpush1.bf16.msra.mxu0 %v7964
    %8068 = vmatprep.subr.bf16.mxu0 0
    %8069 = vmatpush1.bf16.msra.mxu0 %v7965
    %8070 = vmatprep.subr.bf16.mxu0 0
    %8071 = vmatpush1.bf16.msra.mxu0 %v7966
    %8072 = vmatprep.mubr.bf16.mxu0 %v7742
    %8073 = vmatmul.mubr.bf16.gmra.mrb[0].mxu0 %v7741
    %v8074 = vpop.f32.mrb[0].mxu0
    %v8075 = vadd.f32 %v8034, %v8074
    %v8076 = vpop.f32.mrb[0].mxu0
    %v8077 = vpop.f32.mrb[0].mxu0
    %v8078 = vadd.f32 %v8037, %v8077
    %v8079 = vpop.f32.mrb[0].mxu0
    %8080 = vdwg.mxu0
    %v8081 = vld [vmem:[#allocation10 + $0x68] ss:$0 sm:$0xff]
    %v8082 = vmul.f32 %v8075, %v8081
    %v8083 = vmul.f32 %v8078, %v8081
    %v8084 = vld [vmem:[#allocation10 + $0x3] ss:$0 sm:$0xff]
    %v8085 = vadd.f32 %v8082, %v8084
    %v8086 = vadd.f32 %v8083, %v8084
    %v8087 = vand.u32 2147483647, %v8085
    %v8088 = vand.u32 2147483647, %v8086
    %vm8089 = vcmp.lt.f32.partialorder %v8087, 0.01
    %vm8090 = vcmp.lt.f32.partialorder %v8088, 0.01
    %v8091 = vmul.f32 %v8085, 0.16666667
    %v8092 = vmul.f32 %v8086, 0.16666667
    %v8093 = vadd.f32 %v8091, 0.5
    %v8094 = vadd.f32 %v8092, 0.5
    %v8095 = vmul.f32 %v8085, %v8093
    %v8096 = vmul.f32 %v8086, %v8094
    %v8097 = vadd.f32 %v8095, 1.0
    %v8098 = vadd.f32 %v8096, 1.0
    %v8099 = vmul.f32 %v8085, %v8097
    %v8100 = vmul.f32 %v8086, %v8098
    %v8101 = vmul.f32 %v8085, 1.442695
    %v8102 = vpow.pop %v8101
    %v8103 = vmul.f32 %v8086, 1.442695
    %v8104 = vpow.pop %v8103
    %v8105 = vsub.f32 %v8102, 1.0
    %v8106 = vsub.f32 %v8104, 1.0
    %v8107 = vsel %vm8089, %v8099, %v8105
    %v8108 = vsel %vm8090, %v8100, %v8106
    %vm8109 = vcmp.gt.f32.partialorder %v8085, 0.0
    %vm8110 = vcmp.gt.f32.partialorder %v8086, 0.0
    %v8111 = vsel %vm8109, %v8085, %v8107
    %v8112 = vsel %vm8110, %v8086, %v8108
    %v8113 = vpack.c.bf16 %v8112, %v8111
    %v8114 = vld [vmem:[#allocation9] sm:$0xf]
    %v8115 = vld [vmem:[#allocation9 + $0x4] sm:$0xf]
    %v8116 = vld [vmem:[#allocation9 + $0x8] sm:$0xf]
    %v8117 = vld [vmem:[#allocation9 + $0xc] sm:$0xf]
    %v8118 = vld [vmem:[#allocation9 + $0x10] sm:$0xf]
    %v8119 = vld [vmem:[#allocation9 + $0x14] sm:$0xf]
    %v8120 = vld [vmem:[#allocation9 + $0x18] sm:$0xf]
    %v8121 = vld [vmem:[#allocation9 + $0x1c] sm:$0xf]
    %v8122 = vld [vmem:[#allocation9 + $0x20] sm:$0xf]
    %v8123 = vld [vmem:[#allocation9 + $0x24] sm:$0xf]
    %v8124 = vld [vmem:[#allocation9 + $0x28] sm:$0xf]
    %v8125 = vld [vmem:[#allocation9 + $0x2c] sm:$0xf]
    %v8126 = vld [vmem:[#allocation9 + $0x30] sm:$0xf]
    %v8127 = vld [vmem:[#allocation9 + $0x34] sm:$0xf]
    %v8128 = vld [vmem:[#allocation9 + $0x38] sm:$0xf]
    %v8129 = vld [vmem:[#allocation9 + $0x3c] sm:$0xf]
    %v8146 = vunpack.c.l.b16 %v8114
    %v8147 = vunpack.c.l.b16 %v8115
    %v8148 = vunpack.c.l.b16 %v8116
    %v8149 = vunpack.c.l.b16 %v8117
    %v8150 = vunpack.c.l.b16 %v8118
    %v8151 = vunpack.c.l.b16 %v8119
    %v8152 = vunpack.c.l.b16 %v8120
    %v8153 = vunpack.c.l.b16 %v8121
    %v8154 = vunpack.c.l.b16 %v8122
    %v8155 = vunpack.c.l.b16 %v8123
    %v8156 = vunpack.c.l.b16 %v8124
    %v8157 = vunpack.c.l.b16 %v8125
    %v8158 = vunpack.c.l.b16 %v8126
    %v8159 = vunpack.c.l.b16 %v8127
    %v8160 = vunpack.c.l.b16 %v8128
    %v8161 = vunpack.c.l.b16 %v8129
    %v8162 = vpack.c.b16 %v8147, %v8146
    %v8163 = vpack.c.b16 %v8149, %v8148
    %v8164 = vpack.c.b16 %v8151, %v8150
    %v8165 = vpack.c.b16 %v8153, %v8152
    %v8166 = vpack.c.b16 %v8155, %v8154
    %v8167 = vpack.c.b16 %v8157, %v8156
    %v8168 = vpack.c.b16 %v8159, %v8158
    %v8169 = vpack.c.b16 %v8161, %v8160
    %8178 = vmatprep.subr.bf16.mxu0 0
    %8179 = vmatpush1.bf16.msra.mxu0 %v8162
    %8180 = vmatprep.subr.bf16.mxu0 0
    %8181 = vmatpush1.bf16.msra.mxu0 %v8163
    %8182 = vmatprep.subr.bf16.mxu0 0
    %8183 = vmatpush1.bf16.msra.mxu0 %v8164
    %8184 = vmatprep.subr.bf16.mxu0 0
    %8185 = vmatpush1.bf16.msra.mxu0 %v8165
    %8186 = vmatprep.subr.bf16.mxu0 0
    %8187 = vmatpush1.bf16.msra.mxu0 %v8166
    %8188 = vmatprep.subr.bf16.mxu0 0
    %8189 = vmatpush1.bf16.msra.mxu0 %v8167
    %8190 = vmatprep.subr.bf16.mxu0 0
    %8191 = vmatpush1.bf16.msra.mxu0 %v8168
    %8192 = vmatprep.subr.bf16.mxu0 0
    %8193 = vmatpush1.bf16.msra.mxu0 %v8169
    %8194 = vmatprep.subr.bf16.mxu0 0
    %8195 = vmatpush1.bf16.msra.mxu0 0
    %8196 = vmatprep.subr.bf16.mxu0 0
    %8197 = vmatpush1.bf16.msra.mxu0 0
    %8198 = vmatprep.subr.bf16.mxu0 0
    %8199 = vmatpush1.bf16.msra.mxu0 0
    %8200 = vmatprep.subr.bf16.mxu0 0
    %8201 = vmatpush1.bf16.msra.mxu0 0
    %8202 = vmatprep.subr.bf16.mxu0 0
    %8203 = vmatpush1.bf16.msra.mxu0 0
    %8204 = vmatprep.subr.bf16.mxu0 0
    %8205 = vmatpush1.bf16.msra.mxu0 0
    %8206 = vmatprep.subr.bf16.mxu0 0
    %8207 = vmatpush1.bf16.msra.mxu0 0
    %8208 = vmatprep.subr.bf16.mxu0 0
    %8209 = vmatpush1.bf16.msra.mxu0 0
    %8210 = vmatprep.mubr.bf16.mxu0 0
    %8211 = vmatmul.mubr.bf16.gmra.mrb[0].mxu0 %v8113
    %v8212 = vpop.f32.mrb[0].mxu0
    %v8213 = vadd.f32 0.0, %v8212
    %v8214 = vpop.f32.mrb[0].mxu0
    %v8215 = vpop.f32.mrb[0].mxu0
    %v8216 = vadd.f32 0.0, %v8215
    %v8217 = vpop.f32.mrb[0].mxu0
    %8218 = vdwg.mxu0
    %v8219 = vld [vmem:[#allocation10 + $0x69] ss:$0 sm:$0xff]
    %v8220 = vmul.f32 %v8213, %v8219
    %v8221 = vmul.f32 %v8216, %v8219
    %v8222 = vld [vmem:[#allocation10 + $0x4] ss:$0 sm:$0xff]
    %v8223 = vadd.f32 %v8220, %v8222
    %v8224 = vadd.f32 %v8221, %v8222
    %8225 = vst [vmem:[%s7] sm:$0xff] %v8223
    %8226 = vst [vmem:[%s7 + $0x8] sm:$0xff] %v8224
    // Predicated region
    $region54: #{mednet_forward.1} parent=1 // pred_check
      _
    $region55: #{mednet_forward.1} parent=1 // pred_check_branch
      %8228 = sbr.rel (0) target = $region57
    $region56: #{mednet_forward.1} parent=1 // pred_region
      _
    $region57: #{mednet_forward.1} parent=1 // pred_fallthru
      _
    // Predicated region
    $region58: #{mednet_forward.1} parent=1 // pred_check
      _
    $region59: #{mednet_forward.1} parent=1 // pred_check_branch
      %8230 = sbr.rel (0) target = $region61
    $region60: #{mednet_forward.1} parent=1 // pred_region
      _
    $region61: #{mednet_forward.1} parent=1 // pred_fallthru
      _
    %8231 = vsyncpa [#allocation3], 1
    %8232 = vsyncpa [#allocation5], 1
    %8233 = vsyncpa [#allocation8], 1
    %8234 = vsyncpa [#allocation11], 1

</llo_original>
